<compile_context>
chip_gen: v7x
topology: tpu7x:2x2x1
jax: 0.10.0
libtpu: 0.0.40
codegen_flags: <defaults>
</compile_context>

<pallas_src>
import functools
import math

import jax
import jax.numpy as jnp
from jax.experimental import pallas as pl
from jax.experimental.pallas import tpu as pltpu


_LANES = 128


def _round_up(v, m):
    return ((v + m - 1) // m) * m


# ----------------------------------------------------------------------------
# Fused stage kernel
# ----------------------------------------------------------------------------
def _conv3x3_relu(x, w_fold, b, row_w, out_w):
    """VALID 3x3 conv + bias + ReLU on a flat canvas.

    x:      (Cin, >= out_w + 2*row_w + 2) f32 canvas (row pitch = row_w)
    w_fold: (Cout, 9*Cin) bf16, taps folded into the contraction dim
    b:      (Cout, 1) f32
    Returns (Cout, out_w) f32.
    """
    taps = []
    for kh in range(3):
        for kw in range(3):
            s = kh * row_w + kw
            taps.append(x[:, s:s + out_w])
    patches = jnp.concatenate(taps, axis=0).astype(jnp.bfloat16)
    acc = jnp.dot(w_fold, patches, preferred_element_type=jnp.float32)
    acc = acc + b                      # (Cout, 1) broadcasts over lanes
    return jnp.maximum(acc, 0.0)


def _stage_kernel(x_ref, w1_ref, b1_ref, w2_ref, b2_ref, *rest,
                  row_w, with_proj):
    """conv3x3+ReLU -> conv3x3+ReLU (+ optional per-position projection).

    x_ref: (1, Cin, PW + 2*halo)       w1: (Cout, 9*Cin)   b1: (Cout, 1)
                                       w2: (Cout, 9*Cout)  b2: (Cout, 1)
    proj:  wp (Mp, Cout) bf16, bp (Mp, 1) f32  ->  p_ref (1, Mp, PW)
           (covers both folded ConvTranspose2d 2x2 taps and the 1x1 head)
    """
    if with_proj:
        wp_ref, bp_ref, y_ref, p_ref = rest
    else:
        (y_ref,) = rest

    pw = y_ref.shape[-1]
    halo = (x_ref.shape[-1] - pw) // 2

    x = x_ref[0]
    h = _conv3x3_relu(x, w1_ref[...], b1_ref[...], row_w, pw + halo)
    y = _conv3x3_relu(h, w2_ref[...], b2_ref[...], row_w, pw)
    y_ref[0] = y.astype(y_ref.dtype)

    if with_proj:
        p = jnp.dot(wp_ref[...], y.astype(jnp.bfloat16),
                    preferred_element_type=jnp.float32)
        p_ref[0] = (p + bp_ref[...]).astype(p_ref.dtype)


# ----------------------------------------------------------------------------
# Stage wrapper (canvas packing + pallas_call)
# ----------------------------------------------------------------------------
def _fold_conv3x3(w, cin_pad):
    """(Cout, Cin, 3, 3) torch layout -> (Cout, 9*cin_pad) bf16."""
    cout, cin = w.shape[0], w.shape[1]
    wf = jnp.transpose(w, (0, 2, 3, 1))                 # (Cout, 3, 3, Cin)
    if cin_pad > cin:
        wf = jnp.pad(wf, ((0, 0), (0, 0), (0, 0), (0, cin_pad - cin)))
    return wf.reshape(cout, 9 * cin_pad).astype(jnp.bfloat16)


def run_stage(x, conv1, conv2, proj=None):
    """Fused Block (+optional projection) on an NCHW input.

    x: (N, Cin, H, W) f32.  conv1/conv2: (w, b) in torch Conv2d layout.
    proj: optional (wp, bp) with wp (Mp, Cout), bp (Mp,).
    Returns (y, p): y (N, Cout, H-4, W-4) f32; p (N, Mp, H-4, W-4) or None.
    """
    n, cin, h, w = x.shape
    (w1, b1), (w2, b2) = conv1, conv2
    cout = w1.shape[0]

    cin_pad = _round_up(cin, 8)            # sublane-align the folded K blocks
    pw = _round_up(h * w, _LANES)          # lane-dense output canvas width
    halo = _round_up(2 * w + 2, _LANES)    # slack so tap slices stay in-bounds

    xc = x.reshape(n, cin, h * w)
    xc = jnp.pad(xc, ((0, 0), (0, cin_pad - cin), (0, pw + 2 * halo - h * w)))

    w1f = _fold_conv3x3(w1, cin_pad)
    w2f = _fold_conv3x3(w2, cout)
    b1c = b1.reshape(cout, 1).astype(jnp.float32)
    b2c = b2.reshape(cout, 1).astype(jnp.float32)

    inputs = [xc, w1f, b1c, w2f, b2c]
    in_specs = [
        pl.BlockSpec((1, cin_pad, pw + 2 * halo), lambda i: (i, 0, 0)),
        pl.BlockSpec(w1f.shape, lambda i: (0, 0)),
        pl.BlockSpec(b1c.shape, lambda i: (0, 0)),
        pl.BlockSpec(w2f.shape, lambda i: (0, 0)),
        pl.BlockSpec(b2c.shape, lambda i: (0, 0)),
    ]
    out_shape = [jax.ShapeDtypeStruct((n, cout, pw), jnp.float32)]
    out_specs = [pl.BlockSpec((1, cout, pw), lambda i: (i, 0, 0))]

    with_proj = proj is not None
    if with_proj:
        wp, bp = proj
        mp = wp.shape[0]
        inputs += [wp.astype(jnp.bfloat16),
                   bp.reshape(mp, 1).astype(jnp.float32)]
        in_specs += [pl.BlockSpec((mp, cout), lambda i: (0, 0)),
                     pl.BlockSpec((mp, 1), lambda i: (0, 0))]
        out_shape.append(jax.ShapeDtypeStruct((n, mp, pw), jnp.float32))
        out_specs.append(pl.BlockSpec((1, mp, pw), lambda i: (i, 0, 0)))

    outs = pl.pallas_call(
        functools.partial(_stage_kernel, row_w=w, with_proj=with_proj),
        grid=(n,),
        in_specs=in_specs,
        out_specs=out_specs,
        out_shape=out_shape,
        compiler_params=pltpu.CompilerParams(
            dimension_semantics=("parallel",)),
    )(*inputs)

    hv, wv = h - 4, w - 4
    y = outs[0][:, :, :h * w].reshape(n, cout, h, w)[:, :, :hv, :wv]
    p = None
    if with_proj:
        mp = proj[0].shape[0]
        p = outs[1][:, :, :h * w].reshape(n, mp, h, w)[:, :, :hv, :wv]
    return y, p


# ----------------------------------------------------------------------------
# Pure-JAX glue (data movement only; fused by XLA)
# ----------------------------------------------------------------------------
def maxpool2(x):
    # MaxPool2d(2).  Strided-slice + max, fused by XLA into one small op.
    # TODO(synk): could be folded into the stage-kernel epilogue via strided
    # lane compaction, but at these sizes it is launch-free glue.
    x = x[:, :, : (x.shape[2] // 2) * 2, : (x.shape[3] // 2) * 2]
    return jnp.maximum(
        jnp.maximum(x[:, :, 0::2, 0::2], x[:, :, 0::2, 1::2]),
        jnp.maximum(x[:, :, 1::2, 0::2], x[:, :, 1::2, 1::2]))


def center_crop(x, th, tw):
    top = int(round((x.shape[2] - th) / 2.0))
    left = int(round((x.shape[3] - tw) / 2.0))
    return x[:, :, top:top + th, left:left + tw]


def interleave_upconv(p, cout):
    # p: (N, 4*Cout, Hi, Wi) with row index (a*2+b)*Cout + co
    #   -> (N, Cout, 2*Hi, 2*Wi) with out[n, co, 2i+a, 2j+b] = p[n, (2a+b)*Cout+co, i, j]
    n, _, hi, wi = p.shape
    p = p.reshape(n, 2, 2, cout, hi, wi)
    p = jnp.transpose(p, (0, 3, 4, 1, 5, 2))
    return p.reshape(n, cout, 2 * hi, 2 * wi)


def nearest_resize(x, out_h, out_w):
    # matches torch F.interpolate(mode='nearest'): src = floor(dst * in / out)
    n, c, h, w = x.shape
    hi = (jnp.arange(out_h) * h) // out_h
    wi = (jnp.arange(out_w) * w) // out_w
    return x[:, :, hi][:, :, :, wi]


def _fold_upconv(w, b):
    # torch ConvTranspose2d weight (Cin, Cout, 2, 2) -> (4*Cout, Cin),
    # row index (a*2+b)*Cout + co; bias tiled to match.
    cout = w.shape[1]
    wf = jnp.transpose(w, (2, 3, 1, 0)).reshape(4 * cout, w.shape[0])
    return wf, jnp.tile(b, 4)


def _fold_head(w, b):
    # 1x1 Conv2d weight (nb_classes, Cin, 1, 1) -> (nb_classes, Cin)
    return w.reshape(w.shape[0], w.shape[1]), b


# ----------------------------------------------------------------------------
# Parameters (deterministic synthetic init, torch-style shapes / fan-in)
# ----------------------------------------------------------------------------
def _init_conv(key, cout, cin, k):
    kw, kb = jax.random.split(key)
    bound = 1.0 / math.sqrt(cin * k * k)
    w = jax.random.uniform(kw, (cout, cin, k, k), jnp.float32, -bound, bound)
    b = jax.random.uniform(kb, (cout,), jnp.float32, -bound, bound)
    return w, b


def _init_upconv(key, cin, cout):
    kw, kb = jax.random.split(key)
    bound = 1.0 / math.sqrt(cout * 2 * 2)
    w = jax.random.uniform(kw, (cin, cout, 2, 2), jnp.float32, -bound, bound)
    b = jax.random.uniform(kb, (cout,), jnp.float32, -bound, bound)
    return w, b


def init_unet_params(key, enc_channels=(3, 16, 32, 64),
                     dec_channels=(64, 32, 16), nb_classes=1):
    keys = jax.random.split(key, 32)
    ki = iter(range(32))
    params = {"enc": [], "up": [], "dec": []}
    for i in range(len(enc_channels) - 1):
        c_in, c_out = enc_channels[i], enc_channels[i + 1]
        conv1 = _init_conv(keys[next(ki)], c_out, c_in, 3)
        conv2 = _init_conv(keys[next(ki)], c_out, c_out, 3)
        params["enc"].append((conv1, conv2))
    for i in range(len(dec_channels) - 1):
        c_in, c_out = dec_channels[i], dec_channels[i + 1]
        params["up"].append(_init_upconv(keys[next(ki)], c_in, c_out))
        conv1 = _init_conv(keys[next(ki)], c_out, c_in, 3)
        conv2 = _init_conv(keys[next(ki)], c_out, c_out, 3)
        params["dec"].append((conv1, conv2))
    params["head"] = _init_conv(keys[next(ki)], nb_classes, dec_channels[-1], 1)
    return params


# ----------------------------------------------------------------------------
# UNet forward
# ----------------------------------------------------------------------------
def unet_forward(x, params, out_size, retain_dim=True):
    n_enc = len(params["enc"])
    n_dec = len(params["dec"])

    # Encoder: one fused kernel per Block; the bottleneck stage also emits the
    # first transposed-conv taps as a fused projection of its output.
    skips = []
    h = x
    p = None
    for i, (c1, c2) in enumerate(params["enc"]):
        proj = _fold_upconv(*params["up"][0]) if i == n_enc - 1 else None
        y, p = run_stage(h, c1, c2, proj=proj)
        skips.append(y)
        if i < n_enc - 1:            # torch pools after the last block too,
            h = maxpool2(y)          # but discards that result

    # Decoder: glue (tap interleave, center-crop, concat) + one fused kernel
    # per Block; each non-final stage emits the next transposed-conv taps,
    # the final stage emits the 1x1 head.
    seg = None
    for i, (c1, c2) in enumerate(params["dec"]):
        cup = params["up"][i][0].shape[1]
        x_up = interleave_upconv(p, cup)
        skip = skips[n_enc - 2 - i]
        cat = jnp.concatenate(
            [x_up, center_crop(skip, x_up.shape[2], x_up.shape[3])], axis=1)
        if i < n_dec - 1:
            proj = _fold_upconv(*params["up"][i + 1])
        else:
            proj = _fold_head(*params["head"])
        y, p = run_stage(cat, c1, c2, proj=proj)
    seg = p                          # (N, nb_classes, Hf, Wf) from fused head

    if retain_dim:
        seg = nearest_resize(seg, out_size[0], out_size[1])
    return seg


# ----------------------------------------------------------------------------
if __name__ == "__main__":
    # Smallest architecture-consistent size: VALID 3x3 convs + 2x2 pools need
    # H = W = 48 so every intermediate spatial size stays positive.
    N, C, H, W = 2, 3, 48, 48
    x = jax.random.normal(jax.random.PRNGKey(0), (N, C, H, W), dtype=jnp.float32)
    params = init_unet_params(jax.random.PRNGKey(1))

    fwd = jax.jit(functools.partial(unet_forward, out_size=(H, W),
                                    retain_dim=True))
    out = jax.block_until_ready(fwd(x, params))

    assert out.shape == (N, 1, H, W), out.shape
    assert out.dtype == jnp.float32
    assert bool(jnp.all(jnp.isfinite(out)))
    print("KERNEL_OK")
</pallas_src>

<mosaic_0001>
module attributes {stable_mosaic.version = 11 : i64} {
  func.func @_stage_kernel(%arg0: i32, %arg1: memref<1x8x2560xf32, #tpu.memory_space<vmem>>, %arg2: memref<16x72xbf16, #tpu.memory_space<vmem>>, %arg3: memref<16x1xf32, #tpu.memory_space<vmem>>, %arg4: memref<16x144xbf16, #tpu.memory_space<vmem>>, %arg5: memref<16x1xf32, #tpu.memory_space<vmem>>, %arg6: memref<1x16x2304xf32, #tpu.memory_space<vmem>>) attributes {dimension_semantics = [#tpu.dimension_semantics<parallel>], iteration_bounds = array<i64: 2>, scalar_prefetch = 0 : i64, scratch_operands = 0 : i64, tpu.core_type = #tpu.core_type<tc>, window_params = [{transform_indices = @transform_0, window_bounds = array<i64: 1, 8, 2560>}, {pipeline_mode = #tpu.pipeline_mode<synchronous>, transform_indices = @transform_1, window_bounds = array<i64: 16, 72>}, {pipeline_mode = #tpu.pipeline_mode<synchronous>, transform_indices = @transform_2, window_bounds = array<i64: 16, 1>}, {pipeline_mode = #tpu.pipeline_mode<synchronous>, transform_indices = @transform_3, window_bounds = array<i64: 16, 144>}, {pipeline_mode = #tpu.pipeline_mode<synchronous>, transform_indices = @transform_4, window_bounds = array<i64: 16, 1>}, {transform_indices = @transform_5, window_bounds = array<i64: 1, 16, 2304>}]} {
    %c0 = arith.constant 0 : index
    %c0_0 = arith.constant 0 : index
    %c0_1 = arith.constant 0 : index
    %0 = vector.load %arg1[%c0, %c0_0, %c0_1] : memref<1x8x2560xf32, #tpu.memory_space<vmem>>, vector<1x8x2560xf32>
    %1 = vector.shape_cast %0 : vector<1x8x2560xf32> to vector<8x2560xf32>
    %c0_2 = arith.constant 0 : index
    %c0_3 = arith.constant 0 : index
    %2 = vector.load %arg2[%c0_2, %c0_3] : memref<16x72xbf16, #tpu.memory_space<vmem>>, vector<16x72xbf16>
    %c0_4 = arith.constant 0 : index
    %c0_5 = arith.constant 0 : index
    %3 = vector.load %arg3[%c0_4, %c0_5] : memref<16x1xf32, #tpu.memory_space<vmem>>, vector<16x1xf32>
    %4 = vector.extract_strided_slice %1 {offsets = [0, 0], sizes = [8, 2432], strides = [1, 1]} : vector<8x2560xf32> to vector<8x2432xf32>
    %5 = vector.extract_strided_slice %1 {offsets = [0, 1], sizes = [8, 2432], strides = [1, 1]} : vector<8x2560xf32> to vector<8x2432xf32>
    %6 = vector.extract_strided_slice %1 {offsets = [0, 2], sizes = [8, 2432], strides = [1, 1]} : vector<8x2560xf32> to vector<8x2432xf32>
    %7 = vector.extract_strided_slice %1 {offsets = [0, 48], sizes = [8, 2432], strides = [1, 1]} : vector<8x2560xf32> to vector<8x2432xf32>
    %8 = vector.extract_strided_slice %1 {offsets = [0, 49], sizes = [8, 2432], strides = [1, 1]} : vector<8x2560xf32> to vector<8x2432xf32>
    %9 = vector.extract_strided_slice %1 {offsets = [0, 50], sizes = [8, 2432], strides = [1, 1]} : vector<8x2560xf32> to vector<8x2432xf32>
    %10 = vector.extract_strided_slice %1 {offsets = [0, 96], sizes = [8, 2432], strides = [1, 1]} : vector<8x2560xf32> to vector<8x2432xf32>
    %11 = vector.extract_strided_slice %1 {offsets = [0, 97], sizes = [8, 2432], strides = [1, 1]} : vector<8x2560xf32> to vector<8x2432xf32>
    %12 = vector.extract_strided_slice %1 {offsets = [0, 98], sizes = [8, 2432], strides = [1, 1]} : vector<8x2560xf32> to vector<8x2432xf32>
    %13 = tpu.concatenate %4, %5, %6, %7, %8, %9, %10, %11, %12 in 0 : vector<8x2432xf32>, vector<8x2432xf32>, vector<8x2432xf32>, vector<8x2432xf32>, vector<8x2432xf32>, vector<8x2432xf32>, vector<8x2432xf32>, vector<8x2432xf32>, vector<8x2432xf32> -> vector<72x2432xf32>
    %14 = arith.truncf %13 : vector<72x2432xf32> to vector<72x2432xbf16>
    %cst = arith.constant dense<0.000000e+00> : vector<16x2432xf32>
    %15 = tpu.matmul %2, %14, %cst {dimension_numbers = #tpu.dot_dimension_numbers<[1], [0], [0], [1], [0, 0, 1, 1], [], []>} : vector<16x72xbf16>, vector<72x2432xbf16>, vector<16x2432xf32> -> vector<16x2432xf32>
    %16 = vector.broadcast %3 : vector<16x1xf32> to vector<16x2432xf32>
    %17 = arith.addf %15, %16 : vector<16x2432xf32>
    %cst_6 = arith.constant 0.000000e+00 : f32
    %18 = vector.broadcast %cst_6 : f32 to vector<16x2432xf32>
    %19 = arith.maximumf %17, %18 : vector<16x2432xf32>
    %c0_7 = arith.constant 0 : index
    %c0_8 = arith.constant 0 : index
    %20 = vector.load %arg4[%c0_7, %c0_8] : memref<16x144xbf16, #tpu.memory_space<vmem>>, vector<16x144xbf16>
    %c0_9 = arith.constant 0 : index
    %c0_10 = arith.constant 0 : index
    %21 = vector.load %arg5[%c0_9, %c0_10] : memref<16x1xf32, #tpu.memory_space<vmem>>, vector<16x1xf32>
    %22 = vector.extract_strided_slice %19 {offsets = [0, 0], sizes = [16, 2304], strides = [1, 1]} : vector<16x2432xf32> to vector<16x2304xf32>
    %23 = vector.extract_strided_slice %19 {offsets = [0, 1], sizes = [16, 2304], strides = [1, 1]} : vector<16x2432xf32> to vector<16x2304xf32>
    %24 = vector.extract_strided_slice %19 {offsets = [0, 2], sizes = [16, 2304], strides = [1, 1]} : vector<16x2432xf32> to vector<16x2304xf32>
    %25 = vector.extract_strided_slice %19 {offsets = [0, 48], sizes = [16, 2304], strides = [1, 1]} : vector<16x2432xf32> to vector<16x2304xf32>
    %26 = vector.extract_strided_slice %19 {offsets = [0, 49], sizes = [16, 2304], strides = [1, 1]} : vector<16x2432xf32> to vector<16x2304xf32>
    %27 = vector.extract_strided_slice %19 {offsets = [0, 50], sizes = [16, 2304], strides = [1, 1]} : vector<16x2432xf32> to vector<16x2304xf32>
    %28 = vector.extract_strided_slice %19 {offsets = [0, 96], sizes = [16, 2304], strides = [1, 1]} : vector<16x2432xf32> to vector<16x2304xf32>
    %29 = vector.extract_strided_slice %19 {offsets = [0, 97], sizes = [16, 2304], strides = [1, 1]} : vector<16x2432xf32> to vector<16x2304xf32>
    %30 = vector.extract_strided_slice %19 {offsets = [0, 98], sizes = [16, 2304], strides = [1, 1]} : vector<16x2432xf32> to vector<16x2304xf32>
    %31 = tpu.concatenate %22, %23, %24, %25, %26, %27, %28, %29, %30 in 0 : vector<16x2304xf32>, vector<16x2304xf32>, vector<16x2304xf32>, vector<16x2304xf32>, vector<16x2304xf32>, vector<16x2304xf32>, vector<16x2304xf32>, vector<16x2304xf32>, vector<16x2304xf32> -> vector<144x2304xf32>
    %32 = arith.truncf %31 : vector<144x2304xf32> to vector<144x2304xbf16>
    %cst_11 = arith.constant dense<0.000000e+00> : vector<16x2304xf32>
    %33 = tpu.matmul %20, %32, %cst_11 {dimension_numbers = #tpu.dot_dimension_numbers<[1], [0], [0], [1], [0, 0, 1, 1], [], []>} : vector<16x144xbf16>, vector<144x2304xbf16>, vector<16x2304xf32> -> vector<16x2304xf32>
    %34 = vector.broadcast %21 : vector<16x1xf32> to vector<16x2304xf32>
    %35 = arith.addf %33, %34 : vector<16x2304xf32>
    %cst_12 = arith.constant 0.000000e+00 : f32
    %36 = vector.broadcast %cst_12 : f32 to vector<16x2304xf32>
    %37 = arith.maximumf %35, %36 : vector<16x2304xf32>
    %c0_13 = arith.constant 0 : index
    %c0_14 = arith.constant 0 : index
    %c0_15 = arith.constant 0 : index
    %38 = vector.load %arg6[%c0_13, %c0_14, %c0_15] : memref<1x16x2304xf32, #tpu.memory_space<vmem>>, vector<1x16x2304xf32>
    %39 = vector.shape_cast %38 : vector<1x16x2304xf32> to vector<16x2304xf32>
    %40 = vector.shape_cast %37 : vector<16x2304xf32> to vector<1x16x2304xf32>
    tpu.vector_store %arg6[%c0_13, %c0_14, %c0_15], %40 {strides = array<i32>} : memref<1x16x2304xf32, #tpu.memory_space<vmem>>, vector<1x16x2304xf32>,
    return
  }
  func.func @transform_0(%arg0: i32) -> (i32, i32, i32) {
    %c0_i32 = arith.constant 0 : i32
    %c0_i32_0 = arith.constant 0 : i32
    %c0_i32_1 = arith.constant 0 : i32
    return %arg0, %c0_i32, %c0_i32_0 : i32, i32, i32
  }
  func.func @transform_1(%arg0: i32) -> (i32, i32) {
    %c0_i32 = arith.constant 0 : i32
    %c0_i32_0 = arith.constant 0 : i32
    %c0_i32_1 = arith.constant 0 : i32
    return %c0_i32, %c0_i32_0 : i32, i32
  }
  func.func @transform_2(%arg0: i32) -> (i32, i32) {
    %c0_i32 = arith.constant 0 : i32
    %c0_i32_0 = arith.constant 0 : i32
    %c0_i32_1 = arith.constant 0 : i32
    return %c0_i32, %c0_i32_0 : i32, i32
  }
  func.func @transform_3(%arg0: i32) -> (i32, i32) {
    %c0_i32 = arith.constant 0 : i32
    %c0_i32_0 = arith.constant 0 : i32
    %c0_i32_1 = arith.constant 0 : i32
    return %c0_i32, %c0_i32_0 : i32, i32
  }
  func.func @transform_4(%arg0: i32) -> (i32, i32) {
    %c0_i32 = arith.constant 0 : i32
    %c0_i32_0 = arith.constant 0 : i32
    %c0_i32_1 = arith.constant 0 : i32
    return %c0_i32, %c0_i32_0 : i32, i32
  }
  func.func @transform_5(%arg0: i32) -> (i32, i32, i32) {
    %c0_i32 = arith.constant 0 : i32
    %c0_i32_0 = arith.constant 0 : i32
    %c0_i32_1 = arith.constant 0 : i32
    return %arg0, %c0_i32, %c0_i32_0 : i32, i32, i32
  }
}

module attributes {stable_mosaic.version = 11 : i64} {
  func.func @_stage_kernel(%arg0: i32, %arg1: memref<1x16x768xf32, #tpu.memory_space<vmem>>, %arg2: memref<32x144xbf16, #tpu.memory_space<vmem>>, %arg3: memref<32x1xf32, #tpu.memory_space<vmem>>, %arg4: memref<32x288xbf16, #tpu.memory_space<vmem>>, %arg5: memref<32x1xf32, #tpu.memory_space<vmem>>, %arg6: memref<1x32x512xf32, #tpu.memory_space<vmem>>) attributes {dimension_semantics = [#tpu.dimension_semantics<parallel>], iteration_bounds = array<i64: 2>, scalar_prefetch = 0 : i64, scratch_operands = 0 : i64, tpu.core_type = #tpu.core_type<tc>, window_params = [{transform_indices = @transform_0, window_bounds = array<i64: 1, 16, 768>}, {pipeline_mode = #tpu.pipeline_mode<synchronous>, transform_indices = @transform_1, window_bounds = array<i64: 32, 144>}, {pipeline_mode = #tpu.pipeline_mode<synchronous>, transform_indices = @transform_2, window_bounds = array<i64: 32, 1>}, {pipeline_mode = #tpu.pipeline_mode<synchronous>, transform_indices = @transform_3, window_bounds = array<i64: 32, 288>}, {pipeline_mode = #tpu.pipeline_mode<synchronous>, transform_indices = @transform_4, window_bounds = array<i64: 32, 1>}, {transform_indices = @transform_5, window_bounds = array<i64: 1, 32, 512>}]} {
    %c0 = arith.constant 0 : index
    %c0_0 = arith.constant 0 : index
    %c0_1 = arith.constant 0 : index
    %0 = vector.load %arg1[%c0, %c0_0, %c0_1] : memref<1x16x768xf32, #tpu.memory_space<vmem>>, vector<1x16x768xf32>
    %1 = vector.shape_cast %0 : vector<1x16x768xf32> to vector<16x768xf32>
    %c0_2 = arith.constant 0 : index
    %c0_3 = arith.constant 0 : index
    %2 = vector.load %arg2[%c0_2, %c0_3] : memref<32x144xbf16, #tpu.memory_space<vmem>>, vector<32x144xbf16>
    %c0_4 = arith.constant 0 : index
    %c0_5 = arith.constant 0 : index
    %3 = vector.load %arg3[%c0_4, %c0_5] : memref<32x1xf32, #tpu.memory_space<vmem>>, vector<32x1xf32>
    %4 = vector.extract_strided_slice %1 {offsets = [0, 0], sizes = [16, 640], strides = [1, 1]} : vector<16x768xf32> to vector<16x640xf32>
    %5 = vector.extract_strided_slice %1 {offsets = [0, 1], sizes = [16, 640], strides = [1, 1]} : vector<16x768xf32> to vector<16x640xf32>
    %6 = vector.extract_strided_slice %1 {offsets = [0, 2], sizes = [16, 640], strides = [1, 1]} : vector<16x768xf32> to vector<16x640xf32>
    %7 = vector.extract_strided_slice %1 {offsets = [0, 22], sizes = [16, 640], strides = [1, 1]} : vector<16x768xf32> to vector<16x640xf32>
    %8 = vector.extract_strided_slice %1 {offsets = [0, 23], sizes = [16, 640], strides = [1, 1]} : vector<16x768xf32> to vector<16x640xf32>
    %9 = vector.extract_strided_slice %1 {offsets = [0, 24], sizes = [16, 640], strides = [1, 1]} : vector<16x768xf32> to vector<16x640xf32>
    %10 = vector.extract_strided_slice %1 {offsets = [0, 44], sizes = [16, 640], strides = [1, 1]} : vector<16x768xf32> to vector<16x640xf32>
    %11 = vector.extract_strided_slice %1 {offsets = [0, 45], sizes = [16, 640], strides = [1, 1]} : vector<16x768xf32> to vector<16x640xf32>
    %12 = vector.extract_strided_slice %1 {offsets = [0, 46], sizes = [16, 640], strides = [1, 1]} : vector<16x768xf32> to vector<16x640xf32>
    %13 = tpu.concatenate %4, %5, %6, %7, %8, %9, %10, %11, %12 in 0 : vector<16x640xf32>, vector<16x640xf32>, vector<16x640xf32>, vector<16x640xf32>, vector<16x640xf32>, vector<16x640xf32>, vector<16x640xf32>, vector<16x640xf32>, vector<16x640xf32> -> vector<144x640xf32>
    %14 = arith.truncf %13 : vector<144x640xf32> to vector<144x640xbf16>
    %cst = arith.constant dense<0.000000e+00> : vector<32x640xf32>
    %15 = tpu.matmul %2, %14, %cst {dimension_numbers = #tpu.dot_dimension_numbers<[1], [0], [0], [1], [0, 0, 1, 1], [], []>} : vector<32x144xbf16>, vector<144x640xbf16>, vector<32x640xf32> -> vector<32x640xf32>
    %16 = vector.broadcast %3 : vector<32x1xf32> to vector<32x640xf32>
    %17 = arith.addf %15, %16 : vector<32x640xf32>
    %cst_6 = arith.constant 0.000000e+00 : f32
    %18 = vector.broadcast %cst_6 : f32 to vector<32x640xf32>
    %19 = arith.maximumf %17, %18 : vector<32x640xf32>
    %c0_7 = arith.constant 0 : index
    %c0_8 = arith.constant 0 : index
    %20 = vector.load %arg4[%c0_7, %c0_8] : memref<32x288xbf16, #tpu.memory_space<vmem>>, vector<32x288xbf16>
    %c0_9 = arith.constant 0 : index
    %c0_10 = arith.constant 0 : index
    %21 = vector.load %arg5[%c0_9, %c0_10] : memref<32x1xf32, #tpu.memory_space<vmem>>, vector<32x1xf32>
    %22 = vector.extract_strided_slice %19 {offsets = [0, 0], sizes = [32, 512], strides = [1, 1]} : vector<32x640xf32> to vector<32x512xf32>
    %23 = vector.extract_strided_slice %19 {offsets = [0, 1], sizes = [32, 512], strides = [1, 1]} : vector<32x640xf32> to vector<32x512xf32>
    %24 = vector.extract_strided_slice %19 {offsets = [0, 2], sizes = [32, 512], strides = [1, 1]} : vector<32x640xf32> to vector<32x512xf32>
    %25 = vector.extract_strided_slice %19 {offsets = [0, 22], sizes = [32, 512], strides = [1, 1]} : vector<32x640xf32> to vector<32x512xf32>
    %26 = vector.extract_strided_slice %19 {offsets = [0, 23], sizes = [32, 512], strides = [1, 1]} : vector<32x640xf32> to vector<32x512xf32>
    %27 = vector.extract_strided_slice %19 {offsets = [0, 24], sizes = [32, 512], strides = [1, 1]} : vector<32x640xf32> to vector<32x512xf32>
    %28 = vector.extract_strided_slice %19 {offsets = [0, 44], sizes = [32, 512], strides = [1, 1]} : vector<32x640xf32> to vector<32x512xf32>
    %29 = vector.extract_strided_slice %19 {offsets = [0, 45], sizes = [32, 512], strides = [1, 1]} : vector<32x640xf32> to vector<32x512xf32>
    %30 = vector.extract_strided_slice %19 {offsets = [0, 46], sizes = [32, 512], strides = [1, 1]} : vector<32x640xf32> to vector<32x512xf32>
    %31 = tpu.concatenate %22, %23, %24, %25, %26, %27, %28, %29, %30 in 0 : vector<32x512xf32>, vector<32x512xf32>, vector<32x512xf32>, vector<32x512xf32>, vector<32x512xf32>, vector<32x512xf32>, vector<32x512xf32>, vector<32x512xf32>, vector<32x512xf32> -> vector<288x512xf32>
    %32 = arith.truncf %31 : vector<288x512xf32> to vector<288x512xbf16>
    %cst_11 = arith.constant dense<0.000000e+00> : vector<32x512xf32>
    %33 = tpu.matmul %20, %32, %cst_11 {dimension_numbers = #tpu.dot_dimension_numbers<[1], [0], [0], [1], [0, 0, 1, 1], [], []>} : vector<32x288xbf16>, vector<288x512xbf16>, vector<32x512xf32> -> vector<32x512xf32>
    %34 = vector.broadcast %21 : vector<32x1xf32> to vector<32x512xf32>
    %35 = arith.addf %33, %34 : vector<32x512xf32>
    %cst_12 = arith.constant 0.000000e+00 : f32
    %36 = vector.broadcast %cst_12 : f32 to vector<32x512xf32>
    %37 = arith.maximumf %35, %36 : vector<32x512xf32>
    %c0_13 = arith.constant 0 : index
    %c0_14 = arith.constant 0 : index
    %c0_15 = arith.constant 0 : index
    %38 = vector.load %arg6[%c0_13, %c0_14, %c0_15] : memref<1x32x512xf32, #tpu.memory_space<vmem>>, vector<1x32x512xf32>
    %39 = vector.shape_cast %38 : vector<1x32x512xf32> to vector<32x512xf32>
    %40 = vector.shape_cast %37 : vector<32x512xf32> to vector<1x32x512xf32>
    tpu.vector_store %arg6[%c0_13, %c0_14, %c0_15], %40 {strides = array<i32>} : memref<1x32x512xf32, #tpu.memory_space<vmem>>, vector<1x32x512xf32>,
    return
  }
  func.func @transform_0(%arg0: i32) -> (i32, i32, i32) {
    %c0_i32 = arith.constant 0 : i32
    %c0_i32_0 = arith.constant 0 : i32
    %c0_i32_1 = arith.constant 0 : i32
    return %arg0, %c0_i32, %c0_i32_0 : i32, i32, i32
  }
  func.func @transform_1(%arg0: i32) -> (i32, i32) {
    %c0_i32 = arith.constant 0 : i32
    %c0_i32_0 = arith.constant 0 : i32
    %c0_i32_1 = arith.constant 0 : i32
    return %c0_i32, %c0_i32_0 : i32, i32
  }
  func.func @transform_2(%arg0: i32) -> (i32, i32) {
    %c0_i32 = arith.constant 0 : i32
    %c0_i32_0 = arith.constant 0 : i32
    %c0_i32_1 = arith.constant 0 : i32
    return %c0_i32, %c0_i32_0 : i32, i32
  }
  func.func @transform_3(%arg0: i32) -> (i32, i32) {
    %c0_i32 = arith.constant 0 : i32
    %c0_i32_0 = arith.constant 0 : i32
    %c0_i32_1 = arith.constant 0 : i32
    return %c0_i32, %c0_i32_0 : i32, i32
  }
  func.func @transform_4(%arg0: i32) -> (i32, i32) {
    %c0_i32 = arith.constant 0 : i32
    %c0_i32_0 = arith.constant 0 : i32
    %c0_i32_1 = arith.constant 0 : i32
    return %c0_i32, %c0_i32_0 : i32, i32
  }
  func.func @transform_5(%arg0: i32) -> (i32, i32, i32) {
    %c0_i32 = arith.constant 0 : i32
    %c0_i32_0 = arith.constant 0 : i32
    %c0_i32_1 = arith.constant 0 : i32
    return %arg0, %c0_i32, %c0_i32_0 : i32, i32, i32
  }
}

module attributes {stable_mosaic.version = 11 : i64} {
  func.func @_stage_kernel(%arg0: i32, %arg1: memref<1x32x384xf32, #tpu.memory_space<vmem>>, %arg2: memref<64x288xbf16, #tpu.memory_space<vmem>>, %arg3: memref<64x1xf32, #tpu.memory_space<vmem>>, %arg4: memref<64x576xbf16, #tpu.memory_space<vmem>>, %arg5: memref<64x1xf32, #tpu.memory_space<vmem>>, %arg6: memref<128x64xbf16, #tpu.memory_space<vmem>>, %arg7: memref<128x1xf32, #tpu.memory_space<vmem>>, %arg8: memref<1x64x128xf32, #tpu.memory_space<vmem>>, %arg9: memref<1x128x128xf32, #tpu.memory_space<vmem>>) attributes {dimension_semantics = [#tpu.dimension_semantics<parallel>], iteration_bounds = array<i64: 2>, scalar_prefetch = 0 : i64, scratch_operands = 0 : i64, tpu.core_type = #tpu.core_type<tc>, window_params = [{transform_indices = @transform_0, window_bounds = array<i64: 1, 32, 384>}, {pipeline_mode = #tpu.pipeline_mode<synchronous>, transform_indices = @transform_1, window_bounds = array<i64: 64, 288>}, {pipeline_mode = #tpu.pipeline_mode<synchronous>, transform_indices = @transform_2, window_bounds = array<i64: 64, 1>}, {pipeline_mode = #tpu.pipeline_mode<synchronous>, transform_indices = @transform_3, window_bounds = array<i64: 64, 576>}, {pipeline_mode = #tpu.pipeline_mode<synchronous>, transform_indices = @transform_4, window_bounds = array<i64: 64, 1>}, {pipeline_mode = #tpu.pipeline_mode<synchronous>, transform_indices = @transform_5, window_bounds = array<i64: 128, 64>}, {pipeline_mode = #tpu.pipeline_mode<synchronous>, transform_indices = @transform_6, window_bounds = array<i64: 128, 1>}, {transform_indices = @transform_7, window_bounds = array<i64: 1, 64, 128>}, {transform_indices = @transform_8, window_bounds = array<i64: 1, 128, 128>}]} {
    %c0 = arith.constant 0 : index
    %c0_0 = arith.constant 0 : index
    %c0_1 = arith.constant 0 : index
    %0 = vector.load %arg1[%c0, %c0_0, %c0_1] : memref<1x32x384xf32, #tpu.memory_space<vmem>>, vector<1x32x384xf32>
    %1 = vector.shape_cast %0 : vector<1x32x384xf32> to vector<32x384xf32>
    %c0_2 = arith.constant 0 : index
    %c0_3 = arith.constant 0 : index
    %2 = vector.load %arg2[%c0_2, %c0_3] : memref<64x288xbf16, #tpu.memory_space<vmem>>, vector<64x288xbf16>
    %c0_4 = arith.constant 0 : index
    %c0_5 = arith.constant 0 : index
    %3 = vector.load %arg3[%c0_4, %c0_5] : memref<64x1xf32, #tpu.memory_space<vmem>>, vector<64x1xf32>
    %4 = vector.extract_strided_slice %1 {offsets = [0, 0], sizes = [32, 256], strides = [1, 1]} : vector<32x384xf32> to vector<32x256xf32>
    %5 = vector.extract_strided_slice %1 {offsets = [0, 1], sizes = [32, 256], strides = [1, 1]} : vector<32x384xf32> to vector<32x256xf32>
    %6 = vector.extract_strided_slice %1 {offsets = [0, 2], sizes = [32, 256], strides = [1, 1]} : vector<32x384xf32> to vector<32x256xf32>
    %7 = vector.extract_strided_slice %1 {offsets = [0, 9], sizes = [32, 256], strides = [1, 1]} : vector<32x384xf32> to vector<32x256xf32>
    %8 = vector.extract_strided_slice %1 {offsets = [0, 10], sizes = [32, 256], strides = [1, 1]} : vector<32x384xf32> to vector<32x256xf32>
    %9 = vector.extract_strided_slice %1 {offsets = [0, 11], sizes = [32, 256], strides = [1, 1]} : vector<32x384xf32> to vector<32x256xf32>
    %10 = vector.extract_strided_slice %1 {offsets = [0, 18], sizes = [32, 256], strides = [1, 1]} : vector<32x384xf32> to vector<32x256xf32>
    %11 = vector.extract_strided_slice %1 {offsets = [0, 19], sizes = [32, 256], strides = [1, 1]} : vector<32x384xf32> to vector<32x256xf32>
    %12 = vector.extract_strided_slice %1 {offsets = [0, 20], sizes = [32, 256], strides = [1, 1]} : vector<32x384xf32> to vector<32x256xf32>
    %13 = tpu.concatenate %4, %5, %6, %7, %8, %9, %10, %11, %12 in 0 : vector<32x256xf32>, vector<32x256xf32>, vector<32x256xf32>, vector<32x256xf32>, vector<32x256xf32>, vector<32x256xf32>, vector<32x256xf32>, vector<32x256xf32>, vector<32x256xf32> -> vector<288x256xf32>
    %14 = arith.truncf %13 : vector<288x256xf32> to vector<288x256xbf16>
    %cst = arith.constant dense<0.000000e+00> : vector<64x256xf32>
    %15 = tpu.matmul %2, %14, %cst {dimension_numbers = #tpu.dot_dimension_numbers<[1], [0], [0], [1], [0, 0, 1, 1], [], []>} : vector<64x288xbf16>, vector<288x256xbf16>, vector<64x256xf32> -> vector<64x256xf32>
    %16 = vector.broadcast %3 : vector<64x1xf32> to vector<64x256xf32>
    %17 = arith.addf %15, %16 : vector<64x256xf32>
    %cst_6 = arith.constant 0.000000e+00 : f32
    %18 = vector.broadcast %cst_6 : f32 to vector<64x256xf32>
    %19 = arith.maximumf %17, %18 : vector<64x256xf32>
    %c0_7 = arith.constant 0 : index
    %c0_8 = arith.constant 0 : index
    %20 = vector.load %arg4[%c0_7, %c0_8] : memref<64x576xbf16, #tpu.memory_space<vmem>>, vector<64x576xbf16>
    %c0_9 = arith.constant 0 : index
    %c0_10 = arith.constant 0 : index
    %21 = vector.load %arg5[%c0_9, %c0_10] : memref<64x1xf32, #tpu.memory_space<vmem>>, vector<64x1xf32>
    %22 = vector.extract_strided_slice %19 {offsets = [0, 0], sizes = [64, 128], strides = [1, 1]} : vector<64x256xf32> to vector<64x128xf32>
    %23 = vector.extract_strided_slice %19 {offsets = [0, 1], sizes = [64, 128], strides = [1, 1]} : vector<64x256xf32> to vector<64x128xf32>
    %24 = vector.extract_strided_slice %19 {offsets = [0, 2], sizes = [64, 128], strides = [1, 1]} : vector<64x256xf32> to vector<64x128xf32>
    %25 = vector.extract_strided_slice %19 {offsets = [0, 9], sizes = [64, 128], strides = [1, 1]} : vector<64x256xf32> to vector<64x128xf32>
    %26 = vector.extract_strided_slice %19 {offsets = [0, 10], sizes = [64, 128], strides = [1, 1]} : vector<64x256xf32> to vector<64x128xf32>
    %27 = vector.extract_strided_slice %19 {offsets = [0, 11], sizes = [64, 128], strides = [1, 1]} : vector<64x256xf32> to vector<64x128xf32>
    %28 = vector.extract_strided_slice %19 {offsets = [0, 18], sizes = [64, 128], strides = [1, 1]} : vector<64x256xf32> to vector<64x128xf32>
    %29 = vector.extract_strided_slice %19 {offsets = [0, 19], sizes = [64, 128], strides = [1, 1]} : vector<64x256xf32> to vector<64x128xf32>
    %30 = vector.extract_strided_slice %19 {offsets = [0, 20], sizes = [64, 128], strides = [1, 1]} : vector<64x256xf32> to vector<64x128xf32>
    %31 = tpu.concatenate %22, %23, %24, %25, %26, %27, %28, %29, %30 in 0 : vector<64x128xf32>, vector<64x128xf32>, vector<64x128xf32>, vector<64x128xf32>, vector<64x128xf32>, vector<64x128xf32>, vector<64x128xf32>, vector<64x128xf32>, vector<64x128xf32> -> vector<576x128xf32>
    %32 = arith.truncf %31 : vector<576x128xf32> to vector<576x128xbf16>
    %cst_11 = arith.constant dense<0.000000e+00> : vector<64x128xf32>
    %33 = tpu.matmul %20, %32, %cst_11 {dimension_numbers = #tpu.dot_dimension_numbers<[1], [0], [0], [1], [0, 0, 1, 1], [], []>} : vector<64x576xbf16>, vector<576x128xbf16>, vector<64x128xf32> -> vector<64x128xf32>
    %34 = vector.broadcast %21 : vector<64x1xf32> to vector<64x128xf32>
    %35 = arith.addf %33, %34 : vector<64x128xf32>
    %cst_12 = arith.constant 0.000000e+00 : f32
    %36 = vector.broadcast %cst_12 : f32 to vector<64x128xf32>
    %37 = arith.maximumf %35, %36 : vector<64x128xf32>
    %c0_13 = arith.constant 0 : index
    %c0_14 = arith.constant 0 : index
    %c0_15 = arith.constant 0 : index
    %38 = vector.load %arg8[%c0_13, %c0_14, %c0_15] : memref<1x64x128xf32, #tpu.memory_space<vmem>>, vector<1x64x128xf32>
    %39 = vector.shape_cast %38 : vector<1x64x128xf32> to vector<64x128xf32>
    %40 = vector.shape_cast %37 : vector<64x128xf32> to vector<1x64x128xf32>
    tpu.vector_store %arg8[%c0_13, %c0_14, %c0_15], %40 {strides = array<i32>} : memref<1x64x128xf32, #tpu.memory_space<vmem>>, vector<1x64x128xf32>,
    %c0_16 = arith.constant 0 : index
    %c0_17 = arith.constant 0 : index
    %41 = vector.load %arg6[%c0_16, %c0_17] : memref<128x64xbf16, #tpu.memory_space<vmem>>, vector<128x64xbf16>
    %42 = arith.truncf %37 : vector<64x128xf32> to vector<64x128xbf16>
    %cst_18 = arith.constant dense<0.000000e+00> : vector<128x128xf32>
    %43 = tpu.matmul %41, %42, %cst_18 {dimension_numbers = #tpu.dot_dimension_numbers<[1], [0], [0], [1], [0, 0, 1, 1], [], []>} : vector<128x64xbf16>, vector<64x128xbf16>, vector<128x128xf32> -> vector<128x128xf32>
    %c0_19 = arith.constant 0 : index
    %c0_20 = arith.constant 0 : index
    %44 = vector.load %arg7[%c0_19, %c0_20] : memref<128x1xf32, #tpu.memory_space<vmem>>, vector<128x1xf32>
    %45 = vector.broadcast %44 : vector<128x1xf32> to vector<128x128xf32>
    %46 = arith.addf %43, %45 : vector<128x128xf32>
    %c0_21 = arith.constant 0 : index
    %c0_22 = arith.constant 0 : index
    %c0_23 = arith.constant 0 : index
    %47 = vector.load %arg9[%c0_21, %c0_22, %c0_23] : memref<1x128x128xf32, #tpu.memory_space<vmem>>, vector<1x128x128xf32>
    %48 = vector.shape_cast %47 : vector<1x128x128xf32> to vector<128x128xf32>
    %49 = vector.shape_cast %46 : vector<128x128xf32> to vector<1x128x128xf32>
    tpu.vector_store %arg9[%c0_21, %c0_22, %c0_23], %49 {strides = array<i32>} : memref<1x128x128xf32, #tpu.memory_space<vmem>>, vector<1x128x128xf32>,
    return
  }
  func.func @transform_0(%arg0: i32) -> (i32, i32, i32) {
    %c0_i32 = arith.constant 0 : i32
    %c0_i32_0 = arith.constant 0 : i32
    %c0_i32_1 = arith.constant 0 : i32
    return %arg0, %c0_i32, %c0_i32_0 : i32, i32, i32
  }
  func.func @transform_1(%arg0: i32) -> (i32, i32) {
    %c0_i32 = arith.constant 0 : i32
    %c0_i32_0 = arith.constant 0 : i32
    %c0_i32_1 = arith.constant 0 : i32
    return %c0_i32, %c0_i32_0 : i32, i32
  }
  func.func @transform_2(%arg0: i32) -> (i32, i32) {
    %c0_i32 = arith.constant 0 : i32
    %c0_i32_0 = arith.constant 0 : i32
    %c0_i32_1 = arith.constant 0 : i32
    return %c0_i32, %c0_i32_0 : i32, i32
  }
  func.func @transform_3(%arg0: i32) -> (i32, i32) {
    %c0_i32 = arith.constant 0 : i32
    %c0_i32_0 = arith.constant 0 : i32
    %c0_i32_1 = arith.constant 0 : i32
    return %c0_i32, %c0_i32_0 : i32, i32
  }
  func.func @transform_4(%arg0: i32) -> (i32, i32) {
    %c0_i32 = arith.constant 0 : i32
    %c0_i32_0 = arith.constant 0 : i32
    %c0_i32_1 = arith.constant 0 : i32
    return %c0_i32, %c0_i32_0 : i32, i32
  }
  func.func @transform_5(%arg0: i32) -> (i32, i32) {
    %c0_i32 = arith.constant 0 : i32
    %c0_i32_0 = arith.constant 0 : i32
    %c0_i32_1 = arith.constant 0 : i32
    return %c0_i32, %c0_i32_0 : i32, i32
  }
  func.func @transform_6(%arg0: i32) -> (i32, i32) {
    %c0_i32 = arith.constant 0 : i32
    %c0_i32_0 = arith.constant 0 : i32
    %c0_i32_1 = arith.constant 0 : i32
    return %c0_i32, %c0_i32_0 : i32, i32
  }
  func.func @transform_7(%arg0: i32) -> (i32, i32, i32) {
    %c0_i32 = arith.constant 0 : i32
    %c0_i32_0 = arith.constant 0 : i32
    %c0_i32_1 = arith.constant 0 : i32
    return %arg0, %c0_i32, %c0_i32_0 : i32, i32, i32
  }
  func.func @transform_8(%arg0: i32) -> (i32, i32, i32) {
    %c0_i32 = arith.constant 0 : i32
    %c0_i32_0 = arith.constant 0 : i32
    %c0_i32_1 = arith.constant 0 : i32
    return %arg0, %c0_i32, %c0_i32_0 : i32, i32, i32
  }
}

module attributes {stable_mosaic.version = 11 : i64} {
  func.func @_stage_kernel(%arg0: i32, %arg1: memref<1x64x384xf32, #tpu.memory_space<vmem>>, %arg2: memref<32x576xbf16, #tpu.memory_space<vmem>>, %arg3: memref<32x1xf32, #tpu.memory_space<vmem>>, %arg4: memref<32x288xbf16, #tpu.memory_space<vmem>>, %arg5: memref<32x1xf32, #tpu.memory_space<vmem>>, %arg6: memref<64x32xbf16, #tpu.memory_space<vmem>>, %arg7: memref<64x1xf32, #tpu.memory_space<vmem>>, %arg8: memref<1x32x128xf32, #tpu.memory_space<vmem>>, %arg9: memref<1x64x128xf32, #tpu.memory_space<vmem>>) attributes {dimension_semantics = [#tpu.dimension_semantics<parallel>], iteration_bounds = array<i64: 2>, scalar_prefetch = 0 : i64, scratch_operands = 0 : i64, tpu.core_type = #tpu.core_type<tc>, window_params = [{transform_indices = @transform_0, window_bounds = array<i64: 1, 64, 384>}, {pipeline_mode = #tpu.pipeline_mode<synchronous>, transform_indices = @transform_1, window_bounds = array<i64: 32, 576>}, {pipeline_mode = #tpu.pipeline_mode<synchronous>, transform_indices = @transform_2, window_bounds = array<i64: 32, 1>}, {pipeline_mode = #tpu.pipeline_mode<synchronous>, transform_indices = @transform_3, window_bounds = array<i64: 32, 288>}, {pipeline_mode = #tpu.pipeline_mode<synchronous>, transform_indices = @transform_4, window_bounds = array<i64: 32, 1>}, {pipeline_mode = #tpu.pipeline_mode<synchronous>, transform_indices = @transform_5, window_bounds = array<i64: 64, 32>}, {pipeline_mode = #tpu.pipeline_mode<synchronous>, transform_indices = @transform_6, window_bounds = array<i64: 64, 1>}, {transform_indices = @transform_7, window_bounds = array<i64: 1, 32, 128>}, {transform_indices = @transform_8, window_bounds = array<i64: 1, 64, 128>}]} {
    %c0 = arith.constant 0 : index
    %c0_0 = arith.constant 0 : index
    %c0_1 = arith.constant 0 : index
    %0 = vector.load %arg1[%c0, %c0_0, %c0_1] : memref<1x64x384xf32, #tpu.memory_space<vmem>>, vector<1x64x384xf32>
    %1 = vector.shape_cast %0 : vector<1x64x384xf32> to vector<64x384xf32>
    %c0_2 = arith.constant 0 : index
    %c0_3 = arith.constant 0 : index
    %2 = vector.load %arg2[%c0_2, %c0_3] : memref<32x576xbf16, #tpu.memory_space<vmem>>, vector<32x576xbf16>
    %c0_4 = arith.constant 0 : index
    %c0_5 = arith.constant 0 : index
    %3 = vector.load %arg3[%c0_4, %c0_5] : memref<32x1xf32, #tpu.memory_space<vmem>>, vector<32x1xf32>
    %4 = vector.extract_strided_slice %1 {offsets = [0, 0], sizes = [64, 256], strides = [1, 1]} : vector<64x384xf32> to vector<64x256xf32>
    %5 = vector.extract_strided_slice %1 {offsets = [0, 1], sizes = [64, 256], strides = [1, 1]} : vector<64x384xf32> to vector<64x256xf32>
    %6 = vector.extract_strided_slice %1 {offsets = [0, 2], sizes = [64, 256], strides = [1, 1]} : vector<64x384xf32> to vector<64x256xf32>
    %7 = vector.extract_strided_slice %1 {offsets = [0, 10], sizes = [64, 256], strides = [1, 1]} : vector<64x384xf32> to vector<64x256xf32>
    %8 = vector.extract_strided_slice %1 {offsets = [0, 11], sizes = [64, 256], strides = [1, 1]} : vector<64x384xf32> to vector<64x256xf32>
    %9 = vector.extract_strided_slice %1 {offsets = [0, 12], sizes = [64, 256], strides = [1, 1]} : vector<64x384xf32> to vector<64x256xf32>
    %10 = vector.extract_strided_slice %1 {offsets = [0, 20], sizes = [64, 256], strides = [1, 1]} : vector<64x384xf32> to vector<64x256xf32>
    %11 = vector.extract_strided_slice %1 {offsets = [0, 21], sizes = [64, 256], strides = [1, 1]} : vector<64x384xf32> to vector<64x256xf32>
    %12 = vector.extract_strided_slice %1 {offsets = [0, 22], sizes = [64, 256], strides = [1, 1]} : vector<64x384xf32> to vector<64x256xf32>
    %13 = tpu.concatenate %4, %5, %6, %7, %8, %9, %10, %11, %12 in 0 : vector<64x256xf32>, vector<64x256xf32>, vector<64x256xf32>, vector<64x256xf32>, vector<64x256xf32>, vector<64x256xf32>, vector<64x256xf32>, vector<64x256xf32>, vector<64x256xf32> -> vector<576x256xf32>
    %14 = arith.truncf %13 : vector<576x256xf32> to vector<576x256xbf16>
    %cst = arith.constant dense<0.000000e+00> : vector<32x256xf32>
    %15 = tpu.matmul %2, %14, %cst {dimension_numbers = #tpu.dot_dimension_numbers<[1], [0], [0], [1], [0, 0, 1, 1], [], []>} : vector<32x576xbf16>, vector<576x256xbf16>, vector<32x256xf32> -> vector<32x256xf32>
    %16 = vector.broadcast %3 : vector<32x1xf32> to vector<32x256xf32>
    %17 = arith.addf %15, %16 : vector<32x256xf32>
    %cst_6 = arith.constant 0.000000e+00 : f32
    %18 = vector.broadcast %cst_6 : f32 to vector<32x256xf32>
    %19 = arith.maximumf %17, %18 : vector<32x256xf32>
    %c0_7 = arith.constant 0 : index
    %c0_8 = arith.constant 0 : index
    %20 = vector.load %arg4[%c0_7, %c0_8] : memref<32x288xbf16, #tpu.memory_space<vmem>>, vector<32x288xbf16>
    %c0_9 = arith.constant 0 : index
    %c0_10 = arith.constant 0 : index
    %21 = vector.load %arg5[%c0_9, %c0_10] : memref<32x1xf32, #tpu.memory_space<vmem>>, vector<32x1xf32>
    %22 = vector.extract_strided_slice %19 {offsets = [0, 0], sizes = [32, 128], strides = [1, 1]} : vector<32x256xf32> to vector<32x128xf32>
    %23 = vector.extract_strided_slice %19 {offsets = [0, 1], sizes = [32, 128], strides = [1, 1]} : vector<32x256xf32> to vector<32x128xf32>
    %24 = vector.extract_strided_slice %19 {offsets = [0, 2], sizes = [32, 128], strides = [1, 1]} : vector<32x256xf32> to vector<32x128xf32>
    %25 = vector.extract_strided_slice %19 {offsets = [0, 10], sizes = [32, 128], strides = [1, 1]} : vector<32x256xf32> to vector<32x128xf32>
    %26 = vector.extract_strided_slice %19 {offsets = [0, 11], sizes = [32, 128], strides = [1, 1]} : vector<32x256xf32> to vector<32x128xf32>
    %27 = vector.extract_strided_slice %19 {offsets = [0, 12], sizes = [32, 128], strides = [1, 1]} : vector<32x256xf32> to vector<32x128xf32>
    %28 = vector.extract_strided_slice %19 {offsets = [0, 20], sizes = [32, 128], strides = [1, 1]} : vector<32x256xf32> to vector<32x128xf32>
    %29 = vector.extract_strided_slice %19 {offsets = [0, 21], sizes = [32, 128], strides = [1, 1]} : vector<32x256xf32> to vector<32x128xf32>
    %30 = vector.extract_strided_slice %19 {offsets = [0, 22], sizes = [32, 128], strides = [1, 1]} : vector<32x256xf32> to vector<32x128xf32>
    %31 = tpu.concatenate %22, %23, %24, %25, %26, %27, %28, %29, %30 in 0 : vector<32x128xf32>, vector<32x128xf32>, vector<32x128xf32>, vector<32x128xf32>, vector<32x128xf32>, vector<32x128xf32>, vector<32x128xf32>, vector<32x128xf32>, vector<32x128xf32> -> vector<288x128xf32>
    %32 = arith.truncf %31 : vector<288x128xf32> to vector<288x128xbf16>
    %cst_11 = arith.constant dense<0.000000e+00> : vector<32x128xf32>
    %33 = tpu.matmul %20, %32, %cst_11 {dimension_numbers = #tpu.dot_dimension_numbers<[1], [0], [0], [1], [0, 0, 1, 1], [], []>} : vector<32x288xbf16>, vector<288x128xbf16>, vector<32x128xf32> -> vector<32x128xf32>
    %34 = vector.broadcast %21 : vector<32x1xf32> to vector<32x128xf32>
    %35 = arith.addf %33, %34 : vector<32x128xf32>
    %cst_12 = arith.constant 0.000000e+00 : f32
    %36 = vector.broadcast %cst_12 : f32 to vector<32x128xf32>
    %37 = arith.maximumf %35, %36 : vector<32x128xf32>
    %c0_13 = arith.constant 0 : index
    %c0_14 = arith.constant 0 : index
    %c0_15 = arith.constant 0 : index
    %38 = vector.load %arg8[%c0_13, %c0_14, %c0_15] : memref<1x32x128xf32, #tpu.memory_space<vmem>>, vector<1x32x128xf32>
    %39 = vector.shape_cast %38 : vector<1x32x128xf32> to vector<32x128xf32>
    %40 = vector.shape_cast %37 : vector<32x128xf32> to vector<1x32x128xf32>
    tpu.vector_store %arg8[%c0_13, %c0_14, %c0_15], %40 {strides = array<i32>} : memref<1x32x128xf32, #tpu.memory_space<vmem>>, vector<1x32x128xf32>,
    %c0_16 = arith.constant 0 : index
    %c0_17 = arith.constant 0 : index
    %41 = vector.load %arg6[%c0_16, %c0_17] : memref<64x32xbf16, #tpu.memory_space<vmem>>, vector<64x32xbf16>
    %42 = arith.truncf %37 : vector<32x128xf32> to vector<32x128xbf16>
    %cst_18 = arith.constant dense<0.000000e+00> : vector<64x128xf32>
    %43 = tpu.matmul %41, %42, %cst_18 {dimension_numbers = #tpu.dot_dimension_numbers<[1], [0], [0], [1], [0, 0, 1, 1], [], []>} : vector<64x32xbf16>, vector<32x128xbf16>, vector<64x128xf32> -> vector<64x128xf32>
    %c0_19 = arith.constant 0 : index
    %c0_20 = arith.constant 0 : index
    %44 = vector.load %arg7[%c0_19, %c0_20] : memref<64x1xf32, #tpu.memory_space<vmem>>, vector<64x1xf32>
    %45 = vector.broadcast %44 : vector<64x1xf32> to vector<64x128xf32>
    %46 = arith.addf %43, %45 : vector<64x128xf32>
    %c0_21 = arith.constant 0 : index
    %c0_22 = arith.constant 0 : index
    %c0_23 = arith.constant 0 : index
    %47 = vector.load %arg9[%c0_21, %c0_22, %c0_23] : memref<1x64x128xf32, #tpu.memory_space<vmem>>, vector<1x64x128xf32>
    %48 = vector.shape_cast %47 : vector<1x64x128xf32> to vector<64x128xf32>
    %49 = vector.shape_cast %46 : vector<64x128xf32> to vector<1x64x128xf32>
    tpu.vector_store %arg9[%c0_21, %c0_22, %c0_23], %49 {strides = array<i32>} : memref<1x64x128xf32, #tpu.memory_space<vmem>>, vector<1x64x128xf32>,
    return
  }
  func.func @transform_0(%arg0: i32) -> (i32, i32, i32) {
    %c0_i32 = arith.constant 0 : i32
    %c0_i32_0 = arith.constant 0 : i32
    %c0_i32_1 = arith.constant 0 : i32
    return %arg0, %c0_i32, %c0_i32_0 : i32, i32, i32
  }
  func.func @transform_1(%arg0: i32) -> (i32, i32) {
    %c0_i32 = arith.constant 0 : i32
    %c0_i32_0 = arith.constant 0 : i32
    %c0_i32_1 = arith.constant 0 : i32
    return %c0_i32, %c0_i32_0 : i32, i32
  }
  func.func @transform_2(%arg0: i32) -> (i32, i32) {
    %c0_i32 = arith.constant 0 : i32
    %c0_i32_0 = arith.constant 0 : i32
    %c0_i32_1 = arith.constant 0 : i32
    return %c0_i32, %c0_i32_0 : i32, i32
  }
  func.func @transform_3(%arg0: i32) -> (i32, i32) {
    %c0_i32 = arith.constant 0 : i32
    %c0_i32_0 = arith.constant 0 : i32
    %c0_i32_1 = arith.constant 0 : i32
    return %c0_i32, %c0_i32_0 : i32, i32
  }
  func.func @transform_4(%arg0: i32) -> (i32, i32) {
    %c0_i32 = arith.constant 0 : i32
    %c0_i32_0 = arith.constant 0 : i32
    %c0_i32_1 = arith.constant 0 : i32
    return %c0_i32, %c0_i32_0 : i32, i32
  }
  func.func @transform_5(%arg0: i32) -> (i32, i32) {
    %c0_i32 = arith.constant 0 : i32
    %c0_i32_0 = arith.constant 0 : i32
    %c0_i32_1 = arith.constant 0 : i32
    return %c0_i32, %c0_i32_0 : i32, i32
  }
  func.func @transform_6(%arg0: i32) -> (i32, i32) {
    %c0_i32 = arith.constant 0 : i32
    %c0_i32_0 = arith.constant 0 : i32
    %c0_i32_1 = arith.constant 0 : i32
    return %c0_i32, %c0_i32_0 : i32, i32
  }
  func.func @transform_7(%arg0: i32) -> (i32, i32, i32) {
    %c0_i32 = arith.constant 0 : i32
    %c0_i32_0 = arith.constant 0 : i32
    %c0_i32_1 = arith.constant 0 : i32
    return %arg0, %c0_i32, %c0_i32_0 : i32, i32, i32
  }
  func.func @transform_8(%arg0: i32) -> (i32, i32, i32) {
    %c0_i32 = arith.constant 0 : i32
    %c0_i32_0 = arith.constant 0 : i32
    %c0_i32_1 = arith.constant 0 : i32
    return %arg0, %c0_i32, %c0_i32_0 : i32, i32, i32
  }
}

module attributes {stable_mosaic.version = 11 : i64} {
  func.func @_stage_kernel(%arg0: i32, %arg1: memref<1x32x512xf32, #tpu.memory_space<vmem>>, %arg2: memref<16x288xbf16, #tpu.memory_space<vmem>>, %arg3: memref<16x1xf32, #tpu.memory_space<vmem>>, %arg4: memref<16x144xbf16, #tpu.memory_space<vmem>>, %arg5: memref<16x1xf32, #tpu.memory_space<vmem>>, %arg6: memref<1x16xbf16, #tpu.memory_space<vmem>>, %arg7: memref<1x1xf32, #tpu.memory_space<vmem>>, %arg8: memref<1x16x256xf32, #tpu.memory_space<vmem>>, %arg9: memref<1x1x256xf32, #tpu.memory_space<vmem>>) attributes {dimension_semantics = [#tpu.dimension_semantics<parallel>], iteration_bounds = array<i64: 2>, scalar_prefetch = 0 : i64, scratch_operands = 0 : i64, tpu.core_type = #tpu.core_type<tc>, window_params = [{transform_indices = @transform_0, window_bounds = array<i64: 1, 32, 512>}, {pipeline_mode = #tpu.pipeline_mode<synchronous>, transform_indices = @transform_1, window_bounds = array<i64: 16, 288>}, {pipeline_mode = #tpu.pipeline_mode<synchronous>, transform_indices = @transform_2, window_bounds = array<i64: 16, 1>}, {pipeline_mode = #tpu.pipeline_mode<synchronous>, transform_indices = @transform_3, window_bounds = array<i64: 16, 144>}, {pipeline_mode = #tpu.pipeline_mode<synchronous>, transform_indices = @transform_4, window_bounds = array<i64: 16, 1>}, {pipeline_mode = #tpu.pipeline_mode<synchronous>, transform_indices = @transform_5, window_bounds = array<i64: 1, 16>}, {pipeline_mode = #tpu.pipeline_mode<synchronous>, transform_indices = @transform_6, window_bounds = array<i64: 1, 1>}, {transform_indices = @transform_7, window_bounds = array<i64: 1, 16, 256>}, {transform_indices = @transform_8, window_bounds = array<i64: 1, 1, 256>}]} {
    %c0 = arith.constant 0 : index
    %c0_0 = arith.constant 0 : index
    %c0_1 = arith.constant 0 : index
    %0 = vector.load %arg1[%c0, %c0_0, %c0_1] : memref<1x32x512xf32, #tpu.memory_space<vmem>>, vector<1x32x512xf32>
    %1 = vector.shape_cast %0 : vector<1x32x512xf32> to vector<32x512xf32>
    %c0_2 = arith.constant 0 : index
    %c0_3 = arith.constant 0 : index
    %2 = vector.load %arg2[%c0_2, %c0_3] : memref<16x288xbf16, #tpu.memory_space<vmem>>, vector<16x288xbf16>
    %c0_4 = arith.constant 0 : index
    %c0_5 = arith.constant 0 : index
    %3 = vector.load %arg3[%c0_4, %c0_5] : memref<16x1xf32, #tpu.memory_space<vmem>>, vector<16x1xf32>
    %4 = vector.extract_strided_slice %1 {offsets = [0, 0], sizes = [32, 384], strides = [1, 1]} : vector<32x512xf32> to vector<32x384xf32>
    %5 = vector.extract_strided_slice %1 {offsets = [0, 1], sizes = [32, 384], strides = [1, 1]} : vector<32x512xf32> to vector<32x384xf32>
    %6 = vector.extract_strided_slice %1 {offsets = [0, 2], sizes = [32, 384], strides = [1, 1]} : vector<32x512xf32> to vector<32x384xf32>
    %7 = vector.extract_strided_slice %1 {offsets = [0, 12], sizes = [32, 384], strides = [1, 1]} : vector<32x512xf32> to vector<32x384xf32>
    %8 = vector.extract_strided_slice %1 {offsets = [0, 13], sizes = [32, 384], strides = [1, 1]} : vector<32x512xf32> to vector<32x384xf32>
    %9 = vector.extract_strided_slice %1 {offsets = [0, 14], sizes = [32, 384], strides = [1, 1]} : vector<32x512xf32> to vector<32x384xf32>
    %10 = vector.extract_strided_slice %1 {offsets = [0, 24], sizes = [32, 384], strides = [1, 1]} : vector<32x512xf32> to vector<32x384xf32>
    %11 = vector.extract_strided_slice %1 {offsets = [0, 25], sizes = [32, 384], strides = [1, 1]} : vector<32x512xf32> to vector<32x384xf32>
    %12 = vector.extract_strided_slice %1 {offsets = [0, 26], sizes = [32, 384], strides = [1, 1]} : vector<32x512xf32> to vector<32x384xf32>
    %13 = tpu.concatenate %4, %5, %6, %7, %8, %9, %10, %11, %12 in 0 : vector<32x384xf32>, vector<32x384xf32>, vector<32x384xf32>, vector<32x384xf32>, vector<32x384xf32>, vector<32x384xf32>, vector<32x384xf32>, vector<32x384xf32>, vector<32x384xf32> -> vector<288x384xf32>
    %14 = arith.truncf %13 : vector<288x384xf32> to vector<288x384xbf16>
    %cst = arith.constant dense<0.000000e+00> : vector<16x384xf32>
    %15 = tpu.matmul %2, %14, %cst {dimension_numbers = #tpu.dot_dimension_numbers<[1], [0], [0], [1], [0, 0, 1, 1], [], []>} : vector<16x288xbf16>, vector<288x384xbf16>, vector<16x384xf32> -> vector<16x384xf32>
    %16 = vector.broadcast %3 : vector<16x1xf32> to vector<16x384xf32>
    %17 = arith.addf %15, %16 : vector<16x384xf32>
    %cst_6 = arith.constant 0.000000e+00 : f32
    %18 = vector.broadcast %cst_6 : f32 to vector<16x384xf32>
    %19 = arith.maximumf %17, %18 : vector<16x384xf32>
    %c0_7 = arith.constant 0 : index
    %c0_8 = arith.constant 0 : index
    %20 = vector.load %arg4[%c0_7, %c0_8] : memref<16x144xbf16, #tpu.memory_space<vmem>>, vector<16x144xbf16>
    %c0_9 = arith.constant 0 : index
    %c0_10 = arith.constant 0 : index
    %21 = vector.load %arg5[%c0_9, %c0_10] : memref<16x1xf32, #tpu.memory_space<vmem>>, vector<16x1xf32>
    %22 = vector.extract_strided_slice %19 {offsets = [0, 0], sizes = [16, 256], strides = [1, 1]} : vector<16x384xf32> to vector<16x256xf32>
    %23 = vector.extract_strided_slice %19 {offsets = [0, 1], sizes = [16, 256], strides = [1, 1]} : vector<16x384xf32> to vector<16x256xf32>
    %24 = vector.extract_strided_slice %19 {offsets = [0, 2], sizes = [16, 256], strides = [1, 1]} : vector<16x384xf32> to vector<16x256xf32>
    %25 = vector.extract_strided_slice %19 {offsets = [0, 12], sizes = [16, 256], strides = [1, 1]} : vector<16x384xf32> to vector<16x256xf32>
    %26 = vector.extract_strided_slice %19 {offsets = [0, 13], sizes = [16, 256], strides = [1, 1]} : vector<16x384xf32> to vector<16x256xf32>
    %27 = vector.extract_strided_slice %19 {offsets = [0, 14], sizes = [16, 256], strides = [1, 1]} : vector<16x384xf32> to vector<16x256xf32>
    %28 = vector.extract_strided_slice %19 {offsets = [0, 24], sizes = [16, 256], strides = [1, 1]} : vector<16x384xf32> to vector<16x256xf32>
    %29 = vector.extract_strided_slice %19 {offsets = [0, 25], sizes = [16, 256], strides = [1, 1]} : vector<16x384xf32> to vector<16x256xf32>
    %30 = vector.extract_strided_slice %19 {offsets = [0, 26], sizes = [16, 256], strides = [1, 1]} : vector<16x384xf32> to vector<16x256xf32>
    %31 = tpu.concatenate %22, %23, %24, %25, %26, %27, %28, %29, %30 in 0 : vector<16x256xf32>, vector<16x256xf32>, vector<16x256xf32>, vector<16x256xf32>, vector<16x256xf32>, vector<16x256xf32>, vector<16x256xf32>, vector<16x256xf32>, vector<16x256xf32> -> vector<144x256xf32>
    %32 = arith.truncf %31 : vector<144x256xf32> to vector<144x256xbf16>
    %cst_11 = arith.constant dense<0.000000e+00> : vector<16x256xf32>
    %33 = tpu.matmul %20, %32, %cst_11 {dimension_numbers = #tpu.dot_dimension_numbers<[1], [0], [0], [1], [0, 0, 1, 1], [], []>} : vector<16x144xbf16>, vector<144x256xbf16>, vector<16x256xf32> -> vector<16x256xf32>
    %34 = vector.broadcast %21 : vector<16x1xf32> to vector<16x256xf32>
    %35 = arith.addf %33, %34 : vector<16x256xf32>
    %cst_12 = arith.constant 0.000000e+00 : f32
    %36 = vector.broadcast %cst_12 : f32 to vector<16x256xf32>
    %37 = arith.maximumf %35, %36 : vector<16x256xf32>
    %c0_13 = arith.constant 0 : index
    %c0_14 = arith.constant 0 : index
    %c0_15 = arith.constant 0 : index
    %38 = vector.load %arg8[%c0_13, %c0_14, %c0_15] : memref<1x16x256xf32, #tpu.memory_space<vmem>>, vector<1x16x256xf32>
    %39 = vector.shape_cast %38 : vector<1x16x256xf32> to vector<16x256xf32>
    %40 = vector.shape_cast %37 : vector<16x256xf32> to vector<1x16x256xf32>
    tpu.vector_store %arg8[%c0_13, %c0_14, %c0_15], %40 {strides = array<i32>} : memref<1x16x256xf32, #tpu.memory_space<vmem>>, vector<1x16x256xf32>,
    %c0_16 = arith.constant 0 : index
    %c0_17 = arith.constant 0 : index
    %41 = vector.load %arg6[%c0_16, %c0_17] : memref<1x16xbf16, #tpu.memory_space<vmem>>, vector<1x16xbf16>
    %42 = arith.truncf %37 : vector<16x256xf32> to vector<16x256xbf16>
    %cst_18 = arith.constant dense<0.000000e+00> : vector<1x256xf32>
    %43 = tpu.matmul %41, %42, %cst_18 {dimension_numbers = #tpu.dot_dimension_numbers<[1], [0], [0], [1], [0, 0, 1, 1], [], []>} : vector<1x16xbf16>, vector<16x256xbf16>, vector<1x256xf32> -> vector<1x256xf32>
    %c0_19 = arith.constant 0 : index
    %c0_20 = arith.constant 0 : index
    %44 = vector.load %arg7[%c0_19, %c0_20] : memref<1x1xf32, #tpu.memory_space<vmem>>, vector<1x1xf32>
    %45 = vector.broadcast %44 : vector<1x1xf32> to vector<1x256xf32>
    %46 = arith.addf %43, %45 : vector<1x256xf32>
    %c0_21 = arith.constant 0 : index
    %c0_22 = arith.constant 0 : index
    %c0_23 = arith.constant 0 : index
    %47 = vector.load %arg9[%c0_21, %c0_22, %c0_23] : memref<1x1x256xf32, #tpu.memory_space<vmem>>, vector<1x1x256xf32>
    %48 = vector.shape_cast %47 : vector<1x1x256xf32> to vector<1x256xf32>
    %49 = vector.shape_cast %46 : vector<1x256xf32> to vector<1x1x256xf32>
    tpu.vector_store %arg9[%c0_21, %c0_22, %c0_23], %49 {strides = array<i32>} : memref<1x1x256xf32, #tpu.memory_space<vmem>>, vector<1x1x256xf32>,
    return
  }
  func.func @transform_0(%arg0: i32) -> (i32, i32, i32) {
    %c0_i32 = arith.constant 0 : i32
    %c0_i32_0 = arith.constant 0 : i32
    %c0_i32_1 = arith.constant 0 : i32
    return %arg0, %c0_i32, %c0_i32_0 : i32, i32, i32
  }
  func.func @transform_1(%arg0: i32) -> (i32, i32) {
    %c0_i32 = arith.constant 0 : i32
    %c0_i32_0 = arith.constant 0 : i32
    %c0_i32_1 = arith.constant 0 : i32
    return %c0_i32, %c0_i32_0 : i32, i32
  }
  func.func @transform_2(%arg0: i32) -> (i32, i32) {
    %c0_i32 = arith.constant 0 : i32
    %c0_i32_0 = arith.constant 0 : i32
    %c0_i32_1 = arith.constant 0 : i32
    return %c0_i32, %c0_i32_0 : i32, i32
  }
  func.func @transform_3(%arg0: i32) -> (i32, i32) {
    %c0_i32 = arith.constant 0 : i32
    %c0_i32_0 = arith.constant 0 : i32
    %c0_i32_1 = arith.constant 0 : i32
    return %c0_i32, %c0_i32_0 : i32, i32
  }
  func.func @transform_4(%arg0: i32) -> (i32, i32) {
    %c0_i32 = arith.constant 0 : i32
    %c0_i32_0 = arith.constant 0 : i32
    %c0_i32_1 = arith.constant 0 : i32
    return %c0_i32, %c0_i32_0 : i32, i32
  }
  func.func @transform_5(%arg0: i32) -> (i32, i32) {
    %c0_i32 = arith.constant 0 : i32
    %c0_i32_0 = arith.constant 0 : i32
    %c0_i32_1 = arith.constant 0 : i32
    return %c0_i32, %c0_i32_0 : i32, i32
  }
  func.func @transform_6(%arg0: i32) -> (i32, i32) {
    %c0_i32 = arith.constant 0 : i32
    %c0_i32_0 = arith.constant 0 : i32
    %c0_i32_1 = arith.constant 0 : i32
    return %c0_i32, %c0_i32_0 : i32, i32
  }
  func.func @transform_7(%arg0: i32) -> (i32, i32, i32) {
    %c0_i32 = arith.constant 0 : i32
    %c0_i32_0 = arith.constant 0 : i32
    %c0_i32_1 = arith.constant 0 : i32
    return %arg0, %c0_i32, %c0_i32_0 : i32, i32, i32
  }
  func.func @transform_8(%arg0: i32) -> (i32, i32, i32) {
    %c0_i32 = arith.constant 0 : i32
    %c0_i32_0 = arith.constant 0 : i32
    %c0_i32_1 = arith.constant 0 : i32
    return %arg0, %c0_i32, %c0_i32_0 : i32, i32, i32
  }
}

</mosaic_0001>

<llo_original>
// kernel: unet_forward.5
$region0: #{unet_forward.5}
  #allocation0 [shape = 'u32[]', space=smem, size = 0x4, offset = 0x4, fixed_abs, tag = 'smem constant byte address 0x4 - core index']
  #allocation1 [shape = 'u32[144,128]{1,0:T(1,128)}', space=vmem, size = 0x12000, scoped, tag = 'internal scratch']
  %s0 = inlined_call_operand.vmem [shape: f32[2,8,2560], index: 0, kind: input, shape index: {}]
  %s1 = inlined_call_operand.vmem [shape: bf16[16,72], index: 1, kind: input, shape index: {}]
  %s2 = inlined_call_operand.vmem [shape: f32[16,1], index: 2, kind: input, shape index: {}]
  %s3 = inlined_call_operand.vmem [shape: bf16[16,144], index: 3, kind: input, shape index: {}]
  %s4 = inlined_call_operand.vmem [shape: f32[16,1], index: 4, kind: input, shape index: {}]
  %s5 = inlined_call_operand.vmem [shape: f32[2,16,2304], index: 5, kind: output, shape index: {}]
  %s6 = sld [smem:[#allocation0]]
  $region53: #{unet_forward.5} parent=0
    _
  %s8 = ssub.s32 1, %s6
  %s9 = scalar_select 0, %s8, %s6
  loop: start=0, step=1, limit=4
  $region2: #{unet_forward.5} parent=0 // loop_pre_header
    _
  $region3: #{unet_forward.5} parent=0 // loop_header
    %s11 = sphi 0, %s15
    %p12 = scmp.ge.s32.totalorder %s11, 4
    %s21 = sphi 0, %s23
    %s24 = sphi 0, %s21
    %s25 = sphi 0, %s24
    %s41 = sphi 0, %s25
    %s45 = sphi 0, %s45
    %s47 = sphi 0, %s45
    %s48 = sphi 0, %s47
    %s62 = sphi 0, %s48
    %s66 = sphi 0, %s66
    %s68 = sphi 0, %s66
    %s69 = sphi 0, %s68
    %s83 = sphi 0, %s69
    %s87 = sphi 0, %s87
    %s89 = sphi 0, %s87
    %s90 = sphi 0, %s89
    %s104 = sphi 0, %s90
    %s108 = sphi 0, %s108
    %s110 = sphi 0, %s108
    %s111 = sphi 0, %s110
    %s125 = sphi 0, %s111
    %s131 = sphi 0, %s133
    %s134 = sphi 0, %s131
    %s135 = sphi 0, %s134
    %s151 = sphi 0, %s135
  $region4: #{unet_forward.5} parent=0 // loop_header_branch
    %14 = sbr.rel (%p12) target = $region8
  $region5: #{unet_forward.5} parent=0 // loop_body
    %s16 = ssub.s32 %s11, 1
    %s17 = ssub.s32 %s11, 2
    %s18 = sadd.s32 %s11, 1
    %s19 = ssub.s32 %s11, %s18
    %p20 = scmp.eq.s32.totalorder %s19, 0
    %s22 = sadd.s32 %s21, 1
    %s23 = scalar_select %p20, %s21, %s22
    %p26 = pneg %p20
    %p27 = scmp.eq.s32.totalorder %s11, 1
    %p28 = por %p26, %p27
    %p29 = scmp.ne.s32.totalorder %s21, %s24
    %p30 = scmp.eq.s32.totalorder %s11, 0
    %p31 = por %p29, %p30
    %p32 = scmp.ne.s32.totalorder %s21, %s24
    %p33 = scmp.eq.s32.totalorder %s16, 1
    %p34 = por %p32, %p33
    %p35 = scmp.ne.s32.totalorder %s24, %s25
    %p36 = scmp.eq.s32.totalorder %s16, 0
    %p37 = por %p35, %p36
    %p38 = scmp.ne.s32.totalorder %s24, %s25
    %p39 = scmp.eq.s32.totalorder %s17, 1
    %p40 = por %p38, %p39
    %p42 = scmp.ne.s32.totalorder %s25, %s41
    %p43 = scmp.eq.s32.totalorder %s17, 0
    %p44 = por %p42, %p43
    %s46 = sadd.s32 %s45, 1
    %p49 = scmp.eq.s32.totalorder %s11, 1
    %p50 = scmp.ne.s32.totalorder %s45, %s47
    %p51 = scmp.eq.s32.totalorder %s11, 0
    %p52 = por %p50, %p51
    %p53 = scmp.ne.s32.totalorder %s45, %s47
    %p54 = scmp.eq.s32.totalorder %s16, 1
    %p55 = por %p53, %p54
    %p56 = scmp.ne.s32.totalorder %s47, %s48
    %p57 = scmp.eq.s32.totalorder %s16, 0
    %p58 = por %p56, %p57
    %p59 = scmp.ne.s32.totalorder %s47, %s48
    %p60 = scmp.eq.s32.totalorder %s17, 1
    %p61 = por %p59, %p60
    %p63 = scmp.ne.s32.totalorder %s48, %s62
    %p64 = scmp.eq.s32.totalorder %s17, 0
    %p65 = por %p63, %p64
    %s67 = sadd.s32 %s66, 1
    %p70 = scmp.eq.s32.totalorder %s11, 1
    %p71 = scmp.ne.s32.totalorder %s66, %s68
    %p72 = scmp.eq.s32.totalorder %s11, 0
    %p73 = por %p71, %p72
    %p74 = scmp.ne.s32.totalorder %s66, %s68
    %p75 = scmp.eq.s32.totalorder %s16, 1
    %p76 = por %p74, %p75
    %p77 = scmp.ne.s32.totalorder %s68, %s69
    %p78 = scmp.eq.s32.totalorder %s16, 0
    %p79 = por %p77, %p78
    %p80 = scmp.ne.s32.totalorder %s68, %s69
    %p81 = scmp.eq.s32.totalorder %s17, 1
    %p82 = por %p80, %p81
    %p84 = scmp.ne.s32.totalorder %s69, %s83
    %p85 = scmp.eq.s32.totalorder %s17, 0
    %p86 = por %p84, %p85
    %s88 = sadd.s32 %s87, 1
    %p91 = scmp.eq.s32.totalorder %s11, 1
    %p92 = scmp.ne.s32.totalorder %s87, %s89
    %p93 = scmp.eq.s32.totalorder %s11, 0
    %p94 = por %p92, %p93
    %p95 = scmp.ne.s32.totalorder %s87, %s89
    %p96 = scmp.eq.s32.totalorder %s16, 1
    %p97 = por %p95, %p96
    %p98 = scmp.ne.s32.totalorder %s89, %s90
    %p99 = scmp.eq.s32.totalorder %s16, 0
    %p100 = por %p98, %p99
    %p101 = scmp.ne.s32.totalorder %s89, %s90
    %p102 = scmp.eq.s32.totalorder %s17, 1
    %p103 = por %p101, %p102
    %p105 = scmp.ne.s32.totalorder %s90, %s104
    %p106 = scmp.eq.s32.totalorder %s17, 0
    %p107 = por %p105, %p106
    %s109 = sadd.s32 %s108, 1
    %p112 = scmp.eq.s32.totalorder %s11, 1
    %p113 = scmp.ne.s32.totalorder %s108, %s110
    %p114 = scmp.eq.s32.totalorder %s11, 0
    %p115 = por %p113, %p114
    %p116 = scmp.ne.s32.totalorder %s108, %s110
    %p117 = scmp.eq.s32.totalorder %s16, 1
    %p118 = por %p116, %p117
    %p119 = scmp.ne.s32.totalorder %s110, %s111
    %p120 = scmp.eq.s32.totalorder %s16, 0
    %p121 = por %p119, %p120
    %p122 = scmp.ne.s32.totalorder %s110, %s111
    %p123 = scmp.eq.s32.totalorder %s17, 1
    %p124 = por %p122, %p123
    %p126 = scmp.ne.s32.totalorder %s111, %s125
    %p127 = scmp.eq.s32.totalorder %s17, 0
    %p128 = por %p126, %p127
    %s129 = ssub.s32 %s11, %s18
    %p130 = scmp.eq.s32.totalorder %s129, 0
    %s132 = sadd.s32 %s131, 1
    %s133 = scalar_select %p130, %s131, %s132
    %p136 = pneg %p130
    %p137 = scmp.eq.s32.totalorder %s11, 1
    %p138 = por %p136, %p137
    %p139 = scmp.ne.s32.totalorder %s131, %s134
    %p140 = scmp.eq.s32.totalorder %s11, 0
    %p141 = por %p139, %p140
    %p142 = scmp.ne.s32.totalorder %s131, %s134
    %p143 = scmp.eq.s32.totalorder %s16, 1
    %p144 = por %p142, %p143
    %p145 = scmp.ne.s32.totalorder %s134, %s135
    %p146 = scmp.eq.s32.totalorder %s16, 0
    %p147 = por %p145, %p146
    %p148 = scmp.ne.s32.totalorder %s134, %s135
    %p149 = scmp.eq.s32.totalorder %s17, 1
    %p150 = por %p148, %p149
    %p152 = scmp.ne.s32.totalorder %s135, %s151
    %p153 = scmp.eq.s32.totalorder %s17, 0
    %p154 = por %p152, %p153
    %p155 = scmp.le.s32.totalorder 1, %s11
    %p156 = scmp.lt.s32.totalorder %s11, 3
    %p157 = pnand %p155, %p156
    %p158 = pneg %p157
    // Predicated region
    $region9: #{unet_forward.5} parent=5 // pred_check
      _
    $region10: #{unet_forward.5} parent=5 // pred_check_branch
      %160 = sbr.rel (%p157) target = $region12
    $region11: #{unet_forward.5} parent=5 // pred_region
      %s161 = ssub.s32 %s11, 1
      // Predicated region
      $region13: #{unet_forward.5} parent=11 // pred_check
        %p162 = pneg %p58
      $region14: #{unet_forward.5} parent=11 // pred_check_branch
        %164 = sbr.rel (%p162) target = $region16
      $region15: #{unet_forward.5} parent=11 // pred_region
        _
      $region16: #{unet_forward.5} parent=11 // pred_fallthru
        _
      // Predicated region
      $region17: #{unet_forward.5} parent=11 // pred_check
        %p165 = pneg %p79
      $region18: #{unet_forward.5} parent=11 // pred_check_branch
        %167 = sbr.rel (%p165) target = $region20
      $region19: #{unet_forward.5} parent=11 // pred_region
        _
      $region20: #{unet_forward.5} parent=11 // pred_fallthru
        _
      // Predicated region
      $region21: #{unet_forward.5} parent=11 // pred_check
        %p168 = pneg %p100
      $region22: #{unet_forward.5} parent=11 // pred_check_branch
        %170 = sbr.rel (%p168) target = $region24
      $region23: #{unet_forward.5} parent=11 // pred_region
        _
      $region24: #{unet_forward.5} parent=11 // pred_fallthru
        _
      // Predicated region
      $region25: #{unet_forward.5} parent=11 // pred_check
        %p171 = pneg %p121
      $region26: #{unet_forward.5} parent=11 // pred_check_branch
        %173 = sbr.rel (%p171) target = $region28
      $region27: #{unet_forward.5} parent=11 // pred_region
        _
      $region28: #{unet_forward.5} parent=11 // pred_fallthru
        _
    $region12: #{unet_forward.5} parent=5 // pred_fallthru
      _
    %p174 = scmp.lt.s32.totalorder %s11, 2
    // Predicated region
    $region29: #{unet_forward.5} parent=5 // pred_check
      %p175 = pneg %p174
    $region30: #{unet_forward.5} parent=5 // pred_check_branch
      %177 = sbr.rel (%p175) target = $region32
    $region31: #{unet_forward.5} parent=5 // pred_region
      // Predicated region
      $region33: #{unet_forward.5} parent=31 // pred_check
        %p178 = pneg %p31
      $region34: #{unet_forward.5} parent=31 // pred_check_branch
        %180 = sbr.rel (%p178) target = $region36
      $region35: #{unet_forward.5} parent=31 // pred_region
        %p181 = scmp.lt.s32.totalorder %s11, 1
        %s182 = scalar_select %p181, %s11, 1
        %s183 = smul.addr %s182, 20
        %s184 = smul.addr %s183, 8
        %s185 = scalar_lea.vmem %s0, %s184
      $region36: #{unet_forward.5} parent=31 // pred_fallthru
        _
    $region32: #{unet_forward.5} parent=5 // pred_fallthru
      _
    %p186 = scmp.le.s32.totalorder 1, %s11
    %p187 = scmp.lt.s32.totalorder %s11, 3
    %p188 = pnand %p186, %p187
    %p189 = pneg %p188
    // Predicated region
    $region37: #{unet_forward.5} parent=5 // pred_check
      _
    $region38: #{unet_forward.5} parent=5 // pred_check_branch
      %191 = sbr.rel (%p188) target = $region40
    $region39: #{unet_forward.5} parent=5 // pred_region
      %s192 = ssub.s32 %s11, 1
      %p193 = scmp.lt.s32.totalorder %s16, 1
      %s194 = scalar_select %p193, %s16, 1
      %s195 = smul.addr %s194, 20
      %s196 = smul.addr %s195, 8
      %s197 = scalar_lea.vmem %s0, %s196
      %p198 = pneg %p37
      %p199 = pneg %p34
      %p200 = pneg %p58
      %p201 = pneg %p55
      %p202 = pneg %p79
      %p203 = pneg %p76
      %p204 = pneg %p100
      %p205 = pneg %p97
      %p206 = pneg %p121
      %p207 = pneg %p118
      %p208 = pneg %p147
      %p209 = pneg %p144
      %p210 = scmp.lt.s32.totalorder %s16, 1
      %s211 = scalar_select %p210, %s16, 1
      %s212 = smul.addr %s211, 36
      %s213 = smul.addr %s212, 8
      %s214 = scalar_lea.vmem %s5, %s213
      %p215 = scmp.lt.s32.totalorder %s16, 1
      %s216 = scalar_select %p215, %s16, 1
      %s217 = smul.addr %s216, 20
      %s218 = smul.addr %s217, 8
      %s219 = scalar_lea.vmem %s0, %s218
      %p220 = scmp.lt.s32.totalorder %s16, 1
      %s221 = scalar_select %p220, %s16, 1
      %s222 = smul.addr %s221, 36
      %s223 = smul.addr %s222, 8
      %s224 = scalar_lea.vmem %s5, %s223
      %v226 = vld [vmem:[%s219] sm:$0xff]
      %v227 = vld [vmem:[%s219 + $0x8] sm:$0xff]
      %v228 = vld [vmem:[%s219 + $0x10] sm:$0xff]
      %v229 = vld [vmem:[%s219 + $0x18] sm:$0xff]
      %v230 = vld [vmem:[%s219 + $0x20] sm:$0xff]
      %v231 = vld [vmem:[%s219 + $0x28] sm:$0xff]
      %v232 = vld [vmem:[%s219 + $0x30] sm:$0xff]
      %v233 = vld [vmem:[%s219 + $0x38] sm:$0xff]
      %v234 = vld [vmem:[%s219 + $0x40] sm:$0xff]
      %v235 = vld [vmem:[%s219 + $0x48] sm:$0xff]
      %v236 = vld [vmem:[%s219 + $0x50] sm:$0xff]
      %v237 = vld [vmem:[%s219 + $0x58] sm:$0xff]
      %v238 = vld [vmem:[%s219 + $0x60] sm:$0xff]
      %v239 = vld [vmem:[%s219 + $0x68] sm:$0xff]
      %v240 = vld [vmem:[%s219 + $0x70] sm:$0xff]
      %v241 = vld [vmem:[%s219 + $0x78] sm:$0xff]
      %v242 = vld [vmem:[%s219 + $0x80] sm:$0xff]
      %v243 = vld [vmem:[%s219 + $0x88] sm:$0xff]
      %v244 = vld [vmem:[%s219 + $0x90] sm:$0xff]
      %v245 = vld [vmem:[%s219 + $0x98] sm:$0xff]
      %v246 = vld [vmem:[%s1] sm:$0xf]
      %v247 = vld [vmem:[%s1 + $0x4] sm:$0xf]
      %v248 = vld [vmem:[%s2] sm:$0xff]
      %v249 = vld [vmem:[%s2 + $0x8] sm:$0xff]
      %270 = vrot.lane.b32.xlu0 %v226, 127
      %v271 = vpop.permute.xlu0 %270
      %272 = vrot.lane.b32.xlu0 %v227, 127
      %v273 = vpop.permute.xlu0 %272
      %274 = vrot.lane.b32.xlu0 %v228, 127
      %v275 = vpop.permute.xlu0 %274
      %276 = vrot.lane.b32.xlu0 %v229, 127
      %v277 = vpop.permute.xlu0 %276
      %278 = vrot.lane.b32.xlu0 %v230, 127
      %v279 = vpop.permute.xlu0 %278
      %280 = vrot.lane.b32.xlu0 %v231, 127
      %v281 = vpop.permute.xlu0 %280
      %282 = vrot.lane.b32.xlu0 %v232, 127
      %v283 = vpop.permute.xlu0 %282
      %284 = vrot.lane.b32.xlu0 %v233, 127
      %v285 = vpop.permute.xlu0 %284
      %286 = vrot.lane.b32.xlu0 %v234, 127
      %v287 = vpop.permute.xlu0 %286
      %288 = vrot.lane.b32.xlu0 %v235, 127
      %v289 = vpop.permute.xlu0 %288
      %290 = vrot.lane.b32.xlu0 %v236, 127
      %v291 = vpop.permute.xlu0 %290
      %292 = vrot.lane.b32.xlu0 %v237, 127
      %v293 = vpop.permute.xlu0 %292
      %294 = vrot.lane.b32.xlu0 %v238, 127
      %v295 = vpop.permute.xlu0 %294
      %296 = vrot.lane.b32.xlu0 %v239, 127
      %v297 = vpop.permute.xlu0 %296
      %298 = vrot.lane.b32.xlu0 %v240, 127
      %v299 = vpop.permute.xlu0 %298
      %300 = vrot.lane.b32.xlu0 %v241, 127
      %v301 = vpop.permute.xlu0 %300
      %302 = vrot.lane.b32.xlu0 %v242, 127
      %v303 = vpop.permute.xlu0 %302
      %304 = vrot.lane.b32.xlu0 %v243, 127
      %v305 = vpop.permute.xlu0 %304
      %306 = vrot.lane.b32.xlu0 %v244, 127
      %v307 = vpop.permute.xlu0 %306
      %308 = vrot.lane.b32.xlu0 %v245, 127
      %v309 = vpop.permute.xlu0 %308
      %vm310 = vcmask 1039360
      %v311 = vsel %vm310, %v271, %v273
      %v312 = vsel %vm310, %v273, %v275
      %v313 = vsel %vm310, %v275, %v277
      %v314 = vsel %vm310, %v277, %v279
      %v315 = vsel %vm310, %v279, %v281
      %v316 = vsel %vm310, %v281, %v283
      %v317 = vsel %vm310, %v283, %v285
      %v318 = vsel %vm310, %v285, %v287
      %v319 = vsel %vm310, %v287, %v289
      %v320 = vsel %vm310, %v289, %v291
      %v321 = vsel %vm310, %v291, %v293
      %v322 = vsel %vm310, %v293, %v295
      %v323 = vsel %vm310, %v295, %v297
      %v324 = vsel %vm310, %v297, %v299
      %v325 = vsel %vm310, %v299, %v301
      %v326 = vsel %vm310, %v301, %v303
      %v327 = vsel %vm310, %v303, %v305
      %v328 = vsel %vm310, %v305, %v307
      %v329 = vsel %vm310, %v307, %v309
      %349 = vrot.lane.b32.xlu0 %v226, 126
      %v350 = vpop.permute.xlu0 %349
      %351 = vrot.lane.b32.xlu0 %v227, 126
      %v352 = vpop.permute.xlu0 %351
      %353 = vrot.lane.b32.xlu0 %v228, 126
      %v354 = vpop.permute.xlu0 %353
      %355 = vrot.lane.b32.xlu0 %v229, 126
      %v356 = vpop.permute.xlu0 %355
      %357 = vrot.lane.b32.xlu0 %v230, 126
      %v358 = vpop.permute.xlu0 %357
      %359 = vrot.lane.b32.xlu0 %v231, 126
      %v360 = vpop.permute.xlu0 %359
      %361 = vrot.lane.b32.xlu0 %v232, 126
      %v362 = vpop.permute.xlu0 %361
      %363 = vrot.lane.b32.xlu0 %v233, 126
      %v364 = vpop.permute.xlu0 %363
      %365 = vrot.lane.b32.xlu0 %v234, 126
      %v366 = vpop.permute.xlu0 %365
      %367 = vrot.lane.b32.xlu0 %v235, 126
      %v368 = vpop.permute.xlu0 %367
      %369 = vrot.lane.b32.xlu0 %v236, 126
      %v370 = vpop.permute.xlu0 %369
      %371 = vrot.lane.b32.xlu0 %v237, 126
      %v372 = vpop.permute.xlu0 %371
      %373 = vrot.lane.b32.xlu0 %v238, 126
      %v374 = vpop.permute.xlu0 %373
      %375 = vrot.lane.b32.xlu0 %v239, 126
      %v376 = vpop.permute.xlu0 %375
      %377 = vrot.lane.b32.xlu0 %v240, 126
      %v378 = vpop.permute.xlu0 %377
      %379 = vrot.lane.b32.xlu0 %v241, 126
      %v380 = vpop.permute.xlu0 %379
      %381 = vrot.lane.b32.xlu0 %v242, 126
      %v382 = vpop.permute.xlu0 %381
      %383 = vrot.lane.b32.xlu0 %v243, 126
      %v384 = vpop.permute.xlu0 %383
      %385 = vrot.lane.b32.xlu0 %v244, 126
      %v386 = vpop.permute.xlu0 %385
      %387 = vrot.lane.b32.xlu0 %v245, 126
      %v388 = vpop.permute.xlu0 %387
      %vm389 = vcmask 1031168
      %v390 = vsel %vm389, %v350, %v352
      %v391 = vsel %vm389, %v352, %v354
      %v392 = vsel %vm389, %v354, %v356
      %v393 = vsel %vm389, %v356, %v358
      %v394 = vsel %vm389, %v358, %v360
      %v395 = vsel %vm389, %v360, %v362
      %v396 = vsel %vm389, %v362, %v364
      %v397 = vsel %vm389, %v364, %v366
      %v398 = vsel %vm389, %v366, %v368
      %v399 = vsel %vm389, %v368, %v370
      %v400 = vsel %vm389, %v370, %v372
      %v401 = vsel %vm389, %v372, %v374
      %v402 = vsel %vm389, %v374, %v376
      %v403 = vsel %vm389, %v376, %v378
      %v404 = vsel %vm389, %v378, %v380
      %v405 = vsel %vm389, %v380, %v382
      %v406 = vsel %vm389, %v382, %v384
      %v407 = vsel %vm389, %v384, %v386
      %v408 = vsel %vm389, %v386, %v388
      %428 = vrot.lane.b32.xlu0 %v226, 80
      %v429 = vpop.permute.xlu0 %428
      %430 = vrot.lane.b32.xlu0 %v227, 80
      %v431 = vpop.permute.xlu0 %430
      %432 = vrot.lane.b32.xlu0 %v228, 80
      %v433 = vpop.permute.xlu0 %432
      %434 = vrot.lane.b32.xlu0 %v229, 80
      %v435 = vpop.permute.xlu0 %434
      %436 = vrot.lane.b32.xlu0 %v230, 80
      %v437 = vpop.permute.xlu0 %436
      %438 = vrot.lane.b32.xlu0 %v231, 80
      %v439 = vpop.permute.xlu0 %438
      %440 = vrot.lane.b32.xlu0 %v232, 80
      %v441 = vpop.permute.xlu0 %440
      %442 = vrot.lane.b32.xlu0 %v233, 80
      %v443 = vpop.permute.xlu0 %442
      %444 = vrot.lane.b32.xlu0 %v234, 80
      %v445 = vpop.permute.xlu0 %444
      %446 = vrot.lane.b32.xlu0 %v235, 80
      %v447 = vpop.permute.xlu0 %446
      %448 = vrot.lane.b32.xlu0 %v236, 80
      %v449 = vpop.permute.xlu0 %448
      %450 = vrot.lane.b32.xlu0 %v237, 80
      %v451 = vpop.permute.xlu0 %450
      %452 = vrot.lane.b32.xlu0 %v238, 80
      %v453 = vpop.permute.xlu0 %452
      %454 = vrot.lane.b32.xlu0 %v239, 80
      %v455 = vpop.permute.xlu0 %454
      %456 = vrot.lane.b32.xlu0 %v240, 80
      %v457 = vpop.permute.xlu0 %456
      %458 = vrot.lane.b32.xlu0 %v241, 80
      %v459 = vpop.permute.xlu0 %458
      %460 = vrot.lane.b32.xlu0 %v242, 80
      %v461 = vpop.permute.xlu0 %460
      %462 = vrot.lane.b32.xlu0 %v243, 80
      %v463 = vpop.permute.xlu0 %462
      %464 = vrot.lane.b32.xlu0 %v244, 80
      %v465 = vpop.permute.xlu0 %464
      %466 = vrot.lane.b32.xlu0 %v245, 80
      %v467 = vpop.permute.xlu0 %466
      %vm468 = vcmask 654336
      %v469 = vsel %vm468, %v429, %v431
      %v470 = vsel %vm468, %v431, %v433
      %v471 = vsel %vm468, %v433, %v435
      %v472 = vsel %vm468, %v435, %v437
      %v473 = vsel %vm468, %v437, %v439
      %v474 = vsel %vm468, %v439, %v441
      %v475 = vsel %vm468, %v441, %v443
      %v476 = vsel %vm468, %v443, %v445
      %v477 = vsel %vm468, %v445, %v447
      %v478 = vsel %vm468, %v447, %v449
      %v479 = vsel %vm468, %v449, %v451
      %v480 = vsel %vm468, %v451, %v453
      %v481 = vsel %vm468, %v453, %v455
      %v482 = vsel %vm468, %v455, %v457
      %v483 = vsel %vm468, %v457, %v459
      %v484 = vsel %vm468, %v459, %v461
      %v485 = vsel %vm468, %v461, %v463
      %v486 = vsel %vm468, %v463, %v465
      %v487 = vsel %vm468, %v465, %v467
      %507 = vrot.lane.b32.xlu0 %v226, 79
      %v508 = vpop.permute.xlu0 %507
      %509 = vrot.lane.b32.xlu0 %v227, 79
      %v510 = vpop.permute.xlu0 %509
      %511 = vrot.lane.b32.xlu0 %v228, 79
      %v512 = vpop.permute.xlu0 %511
      %513 = vrot.lane.b32.xlu0 %v229, 79
      %v514 = vpop.permute.xlu0 %513
      %515 = vrot.lane.b32.xlu0 %v230, 79
      %v516 = vpop.permute.xlu0 %515
      %517 = vrot.lane.b32.xlu0 %v231, 79
      %v518 = vpop.permute.xlu0 %517
      %519 = vrot.lane.b32.xlu0 %v232, 79
      %v520 = vpop.permute.xlu0 %519
      %521 = vrot.lane.b32.xlu0 %v233, 79
      %v522 = vpop.permute.xlu0 %521
      %523 = vrot.lane.b32.xlu0 %v234, 79
      %v524 = vpop.permute.xlu0 %523
      %525 = vrot.lane.b32.xlu0 %v235, 79
      %v526 = vpop.permute.xlu0 %525
      %527 = vrot.lane.b32.xlu0 %v236, 79
      %v528 = vpop.permute.xlu0 %527
      %529 = vrot.lane.b32.xlu0 %v237, 79
      %v530 = vpop.permute.xlu0 %529
      %531 = vrot.lane.b32.xlu0 %v238, 79
      %v532 = vpop.permute.xlu0 %531
      %533 = vrot.lane.b32.xlu0 %v239, 79
      %v534 = vpop.permute.xlu0 %533
      %535 = vrot.lane.b32.xlu0 %v240, 79
      %v536 = vpop.permute.xlu0 %535
      %537 = vrot.lane.b32.xlu0 %v241, 79
      %v538 = vpop.permute.xlu0 %537
      %539 = vrot.lane.b32.xlu0 %v242, 79
      %v540 = vpop.permute.xlu0 %539
      %541 = vrot.lane.b32.xlu0 %v243, 79
      %v542 = vpop.permute.xlu0 %541
      %543 = vrot.lane.b32.xlu0 %v244, 79
      %v544 = vpop.permute.xlu0 %543
      %545 = vrot.lane.b32.xlu0 %v245, 79
      %v546 = vpop.permute.xlu0 %545
      %vm547 = vcmask 646144
      %v548 = vsel %vm547, %v508, %v510
      %v549 = vsel %vm547, %v510, %v512
      %v550 = vsel %vm547, %v512, %v514
      %v551 = vsel %vm547, %v514, %v516
      %v552 = vsel %vm547, %v516, %v518
      %v553 = vsel %vm547, %v518, %v520
      %v554 = vsel %vm547, %v520, %v522
      %v555 = vsel %vm547, %v522, %v524
      %v556 = vsel %vm547, %v524, %v526
      %v557 = vsel %vm547, %v526, %v528
      %v558 = vsel %vm547, %v528, %v530
      %v559 = vsel %vm547, %v530, %v532
      %v560 = vsel %vm547, %v532, %v534
      %v561 = vsel %vm547, %v534, %v536
      %v562 = vsel %vm547, %v536, %v538
      %v563 = vsel %vm547, %v538, %v540
      %v564 = vsel %vm547, %v540, %v542
      %v565 = vsel %vm547, %v542, %v544
      %v566 = vsel %vm547, %v544, %v546
      %586 = vrot.lane.b32.xlu0 %v226, 78
      %v587 = vpop.permute.xlu0 %586
      %588 = vrot.lane.b32.xlu0 %v227, 78
      %v589 = vpop.permute.xlu0 %588
      %590 = vrot.lane.b32.xlu0 %v228, 78
      %v591 = vpop.permute.xlu0 %590
      %592 = vrot.lane.b32.xlu0 %v229, 78
      %v593 = vpop.permute.xlu0 %592
      %594 = vrot.lane.b32.xlu0 %v230, 78
      %v595 = vpop.permute.xlu0 %594
      %596 = vrot.lane.b32.xlu0 %v231, 78
      %v597 = vpop.permute.xlu0 %596
      %598 = vrot.lane.b32.xlu0 %v232, 78
      %v599 = vpop.permute.xlu0 %598
      %600 = vrot.lane.b32.xlu0 %v233, 78
      %v601 = vpop.permute.xlu0 %600
      %602 = vrot.lane.b32.xlu0 %v234, 78
      %v603 = vpop.permute.xlu0 %602
      %604 = vrot.lane.b32.xlu0 %v235, 78
      %v605 = vpop.permute.xlu0 %604
      %606 = vrot.lane.b32.xlu0 %v236, 78
      %v607 = vpop.permute.xlu0 %606
      %608 = vrot.lane.b32.xlu0 %v237, 78
      %v609 = vpop.permute.xlu0 %608
      %610 = vrot.lane.b32.xlu0 %v238, 78
      %v611 = vpop.permute.xlu0 %610
      %612 = vrot.lane.b32.xlu0 %v239, 78
      %v613 = vpop.permute.xlu0 %612
      %614 = vrot.lane.b32.xlu0 %v240, 78
      %v615 = vpop.permute.xlu0 %614
      %616 = vrot.lane.b32.xlu0 %v241, 78
      %v617 = vpop.permute.xlu0 %616
      %618 = vrot.lane.b32.xlu0 %v242, 78
      %v619 = vpop.permute.xlu0 %618
      %620 = vrot.lane.b32.xlu0 %v243, 78
      %v621 = vpop.permute.xlu0 %620
      %622 = vrot.lane.b32.xlu0 %v244, 78
      %v623 = vpop.permute.xlu0 %622
      %624 = vrot.lane.b32.xlu0 %v245, 78
      %v625 = vpop.permute.xlu0 %624
      %vm626 = vcmask 637952
      %v627 = vsel %vm626, %v587, %v589
      %v628 = vsel %vm626, %v589, %v591
      %v629 = vsel %vm626, %v591, %v593
      %v630 = vsel %vm626, %v593, %v595
      %v631 = vsel %vm626, %v595, %v597
      %v632 = vsel %vm626, %v597, %v599
      %v633 = vsel %vm626, %v599, %v601
      %v634 = vsel %vm626, %v601, %v603
      %v635 = vsel %vm626, %v603, %v605
      %v636 = vsel %vm626, %v605, %v607
      %v637 = vsel %vm626, %v607, %v609
      %v638 = vsel %vm626, %v609, %v611
      %v639 = vsel %vm626, %v611, %v613
      %v640 = vsel %vm626, %v613, %v615
      %v641 = vsel %vm626, %v615, %v617
      %v642 = vsel %vm626, %v617, %v619
      %v643 = vsel %vm626, %v619, %v621
      %v644 = vsel %vm626, %v621, %v623
      %v645 = vsel %vm626, %v623, %v625
      %665 = vrot.lane.b32.xlu0 %v226, 32
      %v666 = vpop.permute.xlu0 %665
      %667 = vrot.lane.b32.xlu0 %v227, 32
      %v668 = vpop.permute.xlu0 %667
      %669 = vrot.lane.b32.xlu0 %v228, 32
      %v670 = vpop.permute.xlu0 %669
      %671 = vrot.lane.b32.xlu0 %v229, 32
      %v672 = vpop.permute.xlu0 %671
      %673 = vrot.lane.b32.xlu0 %v230, 32
      %v674 = vpop.permute.xlu0 %673
      %675 = vrot.lane.b32.xlu0 %v231, 32
      %v676 = vpop.permute.xlu0 %675
      %677 = vrot.lane.b32.xlu0 %v232, 32
      %v678 = vpop.permute.xlu0 %677
      %679 = vrot.lane.b32.xlu0 %v233, 32
      %v680 = vpop.permute.xlu0 %679
      %681 = vrot.lane.b32.xlu0 %v234, 32
      %v682 = vpop.permute.xlu0 %681
      %683 = vrot.lane.b32.xlu0 %v235, 32
      %v684 = vpop.permute.xlu0 %683
      %685 = vrot.lane.b32.xlu0 %v236, 32
      %v686 = vpop.permute.xlu0 %685
      %687 = vrot.lane.b32.xlu0 %v237, 32
      %v688 = vpop.permute.xlu0 %687
      %689 = vrot.lane.b32.xlu0 %v238, 32
      %v690 = vpop.permute.xlu0 %689
      %691 = vrot.lane.b32.xlu0 %v239, 32
      %v692 = vpop.permute.xlu0 %691
      %693 = vrot.lane.b32.xlu0 %v240, 32
      %v694 = vpop.permute.xlu0 %693
      %695 = vrot.lane.b32.xlu0 %v241, 32
      %v696 = vpop.permute.xlu0 %695
      %697 = vrot.lane.b32.xlu0 %v242, 32
      %v698 = vpop.permute.xlu0 %697
      %699 = vrot.lane.b32.xlu0 %v243, 32
      %v700 = vpop.permute.xlu0 %699
      %701 = vrot.lane.b32.xlu0 %v244, 32
      %v702 = vpop.permute.xlu0 %701
      %703 = vrot.lane.b32.xlu0 %v245, 32
      %v704 = vpop.permute.xlu0 %703
      %vm705 = vcmask 261120
      %v706 = vsel %vm705, %v666, %v668
      %v707 = vsel %vm705, %v668, %v670
      %v708 = vsel %vm705, %v670, %v672
      %v709 = vsel %vm705, %v672, %v674
      %v710 = vsel %vm705, %v674, %v676
      %v711 = vsel %vm705, %v676, %v678
      %v712 = vsel %vm705, %v678, %v680
      %v713 = vsel %vm705, %v680, %v682
      %v714 = vsel %vm705, %v682, %v684
      %v715 = vsel %vm705, %v684, %v686
      %v716 = vsel %vm705, %v686, %v688
      %v717 = vsel %vm705, %v688, %v690
      %v718 = vsel %vm705, %v690, %v692
      %v719 = vsel %vm705, %v692, %v694
      %v720 = vsel %vm705, %v694, %v696
      %v721 = vsel %vm705, %v696, %v698
      %v722 = vsel %vm705, %v698, %v700
      %v723 = vsel %vm705, %v700, %v702
      %v724 = vsel %vm705, %v702, %v704
      %744 = vrot.lane.b32.xlu0 %v226, 31
      %v745 = vpop.permute.xlu0 %744
      %746 = vrot.lane.b32.xlu0 %v227, 31
      %v747 = vpop.permute.xlu0 %746
      %748 = vrot.lane.b32.xlu0 %v228, 31
      %v749 = vpop.permute.xlu0 %748
      %750 = vrot.lane.b32.xlu0 %v229, 31
      %v751 = vpop.permute.xlu0 %750
      %752 = vrot.lane.b32.xlu0 %v230, 31
      %v753 = vpop.permute.xlu0 %752
      %754 = vrot.lane.b32.xlu0 %v231, 31
      %v755 = vpop.permute.xlu0 %754
      %756 = vrot.lane.b32.xlu0 %v232, 31
      %v757 = vpop.permute.xlu0 %756
      %758 = vrot.lane.b32.xlu0 %v233, 31
      %v759 = vpop.permute.xlu0 %758
      %760 = vrot.lane.b32.xlu0 %v234, 31
      %v761 = vpop.permute.xlu0 %760
      %762 = vrot.lane.b32.xlu0 %v235, 31
      %v763 = vpop.permute.xlu0 %762
      %764 = vrot.lane.b32.xlu0 %v236, 31
      %v765 = vpop.permute.xlu0 %764
      %766 = vrot.lane.b32.xlu0 %v237, 31
      %v767 = vpop.permute.xlu0 %766
      %768 = vrot.lane.b32.xlu0 %v238, 31
      %v769 = vpop.permute.xlu0 %768
      %770 = vrot.lane.b32.xlu0 %v239, 31
      %v771 = vpop.permute.xlu0 %770
      %772 = vrot.lane.b32.xlu0 %v240, 31
      %v773 = vpop.permute.xlu0 %772
      %774 = vrot.lane.b32.xlu0 %v241, 31
      %v775 = vpop.permute.xlu0 %774
      %776 = vrot.lane.b32.xlu0 %v242, 31
      %v777 = vpop.permute.xlu0 %776
      %778 = vrot.lane.b32.xlu0 %v243, 31
      %v779 = vpop.permute.xlu0 %778
      %780 = vrot.lane.b32.xlu0 %v244, 31
      %v781 = vpop.permute.xlu0 %780
      %782 = vrot.lane.b32.xlu0 %v245, 31
      %v783 = vpop.permute.xlu0 %782
      %vm784 = vcmask 252928
      %v785 = vsel %vm784, %v745, %v747
      %v786 = vsel %vm784, %v747, %v749
      %v787 = vsel %vm784, %v749, %v751
      %v788 = vsel %vm784, %v751, %v753
      %v789 = vsel %vm784, %v753, %v755
      %v790 = vsel %vm784, %v755, %v757
      %v791 = vsel %vm784, %v757, %v759
      %v792 = vsel %vm784, %v759, %v761
      %v793 = vsel %vm784, %v761, %v763
      %v794 = vsel %vm784, %v763, %v765
      %v795 = vsel %vm784, %v765, %v767
      %v796 = vsel %vm784, %v767, %v769
      %v797 = vsel %vm784, %v769, %v771
      %v798 = vsel %vm784, %v771, %v773
      %v799 = vsel %vm784, %v773, %v775
      %v800 = vsel %vm784, %v775, %v777
      %v801 = vsel %vm784, %v777, %v779
      %v802 = vsel %vm784, %v779, %v781
      %v803 = vsel %vm784, %v781, %v783
      %823 = vrot.lane.b32.xlu0 %v226, 30
      %v824 = vpop.permute.xlu0 %823
      %825 = vrot.lane.b32.xlu0 %v227, 30
      %v826 = vpop.permute.xlu0 %825
      %827 = vrot.lane.b32.xlu0 %v228, 30
      %v828 = vpop.permute.xlu0 %827
      %829 = vrot.lane.b32.xlu0 %v229, 30
      %v830 = vpop.permute.xlu0 %829
      %831 = vrot.lane.b32.xlu0 %v230, 30
      %v832 = vpop.permute.xlu0 %831
      %833 = vrot.lane.b32.xlu0 %v231, 30
      %v834 = vpop.permute.xlu0 %833
      %835 = vrot.lane.b32.xlu0 %v232, 30
      %v836 = vpop.permute.xlu0 %835
      %837 = vrot.lane.b32.xlu0 %v233, 30
      %v838 = vpop.permute.xlu0 %837
      %839 = vrot.lane.b32.xlu0 %v234, 30
      %v840 = vpop.permute.xlu0 %839
      %841 = vrot.lane.b32.xlu0 %v235, 30
      %v842 = vpop.permute.xlu0 %841
      %843 = vrot.lane.b32.xlu0 %v236, 30
      %v844 = vpop.permute.xlu0 %843
      %845 = vrot.lane.b32.xlu0 %v237, 30
      %v846 = vpop.permute.xlu0 %845
      %847 = vrot.lane.b32.xlu0 %v238, 30
      %v848 = vpop.permute.xlu0 %847
      %849 = vrot.lane.b32.xlu0 %v239, 30
      %v850 = vpop.permute.xlu0 %849
      %851 = vrot.lane.b32.xlu0 %v240, 30
      %v852 = vpop.permute.xlu0 %851
      %853 = vrot.lane.b32.xlu0 %v241, 30
      %v854 = vpop.permute.xlu0 %853
      %855 = vrot.lane.b32.xlu0 %v242, 30
      %v856 = vpop.permute.xlu0 %855
      %857 = vrot.lane.b32.xlu0 %v243, 30
      %v858 = vpop.permute.xlu0 %857
      %859 = vrot.lane.b32.xlu0 %v244, 30
      %v860 = vpop.permute.xlu0 %859
      %861 = vrot.lane.b32.xlu0 %v245, 30
      %v862 = vpop.permute.xlu0 %861
      %vm863 = vcmask 244736
      %v864 = vsel %vm863, %v824, %v826
      %v865 = vsel %vm863, %v826, %v828
      %v866 = vsel %vm863, %v828, %v830
      %v867 = vsel %vm863, %v830, %v832
      %v868 = vsel %vm863, %v832, %v834
      %v869 = vsel %vm863, %v834, %v836
      %v870 = vsel %vm863, %v836, %v838
      %v871 = vsel %vm863, %v838, %v840
      %v872 = vsel %vm863, %v840, %v842
      %v873 = vsel %vm863, %v842, %v844
      %v874 = vsel %vm863, %v844, %v846
      %v875 = vsel %vm863, %v846, %v848
      %v876 = vsel %vm863, %v848, %v850
      %v877 = vsel %vm863, %v850, %v852
      %v878 = vsel %vm863, %v852, %v854
      %v879 = vsel %vm863, %v854, %v856
      %v880 = vsel %vm863, %v856, %v858
      %v881 = vsel %vm863, %v858, %v860
      %v882 = vsel %vm863, %v860, %v862
      %v902 = vpack.c.bf16 %v311, %v226
      %v903 = vpack.c.bf16 %v312, %v227
      %v904 = vpack.c.bf16 %v313, %v228
      %v905 = vpack.c.bf16 %v314, %v229
      %v906 = vpack.c.bf16 %v315, %v230
      %v907 = vpack.c.bf16 %v316, %v231
      %v908 = vpack.c.bf16 %v317, %v232
      %v909 = vpack.c.bf16 %v318, %v233
      %v910 = vpack.c.bf16 %v319, %v234
      %v911 = vpack.c.bf16 %v320, %v235
      %v912 = vpack.c.bf16 %v321, %v236
      %v913 = vpack.c.bf16 %v322, %v237
      %v914 = vpack.c.bf16 %v323, %v238
      %v915 = vpack.c.bf16 %v324, %v239
      %v916 = vpack.c.bf16 %v325, %v240
      %v917 = vpack.c.bf16 %v326, %v241
      %v918 = vpack.c.bf16 %v327, %v242
      %v919 = vpack.c.bf16 %v328, %v243
      %v920 = vpack.c.bf16 %v329, %v244
      %v921 = vpack.c.bf16 %v469, %v390
      %v922 = vpack.c.bf16 %v470, %v391
      %v923 = vpack.c.bf16 %v471, %v392
      %v924 = vpack.c.bf16 %v472, %v393
      %v925 = vpack.c.bf16 %v473, %v394
      %v926 = vpack.c.bf16 %v474, %v395
      %v927 = vpack.c.bf16 %v475, %v396
      %v928 = vpack.c.bf16 %v476, %v397
      %v929 = vpack.c.bf16 %v477, %v398
      %v930 = vpack.c.bf16 %v478, %v399
      %v931 = vpack.c.bf16 %v479, %v400
      %v932 = vpack.c.bf16 %v480, %v401
      %v933 = vpack.c.bf16 %v481, %v402
      %v934 = vpack.c.bf16 %v482, %v403
      %v935 = vpack.c.bf16 %v483, %v404
      %v936 = vpack.c.bf16 %v484, %v405
      %v937 = vpack.c.bf16 %v485, %v406
      %v938 = vpack.c.bf16 %v486, %v407
      %v939 = vpack.c.bf16 %v487, %v408
      %v940 = vpack.c.bf16 %v627, %v548
      %v941 = vpack.c.bf16 %v628, %v549
      %v942 = vpack.c.bf16 %v629, %v550
      %v943 = vpack.c.bf16 %v630, %v551
      %v944 = vpack.c.bf16 %v631, %v552
      %v945 = vpack.c.bf16 %v632, %v553
      %v946 = vpack.c.bf16 %v633, %v554
      %v947 = vpack.c.bf16 %v634, %v555
      %v948 = vpack.c.bf16 %v635, %v556
      %v949 = vpack.c.bf16 %v636, %v557
      %v950 = vpack.c.bf16 %v637, %v558
      %v951 = vpack.c.bf16 %v638, %v559
      %v952 = vpack.c.bf16 %v639, %v560
      %v953 = vpack.c.bf16 %v640, %v561
      %v954 = vpack.c.bf16 %v641, %v562
      %v955 = vpack.c.bf16 %v642, %v563
      %v956 = vpack.c.bf16 %v643, %v564
      %v957 = vpack.c.bf16 %v644, %v565
      %v958 = vpack.c.bf16 %v645, %v566
      %v959 = vpack.c.bf16 %v785, %v706
      %v960 = vpack.c.bf16 %v786, %v707
      %v961 = vpack.c.bf16 %v787, %v708
      %v962 = vpack.c.bf16 %v788, %v709
      %v963 = vpack.c.bf16 %v789, %v710
      %v964 = vpack.c.bf16 %v790, %v711
      %v965 = vpack.c.bf16 %v791, %v712
      %v966 = vpack.c.bf16 %v792, %v713
      %v967 = vpack.c.bf16 %v793, %v714
      %v968 = vpack.c.bf16 %v794, %v715
      %v969 = vpack.c.bf16 %v795, %v716
      %v970 = vpack.c.bf16 %v796, %v717
      %v971 = vpack.c.bf16 %v797, %v718
      %v972 = vpack.c.bf16 %v798, %v719
      %v973 = vpack.c.bf16 %v799, %v720
      %v974 = vpack.c.bf16 %v800, %v721
      %v975 = vpack.c.bf16 %v801, %v722
      %v976 = vpack.c.bf16 %v802, %v723
      %v977 = vpack.c.bf16 %v803, %v724
      %v978 = vpack.c.bf16 %v864, %v864
      %v979 = vpack.c.bf16 %v865, %v865
      %v980 = vpack.c.bf16 %v866, %v866
      %v981 = vpack.c.bf16 %v867, %v867
      %v982 = vpack.c.bf16 %v868, %v868
      %v983 = vpack.c.bf16 %v869, %v869
      %v984 = vpack.c.bf16 %v870, %v870
      %v985 = vpack.c.bf16 %v871, %v871
      %v986 = vpack.c.bf16 %v872, %v872
      %v987 = vpack.c.bf16 %v873, %v873
      %v988 = vpack.c.bf16 %v874, %v874
      %v989 = vpack.c.bf16 %v875, %v875
      %v990 = vpack.c.bf16 %v876, %v876
      %v991 = vpack.c.bf16 %v877, %v877
      %v992 = vpack.c.bf16 %v878, %v878
      %v993 = vpack.c.bf16 %v879, %v879
      %v994 = vpack.c.bf16 %v880, %v880
      %v995 = vpack.c.bf16 %v881, %v881
      %v996 = vpack.c.bf16 %v882, %v882
      %998 = vset.pattern.permute.xlu0 0
      %999 = vperm.xlu0 %998, %v248
      %v1000 = vpop.permute.xlu0 %999
      %1003 = vset.pattern.permute.xlu0 0
      %1004 = vperm.xlu0 %1003, %v249
      %v1005 = vpop.permute.xlu0 %1004
      %v1009 = vunpack.c.l.b16 %v246
      %v1010 = vunpack.c.l.b16 %v247
      %v1011 = vpack.c.b16 %v1010, %v1009
      %vm1012 = vcmask 588800
      %v1014 = vsel %vm1012, %v1011, 0
      %vm1016 = vcmask 1043456
      %v1018 = vsel %vm1016, %v978, 0
      %v1021 = vsel %vm1016, %v979, 0
      %v1024 = vsel %vm1016, %v980, 0
      %v1027 = vsel %vm1016, %v981, 0
      %v1030 = vsel %vm1016, %v982, 0
      %v1033 = vsel %vm1016, %v983, 0
      %v1036 = vsel %vm1016, %v984, 0
      %v1039 = vsel %vm1016, %v985, 0
      %v1042 = vsel %vm1016, %v986, 0
      %v1045 = vsel %vm1016, %v987, 0
      %v1048 = vsel %vm1016, %v988, 0
      %v1051 = vsel %vm1016, %v989, 0
      %v1054 = vsel %vm1016, %v990, 0
      %v1057 = vsel %vm1016, %v991, 0
      %v1060 = vsel %vm1016, %v992, 0
      %v1063 = vsel %vm1016, %v993, 0
      %v1066 = vsel %vm1016, %v994, 0
      %v1069 = vsel %vm1016, %v995, 0
      %v1072 = vsel %vm1016, %v996, 0
      %1074 = vmatprep.subr.bf16.mxu0 %v903
      %1075 = vmatpush1.bf16.msra.mxu0 %v902
      %1076 = vmatprep.subr.bf16.mxu0 %v922
      %1077 = vmatpush1.bf16.msra.mxu0 %v921
      %1078 = vmatprep.subr.bf16.mxu0 %v941
      %1079 = vmatpush1.bf16.msra.mxu0 %v940
      %1080 = vmatprep.subr.bf16.mxu0 %v960
      %1081 = vmatpush1.bf16.msra.mxu0 %v959
      %1082 = vmatprep.subr.bf16.mxu0 %v1021
      %1083 = vmatpush1.bf16.msra.mxu0 %v1018
      %1084 = vmatprep.subr.bf16.mxu0 0
      %1085 = vmatpush1.bf16.msra.mxu0 0
      %1086 = vmatprep.subr.bf16.mxu0 0
      %1087 = vmatpush1.bf16.msra.mxu0 0
      %1088 = vmatprep.subr.bf16.mxu0 0
      %1089 = vmatpush1.bf16.msra.mxu0 0
      %1090 = vmatprep.subr.bf16.mxu0 0
      %1091 = vmatpush1.bf16.msra.mxu0 0
      %1092 = vmatprep.subr.bf16.mxu0 0
      %1093 = vmatpush1.bf16.msra.mxu0 0
      %1094 = vmatprep.subr.bf16.mxu0 0
      %1095 = vmatpush1.bf16.msra.mxu0 0
      %1096 = vmatprep.subr.bf16.mxu0 0
      %1097 = vmatpush1.bf16.msra.mxu0 0
      %1098 = vmatprep.subr.bf16.mxu0 0
      %1099 = vmatpush1.bf16.msra.mxu0 0
      %1100 = vmatprep.subr.bf16.mxu0 0
      %1101 = vmatpush1.bf16.msra.mxu0 0
      %1102 = vmatprep.subr.bf16.mxu0 0
      %1103 = vmatpush1.bf16.msra.mxu0 0
      %1104 = vmatprep.subr.bf16.mxu0 0
      %1105 = vmatpush1.bf16.msra.mxu0 0
      %1106 = vmatprep.mubr.bf16.mxu0 0
      %1107 = vmatmul.mubr.bf16.gmra.mrb[0].mxu0 %v1014
      %v1108 = vpop.f32.mrb[0].mxu0
      %v1109 = vadd.f32 %v1000, %v1108
      %v1110 = vpop.f32.mrb[0].mxu0
      %v1111 = vadd.f32 %v1000, %v1110
      %v1112 = vpop.f32.mrb[0].mxu0
      %v1113 = vadd.f32 %v1005, %v1112
      %v1114 = vpop.f32.mrb[0].mxu0
      %v1115 = vadd.f32 %v1005, %v1114
      %1116 = vdwg.mxu0
      %1117 = vmatprep.subr.bf16.mxu0 %v905
      %1118 = vmatpush1.bf16.msra.mxu0 %v904
      %1119 = vmatprep.subr.bf16.mxu0 %v924
      %1120 = vmatpush1.bf16.msra.mxu0 %v923
      %1121 = vmatprep.subr.bf16.mxu0 %v943
      %1122 = vmatpush1.bf16.msra.mxu0 %v942
      %1123 = vmatprep.subr.bf16.mxu0 %v962
      %1124 = vmatpush1.bf16.msra.mxu0 %v961
      %1125 = vmatprep.subr.bf16.mxu0 %v1027
      %1126 = vmatpush1.bf16.msra.mxu0 %v1024
      %1127 = vmatprep.subr.bf16.mxu0 0
      %1128 = vmatpush1.bf16.msra.mxu0 0
      %1129 = vmatprep.subr.bf16.mxu0 0
      %1130 = vmatpush1.bf16.msra.mxu0 0
      %1131 = vmatprep.subr.bf16.mxu0 0
      %1132 = vmatpush1.bf16.msra.mxu0 0
      %1133 = vmatprep.subr.bf16.mxu0 0
      %1134 = vmatpush1.bf16.msra.mxu0 0
      %1135 = vmatprep.subr.bf16.mxu0 0
      %1136 = vmatpush1.bf16.msra.mxu0 0
      %1137 = vmatprep.subr.bf16.mxu0 0
      %1138 = vmatpush1.bf16.msra.mxu0 0
      %1139 = vmatprep.subr.bf16.mxu0 0
      %1140 = vmatpush1.bf16.msra.mxu0 0
      %1141 = vmatprep.subr.bf16.mxu0 0
      %1142 = vmatpush1.bf16.msra.mxu0 0
      %1143 = vmatprep.subr.bf16.mxu0 0
      %1144 = vmatpush1.bf16.msra.mxu0 0
      %1145 = vmatprep.subr.bf16.mxu0 0
      %1146 = vmatpush1.bf16.msra.mxu0 0
      %1147 = vmatprep.subr.bf16.mxu0 0
      %1148 = vmatpush1.bf16.msra.mxu0 0
      %1149 = vmatprep.mubr.bf16.mxu0 0
      %1150 = vmatmul.mubr.bf16.gmra.mrb[0].mxu0 %v1014
      %v1151 = vpop.f32.mrb[0].mxu0
      %v1152 = vadd.f32 %v1000, %v1151
      %v1153 = vpop.f32.mrb[0].mxu0
      %v1154 = vadd.f32 %v1000, %v1153
      %v1155 = vpop.f32.mrb[0].mxu0
      %v1156 = vadd.f32 %v1005, %v1155
      %v1157 = vpop.f32.mrb[0].mxu0
      %v1158 = vadd.f32 %v1005, %v1157
      %1159 = vdwg.mxu0
      %1160 = vmatprep.subr.bf16.mxu0 %v907
      %1161 = vmatpush1.bf16.msra.mxu0 %v906
      %1162 = vmatprep.subr.bf16.mxu0 %v926
      %1163 = vmatpush1.bf16.msra.mxu0 %v925
      %1164 = vmatprep.subr.bf16.mxu0 %v945
      %1165 = vmatpush1.bf16.msra.mxu0 %v944
      %1166 = vmatprep.subr.bf16.mxu0 %v964
      %1167 = vmatpush1.bf16.msra.mxu0 %v963
      %1168 = vmatprep.subr.bf16.mxu0 %v1033
      %1169 = vmatpush1.bf16.msra.mxu0 %v1030
      %1170 = vmatprep.subr.bf16.mxu0 0
      %1171 = vmatpush1.bf16.msra.mxu0 0
      %1172 = vmatprep.subr.bf16.mxu0 0
      %1173 = vmatpush1.bf16.msra.mxu0 0
      %1174 = vmatprep.subr.bf16.mxu0 0
      %1175 = vmatpush1.bf16.msra.mxu0 0
      %1176 = vmatprep.subr.bf16.mxu0 0
      %1177 = vmatpush1.bf16.msra.mxu0 0
      %1178 = vmatprep.subr.bf16.mxu0 0
      %1179 = vmatpush1.bf16.msra.mxu0 0
      %1180 = vmatprep.subr.bf16.mxu0 0
      %1181 = vmatpush1.bf16.msra.mxu0 0
      %1182 = vmatprep.subr.bf16.mxu0 0
      %1183 = vmatpush1.bf16.msra.mxu0 0
      %1184 = vmatprep.subr.bf16.mxu0 0
      %1185 = vmatpush1.bf16.msra.mxu0 0
      %1186 = vmatprep.subr.bf16.mxu0 0
      %1187 = vmatpush1.bf16.msra.mxu0 0
      %1188 = vmatprep.subr.bf16.mxu0 0
      %1189 = vmatpush1.bf16.msra.mxu0 0
      %1190 = vmatprep.subr.bf16.mxu0 0
      %1191 = vmatpush1.bf16.msra.mxu0 0
      %1192 = vmatprep.mubr.bf16.mxu0 0
      %1193 = vmatmul.mubr.bf16.gmra.mrb[0].mxu0 %v1014
      %v1194 = vpop.f32.mrb[0].mxu0
      %v1195 = vadd.f32 %v1000, %v1194
      %v1196 = vpop.f32.mrb[0].mxu0
      %v1197 = vadd.f32 %v1000, %v1196
      %v1198 = vpop.f32.mrb[0].mxu0
      %v1199 = vadd.f32 %v1005, %v1198
      %v1200 = vpop.f32.mrb[0].mxu0
      %v1201 = vadd.f32 %v1005, %v1200
      %1202 = vdwg.mxu0
      %1203 = vmatprep.subr.bf16.mxu0 %v909
      %1204 = vmatpush1.bf16.msra.mxu0 %v908
      %1205 = vmatprep.subr.bf16.mxu0 %v928
      %1206 = vmatpush1.bf16.msra.mxu0 %v927
      %1207 = vmatprep.subr.bf16.mxu0 %v947
      %1208 = vmatpush1.bf16.msra.mxu0 %v946
      %1209 = vmatprep.subr.bf16.mxu0 %v966
      %1210 = vmatpush1.bf16.msra.mxu0 %v965
      %1211 = vmatprep.subr.bf16.mxu0 %v1039
      %1212 = vmatpush1.bf16.msra.mxu0 %v1036
      %1213 = vmatprep.subr.bf16.mxu0 0
      %1214 = vmatpush1.bf16.msra.mxu0 0
      %1215 = vmatprep.subr.bf16.mxu0 0
      %1216 = vmatpush1.bf16.msra.mxu0 0
      %1217 = vmatprep.subr.bf16.mxu0 0
      %1218 = vmatpush1.bf16.msra.mxu0 0
      %1219 = vmatprep.subr.bf16.mxu0 0
      %1220 = vmatpush1.bf16.msra.mxu0 0
      %1221 = vmatprep.subr.bf16.mxu0 0
      %1222 = vmatpush1.bf16.msra.mxu0 0
      %1223 = vmatprep.subr.bf16.mxu0 0
      %1224 = vmatpush1.bf16.msra.mxu0 0
      %1225 = vmatprep.subr.bf16.mxu0 0
      %1226 = vmatpush1.bf16.msra.mxu0 0
      %1227 = vmatprep.subr.bf16.mxu0 0
      %1228 = vmatpush1.bf16.msra.mxu0 0
      %1229 = vmatprep.subr.bf16.mxu0 0
      %1230 = vmatpush1.bf16.msra.mxu0 0
      %1231 = vmatprep.subr.bf16.mxu0 0
      %1232 = vmatpush1.bf16.msra.mxu0 0
      %1233 = vmatprep.subr.bf16.mxu0 0
      %1234 = vmatpush1.bf16.msra.mxu0 0
      %1235 = vmatprep.mubr.bf16.mxu0 0
      %1236 = vmatmul.mubr.bf16.gmra.mrb[0].mxu0 %v1014
      %v1237 = vpop.f32.mrb[0].mxu0
      %v1238 = vadd.f32 %v1000, %v1237
      %v1239 = vpop.f32.mrb[0].mxu0
      %v1240 = vadd.f32 %v1000, %v1239
      %v1241 = vpop.f32.mrb[0].mxu0
      %v1242 = vadd.f32 %v1005, %v1241
      %v1243 = vpop.f32.mrb[0].mxu0
      %v1244 = vadd.f32 %v1005, %v1243
      %1245 = vdwg.mxu0
      %1246 = vmatprep.subr.bf16.mxu0 %v911
      %1247 = vmatpush1.bf16.msra.mxu0 %v910
      %1248 = vmatprep.subr.bf16.mxu0 %v930
      %1249 = vmatpush1.bf16.msra.mxu0 %v929
      %1250 = vmatprep.subr.bf16.mxu0 %v949
      %1251 = vmatpush1.bf16.msra.mxu0 %v948
      %1252 = vmatprep.subr.bf16.mxu0 %v968
      %1253 = vmatpush1.bf16.msra.mxu0 %v967
      %1254 = vmatprep.subr.bf16.mxu0 %v1045
      %1255 = vmatpush1.bf16.msra.mxu0 %v1042
      %1256 = vmatprep.subr.bf16.mxu0 0
      %1257 = vmatpush1.bf16.msra.mxu0 0
      %1258 = vmatprep.subr.bf16.mxu0 0
      %1259 = vmatpush1.bf16.msra.mxu0 0
      %1260 = vmatprep.subr.bf16.mxu0 0
      %1261 = vmatpush1.bf16.msra.mxu0 0
      %1262 = vmatprep.subr.bf16.mxu0 0
      %1263 = vmatpush1.bf16.msra.mxu0 0
      %1264 = vmatprep.subr.bf16.mxu0 0
      %1265 = vmatpush1.bf16.msra.mxu0 0
      %1266 = vmatprep.subr.bf16.mxu0 0
      %1267 = vmatpush1.bf16.msra.mxu0 0
      %1268 = vmatprep.subr.bf16.mxu0 0
      %1269 = vmatpush1.bf16.msra.mxu0 0
      %1270 = vmatprep.subr.bf16.mxu0 0
      %1271 = vmatpush1.bf16.msra.mxu0 0
      %1272 = vmatprep.subr.bf16.mxu0 0
      %1273 = vmatpush1.bf16.msra.mxu0 0
      %1274 = vmatprep.subr.bf16.mxu0 0
      %1275 = vmatpush1.bf16.msra.mxu0 0
      %1276 = vmatprep.subr.bf16.mxu0 0
      %1277 = vmatpush1.bf16.msra.mxu0 0
      %1278 = vmatprep.mubr.bf16.mxu0 0
      %1279 = vmatmul.mubr.bf16.gmra.mrb[0].mxu0 %v1014
      %v1280 = vpop.f32.mrb[0].mxu0
      %v1281 = vadd.f32 %v1000, %v1280
      %v1282 = vpop.f32.mrb[0].mxu0
      %v1283 = vadd.f32 %v1000, %v1282
      %v1284 = vpop.f32.mrb[0].mxu0
      %v1285 = vadd.f32 %v1005, %v1284
      %v1286 = vpop.f32.mrb[0].mxu0
      %v1287 = vadd.f32 %v1005, %v1286
      %1288 = vdwg.mxu0
      %1289 = vmatprep.subr.bf16.mxu0 %v913
      %1290 = vmatpush1.bf16.msra.mxu0 %v912
      %1291 = vmatprep.subr.bf16.mxu0 %v932
      %1292 = vmatpush1.bf16.msra.mxu0 %v931
      %1293 = vmatprep.subr.bf16.mxu0 %v951
      %1294 = vmatpush1.bf16.msra.mxu0 %v950
      %1295 = vmatprep.subr.bf16.mxu0 %v970
      %1296 = vmatpush1.bf16.msra.mxu0 %v969
      %1297 = vmatprep.subr.bf16.mxu0 %v1051
      %1298 = vmatpush1.bf16.msra.mxu0 %v1048
      %1299 = vmatprep.subr.bf16.mxu0 0
      %1300 = vmatpush1.bf16.msra.mxu0 0
      %1301 = vmatprep.subr.bf16.mxu0 0
      %1302 = vmatpush1.bf16.msra.mxu0 0
      %1303 = vmatprep.subr.bf16.mxu0 0
      %1304 = vmatpush1.bf16.msra.mxu0 0
      %1305 = vmatprep.subr.bf16.mxu0 0
      %1306 = vmatpush1.bf16.msra.mxu0 0
      %1307 = vmatprep.subr.bf16.mxu0 0
      %1308 = vmatpush1.bf16.msra.mxu0 0
      %1309 = vmatprep.subr.bf16.mxu0 0
      %1310 = vmatpush1.bf16.msra.mxu0 0
      %1311 = vmatprep.subr.bf16.mxu0 0
      %1312 = vmatpush1.bf16.msra.mxu0 0
      %1313 = vmatprep.subr.bf16.mxu0 0
      %1314 = vmatpush1.bf16.msra.mxu0 0
      %1315 = vmatprep.subr.bf16.mxu0 0
      %1316 = vmatpush1.bf16.msra.mxu0 0
      %1317 = vmatprep.subr.bf16.mxu0 0
      %1318 = vmatpush1.bf16.msra.mxu0 0
      %1319 = vmatprep.subr.bf16.mxu0 0
      %1320 = vmatpush1.bf16.msra.mxu0 0
      %1321 = vmatprep.mubr.bf16.mxu0 0
      %1322 = vmatmul.mubr.bf16.gmra.mrb[0].mxu0 %v1014
      %v1323 = vpop.f32.mrb[0].mxu0
      %v1324 = vadd.f32 %v1000, %v1323
      %v1325 = vpop.f32.mrb[0].mxu0
      %v1326 = vadd.f32 %v1000, %v1325
      %v1327 = vpop.f32.mrb[0].mxu0
      %v1328 = vadd.f32 %v1005, %v1327
      %v1329 = vpop.f32.mrb[0].mxu0
      %v1330 = vadd.f32 %v1005, %v1329
      %1331 = vdwg.mxu0
      %1332 = vmatprep.subr.bf16.mxu0 %v915
      %1333 = vmatpush1.bf16.msra.mxu0 %v914
      %1334 = vmatprep.subr.bf16.mxu0 %v934
      %1335 = vmatpush1.bf16.msra.mxu0 %v933
      %1336 = vmatprep.subr.bf16.mxu0 %v953
      %1337 = vmatpush1.bf16.msra.mxu0 %v952
      %1338 = vmatprep.subr.bf16.mxu0 %v972
      %1339 = vmatpush1.bf16.msra.mxu0 %v971
      %1340 = vmatprep.subr.bf16.mxu0 %v1057
      %1341 = vmatpush1.bf16.msra.mxu0 %v1054
      %1342 = vmatprep.subr.bf16.mxu0 0
      %1343 = vmatpush1.bf16.msra.mxu0 0
      %1344 = vmatprep.subr.bf16.mxu0 0
      %1345 = vmatpush1.bf16.msra.mxu0 0
      %1346 = vmatprep.subr.bf16.mxu0 0
      %1347 = vmatpush1.bf16.msra.mxu0 0
      %1348 = vmatprep.subr.bf16.mxu0 0
      %1349 = vmatpush1.bf16.msra.mxu0 0
      %1350 = vmatprep.subr.bf16.mxu0 0
      %1351 = vmatpush1.bf16.msra.mxu0 0
      %1352 = vmatprep.subr.bf16.mxu0 0
      %1353 = vmatpush1.bf16.msra.mxu0 0
      %1354 = vmatprep.subr.bf16.mxu0 0
      %1355 = vmatpush1.bf16.msra.mxu0 0
      %1356 = vmatprep.subr.bf16.mxu0 0
      %1357 = vmatpush1.bf16.msra.mxu0 0
      %1358 = vmatprep.subr.bf16.mxu0 0
      %1359 = vmatpush1.bf16.msra.mxu0 0
      %1360 = vmatprep.subr.bf16.mxu0 0
      %1361 = vmatpush1.bf16.msra.mxu0 0
      %1362 = vmatprep.subr.bf16.mxu0 0
      %1363 = vmatpush1.bf16.msra.mxu0 0
      %1364 = vmatprep.mubr.bf16.mxu0 0
      %1365 = vmatmul.mubr.bf16.gmra.mrb[0].mxu0 %v1014
      %v1366 = vpop.f32.mrb[0].mxu0
      %v1367 = vadd.f32 %v1000, %v1366
      %v1368 = vpop.f32.mrb[0].mxu0
      %v1369 = vadd.f32 %v1000, %v1368
      %v1370 = vpop.f32.mrb[0].mxu0
      %v1371 = vadd.f32 %v1005, %v1370
      %v1372 = vpop.f32.mrb[0].mxu0
      %v1373 = vadd.f32 %v1005, %v1372
      %1374 = vdwg.mxu0
      %1375 = vmatprep.subr.bf16.mxu0 %v917
      %1376 = vmatpush1.bf16.msra.mxu0 %v916
      %1377 = vmatprep.subr.bf16.mxu0 %v936
      %1378 = vmatpush1.bf16.msra.mxu0 %v935
      %1379 = vmatprep.subr.bf16.mxu0 %v955
      %1380 = vmatpush1.bf16.msra.mxu0 %v954
      %1381 = vmatprep.subr.bf16.mxu0 %v974
      %1382 = vmatpush1.bf16.msra.mxu0 %v973
      %1383 = vmatprep.subr.bf16.mxu0 %v1063
      %1384 = vmatpush1.bf16.msra.mxu0 %v1060
      %1385 = vmatprep.subr.bf16.mxu0 0
      %1386 = vmatpush1.bf16.msra.mxu0 0
      %1387 = vmatprep.subr.bf16.mxu0 0
      %1388 = vmatpush1.bf16.msra.mxu0 0
      %1389 = vmatprep.subr.bf16.mxu0 0
      %1390 = vmatpush1.bf16.msra.mxu0 0
      %1391 = vmatprep.subr.bf16.mxu0 0
      %1392 = vmatpush1.bf16.msra.mxu0 0
      %1393 = vmatprep.subr.bf16.mxu0 0
      %1394 = vmatpush1.bf16.msra.mxu0 0
      %1395 = vmatprep.subr.bf16.mxu0 0
      %1396 = vmatpush1.bf16.msra.mxu0 0
      %1397 = vmatprep.subr.bf16.mxu0 0
      %1398 = vmatpush1.bf16.msra.mxu0 0
      %1399 = vmatprep.subr.bf16.mxu0 0
      %1400 = vmatpush1.bf16.msra.mxu0 0
      %1401 = vmatprep.subr.bf16.mxu0 0
      %1402 = vmatpush1.bf16.msra.mxu0 0
      %1403 = vmatprep.subr.bf16.mxu0 0
      %1404 = vmatpush1.bf16.msra.mxu0 0
      %1405 = vmatprep.subr.bf16.mxu0 0
      %1406 = vmatpush1.bf16.msra.mxu0 0
      %1407 = vmatprep.mubr.bf16.mxu0 0
      %1408 = vmatmul.mubr.bf16.gmra.mrb[0].mxu0 %v1014
      %v1409 = vpop.f32.mrb[0].mxu0
      %v1410 = vadd.f32 %v1000, %v1409
      %v1411 = vpop.f32.mrb[0].mxu0
      %v1412 = vadd.f32 %v1000, %v1411
      %v1413 = vpop.f32.mrb[0].mxu0
      %v1414 = vadd.f32 %v1005, %v1413
      %v1415 = vpop.f32.mrb[0].mxu0
      %v1416 = vadd.f32 %v1005, %v1415
      %1417 = vdwg.mxu0
      %1418 = vmatprep.subr.bf16.mxu0 %v919
      %1419 = vmatpush1.bf16.msra.mxu0 %v918
      %1420 = vmatprep.subr.bf16.mxu0 %v938
      %1421 = vmatpush1.bf16.msra.mxu0 %v937
      %1422 = vmatprep.subr.bf16.mxu0 %v957
      %1423 = vmatpush1.bf16.msra.mxu0 %v956
      %1424 = vmatprep.subr.bf16.mxu0 %v976
      %1425 = vmatpush1.bf16.msra.mxu0 %v975
      %1426 = vmatprep.subr.bf16.mxu0 %v1069
      %1427 = vmatpush1.bf16.msra.mxu0 %v1066
      %1428 = vmatprep.subr.bf16.mxu0 0
      %1429 = vmatpush1.bf16.msra.mxu0 0
      %1430 = vmatprep.subr.bf16.mxu0 0
      %1431 = vmatpush1.bf16.msra.mxu0 0
      %1432 = vmatprep.subr.bf16.mxu0 0
      %1433 = vmatpush1.bf16.msra.mxu0 0
      %1434 = vmatprep.subr.bf16.mxu0 0
      %1435 = vmatpush1.bf16.msra.mxu0 0
      %1436 = vmatprep.subr.bf16.mxu0 0
      %1437 = vmatpush1.bf16.msra.mxu0 0
      %1438 = vmatprep.subr.bf16.mxu0 0
      %1439 = vmatpush1.bf16.msra.mxu0 0
      %1440 = vmatprep.subr.bf16.mxu0 0
      %1441 = vmatpush1.bf16.msra.mxu0 0
      %1442 = vmatprep.subr.bf16.mxu0 0
      %1443 = vmatpush1.bf16.msra.mxu0 0
      %1444 = vmatprep.subr.bf16.mxu0 0
      %1445 = vmatpush1.bf16.msra.mxu0 0
      %1446 = vmatprep.subr.bf16.mxu0 0
      %1447 = vmatpush1.bf16.msra.mxu0 0
      %1448 = vmatprep.subr.bf16.mxu0 0
      %1449 = vmatpush1.bf16.msra.mxu0 0
      %1450 = vmatprep.mubr.bf16.mxu0 0
      %1451 = vmatmul.mubr.bf16.gmra.mrb[0].mxu0 %v1014
      %v1452 = vpop.f32.mrb[0].mxu0
      %v1453 = vadd.f32 %v1000, %v1452
      %v1454 = vpop.f32.mrb[0].mxu0
      %v1455 = vadd.f32 %v1000, %v1454
      %v1456 = vpop.f32.mrb[0].mxu0
      %v1457 = vadd.f32 %v1005, %v1456
      %v1458 = vpop.f32.mrb[0].mxu0
      %v1459 = vadd.f32 %v1005, %v1458
      %1460 = vdwg.mxu0
      %1461 = vmatprep.subr.bf16.mxu0 0
      %1462 = vmatpush1.bf16.msra.mxu0 %v920
      %1463 = vmatprep.subr.bf16.mxu0 0
      %1464 = vmatpush1.bf16.msra.mxu0 %v939
      %1465 = vmatprep.subr.bf16.mxu0 0
      %1466 = vmatpush1.bf16.msra.mxu0 %v958
      %1467 = vmatprep.subr.bf16.mxu0 0
      %1468 = vmatpush1.bf16.msra.mxu0 %v977
      %1469 = vmatprep.subr.bf16.mxu0 0
      %1470 = vmatpush1.bf16.msra.mxu0 %v1072
      %1471 = vmatprep.subr.bf16.mxu0 0
      %1472 = vmatpush1.bf16.msra.mxu0 0
      %1473 = vmatprep.subr.bf16.mxu0 0
      %1474 = vmatpush1.bf16.msra.mxu0 0
      %1475 = vmatprep.subr.bf16.mxu0 0
      %1476 = vmatpush1.bf16.msra.mxu0 0
      %1477 = vmatprep.subr.bf16.mxu0 0
      %1478 = vmatpush1.bf16.msra.mxu0 0
      %1479 = vmatprep.subr.bf16.mxu0 0
      %1480 = vmatpush1.bf16.msra.mxu0 0
      %1481 = vmatprep.subr.bf16.mxu0 0
      %1482 = vmatpush1.bf16.msra.mxu0 0
      %1483 = vmatprep.subr.bf16.mxu0 0
      %1484 = vmatpush1.bf16.msra.mxu0 0
      %1485 = vmatprep.subr.bf16.mxu0 0
      %1486 = vmatpush1.bf16.msra.mxu0 0
      %1487 = vmatprep.subr.bf16.mxu0 0
      %1488 = vmatpush1.bf16.msra.mxu0 0
      %1489 = vmatprep.subr.bf16.mxu0 0
      %1490 = vmatpush1.bf16.msra.mxu0 0
      %1491 = vmatprep.subr.bf16.mxu0 0
      %1492 = vmatpush1.bf16.msra.mxu0 0
      %1493 = vmatprep.mubr.bf16.mxu0 0
      %1494 = vmatmul.mubr.bf16.gmra.mrb[0].mxu0 %v1014
      %v1495 = vpop.f32.mrb[0].mxu0
      %v1496 = vadd.f32 %v1000, %v1495
      %v1497 = vpop.f32.mrb[0].mxu0
      %v1498 = vpop.f32.mrb[0].mxu0
      %v1499 = vadd.f32 %v1005, %v1498
      %v1500 = vpop.f32.mrb[0].mxu0
      %1501 = vdwg.mxu0
      %v1502 = vmax.f32 %v1109, 0.0
      %v1503 = vmax.f32 %v1111, 0.0
      %v1504 = vmax.f32 %v1152, 0.0
      %v1505 = vmax.f32 %v1154, 0.0
      %v1506 = vmax.f32 %v1195, 0.0
      %v1507 = vmax.f32 %v1197, 0.0
      %v1508 = vmax.f32 %v1238, 0.0
      %v1509 = vmax.f32 %v1240, 0.0
      %v1510 = vmax.f32 %v1281, 0.0
      %v1511 = vmax.f32 %v1283, 0.0
      %v1512 = vmax.f32 %v1324, 0.0
      %v1513 = vmax.f32 %v1326, 0.0
      %v1514 = vmax.f32 %v1367, 0.0
      %v1515 = vmax.f32 %v1369, 0.0
      %v1516 = vmax.f32 %v1410, 0.0
      %v1517 = vmax.f32 %v1412, 0.0
      %v1518 = vmax.f32 %v1453, 0.0
      %v1519 = vmax.f32 %v1455, 0.0
      %v1520 = vmax.f32 %v1496, 0.0
      %v1521 = vmax.f32 %v1113, 0.0
      %v1522 = vmax.f32 %v1115, 0.0
      %v1523 = vmax.f32 %v1156, 0.0
      %v1524 = vmax.f32 %v1158, 0.0
      %v1525 = vmax.f32 %v1199, 0.0
      %v1526 = vmax.f32 %v1201, 0.0
      %v1527 = vmax.f32 %v1242, 0.0
      %v1528 = vmax.f32 %v1244, 0.0
      %v1529 = vmax.f32 %v1285, 0.0
      %v1530 = vmax.f32 %v1287, 0.0
      %v1531 = vmax.f32 %v1328, 0.0
      %v1532 = vmax.f32 %v1330, 0.0
      %v1533 = vmax.f32 %v1371, 0.0
      %v1534 = vmax.f32 %v1373, 0.0
      %v1535 = vmax.f32 %v1414, 0.0
      %v1536 = vmax.f32 %v1416, 0.0
      %v1537 = vmax.f32 %v1457, 0.0
      %v1538 = vmax.f32 %v1459, 0.0
      %v1539 = vmax.f32 %v1499, 0.0
      %v1540 = vld [vmem:[%s3] sm:$0xff]
      %v1541 = vld [vmem:[%s3 + $0x8] sm:$0xff]
      %v1542 = vld [vmem:[%s4] sm:$0xff]
      %v1543 = vld [vmem:[%s4 + $0x8] sm:$0xff]
      %1582 = vrot.lane.b32.xlu0 %v1502, 127
      %v1583 = vpop.permute.xlu0 %1582
      %1584 = vrot.lane.b32.xlu0 %v1503, 127
      %v1585 = vpop.permute.xlu0 %1584
      %1586 = vrot.lane.b32.xlu0 %v1504, 127
      %v1587 = vpop.permute.xlu0 %1586
      %1588 = vrot.lane.b32.xlu0 %v1505, 127
      %v1589 = vpop.permute.xlu0 %1588
      %1590 = vrot.lane.b32.xlu0 %v1506, 127
      %v1591 = vpop.permute.xlu0 %1590
      %1592 = vrot.lane.b32.xlu0 %v1507, 127
      %v1593 = vpop.permute.xlu0 %1592
      %1594 = vrot.lane.b32.xlu0 %v1508, 127
      %v1595 = vpop.permute.xlu0 %1594
      %1596 = vrot.lane.b32.xlu0 %v1509, 127
      %v1597 = vpop.permute.xlu0 %1596
      %1598 = vrot.lane.b32.xlu0 %v1510, 127
      %v1599 = vpop.permute.xlu0 %1598
      %1600 = vrot.lane.b32.xlu0 %v1511, 127
      %v1601 = vpop.permute.xlu0 %1600
      %1602 = vrot.lane.b32.xlu0 %v1512, 127
      %v1603 = vpop.permute.xlu0 %1602
      %1604 = vrot.lane.b32.xlu0 %v1513, 127
      %v1605 = vpop.permute.xlu0 %1604
      %1606 = vrot.lane.b32.xlu0 %v1514, 127
      %v1607 = vpop.permute.xlu0 %1606
      %1608 = vrot.lane.b32.xlu0 %v1515, 127
      %v1609 = vpop.permute.xlu0 %1608
      %1610 = vrot.lane.b32.xlu0 %v1516, 127
      %v1611 = vpop.permute.xlu0 %1610
      %1612 = vrot.lane.b32.xlu0 %v1517, 127
      %v1613 = vpop.permute.xlu0 %1612
      %1614 = vrot.lane.b32.xlu0 %v1518, 127
      %v1615 = vpop.permute.xlu0 %1614
      %1616 = vrot.lane.b32.xlu0 %v1519, 127
      %v1617 = vpop.permute.xlu0 %1616
      %1618 = vrot.lane.b32.xlu0 %v1520, 127
      %v1619 = vpop.permute.xlu0 %1618
      %1620 = vrot.lane.b32.xlu0 %v1521, 127
      %v1621 = vpop.permute.xlu0 %1620
      %1622 = vrot.lane.b32.xlu0 %v1522, 127
      %v1623 = vpop.permute.xlu0 %1622
      %1624 = vrot.lane.b32.xlu0 %v1523, 127
      %v1625 = vpop.permute.xlu0 %1624
      %1626 = vrot.lane.b32.xlu0 %v1524, 127
      %v1627 = vpop.permute.xlu0 %1626
      %1628 = vrot.lane.b32.xlu0 %v1525, 127
      %v1629 = vpop.permute.xlu0 %1628
      %1630 = vrot.lane.b32.xlu0 %v1526, 127
      %v1631 = vpop.permute.xlu0 %1630
      %1632 = vrot.lane.b32.xlu0 %v1527, 127
      %v1633 = vpop.permute.xlu0 %1632
      %1634 = vrot.lane.b32.xlu0 %v1528, 127
      %v1635 = vpop.permute.xlu0 %1634
      %1636 = vrot.lane.b32.xlu0 %v1529, 127
      %v1637 = vpop.permute.xlu0 %1636
      %1638 = vrot.lane.b32.xlu0 %v1530, 127
      %v1639 = vpop.permute.xlu0 %1638
      %1640 = vrot.lane.b32.xlu0 %v1531, 127
      %v1641 = vpop.permute.xlu0 %1640
      %1642 = vrot.lane.b32.xlu0 %v1532, 127
      %v1643 = vpop.permute.xlu0 %1642
      %1644 = vrot.lane.b32.xlu0 %v1533, 127
      %v1645 = vpop.permute.xlu0 %1644
      %1646 = vrot.lane.b32.xlu0 %v1534, 127
      %v1647 = vpop.permute.xlu0 %1646
      %1648 = vrot.lane.b32.xlu0 %v1535, 127
      %v1649 = vpop.permute.xlu0 %1648
      %1650 = vrot.lane.b32.xlu0 %v1536, 127
      %v1651 = vpop.permute.xlu0 %1650
      %1652 = vrot.lane.b32.xlu0 %v1537, 127
      %v1653 = vpop.permute.xlu0 %1652
      %1654 = vrot.lane.b32.xlu0 %v1538, 127
      %v1655 = vpop.permute.xlu0 %1654
      %1656 = vrot.lane.b32.xlu0 %v1539, 127
      %v1657 = vpop.permute.xlu0 %1656
      %v1658 = vsel %vm310, %v1583, %v1585
      %v1659 = vsel %vm310, %v1585, %v1587
      %v1660 = vsel %vm310, %v1587, %v1589
      %v1661 = vsel %vm310, %v1589, %v1591
      %v1662 = vsel %vm310, %v1591, %v1593
      %v1663 = vsel %vm310, %v1593, %v1595
      %v1664 = vsel %vm310, %v1595, %v1597
      %v1665 = vsel %vm310, %v1597, %v1599
      %v1666 = vsel %vm310, %v1599, %v1601
      %v1667 = vsel %vm310, %v1601, %v1603
      %v1668 = vsel %vm310, %v1603, %v1605
      %v1669 = vsel %vm310, %v1605, %v1607
      %v1670 = vsel %vm310, %v1607, %v1609
      %v1671 = vsel %vm310, %v1609, %v1611
      %v1672 = vsel %vm310, %v1611, %v1613
      %v1673 = vsel %vm310, %v1613, %v1615
      %v1674 = vsel %vm310, %v1615, %v1617
      %v1675 = vsel %vm310, %v1617, %v1619
      %v1676 = vsel %vm310, %v1621, %v1623
      %v1677 = vsel %vm310, %v1623, %v1625
      %v1678 = vsel %vm310, %v1625, %v1627
      %v1679 = vsel %vm310, %v1627, %v1629
      %v1680 = vsel %vm310, %v1629, %v1631
      %v1681 = vsel %vm310, %v1631, %v1633
      %v1682 = vsel %vm310, %v1633, %v1635
      %v1683 = vsel %vm310, %v1635, %v1637
      %v1684 = vsel %vm310, %v1637, %v1639
      %v1685 = vsel %vm310, %v1639, %v1641
      %v1686 = vsel %vm310, %v1641, %v1643
      %v1687 = vsel %vm310, %v1643, %v1645
      %v1688 = vsel %vm310, %v1645, %v1647
      %v1689 = vsel %vm310, %v1647, %v1649
      %v1690 = vsel %vm310, %v1649, %v1651
      %v1691 = vsel %vm310, %v1651, %v1653
      %v1692 = vsel %vm310, %v1653, %v1655
      %v1693 = vsel %vm310, %v1655, %v1657
      %1730 = vrot.lane.b32.xlu0 %v1502, 126
      %v1731 = vpop.permute.xlu0 %1730
      %1732 = vrot.lane.b32.xlu0 %v1503, 126
      %v1733 = vpop.permute.xlu0 %1732
      %1734 = vrot.lane.b32.xlu0 %v1504, 126
      %v1735 = vpop.permute.xlu0 %1734
      %1736 = vrot.lane.b32.xlu0 %v1505, 126
      %v1737 = vpop.permute.xlu0 %1736
      %1738 = vrot.lane.b32.xlu0 %v1506, 126
      %v1739 = vpop.permute.xlu0 %1738
      %1740 = vrot.lane.b32.xlu0 %v1507, 126
      %v1741 = vpop.permute.xlu0 %1740
      %1742 = vrot.lane.b32.xlu0 %v1508, 126
      %v1743 = vpop.permute.xlu0 %1742
      %1744 = vrot.lane.b32.xlu0 %v1509, 126
      %v1745 = vpop.permute.xlu0 %1744
      %1746 = vrot.lane.b32.xlu0 %v1510, 126
      %v1747 = vpop.permute.xlu0 %1746
      %1748 = vrot.lane.b32.xlu0 %v1511, 126
      %v1749 = vpop.permute.xlu0 %1748
      %1750 = vrot.lane.b32.xlu0 %v1512, 126
      %v1751 = vpop.permute.xlu0 %1750
      %1752 = vrot.lane.b32.xlu0 %v1513, 126
      %v1753 = vpop.permute.xlu0 %1752
      %1754 = vrot.lane.b32.xlu0 %v1514, 126
      %v1755 = vpop.permute.xlu0 %1754
      %1756 = vrot.lane.b32.xlu0 %v1515, 126
      %v1757 = vpop.permute.xlu0 %1756
      %1758 = vrot.lane.b32.xlu0 %v1516, 126
      %v1759 = vpop.permute.xlu0 %1758
      %1760 = vrot.lane.b32.xlu0 %v1517, 126
      %v1761 = vpop.permute.xlu0 %1760
      %1762 = vrot.lane.b32.xlu0 %v1518, 126
      %v1763 = vpop.permute.xlu0 %1762
      %1764 = vrot.lane.b32.xlu0 %v1519, 126
      %v1765 = vpop.permute.xlu0 %1764
      %1766 = vrot.lane.b32.xlu0 %v1520, 126
      %v1767 = vpop.permute.xlu0 %1766
      %1768 = vrot.lane.b32.xlu0 %v1521, 126
      %v1769 = vpop.permute.xlu0 %1768
      %1770 = vrot.lane.b32.xlu0 %v1522, 126
      %v1771 = vpop.permute.xlu0 %1770
      %1772 = vrot.lane.b32.xlu0 %v1523, 126
      %v1773 = vpop.permute.xlu0 %1772
      %1774 = vrot.lane.b32.xlu0 %v1524, 126
      %v1775 = vpop.permute.xlu0 %1774
      %1776 = vrot.lane.b32.xlu0 %v1525, 126
      %v1777 = vpop.permute.xlu0 %1776
      %1778 = vrot.lane.b32.xlu0 %v1526, 126
      %v1779 = vpop.permute.xlu0 %1778
      %1780 = vrot.lane.b32.xlu0 %v1527, 126
      %v1781 = vpop.permute.xlu0 %1780
      %1782 = vrot.lane.b32.xlu0 %v1528, 126
      %v1783 = vpop.permute.xlu0 %1782
      %1784 = vrot.lane.b32.xlu0 %v1529, 126
      %v1785 = vpop.permute.xlu0 %1784
      %1786 = vrot.lane.b32.xlu0 %v1530, 126
      %v1787 = vpop.permute.xlu0 %1786
      %1788 = vrot.lane.b32.xlu0 %v1531, 126
      %v1789 = vpop.permute.xlu0 %1788
      %1790 = vrot.lane.b32.xlu0 %v1532, 126
      %v1791 = vpop.permute.xlu0 %1790
      %1792 = vrot.lane.b32.xlu0 %v1533, 126
      %v1793 = vpop.permute.xlu0 %1792
      %1794 = vrot.lane.b32.xlu0 %v1534, 126
      %v1795 = vpop.permute.xlu0 %1794
      %1796 = vrot.lane.b32.xlu0 %v1535, 126
      %v1797 = vpop.permute.xlu0 %1796
      %1798 = vrot.lane.b32.xlu0 %v1536, 126
      %v1799 = vpop.permute.xlu0 %1798
      %1800 = vrot.lane.b32.xlu0 %v1537, 126
      %v1801 = vpop.permute.xlu0 %1800
      %1802 = vrot.lane.b32.xlu0 %v1538, 126
      %v1803 = vpop.permute.xlu0 %1802
      %1804 = vrot.lane.b32.xlu0 %v1539, 126
      %v1805 = vpop.permute.xlu0 %1804
      %v1806 = vsel %vm389, %v1731, %v1733
      %v1807 = vsel %vm389, %v1733, %v1735
      %v1808 = vsel %vm389, %v1735, %v1737
      %v1809 = vsel %vm389, %v1737, %v1739
      %v1810 = vsel %vm389, %v1739, %v1741
      %v1811 = vsel %vm389, %v1741, %v1743
      %v1812 = vsel %vm389, %v1743, %v1745
      %v1813 = vsel %vm389, %v1745, %v1747
      %v1814 = vsel %vm389, %v1747, %v1749
      %v1815 = vsel %vm389, %v1749, %v1751
      %v1816 = vsel %vm389, %v1751, %v1753
      %v1817 = vsel %vm389, %v1753, %v1755
      %v1818 = vsel %vm389, %v1755, %v1757
      %v1819 = vsel %vm389, %v1757, %v1759
      %v1820 = vsel %vm389, %v1759, %v1761
      %v1821 = vsel %vm389, %v1761, %v1763
      %v1822 = vsel %vm389, %v1763, %v1765
      %v1823 = vsel %vm389, %v1765, %v1767
      %v1824 = vsel %vm389, %v1769, %v1771
      %v1825 = vsel %vm389, %v1771, %v1773
      %v1826 = vsel %vm389, %v1773, %v1775
      %v1827 = vsel %vm389, %v1775, %v1777
      %v1828 = vsel %vm389, %v1777, %v1779
      %v1829 = vsel %vm389, %v1779, %v1781
      %v1830 = vsel %vm389, %v1781, %v1783
      %v1831 = vsel %vm389, %v1783, %v1785
      %v1832 = vsel %vm389, %v1785, %v1787
      %v1833 = vsel %vm389, %v1787, %v1789
      %v1834 = vsel %vm389, %v1789, %v1791
      %v1835 = vsel %vm389, %v1791, %v1793
      %v1836 = vsel %vm389, %v1793, %v1795
      %v1837 = vsel %vm389, %v1795, %v1797
      %v1838 = vsel %vm389, %v1797, %v1799
      %v1839 = vsel %vm389, %v1799, %v1801
      %v1840 = vsel %vm389, %v1801, %v1803
      %v1841 = vsel %vm389, %v1803, %v1805
      %1878 = vrot.lane.b32.xlu0 %v1502, 80
      %v1879 = vpop.permute.xlu0 %1878
      %1880 = vrot.lane.b32.xlu0 %v1503, 80
      %v1881 = vpop.permute.xlu0 %1880
      %1882 = vrot.lane.b32.xlu0 %v1504, 80
      %v1883 = vpop.permute.xlu0 %1882
      %1884 = vrot.lane.b32.xlu0 %v1505, 80
      %v1885 = vpop.permute.xlu0 %1884
      %1886 = vrot.lane.b32.xlu0 %v1506, 80
      %v1887 = vpop.permute.xlu0 %1886
      %1888 = vrot.lane.b32.xlu0 %v1507, 80
      %v1889 = vpop.permute.xlu0 %1888
      %1890 = vrot.lane.b32.xlu0 %v1508, 80
      %v1891 = vpop.permute.xlu0 %1890
      %1892 = vrot.lane.b32.xlu0 %v1509, 80
      %v1893 = vpop.permute.xlu0 %1892
      %1894 = vrot.lane.b32.xlu0 %v1510, 80
      %v1895 = vpop.permute.xlu0 %1894
      %1896 = vrot.lane.b32.xlu0 %v1511, 80
      %v1897 = vpop.permute.xlu0 %1896
      %1898 = vrot.lane.b32.xlu0 %v1512, 80
      %v1899 = vpop.permute.xlu0 %1898
      %1900 = vrot.lane.b32.xlu0 %v1513, 80
      %v1901 = vpop.permute.xlu0 %1900
      %1902 = vrot.lane.b32.xlu0 %v1514, 80
      %v1903 = vpop.permute.xlu0 %1902
      %1904 = vrot.lane.b32.xlu0 %v1515, 80
      %v1905 = vpop.permute.xlu0 %1904
      %1906 = vrot.lane.b32.xlu0 %v1516, 80
      %v1907 = vpop.permute.xlu0 %1906
      %1908 = vrot.lane.b32.xlu0 %v1517, 80
      %v1909 = vpop.permute.xlu0 %1908
      %1910 = vrot.lane.b32.xlu0 %v1518, 80
      %v1911 = vpop.permute.xlu0 %1910
      %1912 = vrot.lane.b32.xlu0 %v1519, 80
      %v1913 = vpop.permute.xlu0 %1912
      %1914 = vrot.lane.b32.xlu0 %v1520, 80
      %v1915 = vpop.permute.xlu0 %1914
      %1916 = vrot.lane.b32.xlu0 %v1521, 80
      %v1917 = vpop.permute.xlu0 %1916
      %1918 = vrot.lane.b32.xlu0 %v1522, 80
      %v1919 = vpop.permute.xlu0 %1918
      %1920 = vrot.lane.b32.xlu0 %v1523, 80
      %v1921 = vpop.permute.xlu0 %1920
      %1922 = vrot.lane.b32.xlu0 %v1524, 80
      %v1923 = vpop.permute.xlu0 %1922
      %1924 = vrot.lane.b32.xlu0 %v1525, 80
      %v1925 = vpop.permute.xlu0 %1924
      %1926 = vrot.lane.b32.xlu0 %v1526, 80
      %v1927 = vpop.permute.xlu0 %1926
      %1928 = vrot.lane.b32.xlu0 %v1527, 80
      %v1929 = vpop.permute.xlu0 %1928
      %1930 = vrot.lane.b32.xlu0 %v1528, 80
      %v1931 = vpop.permute.xlu0 %1930
      %1932 = vrot.lane.b32.xlu0 %v1529, 80
      %v1933 = vpop.permute.xlu0 %1932
      %1934 = vrot.lane.b32.xlu0 %v1530, 80
      %v1935 = vpop.permute.xlu0 %1934
      %1936 = vrot.lane.b32.xlu0 %v1531, 80
      %v1937 = vpop.permute.xlu0 %1936
      %1938 = vrot.lane.b32.xlu0 %v1532, 80
      %v1939 = vpop.permute.xlu0 %1938
      %1940 = vrot.lane.b32.xlu0 %v1533, 80
      %v1941 = vpop.permute.xlu0 %1940
      %1942 = vrot.lane.b32.xlu0 %v1534, 80
      %v1943 = vpop.permute.xlu0 %1942
      %1944 = vrot.lane.b32.xlu0 %v1535, 80
      %v1945 = vpop.permute.xlu0 %1944
      %1946 = vrot.lane.b32.xlu0 %v1536, 80
      %v1947 = vpop.permute.xlu0 %1946
      %1948 = vrot.lane.b32.xlu0 %v1537, 80
      %v1949 = vpop.permute.xlu0 %1948
      %1950 = vrot.lane.b32.xlu0 %v1538, 80
      %v1951 = vpop.permute.xlu0 %1950
      %1952 = vrot.lane.b32.xlu0 %v1539, 80
      %v1953 = vpop.permute.xlu0 %1952
      %v1954 = vsel %vm468, %v1879, %v1881
      %v1955 = vsel %vm468, %v1881, %v1883
      %v1956 = vsel %vm468, %v1883, %v1885
      %v1957 = vsel %vm468, %v1885, %v1887
      %v1958 = vsel %vm468, %v1887, %v1889
      %v1959 = vsel %vm468, %v1889, %v1891
      %v1960 = vsel %vm468, %v1891, %v1893
      %v1961 = vsel %vm468, %v1893, %v1895
      %v1962 = vsel %vm468, %v1895, %v1897
      %v1963 = vsel %vm468, %v1897, %v1899
      %v1964 = vsel %vm468, %v1899, %v1901
      %v1965 = vsel %vm468, %v1901, %v1903
      %v1966 = vsel %vm468, %v1903, %v1905
      %v1967 = vsel %vm468, %v1905, %v1907
      %v1968 = vsel %vm468, %v1907, %v1909
      %v1969 = vsel %vm468, %v1909, %v1911
      %v1970 = vsel %vm468, %v1911, %v1913
      %v1971 = vsel %vm468, %v1913, %v1915
      %v1972 = vsel %vm468, %v1917, %v1919
      %v1973 = vsel %vm468, %v1919, %v1921
      %v1974 = vsel %vm468, %v1921, %v1923
      %v1975 = vsel %vm468, %v1923, %v1925
      %v1976 = vsel %vm468, %v1925, %v1927
      %v1977 = vsel %vm468, %v1927, %v1929
      %v1978 = vsel %vm468, %v1929, %v1931
      %v1979 = vsel %vm468, %v1931, %v1933
      %v1980 = vsel %vm468, %v1933, %v1935
      %v1981 = vsel %vm468, %v1935, %v1937
      %v1982 = vsel %vm468, %v1937, %v1939
      %v1983 = vsel %vm468, %v1939, %v1941
      %v1984 = vsel %vm468, %v1941, %v1943
      %v1985 = vsel %vm468, %v1943, %v1945
      %v1986 = vsel %vm468, %v1945, %v1947
      %v1987 = vsel %vm468, %v1947, %v1949
      %v1988 = vsel %vm468, %v1949, %v1951
      %v1989 = vsel %vm468, %v1951, %v1953
      %2026 = vrot.lane.b32.xlu0 %v1502, 79
      %v2027 = vpop.permute.xlu0 %2026
      %2028 = vrot.lane.b32.xlu0 %v1503, 79
      %v2029 = vpop.permute.xlu0 %2028
      %2030 = vrot.lane.b32.xlu0 %v1504, 79
      %v2031 = vpop.permute.xlu0 %2030
      %2032 = vrot.lane.b32.xlu0 %v1505, 79
      %v2033 = vpop.permute.xlu0 %2032
      %2034 = vrot.lane.b32.xlu0 %v1506, 79
      %v2035 = vpop.permute.xlu0 %2034
      %2036 = vrot.lane.b32.xlu0 %v1507, 79
      %v2037 = vpop.permute.xlu0 %2036
      %2038 = vrot.lane.b32.xlu0 %v1508, 79
      %v2039 = vpop.permute.xlu0 %2038
      %2040 = vrot.lane.b32.xlu0 %v1509, 79
      %v2041 = vpop.permute.xlu0 %2040
      %2042 = vrot.lane.b32.xlu0 %v1510, 79
      %v2043 = vpop.permute.xlu0 %2042
      %2044 = vrot.lane.b32.xlu0 %v1511, 79
      %v2045 = vpop.permute.xlu0 %2044
      %2046 = vrot.lane.b32.xlu0 %v1512, 79
      %v2047 = vpop.permute.xlu0 %2046
      %2048 = vrot.lane.b32.xlu0 %v1513, 79
      %v2049 = vpop.permute.xlu0 %2048
      %2050 = vrot.lane.b32.xlu0 %v1514, 79
      %v2051 = vpop.permute.xlu0 %2050
      %2052 = vrot.lane.b32.xlu0 %v1515, 79
      %v2053 = vpop.permute.xlu0 %2052
      %2054 = vrot.lane.b32.xlu0 %v1516, 79
      %v2055 = vpop.permute.xlu0 %2054
      %2056 = vrot.lane.b32.xlu0 %v1517, 79
      %v2057 = vpop.permute.xlu0 %2056
      %2058 = vrot.lane.b32.xlu0 %v1518, 79
      %v2059 = vpop.permute.xlu0 %2058
      %2060 = vrot.lane.b32.xlu0 %v1519, 79
      %v2061 = vpop.permute.xlu0 %2060
      %2062 = vrot.lane.b32.xlu0 %v1520, 79
      %v2063 = vpop.permute.xlu0 %2062
      %2064 = vrot.lane.b32.xlu0 %v1521, 79
      %v2065 = vpop.permute.xlu0 %2064
      %2066 = vrot.lane.b32.xlu0 %v1522, 79
      %v2067 = vpop.permute.xlu0 %2066
      %2068 = vrot.lane.b32.xlu0 %v1523, 79
      %v2069 = vpop.permute.xlu0 %2068
      %2070 = vrot.lane.b32.xlu0 %v1524, 79
      %v2071 = vpop.permute.xlu0 %2070
      %2072 = vrot.lane.b32.xlu0 %v1525, 79
      %v2073 = vpop.permute.xlu0 %2072
      %2074 = vrot.lane.b32.xlu0 %v1526, 79
      %v2075 = vpop.permute.xlu0 %2074
      %2076 = vrot.lane.b32.xlu0 %v1527, 79
      %v2077 = vpop.permute.xlu0 %2076
      %2078 = vrot.lane.b32.xlu0 %v1528, 79
      %v2079 = vpop.permute.xlu0 %2078
      %2080 = vrot.lane.b32.xlu0 %v1529, 79
      %v2081 = vpop.permute.xlu0 %2080
      %2082 = vrot.lane.b32.xlu0 %v1530, 79
      %v2083 = vpop.permute.xlu0 %2082
      %2084 = vrot.lane.b32.xlu0 %v1531, 79
      %v2085 = vpop.permute.xlu0 %2084
      %2086 = vrot.lane.b32.xlu0 %v1532, 79
      %v2087 = vpop.permute.xlu0 %2086
      %2088 = vrot.lane.b32.xlu0 %v1533, 79
      %v2089 = vpop.permute.xlu0 %2088
      %2090 = vrot.lane.b32.xlu0 %v1534, 79
      %v2091 = vpop.permute.xlu0 %2090
      %2092 = vrot.lane.b32.xlu0 %v1535, 79
      %v2093 = vpop.permute.xlu0 %2092
      %2094 = vrot.lane.b32.xlu0 %v1536, 79
      %v2095 = vpop.permute.xlu0 %2094
      %2096 = vrot.lane.b32.xlu0 %v1537, 79
      %v2097 = vpop.permute.xlu0 %2096
      %2098 = vrot.lane.b32.xlu0 %v1538, 79
      %v2099 = vpop.permute.xlu0 %2098
      %2100 = vrot.lane.b32.xlu0 %v1539, 79
      %v2101 = vpop.permute.xlu0 %2100
      %v2102 = vsel %vm547, %v2027, %v2029
      %v2103 = vsel %vm547, %v2029, %v2031
      %v2104 = vsel %vm547, %v2031, %v2033
      %v2105 = vsel %vm547, %v2033, %v2035
      %v2106 = vsel %vm547, %v2035, %v2037
      %v2107 = vsel %vm547, %v2037, %v2039
      %v2108 = vsel %vm547, %v2039, %v2041
      %v2109 = vsel %vm547, %v2041, %v2043
      %v2110 = vsel %vm547, %v2043, %v2045
      %v2111 = vsel %vm547, %v2045, %v2047
      %v2112 = vsel %vm547, %v2047, %v2049
      %v2113 = vsel %vm547, %v2049, %v2051
      %v2114 = vsel %vm547, %v2051, %v2053
      %v2115 = vsel %vm547, %v2053, %v2055
      %v2116 = vsel %vm547, %v2055, %v2057
      %v2117 = vsel %vm547, %v2057, %v2059
      %v2118 = vsel %vm547, %v2059, %v2061
      %v2119 = vsel %vm547, %v2061, %v2063
      %v2120 = vsel %vm547, %v2065, %v2067
      %v2121 = vsel %vm547, %v2067, %v2069
      %v2122 = vsel %vm547, %v2069, %v2071
      %v2123 = vsel %vm547, %v2071, %v2073
      %v2124 = vsel %vm547, %v2073, %v2075
      %v2125 = vsel %vm547, %v2075, %v2077
      %v2126 = vsel %vm547, %v2077, %v2079
      %v2127 = vsel %vm547, %v2079, %v2081
      %v2128 = vsel %vm547, %v2081, %v2083
      %v2129 = vsel %vm547, %v2083, %v2085
      %v2130 = vsel %vm547, %v2085, %v2087
      %v2131 = vsel %vm547, %v2087, %v2089
      %v2132 = vsel %vm547, %v2089, %v2091
      %v2133 = vsel %vm547, %v2091, %v2093
      %v2134 = vsel %vm547, %v2093, %v2095
      %v2135 = vsel %vm547, %v2095, %v2097
      %v2136 = vsel %vm547, %v2097, %v2099
      %v2137 = vsel %vm547, %v2099, %v2101
      %2174 = vrot.lane.b32.xlu0 %v1502, 78
      %v2175 = vpop.permute.xlu0 %2174
      %2176 = vrot.lane.b32.xlu0 %v1503, 78
      %v2177 = vpop.permute.xlu0 %2176
      %2178 = vrot.lane.b32.xlu0 %v1504, 78
      %v2179 = vpop.permute.xlu0 %2178
      %2180 = vrot.lane.b32.xlu0 %v1505, 78
      %v2181 = vpop.permute.xlu0 %2180
      %2182 = vrot.lane.b32.xlu0 %v1506, 78
      %v2183 = vpop.permute.xlu0 %2182
      %2184 = vrot.lane.b32.xlu0 %v1507, 78
      %v2185 = vpop.permute.xlu0 %2184
      %2186 = vrot.lane.b32.xlu0 %v1508, 78
      %v2187 = vpop.permute.xlu0 %2186
      %2188 = vrot.lane.b32.xlu0 %v1509, 78
      %v2189 = vpop.permute.xlu0 %2188
      %2190 = vrot.lane.b32.xlu0 %v1510, 78
      %v2191 = vpop.permute.xlu0 %2190
      %2192 = vrot.lane.b32.xlu0 %v1511, 78
      %v2193 = vpop.permute.xlu0 %2192
      %2194 = vrot.lane.b32.xlu0 %v1512, 78
      %v2195 = vpop.permute.xlu0 %2194
      %2196 = vrot.lane.b32.xlu0 %v1513, 78
      %v2197 = vpop.permute.xlu0 %2196
      %2198 = vrot.lane.b32.xlu0 %v1514, 78
      %v2199 = vpop.permute.xlu0 %2198
      %2200 = vrot.lane.b32.xlu0 %v1515, 78
      %v2201 = vpop.permute.xlu0 %2200
      %2202 = vrot.lane.b32.xlu0 %v1516, 78
      %v2203 = vpop.permute.xlu0 %2202
      %2204 = vrot.lane.b32.xlu0 %v1517, 78
      %v2205 = vpop.permute.xlu0 %2204
      %2206 = vrot.lane.b32.xlu0 %v1518, 78
      %v2207 = vpop.permute.xlu0 %2206
      %2208 = vrot.lane.b32.xlu0 %v1519, 78
      %v2209 = vpop.permute.xlu0 %2208
      %2210 = vrot.lane.b32.xlu0 %v1520, 78
      %v2211 = vpop.permute.xlu0 %2210
      %2212 = vrot.lane.b32.xlu0 %v1521, 78
      %v2213 = vpop.permute.xlu0 %2212
      %2214 = vrot.lane.b32.xlu0 %v1522, 78
      %v2215 = vpop.permute.xlu0 %2214
      %2216 = vrot.lane.b32.xlu0 %v1523, 78
      %v2217 = vpop.permute.xlu0 %2216
      %2218 = vrot.lane.b32.xlu0 %v1524, 78
      %v2219 = vpop.permute.xlu0 %2218
      %2220 = vrot.lane.b32.xlu0 %v1525, 78
      %v2221 = vpop.permute.xlu0 %2220
      %2222 = vrot.lane.b32.xlu0 %v1526, 78
      %v2223 = vpop.permute.xlu0 %2222
      %2224 = vrot.lane.b32.xlu0 %v1527, 78
      %v2225 = vpop.permute.xlu0 %2224
      %2226 = vrot.lane.b32.xlu0 %v1528, 78
      %v2227 = vpop.permute.xlu0 %2226
      %2228 = vrot.lane.b32.xlu0 %v1529, 78
      %v2229 = vpop.permute.xlu0 %2228
      %2230 = vrot.lane.b32.xlu0 %v1530, 78
      %v2231 = vpop.permute.xlu0 %2230
      %2232 = vrot.lane.b32.xlu0 %v1531, 78
      %v2233 = vpop.permute.xlu0 %2232
      %2234 = vrot.lane.b32.xlu0 %v1532, 78
      %v2235 = vpop.permute.xlu0 %2234
      %2236 = vrot.lane.b32.xlu0 %v1533, 78
      %v2237 = vpop.permute.xlu0 %2236
      %2238 = vrot.lane.b32.xlu0 %v1534, 78
      %v2239 = vpop.permute.xlu0 %2238
      %2240 = vrot.lane.b32.xlu0 %v1535, 78
      %v2241 = vpop.permute.xlu0 %2240
      %2242 = vrot.lane.b32.xlu0 %v1536, 78
      %v2243 = vpop.permute.xlu0 %2242
      %2244 = vrot.lane.b32.xlu0 %v1537, 78
      %v2245 = vpop.permute.xlu0 %2244
      %2246 = vrot.lane.b32.xlu0 %v1538, 78
      %v2247 = vpop.permute.xlu0 %2246
      %2248 = vrot.lane.b32.xlu0 %v1539, 78
      %v2249 = vpop.permute.xlu0 %2248
      %v2250 = vsel %vm626, %v2175, %v2177
      %v2251 = vsel %vm626, %v2177, %v2179
      %v2252 = vsel %vm626, %v2179, %v2181
      %v2253 = vsel %vm626, %v2181, %v2183
      %v2254 = vsel %vm626, %v2183, %v2185
      %v2255 = vsel %vm626, %v2185, %v2187
      %v2256 = vsel %vm626, %v2187, %v2189
      %v2257 = vsel %vm626, %v2189, %v2191
      %v2258 = vsel %vm626, %v2191, %v2193
      %v2259 = vsel %vm626, %v2193, %v2195
      %v2260 = vsel %vm626, %v2195, %v2197
      %v2261 = vsel %vm626, %v2197, %v2199
      %v2262 = vsel %vm626, %v2199, %v2201
      %v2263 = vsel %vm626, %v2201, %v2203
      %v2264 = vsel %vm626, %v2203, %v2205
      %v2265 = vsel %vm626, %v2205, %v2207
      %v2266 = vsel %vm626, %v2207, %v2209
      %v2267 = vsel %vm626, %v2209, %v2211
      %v2268 = vsel %vm626, %v2213, %v2215
      %v2269 = vsel %vm626, %v2215, %v2217
      %v2270 = vsel %vm626, %v2217, %v2219
      %v2271 = vsel %vm626, %v2219, %v2221
      %v2272 = vsel %vm626, %v2221, %v2223
      %v2273 = vsel %vm626, %v2223, %v2225
      %v2274 = vsel %vm626, %v2225, %v2227
      %v2275 = vsel %vm626, %v2227, %v2229
      %v2276 = vsel %vm626, %v2229, %v2231
      %v2277 = vsel %vm626, %v2231, %v2233
      %v2278 = vsel %vm626, %v2233, %v2235
      %v2279 = vsel %vm626, %v2235, %v2237
      %v2280 = vsel %vm626, %v2237, %v2239
      %v2281 = vsel %vm626, %v2239, %v2241
      %v2282 = vsel %vm626, %v2241, %v2243
      %v2283 = vsel %vm626, %v2243, %v2245
      %v2284 = vsel %vm626, %v2245, %v2247
      %v2285 = vsel %vm626, %v2247, %v2249
      %2322 = vrot.lane.b32.xlu0 %v1502, 32
      %v2323 = vpop.permute.xlu0 %2322
      %2324 = vrot.lane.b32.xlu0 %v1503, 32
      %v2325 = vpop.permute.xlu0 %2324
      %2326 = vrot.lane.b32.xlu0 %v1504, 32
      %v2327 = vpop.permute.xlu0 %2326
      %2328 = vrot.lane.b32.xlu0 %v1505, 32
      %v2329 = vpop.permute.xlu0 %2328
      %2330 = vrot.lane.b32.xlu0 %v1506, 32
      %v2331 = vpop.permute.xlu0 %2330
      %2332 = vrot.lane.b32.xlu0 %v1507, 32
      %v2333 = vpop.permute.xlu0 %2332
      %2334 = vrot.lane.b32.xlu0 %v1508, 32
      %v2335 = vpop.permute.xlu0 %2334
      %2336 = vrot.lane.b32.xlu0 %v1509, 32
      %v2337 = vpop.permute.xlu0 %2336
      %2338 = vrot.lane.b32.xlu0 %v1510, 32
      %v2339 = vpop.permute.xlu0 %2338
      %2340 = vrot.lane.b32.xlu0 %v1511, 32
      %v2341 = vpop.permute.xlu0 %2340
      %2342 = vrot.lane.b32.xlu0 %v1512, 32
      %v2343 = vpop.permute.xlu0 %2342
      %2344 = vrot.lane.b32.xlu0 %v1513, 32
      %v2345 = vpop.permute.xlu0 %2344
      %2346 = vrot.lane.b32.xlu0 %v1514, 32
      %v2347 = vpop.permute.xlu0 %2346
      %2348 = vrot.lane.b32.xlu0 %v1515, 32
      %v2349 = vpop.permute.xlu0 %2348
      %2350 = vrot.lane.b32.xlu0 %v1516, 32
      %v2351 = vpop.permute.xlu0 %2350
      %2352 = vrot.lane.b32.xlu0 %v1517, 32
      %v2353 = vpop.permute.xlu0 %2352
      %2354 = vrot.lane.b32.xlu0 %v1518, 32
      %v2355 = vpop.permute.xlu0 %2354
      %2356 = vrot.lane.b32.xlu0 %v1519, 32
      %v2357 = vpop.permute.xlu0 %2356
      %2358 = vrot.lane.b32.xlu0 %v1520, 32
      %v2359 = vpop.permute.xlu0 %2358
      %2360 = vrot.lane.b32.xlu0 %v1521, 32
      %v2361 = vpop.permute.xlu0 %2360
      %2362 = vrot.lane.b32.xlu0 %v1522, 32
      %v2363 = vpop.permute.xlu0 %2362
      %2364 = vrot.lane.b32.xlu0 %v1523, 32
      %v2365 = vpop.permute.xlu0 %2364
      %2366 = vrot.lane.b32.xlu0 %v1524, 32
      %v2367 = vpop.permute.xlu0 %2366
      %2368 = vrot.lane.b32.xlu0 %v1525, 32
      %v2369 = vpop.permute.xlu0 %2368
      %2370 = vrot.lane.b32.xlu0 %v1526, 32
      %v2371 = vpop.permute.xlu0 %2370
      %2372 = vrot.lane.b32.xlu0 %v1527, 32
      %v2373 = vpop.permute.xlu0 %2372
      %2374 = vrot.lane.b32.xlu0 %v1528, 32
      %v2375 = vpop.permute.xlu0 %2374
      %2376 = vrot.lane.b32.xlu0 %v1529, 32
      %v2377 = vpop.permute.xlu0 %2376
      %2378 = vrot.lane.b32.xlu0 %v1530, 32
      %v2379 = vpop.permute.xlu0 %2378
      %2380 = vrot.lane.b32.xlu0 %v1531, 32
      %v2381 = vpop.permute.xlu0 %2380
      %2382 = vrot.lane.b32.xlu0 %v1532, 32
      %v2383 = vpop.permute.xlu0 %2382
      %2384 = vrot.lane.b32.xlu0 %v1533, 32
      %v2385 = vpop.permute.xlu0 %2384
      %2386 = vrot.lane.b32.xlu0 %v1534, 32
      %v2387 = vpop.permute.xlu0 %2386
      %2388 = vrot.lane.b32.xlu0 %v1535, 32
      %v2389 = vpop.permute.xlu0 %2388
      %2390 = vrot.lane.b32.xlu0 %v1536, 32
      %v2391 = vpop.permute.xlu0 %2390
      %2392 = vrot.lane.b32.xlu0 %v1537, 32
      %v2393 = vpop.permute.xlu0 %2392
      %2394 = vrot.lane.b32.xlu0 %v1538, 32
      %v2395 = vpop.permute.xlu0 %2394
      %2396 = vrot.lane.b32.xlu0 %v1539, 32
      %v2397 = vpop.permute.xlu0 %2396
      %v2398 = vsel %vm705, %v2323, %v2325
      %v2399 = vsel %vm705, %v2325, %v2327
      %v2400 = vsel %vm705, %v2327, %v2329
      %v2401 = vsel %vm705, %v2329, %v2331
      %v2402 = vsel %vm705, %v2331, %v2333
      %v2403 = vsel %vm705, %v2333, %v2335
      %v2404 = vsel %vm705, %v2335, %v2337
      %v2405 = vsel %vm705, %v2337, %v2339
      %v2406 = vsel %vm705, %v2339, %v2341
      %v2407 = vsel %vm705, %v2341, %v2343
      %v2408 = vsel %vm705, %v2343, %v2345
      %v2409 = vsel %vm705, %v2345, %v2347
      %v2410 = vsel %vm705, %v2347, %v2349
      %v2411 = vsel %vm705, %v2349, %v2351
      %v2412 = vsel %vm705, %v2351, %v2353
      %v2413 = vsel %vm705, %v2353, %v2355
      %v2414 = vsel %vm705, %v2355, %v2357
      %v2415 = vsel %vm705, %v2357, %v2359
      %v2416 = vsel %vm705, %v2361, %v2363
      %v2417 = vsel %vm705, %v2363, %v2365
      %v2418 = vsel %vm705, %v2365, %v2367
      %v2419 = vsel %vm705, %v2367, %v2369
      %v2420 = vsel %vm705, %v2369, %v2371
      %v2421 = vsel %vm705, %v2371, %v2373
      %v2422 = vsel %vm705, %v2373, %v2375
      %v2423 = vsel %vm705, %v2375, %v2377
      %v2424 = vsel %vm705, %v2377, %v2379
      %v2425 = vsel %vm705, %v2379, %v2381
      %v2426 = vsel %vm705, %v2381, %v2383
      %v2427 = vsel %vm705, %v2383, %v2385
      %v2428 = vsel %vm705, %v2385, %v2387
      %v2429 = vsel %vm705, %v2387, %v2389
      %v2430 = vsel %vm705, %v2389, %v2391
      %v2431 = vsel %vm705, %v2391, %v2393
      %v2432 = vsel %vm705, %v2393, %v2395
      %v2433 = vsel %vm705, %v2395, %v2397
      %2470 = vrot.lane.b32.xlu0 %v1502, 31
      %v2471 = vpop.permute.xlu0 %2470
      %2472 = vrot.lane.b32.xlu0 %v1503, 31
      %v2473 = vpop.permute.xlu0 %2472
      %2474 = vrot.lane.b32.xlu0 %v1504, 31
      %v2475 = vpop.permute.xlu0 %2474
      %2476 = vrot.lane.b32.xlu0 %v1505, 31
      %v2477 = vpop.permute.xlu0 %2476
      %2478 = vrot.lane.b32.xlu0 %v1506, 31
      %v2479 = vpop.permute.xlu0 %2478
      %2480 = vrot.lane.b32.xlu0 %v1507, 31
      %v2481 = vpop.permute.xlu0 %2480
      %2482 = vrot.lane.b32.xlu0 %v1508, 31
      %v2483 = vpop.permute.xlu0 %2482
      %2484 = vrot.lane.b32.xlu0 %v1509, 31
      %v2485 = vpop.permute.xlu0 %2484
      %2486 = vrot.lane.b32.xlu0 %v1510, 31
      %v2487 = vpop.permute.xlu0 %2486
      %2488 = vrot.lane.b32.xlu0 %v1511, 31
      %v2489 = vpop.permute.xlu0 %2488
      %2490 = vrot.lane.b32.xlu0 %v1512, 31
      %v2491 = vpop.permute.xlu0 %2490
      %2492 = vrot.lane.b32.xlu0 %v1513, 31
      %v2493 = vpop.permute.xlu0 %2492
      %2494 = vrot.lane.b32.xlu0 %v1514, 31
      %v2495 = vpop.permute.xlu0 %2494
      %2496 = vrot.lane.b32.xlu0 %v1515, 31
      %v2497 = vpop.permute.xlu0 %2496
      %2498 = vrot.lane.b32.xlu0 %v1516, 31
      %v2499 = vpop.permute.xlu0 %2498
      %2500 = vrot.lane.b32.xlu0 %v1517, 31
      %v2501 = vpop.permute.xlu0 %2500
      %2502 = vrot.lane.b32.xlu0 %v1518, 31
      %v2503 = vpop.permute.xlu0 %2502
      %2504 = vrot.lane.b32.xlu0 %v1519, 31
      %v2505 = vpop.permute.xlu0 %2504
      %2506 = vrot.lane.b32.xlu0 %v1520, 31
      %v2507 = vpop.permute.xlu0 %2506
      %2508 = vrot.lane.b32.xlu0 %v1521, 31
      %v2509 = vpop.permute.xlu0 %2508
      %2510 = vrot.lane.b32.xlu0 %v1522, 31
      %v2511 = vpop.permute.xlu0 %2510
      %2512 = vrot.lane.b32.xlu0 %v1523, 31
      %v2513 = vpop.permute.xlu0 %2512
      %2514 = vrot.lane.b32.xlu0 %v1524, 31
      %v2515 = vpop.permute.xlu0 %2514
      %2516 = vrot.lane.b32.xlu0 %v1525, 31
      %v2517 = vpop.permute.xlu0 %2516
      %2518 = vrot.lane.b32.xlu0 %v1526, 31
      %v2519 = vpop.permute.xlu0 %2518
      %2520 = vrot.lane.b32.xlu0 %v1527, 31
      %v2521 = vpop.permute.xlu0 %2520
      %2522 = vrot.lane.b32.xlu0 %v1528, 31
      %v2523 = vpop.permute.xlu0 %2522
      %2524 = vrot.lane.b32.xlu0 %v1529, 31
      %v2525 = vpop.permute.xlu0 %2524
      %2526 = vrot.lane.b32.xlu0 %v1530, 31
      %v2527 = vpop.permute.xlu0 %2526
      %2528 = vrot.lane.b32.xlu0 %v1531, 31
      %v2529 = vpop.permute.xlu0 %2528
      %2530 = vrot.lane.b32.xlu0 %v1532, 31
      %v2531 = vpop.permute.xlu0 %2530
      %2532 = vrot.lane.b32.xlu0 %v1533, 31
      %v2533 = vpop.permute.xlu0 %2532
      %2534 = vrot.lane.b32.xlu0 %v1534, 31
      %v2535 = vpop.permute.xlu0 %2534
      %2536 = vrot.lane.b32.xlu0 %v1535, 31
      %v2537 = vpop.permute.xlu0 %2536
      %2538 = vrot.lane.b32.xlu0 %v1536, 31
      %v2539 = vpop.permute.xlu0 %2538
      %2540 = vrot.lane.b32.xlu0 %v1537, 31
      %v2541 = vpop.permute.xlu0 %2540
      %2542 = vrot.lane.b32.xlu0 %v1538, 31
      %v2543 = vpop.permute.xlu0 %2542
      %2544 = vrot.lane.b32.xlu0 %v1539, 31
      %v2545 = vpop.permute.xlu0 %2544
      %v2546 = vsel %vm784, %v2471, %v2473
      %v2547 = vsel %vm784, %v2473, %v2475
      %v2548 = vsel %vm784, %v2475, %v2477
      %v2549 = vsel %vm784, %v2477, %v2479
      %v2550 = vsel %vm784, %v2479, %v2481
      %v2551 = vsel %vm784, %v2481, %v2483
      %v2552 = vsel %vm784, %v2483, %v2485
      %v2553 = vsel %vm784, %v2485, %v2487
      %v2554 = vsel %vm784, %v2487, %v2489
      %v2555 = vsel %vm784, %v2489, %v2491
      %v2556 = vsel %vm784, %v2491, %v2493
      %v2557 = vsel %vm784, %v2493, %v2495
      %v2558 = vsel %vm784, %v2495, %v2497
      %v2559 = vsel %vm784, %v2497, %v2499
      %v2560 = vsel %vm784, %v2499, %v2501
      %v2561 = vsel %vm784, %v2501, %v2503
      %v2562 = vsel %vm784, %v2503, %v2505
      %v2563 = vsel %vm784, %v2505, %v2507
      %v2564 = vsel %vm784, %v2509, %v2511
      %v2565 = vsel %vm784, %v2511, %v2513
      %v2566 = vsel %vm784, %v2513, %v2515
      %v2567 = vsel %vm784, %v2515, %v2517
      %v2568 = vsel %vm784, %v2517, %v2519
      %v2569 = vsel %vm784, %v2519, %v2521
      %v2570 = vsel %vm784, %v2521, %v2523
      %v2571 = vsel %vm784, %v2523, %v2525
      %v2572 = vsel %vm784, %v2525, %v2527
      %v2573 = vsel %vm784, %v2527, %v2529
      %v2574 = vsel %vm784, %v2529, %v2531
      %v2575 = vsel %vm784, %v2531, %v2533
      %v2576 = vsel %vm784, %v2533, %v2535
      %v2577 = vsel %vm784, %v2535, %v2537
      %v2578 = vsel %vm784, %v2537, %v2539
      %v2579 = vsel %vm784, %v2539, %v2541
      %v2580 = vsel %vm784, %v2541, %v2543
      %v2581 = vsel %vm784, %v2543, %v2545
      %2618 = vrot.lane.b32.xlu0 %v1502, 30
      %v2619 = vpop.permute.xlu0 %2618
      %2620 = vrot.lane.b32.xlu0 %v1503, 30
      %v2621 = vpop.permute.xlu0 %2620
      %2622 = vrot.lane.b32.xlu0 %v1504, 30
      %v2623 = vpop.permute.xlu0 %2622
      %2624 = vrot.lane.b32.xlu0 %v1505, 30
      %v2625 = vpop.permute.xlu0 %2624
      %2626 = vrot.lane.b32.xlu0 %v1506, 30
      %v2627 = vpop.permute.xlu0 %2626
      %2628 = vrot.lane.b32.xlu0 %v1507, 30
      %v2629 = vpop.permute.xlu0 %2628
      %2630 = vrot.lane.b32.xlu0 %v1508, 30
      %v2631 = vpop.permute.xlu0 %2630
      %2632 = vrot.lane.b32.xlu0 %v1509, 30
      %v2633 = vpop.permute.xlu0 %2632
      %2634 = vrot.lane.b32.xlu0 %v1510, 30
      %v2635 = vpop.permute.xlu0 %2634
      %2636 = vrot.lane.b32.xlu0 %v1511, 30
      %v2637 = vpop.permute.xlu0 %2636
      %2638 = vrot.lane.b32.xlu0 %v1512, 30
      %v2639 = vpop.permute.xlu0 %2638
      %2640 = vrot.lane.b32.xlu0 %v1513, 30
      %v2641 = vpop.permute.xlu0 %2640
      %2642 = vrot.lane.b32.xlu0 %v1514, 30
      %v2643 = vpop.permute.xlu0 %2642
      %2644 = vrot.lane.b32.xlu0 %v1515, 30
      %v2645 = vpop.permute.xlu0 %2644
      %2646 = vrot.lane.b32.xlu0 %v1516, 30
      %v2647 = vpop.permute.xlu0 %2646
      %2648 = vrot.lane.b32.xlu0 %v1517, 30
      %v2649 = vpop.permute.xlu0 %2648
      %2650 = vrot.lane.b32.xlu0 %v1518, 30
      %v2651 = vpop.permute.xlu0 %2650
      %2652 = vrot.lane.b32.xlu0 %v1519, 30
      %v2653 = vpop.permute.xlu0 %2652
      %2654 = vrot.lane.b32.xlu0 %v1520, 30
      %v2655 = vpop.permute.xlu0 %2654
      %2656 = vrot.lane.b32.xlu0 %v1521, 30
      %v2657 = vpop.permute.xlu0 %2656
      %2658 = vrot.lane.b32.xlu0 %v1522, 30
      %v2659 = vpop.permute.xlu0 %2658
      %2660 = vrot.lane.b32.xlu0 %v1523, 30
      %v2661 = vpop.permute.xlu0 %2660
      %2662 = vrot.lane.b32.xlu0 %v1524, 30
      %v2663 = vpop.permute.xlu0 %2662
      %2664 = vrot.lane.b32.xlu0 %v1525, 30
      %v2665 = vpop.permute.xlu0 %2664
      %2666 = vrot.lane.b32.xlu0 %v1526, 30
      %v2667 = vpop.permute.xlu0 %2666
      %2668 = vrot.lane.b32.xlu0 %v1527, 30
      %v2669 = vpop.permute.xlu0 %2668
      %2670 = vrot.lane.b32.xlu0 %v1528, 30
      %v2671 = vpop.permute.xlu0 %2670
      %2672 = vrot.lane.b32.xlu0 %v1529, 30
      %v2673 = vpop.permute.xlu0 %2672
      %2674 = vrot.lane.b32.xlu0 %v1530, 30
      %v2675 = vpop.permute.xlu0 %2674
      %2676 = vrot.lane.b32.xlu0 %v1531, 30
      %v2677 = vpop.permute.xlu0 %2676
      %2678 = vrot.lane.b32.xlu0 %v1532, 30
      %v2679 = vpop.permute.xlu0 %2678
      %2680 = vrot.lane.b32.xlu0 %v1533, 30
      %v2681 = vpop.permute.xlu0 %2680
      %2682 = vrot.lane.b32.xlu0 %v1534, 30
      %v2683 = vpop.permute.xlu0 %2682
      %2684 = vrot.lane.b32.xlu0 %v1535, 30
      %v2685 = vpop.permute.xlu0 %2684
      %2686 = vrot.lane.b32.xlu0 %v1536, 30
      %v2687 = vpop.permute.xlu0 %2686
      %2688 = vrot.lane.b32.xlu0 %v1537, 30
      %v2689 = vpop.permute.xlu0 %2688
      %2690 = vrot.lane.b32.xlu0 %v1538, 30
      %v2691 = vpop.permute.xlu0 %2690
      %2692 = vrot.lane.b32.xlu0 %v1539, 30
      %v2693 = vpop.permute.xlu0 %2692
      %v2694 = vsel %vm863, %v2619, %v2621
      %v2695 = vsel %vm863, %v2621, %v2623
      %v2696 = vsel %vm863, %v2623, %v2625
      %v2697 = vsel %vm863, %v2625, %v2627
      %v2698 = vsel %vm863, %v2627, %v2629
      %v2699 = vsel %vm863, %v2629, %v2631
      %v2700 = vsel %vm863, %v2631, %v2633
      %v2701 = vsel %vm863, %v2633, %v2635
      %v2702 = vsel %vm863, %v2635, %v2637
      %v2703 = vsel %vm863, %v2637, %v2639
      %v2704 = vsel %vm863, %v2639, %v2641
      %v2705 = vsel %vm863, %v2641, %v2643
      %v2706 = vsel %vm863, %v2643, %v2645
      %v2707 = vsel %vm863, %v2645, %v2647
      %v2708 = vsel %vm863, %v2647, %v2649
      %v2709 = vsel %vm863, %v2649, %v2651
      %v2710 = vsel %vm863, %v2651, %v2653
      %v2711 = vsel %vm863, %v2653, %v2655
      %v2712 = vsel %vm863, %v2657, %v2659
      %v2713 = vsel %vm863, %v2659, %v2661
      %v2714 = vsel %vm863, %v2661, %v2663
      %v2715 = vsel %vm863, %v2663, %v2665
      %v2716 = vsel %vm863, %v2665, %v2667
      %v2717 = vsel %vm863, %v2667, %v2669
      %v2718 = vsel %vm863, %v2669, %v2671
      %v2719 = vsel %vm863, %v2671, %v2673
      %v2720 = vsel %vm863, %v2673, %v2675
      %v2721 = vsel %vm863, %v2675, %v2677
      %v2722 = vsel %vm863, %v2677, %v2679
      %v2723 = vsel %vm863, %v2679, %v2681
      %v2724 = vsel %vm863, %v2681, %v2683
      %v2725 = vsel %vm863, %v2683, %v2685
      %v2726 = vsel %vm863, %v2685, %v2687
      %v2727 = vsel %vm863, %v2687, %v2689
      %v2728 = vsel %vm863, %v2689, %v2691
      %v2729 = vsel %vm863, %v2691, %v2693
      %v2766 = vpack.c.bf16 %v1521, %v1502
      %v2767 = vpack.c.bf16 %v1522, %v1503
      %v2768 = vpack.c.bf16 %v1523, %v1504
      %v2769 = vpack.c.bf16 %v1524, %v1505
      %v2770 = vpack.c.bf16 %v1525, %v1506
      %v2771 = vpack.c.bf16 %v1526, %v1507
      %v2772 = vpack.c.bf16 %v1527, %v1508
      %v2773 = vpack.c.bf16 %v1528, %v1509
      %v2774 = vpack.c.bf16 %v1529, %v1510
      %v2775 = vpack.c.bf16 %v1530, %v1511
      %v2776 = vpack.c.bf16 %v1531, %v1512
      %v2777 = vpack.c.bf16 %v1532, %v1513
      %v2778 = vpack.c.bf16 %v1533, %v1514
      %v2779 = vpack.c.bf16 %v1534, %v1515
      %v2780 = vpack.c.bf16 %v1535, %v1516
      %v2781 = vpack.c.bf16 %v1536, %v1517
      %v2782 = vpack.c.bf16 %v1537, %v1518
      %v2783 = vpack.c.bf16 %v1538, %v1519
      %v2784 = vpack.c.bf16 %v1676, %v1658
      %v2785 = vpack.c.bf16 %v1677, %v1659
      %v2786 = vpack.c.bf16 %v1678, %v1660
      %v2787 = vpack.c.bf16 %v1679, %v1661
      %v2788 = vpack.c.bf16 %v1680, %v1662
      %v2789 = vpack.c.bf16 %v1681, %v1663
      %v2790 = vpack.c.bf16 %v1682, %v1664
      %v2791 = vpack.c.bf16 %v1683, %v1665
      %v2792 = vpack.c.bf16 %v1684, %v1666
      %v2793 = vpack.c.bf16 %v1685, %v1667
      %v2794 = vpack.c.bf16 %v1686, %v1668
      %v2795 = vpack.c.bf16 %v1687, %v1669
      %v2796 = vpack.c.bf16 %v1688, %v1670
      %v2797 = vpack.c.bf16 %v1689, %v1671
      %v2798 = vpack.c.bf16 %v1690, %v1672
      %v2799 = vpack.c.bf16 %v1691, %v1673
      %v2800 = vpack.c.bf16 %v1692, %v1674
      %v2801 = vpack.c.bf16 %v1693, %v1675
      %v2802 = vpack.c.bf16 %v1824, %v1806
      %v2803 = vpack.c.bf16 %v1825, %v1807
      %v2804 = vpack.c.bf16 %v1826, %v1808
      %v2805 = vpack.c.bf16 %v1827, %v1809
      %v2806 = vpack.c.bf16 %v1828, %v1810
      %v2807 = vpack.c.bf16 %v1829, %v1811
      %v2808 = vpack.c.bf16 %v1830, %v1812
      %v2809 = vpack.c.bf16 %v1831, %v1813
      %v2810 = vpack.c.bf16 %v1832, %v1814
      %v2811 = vpack.c.bf16 %v1833, %v1815
      %v2812 = vpack.c.bf16 %v1834, %v1816
      %v2813 = vpack.c.bf16 %v1835, %v1817
      %v2814 = vpack.c.bf16 %v1836, %v1818
      %v2815 = vpack.c.bf16 %v1837, %v1819
      %v2816 = vpack.c.bf16 %v1838, %v1820
      %v2817 = vpack.c.bf16 %v1839, %v1821
      %v2818 = vpack.c.bf16 %v1840, %v1822
      %v2819 = vpack.c.bf16 %v1841, %v1823
      %v2820 = vpack.c.bf16 %v1972, %v1954
      %v2821 = vpack.c.bf16 %v1973, %v1955
      %v2822 = vpack.c.bf16 %v1974, %v1956
      %v2823 = vpack.c.bf16 %v1975, %v1957
      %v2824 = vpack.c.bf16 %v1976, %v1958
      %v2825 = vpack.c.bf16 %v1977, %v1959
      %v2826 = vpack.c.bf16 %v1978, %v1960
      %v2827 = vpack.c.bf16 %v1979, %v1961
      %v2828 = vpack.c.bf16 %v1980, %v1962
      %v2829 = vpack.c.bf16 %v1981, %v1963
      %v2830 = vpack.c.bf16 %v1982, %v1964
      %v2831 = vpack.c.bf16 %v1983, %v1965
      %v2832 = vpack.c.bf16 %v1984, %v1966
      %v2833 = vpack.c.bf16 %v1985, %v1967
      %v2834 = vpack.c.bf16 %v1986, %v1968
      %v2835 = vpack.c.bf16 %v1987, %v1969
      %v2836 = vpack.c.bf16 %v1988, %v1970
      %v2837 = vpack.c.bf16 %v1989, %v1971
      %v2838 = vpack.c.bf16 %v2120, %v2102
      %v2839 = vpack.c.bf16 %v2121, %v2103
      %v2840 = vpack.c.bf16 %v2122, %v2104
      %v2841 = vpack.c.bf16 %v2123, %v2105
      %v2842 = vpack.c.bf16 %v2124, %v2106
      %v2843 = vpack.c.bf16 %v2125, %v2107
      %v2844 = vpack.c.bf16 %v2126, %v2108
      %v2845 = vpack.c.bf16 %v2127, %v2109
      %v2846 = vpack.c.bf16 %v2128, %v2110
      %v2847 = vpack.c.bf16 %v2129, %v2111
      %v2848 = vpack.c.bf16 %v2130, %v2112
      %v2849 = vpack.c.bf16 %v2131, %v2113
      %v2850 = vpack.c.bf16 %v2132, %v2114
      %v2851 = vpack.c.bf16 %v2133, %v2115
      %v2852 = vpack.c.bf16 %v2134, %v2116
      %v2853 = vpack.c.bf16 %v2135, %v2117
      %v2854 = vpack.c.bf16 %v2136, %v2118
      %v2855 = vpack.c.bf16 %v2137, %v2119
      %v2856 = vpack.c.bf16 %v2268, %v2250
      %v2857 = vpack.c.bf16 %v2269, %v2251
      %v2858 = vpack.c.bf16 %v2270, %v2252
      %v2859 = vpack.c.bf16 %v2271, %v2253
      %v2860 = vpack.c.bf16 %v2272, %v2254
      %v2861 = vpack.c.bf16 %v2273, %v2255
      %v2862 = vpack.c.bf16 %v2274, %v2256
      %v2863 = vpack.c.bf16 %v2275, %v2257
      %v2864 = vpack.c.bf16 %v2276, %v2258
      %v2865 = vpack.c.bf16 %v2277, %v2259
      %v2866 = vpack.c.bf16 %v2278, %v2260
      %v2867 = vpack.c.bf16 %v2279, %v2261
      %v2868 = vpack.c.bf16 %v2280, %v2262
      %v2869 = vpack.c.bf16 %v2281, %v2263
      %v2870 = vpack.c.bf16 %v2282, %v2264
      %v2871 = vpack.c.bf16 %v2283, %v2265
      %v2872 = vpack.c.bf16 %v2284, %v2266
      %v2873 = vpack.c.bf16 %v2285, %v2267
      %v2874 = vpack.c.bf16 %v2416, %v2398
      %v2875 = vpack.c.bf16 %v2417, %v2399
      %v2876 = vpack.c.bf16 %v2418, %v2400
      %v2877 = vpack.c.bf16 %v2419, %v2401
      %v2878 = vpack.c.bf16 %v2420, %v2402
      %v2879 = vpack.c.bf16 %v2421, %v2403
      %v2880 = vpack.c.bf16 %v2422, %v2404
      %v2881 = vpack.c.bf16 %v2423, %v2405
      %v2882 = vpack.c.bf16 %v2424, %v2406
      %v2883 = vpack.c.bf16 %v2425, %v2407
      %v2884 = vpack.c.bf16 %v2426, %v2408
      %v2885 = vpack.c.bf16 %v2427, %v2409
      %v2886 = vpack.c.bf16 %v2428, %v2410
      %v2887 = vpack.c.bf16 %v2429, %v2411
      %v2888 = vpack.c.bf16 %v2430, %v2412
      %v2889 = vpack.c.bf16 %v2431, %v2413
      %v2890 = vpack.c.bf16 %v2432, %v2414
      %v2891 = vpack.c.bf16 %v2433, %v2415
      %v2892 = vpack.c.bf16 %v2564, %v2546
      %v2893 = vpack.c.bf16 %v2565, %v2547
      %v2894 = vpack.c.bf16 %v2566, %v2548
      %v2895 = vpack.c.bf16 %v2567, %v2549
      %v2896 = vpack.c.bf16 %v2568, %v2550
      %v2897 = vpack.c.bf16 %v2569, %v2551
      %v2898 = vpack.c.bf16 %v2570, %v2552
      %v2899 = vpack.c.bf16 %v2571, %v2553
      %v2900 = vpack.c.bf16 %v2572, %v2554
      %v2901 = vpack.c.bf16 %v2573, %v2555
      %v2902 = vpack.c.bf16 %v2574, %v2556
      %v2903 = vpack.c.bf16 %v2575, %v2557
      %v2904 = vpack.c.bf16 %v2576, %v2558
      %v2905 = vpack.c.bf16 %v2577, %v2559
      %v2906 = vpack.c.bf16 %v2578, %v2560
      %v2907 = vpack.c.bf16 %v2579, %v2561
      %v2908 = vpack.c.bf16 %v2580, %v2562
      %v2909 = vpack.c.bf16 %v2581, %v2563
      %v2910 = vpack.c.bf16 %v2712, %v2694
      %v2911 = vpack.c.bf16 %v2713, %v2695
      %v2912 = vpack.c.bf16 %v2714, %v2696
      %v2913 = vpack.c.bf16 %v2715, %v2697
      %v2914 = vpack.c.bf16 %v2716, %v2698
      %v2915 = vpack.c.bf16 %v2717, %v2699
      %v2916 = vpack.c.bf16 %v2718, %v2700
      %v2917 = vpack.c.bf16 %v2719, %v2701
      %v2918 = vpack.c.bf16 %v2720, %v2702
      %v2919 = vpack.c.bf16 %v2721, %v2703
      %v2920 = vpack.c.bf16 %v2722, %v2704
      %v2921 = vpack.c.bf16 %v2723, %v2705
      %v2922 = vpack.c.bf16 %v2724, %v2706
      %v2923 = vpack.c.bf16 %v2725, %v2707
      %v2924 = vpack.c.bf16 %v2726, %v2708
      %v2925 = vpack.c.bf16 %v2727, %v2709
      %v2926 = vpack.c.bf16 %v2728, %v2710
      %v2927 = vpack.c.bf16 %v2729, %v2711
      %2929 = vset.pattern.permute.xlu0 0
      %2930 = vperm.xlu0 %2929, %v1542
      %v2931 = vpop.permute.xlu0 %2930
      %2934 = vset.pattern.permute.xlu0 0
      %2935 = vperm.xlu0 %2934, %v1543
      %v2936 = vpop.permute.xlu0 %2935
      %v2940 = vunpack.c.l.b16 %v1540
      %v2941 = vunpack.c.h.b16 %v1540
      %v2942 = vunpack.c.l.b16 %v1541
      %v2943 = vunpack.c.h.b16 %v1541
      %v2944 = vpack.c.b16 %v2942, %v2940
      %v2945 = vpack.c.b16 %v2943, %v2941
      %vm2947 = vcmask 130048
      %v2949 = vsel %vm2947, %v2945, 0
      %2951 = vmatprep.subr.bf16.mxu0 %v2767
      %2952 = vmatpush1.bf16.msra.mxu0 %v2766
      %2953 = vmatprep.subr.bf16.mxu0 %v2785
      %2954 = vmatpush1.bf16.msra.mxu0 %v2784
      %2955 = vmatprep.subr.bf16.mxu0 %v2803
      %2956 = vmatpush1.bf16.msra.mxu0 %v2802
      %2957 = vmatprep.subr.bf16.mxu0 %v2821
      %2958 = vmatpush1.bf16.msra.mxu0 %v2820
      %2959 = vmatprep.subr.bf16.mxu0 %v2839
      %2960 = vmatpush1.bf16.msra.mxu0 %v2838
      %2961 = vmatprep.subr.bf16.mxu0 %v2857
      %2962 = vmatpush1.bf16.msra.mxu0 %v2856
      %2963 = vmatprep.subr.bf16.mxu0 %v2875
      %2964 = vmatpush1.bf16.msra.mxu0 %v2874
      %2965 = vmatprep.subr.bf16.mxu0 %v2893
      %2966 = vmatpush1.bf16.msra.mxu0 %v2892
      %2967 = vmatprep.subr.bf16.mxu0 %v2911
      %2968 = vmatpush1.bf16.msra.mxu0 %v2910
      %2969 = vmatprep.subr.bf16.mxu0 0
      %2970 = vmatpush1.bf16.msra.mxu0 0
      %2971 = vmatprep.subr.bf16.mxu0 0
      %2972 = vmatpush1.bf16.msra.mxu0 0
      %2973 = vmatprep.subr.bf16.mxu0 0
      %2974 = vmatpush1.bf16.msra.mxu0 0
      %2975 = vmatprep.subr.bf16.mxu0 0
      %2976 = vmatpush1.bf16.msra.mxu0 0
      %2977 = vmatprep.subr.bf16.mxu0 0
      %2978 = vmatpush1.bf16.msra.mxu0 0
      %2979 = vmatprep.subr.bf16.mxu0 0
      %2980 = vmatpush1.bf16.msra.mxu0 0
      %2981 = vmatprep.subr.bf16.mxu0 0
      %2982 = vmatpush1.bf16.msra.mxu0 0
      %2983 = vmatprep.mubr.bf16.mxu0 %v2949
      %2984 = vmatmul.mubr.bf16.gmra.mrb[0].mxu0 %v2944
      %v2985 = vpop.f32.mrb[0].mxu0
      %v2986 = vadd.f32 %v2931, %v2985
      %v2987 = vpop.f32.mrb[0].mxu0
      %v2988 = vadd.f32 %v2931, %v2987
      %v2989 = vpop.f32.mrb[0].mxu0
      %v2990 = vadd.f32 %v2936, %v2989
      %v2991 = vpop.f32.mrb[0].mxu0
      %v2992 = vadd.f32 %v2936, %v2991
      %2993 = vdwg.mxu0
      %2994 = vmatprep.subr.bf16.mxu0 %v2769
      %2995 = vmatpush1.bf16.msra.mxu0 %v2768
      %2996 = vmatprep.subr.bf16.mxu0 %v2787
      %2997 = vmatpush1.bf16.msra.mxu0 %v2786
      %2998 = vmatprep.subr.bf16.mxu0 %v2805
      %2999 = vmatpush1.bf16.msra.mxu0 %v2804
      %3000 = vmatprep.subr.bf16.mxu0 %v2823
      %3001 = vmatpush1.bf16.msra.mxu0 %v2822
      %3002 = vmatprep.subr.bf16.mxu0 %v2841
      %3003 = vmatpush1.bf16.msra.mxu0 %v2840
      %3004 = vmatprep.subr.bf16.mxu0 %v2859
      %3005 = vmatpush1.bf16.msra.mxu0 %v2858
      %3006 = vmatprep.subr.bf16.mxu0 %v2877
      %3007 = vmatpush1.bf16.msra.mxu0 %v2876
      %3008 = vmatprep.subr.bf16.mxu0 %v2895
      %3009 = vmatpush1.bf16.msra.mxu0 %v2894
      %3010 = vmatprep.subr.bf16.mxu0 %v2913
      %3011 = vmatpush1.bf16.msra.mxu0 %v2912
      %3012 = vmatprep.subr.bf16.mxu0 0
      %3013 = vmatpush1.bf16.msra.mxu0 0
      %3014 = vmatprep.subr.bf16.mxu0 0
      %3015 = vmatpush1.bf16.msra.mxu0 0
      %3016 = vmatprep.subr.bf16.mxu0 0
      %3017 = vmatpush1.bf16.msra.mxu0 0
      %3018 = vmatprep.subr.bf16.mxu0 0
      %3019 = vmatpush1.bf16.msra.mxu0 0
      %3020 = vmatprep.subr.bf16.mxu0 0
      %3021 = vmatpush1.bf16.msra.mxu0 0
      %3022 = vmatprep.subr.bf16.mxu0 0
      %3023 = vmatpush1.bf16.msra.mxu0 0
      %3024 = vmatprep.subr.bf16.mxu0 0
      %3025 = vmatpush1.bf16.msra.mxu0 0
      %3026 = vmatprep.mubr.bf16.mxu0 %v2949
      %3027 = vmatmul.mubr.bf16.gmra.mrb[0].mxu0 %v2944
      %v3028 = vpop.f32.mrb[0].mxu0
      %v3029 = vadd.f32 %v2931, %v3028
      %v3030 = vpop.f32.mrb[0].mxu0
      %v3031 = vadd.f32 %v2931, %v3030
      %v3032 = vpop.f32.mrb[0].mxu0
      %v3033 = vadd.f32 %v2936, %v3032
      %v3034 = vpop.f32.mrb[0].mxu0
      %v3035 = vadd.f32 %v2936, %v3034
      %3036 = vdwg.mxu0
      %3037 = vmatprep.subr.bf16.mxu0 %v2771
      %3038 = vmatpush1.bf16.msra.mxu0 %v2770
      %3039 = vmatprep.subr.bf16.mxu0 %v2789
      %3040 = vmatpush1.bf16.msra.mxu0 %v2788
      %3041 = vmatprep.subr.bf16.mxu0 %v2807
      %3042 = vmatpush1.bf16.msra.mxu0 %v2806
      %3043 = vmatprep.subr.bf16.mxu0 %v2825
      %3044 = vmatpush1.bf16.msra.mxu0 %v2824
      %3045 = vmatprep.subr.bf16.mxu0 %v2843
      %3046 = vmatpush1.bf16.msra.mxu0 %v2842
      %3047 = vmatprep.subr.bf16.mxu0 %v2861
      %3048 = vmatpush1.bf16.msra.mxu0 %v2860
      %3049 = vmatprep.subr.bf16.mxu0 %v2879
      %3050 = vmatpush1.bf16.msra.mxu0 %v2878
      %3051 = vmatprep.subr.bf16.mxu0 %v2897
      %3052 = vmatpush1.bf16.msra.mxu0 %v2896
      %3053 = vmatprep.subr.bf16.mxu0 %v2915
      %3054 = vmatpush1.bf16.msra.mxu0 %v2914
      %3055 = vmatprep.subr.bf16.mxu0 0
      %3056 = vmatpush1.bf16.msra.mxu0 0
      %3057 = vmatprep.subr.bf16.mxu0 0
      %3058 = vmatpush1.bf16.msra.mxu0 0
      %3059 = vmatprep.subr.bf16.mxu0 0
      %3060 = vmatpush1.bf16.msra.mxu0 0
      %3061 = vmatprep.subr.bf16.mxu0 0
      %3062 = vmatpush1.bf16.msra.mxu0 0
      %3063 = vmatprep.subr.bf16.mxu0 0
      %3064 = vmatpush1.bf16.msra.mxu0 0
      %3065 = vmatprep.subr.bf16.mxu0 0
      %3066 = vmatpush1.bf16.msra.mxu0 0
      %3067 = vmatprep.subr.bf16.mxu0 0
      %3068 = vmatpush1.bf16.msra.mxu0 0
      %3069 = vmatprep.mubr.bf16.mxu0 %v2949
      %3070 = vmatmul.mubr.bf16.gmra.mrb[0].mxu0 %v2944
      %v3071 = vpop.f32.mrb[0].mxu0
      %v3072 = vadd.f32 %v2931, %v3071
      %v3073 = vpop.f32.mrb[0].mxu0
      %v3074 = vadd.f32 %v2931, %v3073
      %v3075 = vpop.f32.mrb[0].mxu0
      %v3076 = vadd.f32 %v2936, %v3075
      %v3077 = vpop.f32.mrb[0].mxu0
      %v3078 = vadd.f32 %v2936, %v3077
      %3079 = vdwg.mxu0
      %3080 = vmatprep.subr.bf16.mxu0 %v2773
      %3081 = vmatpush1.bf16.msra.mxu0 %v2772
      %3082 = vmatprep.subr.bf16.mxu0 %v2791
      %3083 = vmatpush1.bf16.msra.mxu0 %v2790
      %3084 = vmatprep.subr.bf16.mxu0 %v2809
      %3085 = vmatpush1.bf16.msra.mxu0 %v2808
      %3086 = vmatprep.subr.bf16.mxu0 %v2827
      %3087 = vmatpush1.bf16.msra.mxu0 %v2826
      %3088 = vmatprep.subr.bf16.mxu0 %v2845
      %3089 = vmatpush1.bf16.msra.mxu0 %v2844
      %3090 = vmatprep.subr.bf16.mxu0 %v2863
      %3091 = vmatpush1.bf16.msra.mxu0 %v2862
      %3092 = vmatprep.subr.bf16.mxu0 %v2881
      %3093 = vmatpush1.bf16.msra.mxu0 %v2880
      %3094 = vmatprep.subr.bf16.mxu0 %v2899
      %3095 = vmatpush1.bf16.msra.mxu0 %v2898
      %3096 = vmatprep.subr.bf16.mxu0 %v2917
      %3097 = vmatpush1.bf16.msra.mxu0 %v2916
      %3098 = vmatprep.subr.bf16.mxu0 0
      %3099 = vmatpush1.bf16.msra.mxu0 0
      %3100 = vmatprep.subr.bf16.mxu0 0
      %3101 = vmatpush1.bf16.msra.mxu0 0
      %3102 = vmatprep.subr.bf16.mxu0 0
      %3103 = vmatpush1.bf16.msra.mxu0 0
      %3104 = vmatprep.subr.bf16.mxu0 0
      %3105 = vmatpush1.bf16.msra.mxu0 0
      %3106 = vmatprep.subr.bf16.mxu0 0
      %3107 = vmatpush1.bf16.msra.mxu0 0
      %3108 = vmatprep.subr.bf16.mxu0 0
      %3109 = vmatpush1.bf16.msra.mxu0 0
      %3110 = vmatprep.subr.bf16.mxu0 0
      %3111 = vmatpush1.bf16.msra.mxu0 0
      %3112 = vmatprep.mubr.bf16.mxu0 %v2949
      %3113 = vmatmul.mubr.bf16.gmra.mrb[0].mxu0 %v2944
      %v3114 = vpop.f32.mrb[0].mxu0
      %v3115 = vadd.f32 %v2931, %v3114
      %v3116 = vpop.f32.mrb[0].mxu0
      %v3117 = vadd.f32 %v2931, %v3116
      %v3118 = vpop.f32.mrb[0].mxu0
      %v3119 = vadd.f32 %v2936, %v3118
      %v3120 = vpop.f32.mrb[0].mxu0
      %v3121 = vadd.f32 %v2936, %v3120
      %3122 = vdwg.mxu0
      %3123 = vmatprep.subr.bf16.mxu0 %v2775
      %3124 = vmatpush1.bf16.msra.mxu0 %v2774
      %3125 = vmatprep.subr.bf16.mxu0 %v2793
      %3126 = vmatpush1.bf16.msra.mxu0 %v2792
      %3127 = vmatprep.subr.bf16.mxu0 %v2811
      %3128 = vmatpush1.bf16.msra.mxu0 %v2810
      %3129 = vmatprep.subr.bf16.mxu0 %v2829
      %3130 = vmatpush1.bf16.msra.mxu0 %v2828
      %3131 = vmatprep.subr.bf16.mxu0 %v2847
      %3132 = vmatpush1.bf16.msra.mxu0 %v2846
      %3133 = vmatprep.subr.bf16.mxu0 %v2865
      %3134 = vmatpush1.bf16.msra.mxu0 %v2864
      %3135 = vmatprep.subr.bf16.mxu0 %v2883
      %3136 = vmatpush1.bf16.msra.mxu0 %v2882
      %3137 = vmatprep.subr.bf16.mxu0 %v2901
      %3138 = vmatpush1.bf16.msra.mxu0 %v2900
      %3139 = vmatprep.subr.bf16.mxu0 %v2919
      %3140 = vmatpush1.bf16.msra.mxu0 %v2918
      %3141 = vmatprep.subr.bf16.mxu0 0
      %3142 = vmatpush1.bf16.msra.mxu0 0
      %3143 = vmatprep.subr.bf16.mxu0 0
      %3144 = vmatpush1.bf16.msra.mxu0 0
      %3145 = vmatprep.subr.bf16.mxu0 0
      %3146 = vmatpush1.bf16.msra.mxu0 0
      %3147 = vmatprep.subr.bf16.mxu0 0
      %3148 = vmatpush1.bf16.msra.mxu0 0
      %3149 = vmatprep.subr.bf16.mxu0 0
      %3150 = vmatpush1.bf16.msra.mxu0 0
      %3151 = vmatprep.subr.bf16.mxu0 0
      %3152 = vmatpush1.bf16.msra.mxu0 0
      %3153 = vmatprep.subr.bf16.mxu0 0
      %3154 = vmatpush1.bf16.msra.mxu0 0
      %3155 = vmatprep.mubr.bf16.mxu0 %v2949
      %3156 = vmatmul.mubr.bf16.gmra.mrb[0].mxu0 %v2944
      %v3157 = vpop.f32.mrb[0].mxu0
      %v3158 = vadd.f32 %v2931, %v3157
      %v3159 = vpop.f32.mrb[0].mxu0
      %v3160 = vadd.f32 %v2931, %v3159
      %v3161 = vpop.f32.mrb[0].mxu0
      %v3162 = vadd.f32 %v2936, %v3161
      %v3163 = vpop.f32.mrb[0].mxu0
      %v3164 = vadd.f32 %v2936, %v3163
      %3165 = vdwg.mxu0
      %3166 = vmatprep.subr.bf16.mxu0 %v2777
      %3167 = vmatpush1.bf16.msra.mxu0 %v2776
      %3168 = vmatprep.subr.bf16.mxu0 %v2795
      %3169 = vmatpush1.bf16.msra.mxu0 %v2794
      %3170 = vmatprep.subr.bf16.mxu0 %v2813
      %3171 = vmatpush1.bf16.msra.mxu0 %v2812
      %3172 = vmatprep.subr.bf16.mxu0 %v2831
      %3173 = vmatpush1.bf16.msra.mxu0 %v2830
      %3174 = vmatprep.subr.bf16.mxu0 %v2849
      %3175 = vmatpush1.bf16.msra.mxu0 %v2848
      %3176 = vmatprep.subr.bf16.mxu0 %v2867
      %3177 = vmatpush1.bf16.msra.mxu0 %v2866
      %3178 = vmatprep.subr.bf16.mxu0 %v2885
      %3179 = vmatpush1.bf16.msra.mxu0 %v2884
      %3180 = vmatprep.subr.bf16.mxu0 %v2903
      %3181 = vmatpush1.bf16.msra.mxu0 %v2902
      %3182 = vmatprep.subr.bf16.mxu0 %v2921
      %3183 = vmatpush1.bf16.msra.mxu0 %v2920
      %3184 = vmatprep.subr.bf16.mxu0 0
      %3185 = vmatpush1.bf16.msra.mxu0 0
      %3186 = vmatprep.subr.bf16.mxu0 0
      %3187 = vmatpush1.bf16.msra.mxu0 0
      %3188 = vmatprep.subr.bf16.mxu0 0
      %3189 = vmatpush1.bf16.msra.mxu0 0
      %3190 = vmatprep.subr.bf16.mxu0 0
      %3191 = vmatpush1.bf16.msra.mxu0 0
      %3192 = vmatprep.subr.bf16.mxu0 0
      %3193 = vmatpush1.bf16.msra.mxu0 0
      %3194 = vmatprep.subr.bf16.mxu0 0
      %3195 = vmatpush1.bf16.msra.mxu0 0
      %3196 = vmatprep.subr.bf16.mxu0 0
      %3197 = vmatpush1.bf16.msra.mxu0 0
      %3198 = vmatprep.mubr.bf16.mxu0 %v2949
      %3199 = vmatmul.mubr.bf16.gmra.mrb[0].mxu0 %v2944
      %v3200 = vpop.f32.mrb[0].mxu0
      %v3201 = vadd.f32 %v2931, %v3200
      %v3202 = vpop.f32.mrb[0].mxu0
      %v3203 = vadd.f32 %v2931, %v3202
      %v3204 = vpop.f32.mrb[0].mxu0
      %v3205 = vadd.f32 %v2936, %v3204
      %v3206 = vpop.f32.mrb[0].mxu0
      %v3207 = vadd.f32 %v2936, %v3206
      %3208 = vdwg.mxu0
      %3209 = vmatprep.subr.bf16.mxu0 %v2779
      %3210 = vmatpush1.bf16.msra.mxu0 %v2778
      %3211 = vmatprep.subr.bf16.mxu0 %v2797
      %3212 = vmatpush1.bf16.msra.mxu0 %v2796
      %3213 = vmatprep.subr.bf16.mxu0 %v2815
      %3214 = vmatpush1.bf16.msra.mxu0 %v2814
      %3215 = vmatprep.subr.bf16.mxu0 %v2833
      %3216 = vmatpush1.bf16.msra.mxu0 %v2832
      %3217 = vmatprep.subr.bf16.mxu0 %v2851
      %3218 = vmatpush1.bf16.msra.mxu0 %v2850
      %3219 = vmatprep.subr.bf16.mxu0 %v2869
      %3220 = vmatpush1.bf16.msra.mxu0 %v2868
      %3221 = vmatprep.subr.bf16.mxu0 %v2887
      %3222 = vmatpush1.bf16.msra.mxu0 %v2886
      %3223 = vmatprep.subr.bf16.mxu0 %v2905
      %3224 = vmatpush1.bf16.msra.mxu0 %v2904
      %3225 = vmatprep.subr.bf16.mxu0 %v2923
      %3226 = vmatpush1.bf16.msra.mxu0 %v2922
      %3227 = vmatprep.subr.bf16.mxu0 0
      %3228 = vmatpush1.bf16.msra.mxu0 0
      %3229 = vmatprep.subr.bf16.mxu0 0
      %3230 = vmatpush1.bf16.msra.mxu0 0
      %3231 = vmatprep.subr.bf16.mxu0 0
      %3232 = vmatpush1.bf16.msra.mxu0 0
      %3233 = vmatprep.subr.bf16.mxu0 0
      %3234 = vmatpush1.bf16.msra.mxu0 0
      %3235 = vmatprep.subr.bf16.mxu0 0
      %3236 = vmatpush1.bf16.msra.mxu0 0
      %3237 = vmatprep.subr.bf16.mxu0 0
      %3238 = vmatpush1.bf16.msra.mxu0 0
      %3239 = vmatprep.subr.bf16.mxu0 0
      %3240 = vmatpush1.bf16.msra.mxu0 0
      %3241 = vmatprep.mubr.bf16.mxu0 %v2949
      %3242 = vmatmul.mubr.bf16.gmra.mrb[0].mxu0 %v2944
      %v3243 = vpop.f32.mrb[0].mxu0
      %v3244 = vadd.f32 %v2931, %v3243
      %v3245 = vpop.f32.mrb[0].mxu0
      %v3246 = vadd.f32 %v2931, %v3245
      %v3247 = vpop.f32.mrb[0].mxu0
      %v3248 = vadd.f32 %v2936, %v3247
      %v3249 = vpop.f32.mrb[0].mxu0
      %v3250 = vadd.f32 %v2936, %v3249
      %3251 = vdwg.mxu0
      %3252 = vmatprep.subr.bf16.mxu0 %v2781
      %3253 = vmatpush1.bf16.msra.mxu0 %v2780
      %3254 = vmatprep.subr.bf16.mxu0 %v2799
      %3255 = vmatpush1.bf16.msra.mxu0 %v2798
      %3256 = vmatprep.subr.bf16.mxu0 %v2817
      %3257 = vmatpush1.bf16.msra.mxu0 %v2816
      %3258 = vmatprep.subr.bf16.mxu0 %v2835
      %3259 = vmatpush1.bf16.msra.mxu0 %v2834
      %3260 = vmatprep.subr.bf16.mxu0 %v2853
      %3261 = vmatpush1.bf16.msra.mxu0 %v2852
      %3262 = vmatprep.subr.bf16.mxu0 %v2871
      %3263 = vmatpush1.bf16.msra.mxu0 %v2870
      %3264 = vmatprep.subr.bf16.mxu0 %v2889
      %3265 = vmatpush1.bf16.msra.mxu0 %v2888
      %3266 = vmatprep.subr.bf16.mxu0 %v2907
      %3267 = vmatpush1.bf16.msra.mxu0 %v2906
      %3268 = vmatprep.subr.bf16.mxu0 %v2925
      %3269 = vmatpush1.bf16.msra.mxu0 %v2924
      %3270 = vmatprep.subr.bf16.mxu0 0
      %3271 = vmatpush1.bf16.msra.mxu0 0
      %3272 = vmatprep.subr.bf16.mxu0 0
      %3273 = vmatpush1.bf16.msra.mxu0 0
      %3274 = vmatprep.subr.bf16.mxu0 0
      %3275 = vmatpush1.bf16.msra.mxu0 0
      %3276 = vmatprep.subr.bf16.mxu0 0
      %3277 = vmatpush1.bf16.msra.mxu0 0
      %3278 = vmatprep.subr.bf16.mxu0 0
      %3279 = vmatpush1.bf16.msra.mxu0 0
      %3280 = vmatprep.subr.bf16.mxu0 0
      %3281 = vmatpush1.bf16.msra.mxu0 0
      %3282 = vmatprep.subr.bf16.mxu0 0
      %3283 = vmatpush1.bf16.msra.mxu0 0
      %3284 = vmatprep.mubr.bf16.mxu0 %v2949
      %3285 = vmatmul.mubr.bf16.gmra.mrb[0].mxu0 %v2944
      %v3286 = vpop.f32.mrb[0].mxu0
      %v3287 = vadd.f32 %v2931, %v3286
      %v3288 = vpop.f32.mrb[0].mxu0
      %v3289 = vadd.f32 %v2931, %v3288
      %v3290 = vpop.f32.mrb[0].mxu0
      %v3291 = vadd.f32 %v2936, %v3290
      %v3292 = vpop.f32.mrb[0].mxu0
      %v3293 = vadd.f32 %v2936, %v3292
      %3294 = vdwg.mxu0
      %3295 = vmatprep.subr.bf16.mxu0 %v2783
      %3296 = vmatpush1.bf16.msra.mxu0 %v2782
      %3297 = vmatprep.subr.bf16.mxu0 %v2801
      %3298 = vmatpush1.bf16.msra.mxu0 %v2800
      %3299 = vmatprep.subr.bf16.mxu0 %v2819
      %3300 = vmatpush1.bf16.msra.mxu0 %v2818
      %3301 = vmatprep.subr.bf16.mxu0 %v2837
      %3302 = vmatpush1.bf16.msra.mxu0 %v2836
      %3303 = vmatprep.subr.bf16.mxu0 %v2855
      %3304 = vmatpush1.bf16.msra.mxu0 %v2854
      %3305 = vmatprep.subr.bf16.mxu0 %v2873
      %3306 = vmatpush1.bf16.msra.mxu0 %v2872
      %3307 = vmatprep.subr.bf16.mxu0 %v2891
      %3308 = vmatpush1.bf16.msra.mxu0 %v2890
      %3309 = vmatprep.subr.bf16.mxu0 %v2909
      %3310 = vmatpush1.bf16.msra.mxu0 %v2908
      %3311 = vmatprep.subr.bf16.mxu0 %v2927
      %3312 = vmatpush1.bf16.msra.mxu0 %v2926
      %3313 = vmatprep.subr.bf16.mxu0 0
      %3314 = vmatpush1.bf16.msra.mxu0 0
      %3315 = vmatprep.subr.bf16.mxu0 0
      %3316 = vmatpush1.bf16.msra.mxu0 0
      %3317 = vmatprep.subr.bf16.mxu0 0
      %3318 = vmatpush1.bf16.msra.mxu0 0
      %3319 = vmatprep.subr.bf16.mxu0 0
      %3320 = vmatpush1.bf16.msra.mxu0 0
      %3321 = vmatprep.subr.bf16.mxu0 0
      %3322 = vmatpush1.bf16.msra.mxu0 0
      %3323 = vmatprep.subr.bf16.mxu0 0
      %3324 = vmatpush1.bf16.msra.mxu0 0
      %3325 = vmatprep.subr.bf16.mxu0 0
      %3326 = vmatpush1.bf16.msra.mxu0 0
      %3327 = vmatprep.mubr.bf16.mxu0 %v2949
      %3328 = vmatmul.mubr.bf16.gmra.mrb[0].mxu0 %v2944
      %v3329 = vpop.f32.mrb[0].mxu0
      %v3330 = vadd.f32 %v2931, %v3329
      %v3331 = vpop.f32.mrb[0].mxu0
      %v3332 = vadd.f32 %v2931, %v3331
      %v3333 = vpop.f32.mrb[0].mxu0
      %v3334 = vadd.f32 %v2936, %v3333
      %v3335 = vpop.f32.mrb[0].mxu0
      %v3336 = vadd.f32 %v2936, %v3335
      %3337 = vdwg.mxu0
      %v3338 = vmax.f32 %v2986, 0.0
      %v3339 = vmax.f32 %v2988, 0.0
      %v3340 = vmax.f32 %v3029, 0.0
      %v3341 = vmax.f32 %v3031, 0.0
      %v3342 = vmax.f32 %v3072, 0.0
      %v3343 = vmax.f32 %v3074, 0.0
      %v3344 = vmax.f32 %v3115, 0.0
      %v3345 = vmax.f32 %v3117, 0.0
      %v3346 = vmax.f32 %v3158, 0.0
      %v3347 = vmax.f32 %v3160, 0.0
      %v3348 = vmax.f32 %v3201, 0.0
      %v3349 = vmax.f32 %v3203, 0.0
      %v3350 = vmax.f32 %v3244, 0.0
      %v3351 = vmax.f32 %v3246, 0.0
      %v3352 = vmax.f32 %v3287, 0.0
      %v3353 = vmax.f32 %v3289, 0.0
      %v3354 = vmax.f32 %v3330, 0.0
      %v3355 = vmax.f32 %v3332, 0.0
      %v3356 = vmax.f32 %v2990, 0.0
      %v3357 = vmax.f32 %v2992, 0.0
      %v3358 = vmax.f32 %v3033, 0.0
      %v3359 = vmax.f32 %v3035, 0.0
      %v3360 = vmax.f32 %v3076, 0.0
      %v3361 = vmax.f32 %v3078, 0.0
      %v3362 = vmax.f32 %v3119, 0.0
      %v3363 = vmax.f32 %v3121, 0.0
      %v3364 = vmax.f32 %v3162, 0.0
      %v3365 = vmax.f32 %v3164, 0.0
      %v3366 = vmax.f32 %v3205, 0.0
      %v3367 = vmax.f32 %v3207, 0.0
      %v3368 = vmax.f32 %v3248, 0.0
      %v3369 = vmax.f32 %v3250, 0.0
      %v3370 = vmax.f32 %v3291, 0.0
      %v3371 = vmax.f32 %v3293, 0.0
      %v3372 = vmax.f32 %v3334, 0.0
      %v3373 = vmax.f32 %v3336, 0.0
      %3374 = vst [vmem:[%s224] sm:$0xff] %v3338
      %3375 = vst [vmem:[%s224 + $0x8] sm:$0xff] %v3339
      %3376 = vst [vmem:[%s224 + $0x10] sm:$0xff] %v3340
      %3377 = vst [vmem:[%s224 + $0x18] sm:$0xff] %v3341
      %3378 = vst [vmem:[%s224 + $0x20] sm:$0xff] %v3342
      %3379 = vst [vmem:[%s224 + $0x28] sm:$0xff] %v3343
      %3380 = vst [vmem:[%s224 + $0x30] sm:$0xff] %v3344
      %3381 = vst [vmem:[%s224 + $0x38] sm:$0xff] %v3345
      %3382 = vst [vmem:[%s224 + $0x40] sm:$0xff] %v3346
      %3383 = vst [vmem:[%s224 + $0x48] sm:$0xff] %v3347
      %3384 = vst [vmem:[%s224 + $0x50] sm:$0xff] %v3348
      %3385 = vst [vmem:[%s224 + $0x58] sm:$0xff] %v3349
      %3386 = vst [vmem:[%s224 + $0x60] sm:$0xff] %v3350
      %3387 = vst [vmem:[%s224 + $0x68] sm:$0xff] %v3351
      %3388 = vst [vmem:[%s224 + $0x70] sm:$0xff] %v3352
      %3389 = vst [vmem:[%s224 + $0x78] sm:$0xff] %v3353
      %3390 = vst [vmem:[%s224 + $0x80] sm:$0xff] %v3354
      %3391 = vst [vmem:[%s224 + $0x88] sm:$0xff] %v3355
      %3392 = vst [vmem:[%s224 + $0x90] sm:$0xff] %v3356
      %3393 = vst [vmem:[%s224 + $0x98] sm:$0xff] %v3357
      %3394 = vst [vmem:[%s224 + $0xa0] sm:$0xff] %v3358
      %3395 = vst [vmem:[%s224 + $0xa8] sm:$0xff] %v3359
      %3396 = vst [vmem:[%s224 + $0xb0] sm:$0xff] %v3360
      %3397 = vst [vmem:[%s224 + $0xb8] sm:$0xff] %v3361
      %3398 = vst [vmem:[%s224 + $0xc0] sm:$0xff] %v3362
      %3399 = vst [vmem:[%s224 + $0xc8] sm:$0xff] %v3363
      %3400 = vst [vmem:[%s224 + $0xd0] sm:$0xff] %v3364
      %3401 = vst [vmem:[%s224 + $0xd8] sm:$0xff] %v3365
      %3402 = vst [vmem:[%s224 + $0xe0] sm:$0xff] %v3366
      %3403 = vst [vmem:[%s224 + $0xe8] sm:$0xff] %v3367
      %3404 = vst [vmem:[%s224 + $0xf0] sm:$0xff] %v3368
      %3405 = vst [vmem:[%s224 + $0xf8] sm:$0xff] %v3369
      %3406 = vst [vmem:[%s224 + $0x100] sm:$0xff] %v3370
      %3407 = vst [vmem:[%s224 + $0x108] sm:$0xff] %v3371
      %3408 = vst [vmem:[%s224 + $0x110] sm:$0xff] %v3372
      %3409 = vst [vmem:[%s224 + $0x118] sm:$0xff] %v3373
      %p3410 = scmp.lt.s32.totalorder %s16, 1
      %s3411 = scalar_select %p3410, %s16, 1
      %s3412 = smul.addr %s3411, 36
      %s3413 = smul.addr %s3412, 8
      %s3414 = scalar_lea.vmem %s5, %s3413
      // Predicated region
      $region41: #{unet_forward.5} parent=39 // pred_check
        %p3415 = pneg %p144
      $region42: #{unet_forward.5} parent=39 // pred_check_branch
        %3417 = sbr.rel (%p3415) target = $region44
      $region43: #{unet_forward.5} parent=39 // pred_region
        _
      $region44: #{unet_forward.5} parent=39 // pred_fallthru
        _
    $region40: #{unet_forward.5} parent=5 // pred_fallthru
      _
    %p3418 = scmp.le.s32.totalorder 2, %s11
    // Predicated region
    $region45: #{unet_forward.5} parent=5 // pred_check
      %p3419 = pneg %p3418
    $region46: #{unet_forward.5} parent=5 // pred_check_branch
      %3421 = sbr.rel (%p3419) target = $region48
    $region47: #{unet_forward.5} parent=5 // pred_region
      %s3422 = ssub.s32 %s11, 2
      // Predicated region
      $region49: #{unet_forward.5} parent=47 // pred_check
        %p3423 = pneg %p150
      $region50: #{unet_forward.5} parent=47 // pred_check_branch
        %3425 = sbr.rel (%p3423) target = $region52
      $region51: #{unet_forward.5} parent=47 // pred_region
        %p3426 = scmp.lt.s32.totalorder %s17, 1
        %s3427 = scalar_select %p3426, %s17, 1
        %s3428 = smul.addr %s3427, 36
        %s3429 = smul.addr %s3428, 8
        %s3430 = scalar_lea.vmem %s5, %s3429
      $region52: #{unet_forward.5} parent=47 // pred_fallthru
        _
    $region48: #{unet_forward.5} parent=5 // pred_fallthru
      _
  $region6: #{unet_forward.5} parent=0 // loop_footer
    %s15 = sadd.s32 1, %s11
  $region7: #{unet_forward.5} parent=0 // loop_footer_branch
    %10 = sbr.rel target = $region3
  $region8: #{unet_forward.5} parent=0 // loop_exit
    _

// kernel: unet_forward.6
$region0: #{unet_forward.6}
  #allocation0 [shape = 'u32[]', space=smem, size = 0x4, offset = 0x4, fixed_abs, tag = 'smem constant byte address 0x4 - core index']
  #allocation1 [shape = 'u32[144,128]{1,0:T(1,128)}', space=vmem, size = 0x12000, scoped, tag = 'internal scratch']
  %s0 = inlined_call_operand.vmem [shape: f32[2,16,768], index: 0, kind: input, shape index: {}]
  %s1 = inlined_call_operand.vmem [shape: bf16[32,144], index: 1, kind: input, shape index: {}]
  %s2 = inlined_call_operand.vmem [shape: f32[32,1], index: 2, kind: input, shape index: {}]
  %s3 = inlined_call_operand.vmem [shape: bf16[32,288], index: 3, kind: input, shape index: {}]
  %s4 = inlined_call_operand.vmem [shape: f32[32,1], index: 4, kind: input, shape index: {}]
  %s5 = inlined_call_operand.vmem [shape: f32[2,32,512], index: 5, kind: output, shape index: {}]
  %s6 = sld [smem:[#allocation0]]
  $region53: #{unet_forward.6} parent=0
    _
  %s8 = ssub.s32 1, %s6
  %s9 = scalar_select 0, %s8, %s6
  loop: start=0, step=1, limit=4
  $region2: #{unet_forward.6} parent=0 // loop_pre_header
    _
  $region3: #{unet_forward.6} parent=0 // loop_header
    %s11 = sphi 0, %s15
    %p12 = scmp.ge.s32.totalorder %s11, 4
    %s21 = sphi 0, %s23
    %s24 = sphi 0, %s21
    %s25 = sphi 0, %s24
    %s41 = sphi 0, %s25
    %s45 = sphi 0, %s45
    %s47 = sphi 0, %s45
    %s48 = sphi 0, %s47
    %s62 = sphi 0, %s48
    %s66 = sphi 0, %s66
    %s68 = sphi 0, %s66
    %s69 = sphi 0, %s68
    %s83 = sphi 0, %s69
    %s87 = sphi 0, %s87
    %s89 = sphi 0, %s87
    %s90 = sphi 0, %s89
    %s104 = sphi 0, %s90
    %s108 = sphi 0, %s108
    %s110 = sphi 0, %s108
    %s111 = sphi 0, %s110
    %s125 = sphi 0, %s111
    %s131 = sphi 0, %s133
    %s134 = sphi 0, %s131
    %s135 = sphi 0, %s134
    %s151 = sphi 0, %s135
  $region4: #{unet_forward.6} parent=0 // loop_header_branch
    %14 = sbr.rel (%p12) target = $region8
  $region5: #{unet_forward.6} parent=0 // loop_body
    %s16 = ssub.s32 %s11, 1
    %s17 = ssub.s32 %s11, 2
    %s18 = sadd.s32 %s11, 1
    %s19 = ssub.s32 %s11, %s18
    %p20 = scmp.eq.s32.totalorder %s19, 0
    %s22 = sadd.s32 %s21, 1
    %s23 = scalar_select %p20, %s21, %s22
    %p26 = pneg %p20
    %p27 = scmp.eq.s32.totalorder %s11, 1
    %p28 = por %p26, %p27
    %p29 = scmp.ne.s32.totalorder %s21, %s24
    %p30 = scmp.eq.s32.totalorder %s11, 0
    %p31 = por %p29, %p30
    %p32 = scmp.ne.s32.totalorder %s21, %s24
    %p33 = scmp.eq.s32.totalorder %s16, 1
    %p34 = por %p32, %p33
    %p35 = scmp.ne.s32.totalorder %s24, %s25
    %p36 = scmp.eq.s32.totalorder %s16, 0
    %p37 = por %p35, %p36
    %p38 = scmp.ne.s32.totalorder %s24, %s25
    %p39 = scmp.eq.s32.totalorder %s17, 1
    %p40 = por %p38, %p39
    %p42 = scmp.ne.s32.totalorder %s25, %s41
    %p43 = scmp.eq.s32.totalorder %s17, 0
    %p44 = por %p42, %p43
    %s46 = sadd.s32 %s45, 1
    %p49 = scmp.eq.s32.totalorder %s11, 1
    %p50 = scmp.ne.s32.totalorder %s45, %s47
    %p51 = scmp.eq.s32.totalorder %s11, 0
    %p52 = por %p50, %p51
    %p53 = scmp.ne.s32.totalorder %s45, %s47
    %p54 = scmp.eq.s32.totalorder %s16, 1
    %p55 = por %p53, %p54
    %p56 = scmp.ne.s32.totalorder %s47, %s48
    %p57 = scmp.eq.s32.totalorder %s16, 0
    %p58 = por %p56, %p57
    %p59 = scmp.ne.s32.totalorder %s47, %s48
    %p60 = scmp.eq.s32.totalorder %s17, 1
    %p61 = por %p59, %p60
    %p63 = scmp.ne.s32.totalorder %s48, %s62
    %p64 = scmp.eq.s32.totalorder %s17, 0
    %p65 = por %p63, %p64
    %s67 = sadd.s32 %s66, 1
    %p70 = scmp.eq.s32.totalorder %s11, 1
    %p71 = scmp.ne.s32.totalorder %s66, %s68
    %p72 = scmp.eq.s32.totalorder %s11, 0
    %p73 = por %p71, %p72
    %p74 = scmp.ne.s32.totalorder %s66, %s68
    %p75 = scmp.eq.s32.totalorder %s16, 1
    %p76 = por %p74, %p75
    %p77 = scmp.ne.s32.totalorder %s68, %s69
    %p78 = scmp.eq.s32.totalorder %s16, 0
    %p79 = por %p77, %p78
    %p80 = scmp.ne.s32.totalorder %s68, %s69
    %p81 = scmp.eq.s32.totalorder %s17, 1
    %p82 = por %p80, %p81
    %p84 = scmp.ne.s32.totalorder %s69, %s83
    %p85 = scmp.eq.s32.totalorder %s17, 0
    %p86 = por %p84, %p85
    %s88 = sadd.s32 %s87, 1
    %p91 = scmp.eq.s32.totalorder %s11, 1
    %p92 = scmp.ne.s32.totalorder %s87, %s89
    %p93 = scmp.eq.s32.totalorder %s11, 0
    %p94 = por %p92, %p93
    %p95 = scmp.ne.s32.totalorder %s87, %s89
    %p96 = scmp.eq.s32.totalorder %s16, 1
    %p97 = por %p95, %p96
    %p98 = scmp.ne.s32.totalorder %s89, %s90
    %p99 = scmp.eq.s32.totalorder %s16, 0
    %p100 = por %p98, %p99
    %p101 = scmp.ne.s32.totalorder %s89, %s90
    %p102 = scmp.eq.s32.totalorder %s17, 1
    %p103 = por %p101, %p102
    %p105 = scmp.ne.s32.totalorder %s90, %s104
    %p106 = scmp.eq.s32.totalorder %s17, 0
    %p107 = por %p105, %p106
    %s109 = sadd.s32 %s108, 1
    %p112 = scmp.eq.s32.totalorder %s11, 1
    %p113 = scmp.ne.s32.totalorder %s108, %s110
    %p114 = scmp.eq.s32.totalorder %s11, 0
    %p115 = por %p113, %p114
    %p116 = scmp.ne.s32.totalorder %s108, %s110
    %p117 = scmp.eq.s32.totalorder %s16, 1
    %p118 = por %p116, %p117
    %p119 = scmp.ne.s32.totalorder %s110, %s111
    %p120 = scmp.eq.s32.totalorder %s16, 0
    %p121 = por %p119, %p120
    %p122 = scmp.ne.s32.totalorder %s110, %s111
    %p123 = scmp.eq.s32.totalorder %s17, 1
    %p124 = por %p122, %p123
    %p126 = scmp.ne.s32.totalorder %s111, %s125
    %p127 = scmp.eq.s32.totalorder %s17, 0
    %p128 = por %p126, %p127
    %s129 = ssub.s32 %s11, %s18
    %p130 = scmp.eq.s32.totalorder %s129, 0
    %s132 = sadd.s32 %s131, 1
    %s133 = scalar_select %p130, %s131, %s132
    %p136 = pneg %p130
    %p137 = scmp.eq.s32.totalorder %s11, 1
    %p138 = por %p136, %p137
    %p139 = scmp.ne.s32.totalorder %s131, %s134
    %p140 = scmp.eq.s32.totalorder %s11, 0
    %p141 = por %p139, %p140
    %p142 = scmp.ne.s32.totalorder %s131, %s134
    %p143 = scmp.eq.s32.totalorder %s16, 1
    %p144 = por %p142, %p143
    %p145 = scmp.ne.s32.totalorder %s134, %s135
    %p146 = scmp.eq.s32.totalorder %s16, 0
    %p147 = por %p145, %p146
    %p148 = scmp.ne.s32.totalorder %s134, %s135
    %p149 = scmp.eq.s32.totalorder %s17, 1
    %p150 = por %p148, %p149
    %p152 = scmp.ne.s32.totalorder %s135, %s151
    %p153 = scmp.eq.s32.totalorder %s17, 0
    %p154 = por %p152, %p153
    %p155 = scmp.le.s32.totalorder 1, %s11
    %p156 = scmp.lt.s32.totalorder %s11, 3
    %p157 = pnand %p155, %p156
    %p158 = pneg %p157
    // Predicated region
    $region9: #{unet_forward.6} parent=5 // pred_check
      _
    $region10: #{unet_forward.6} parent=5 // pred_check_branch
      %160 = sbr.rel (%p157) target = $region12
    $region11: #{unet_forward.6} parent=5 // pred_region
      %s161 = ssub.s32 %s11, 1
      // Predicated region
      $region13: #{unet_forward.6} parent=11 // pred_check
        %p162 = pneg %p58
      $region14: #{unet_forward.6} parent=11 // pred_check_branch
        %164 = sbr.rel (%p162) target = $region16
      $region15: #{unet_forward.6} parent=11 // pred_region
        _
      $region16: #{unet_forward.6} parent=11 // pred_fallthru
        _
      // Predicated region
      $region17: #{unet_forward.6} parent=11 // pred_check
        %p165 = pneg %p79
      $region18: #{unet_forward.6} parent=11 // pred_check_branch
        %167 = sbr.rel (%p165) target = $region20
      $region19: #{unet_forward.6} parent=11 // pred_region
        _
      $region20: #{unet_forward.6} parent=11 // pred_fallthru
        _
      // Predicated region
      $region21: #{unet_forward.6} parent=11 // pred_check
        %p168 = pneg %p100
      $region22: #{unet_forward.6} parent=11 // pred_check_branch
        %170 = sbr.rel (%p168) target = $region24
      $region23: #{unet_forward.6} parent=11 // pred_region
        _
      $region24: #{unet_forward.6} parent=11 // pred_fallthru
        _
      // Predicated region
      $region25: #{unet_forward.6} parent=11 // pred_check
        %p171 = pneg %p121
      $region26: #{unet_forward.6} parent=11 // pred_check_branch
        %173 = sbr.rel (%p171) target = $region28
      $region27: #{unet_forward.6} parent=11 // pred_region
        _
      $region28: #{unet_forward.6} parent=11 // pred_fallthru
        _
    $region12: #{unet_forward.6} parent=5 // pred_fallthru
      _
    %p174 = scmp.lt.s32.totalorder %s11, 2
    // Predicated region
    $region29: #{unet_forward.6} parent=5 // pred_check
      %p175 = pneg %p174
    $region30: #{unet_forward.6} parent=5 // pred_check_branch
      %177 = sbr.rel (%p175) target = $region32
    $region31: #{unet_forward.6} parent=5 // pred_region
      // Predicated region
      $region33: #{unet_forward.6} parent=31 // pred_check
        %p178 = pneg %p31
      $region34: #{unet_forward.6} parent=31 // pred_check_branch
        %180 = sbr.rel (%p178) target = $region36
      $region35: #{unet_forward.6} parent=31 // pred_region
        %p181 = scmp.lt.s32.totalorder %s11, 1
        %s182 = scalar_select %p181, %s11, 1
        %s183 = smul.addr %s182, 12
        %s184 = smul.addr %s183, 8
        %s185 = scalar_lea.vmem %s0, %s184
      $region36: #{unet_forward.6} parent=31 // pred_fallthru
        _
    $region32: #{unet_forward.6} parent=5 // pred_fallthru
      _
    %p186 = scmp.le.s32.totalorder 1, %s11
    %p187 = scmp.lt.s32.totalorder %s11, 3
    %p188 = pnand %p186, %p187
    %p189 = pneg %p188
    // Predicated region
    $region37: #{unet_forward.6} parent=5 // pred_check
      _
    $region38: #{unet_forward.6} parent=5 // pred_check_branch
      %191 = sbr.rel (%p188) target = $region40
    $region39: #{unet_forward.6} parent=5 // pred_region
      %s192 = ssub.s32 %s11, 1
      %p193 = scmp.lt.s32.totalorder %s16, 1
      %s194 = scalar_select %p193, %s16, 1
      %s195 = smul.addr %s194, 12
      %s196 = smul.addr %s195, 8
      %s197 = scalar_lea.vmem %s0, %s196
      %p198 = pneg %p37
      %p199 = pneg %p34
      %p200 = pneg %p58
      %p201 = pneg %p55
      %p202 = pneg %p79
      %p203 = pneg %p76
      %p204 = pneg %p100
      %p205 = pneg %p97
      %p206 = pneg %p121
      %p207 = pneg %p118
      %p208 = pneg %p147
      %p209 = pneg %p144
      %p210 = scmp.lt.s32.totalorder %s16, 1
      %s211 = scalar_select %p210, %s16, 1
      %s212 = smul.addr %s211, 16
      %s213 = smul.addr %s212, 8
      %s214 = scalar_lea.vmem %s5, %s213
      %p215 = scmp.lt.s32.totalorder %s16, 1
      %s216 = scalar_select %p215, %s16, 1
      %s217 = smul.addr %s216, 12
      %s218 = smul.addr %s217, 8
      %s219 = scalar_lea.vmem %s0, %s218
      %p220 = scmp.lt.s32.totalorder %s16, 1
      %s221 = scalar_select %p220, %s16, 1
      %s222 = smul.addr %s221, 16
      %s223 = smul.addr %s222, 8
      %s224 = scalar_lea.vmem %s5, %s223
      %v226 = vld [vmem:[%s219] sm:$0xff]
      %v227 = vld [vmem:[%s219 + $0x8] sm:$0xff]
      %v228 = vld [vmem:[%s219 + $0x10] sm:$0xff]
      %v229 = vld [vmem:[%s219 + $0x18] sm:$0xff]
      %v230 = vld [vmem:[%s219 + $0x20] sm:$0xff]
      %v231 = vld [vmem:[%s219 + $0x28] sm:$0xff]
      %v232 = vld [vmem:[%s219 + $0x30] sm:$0xff]
      %v233 = vld [vmem:[%s219 + $0x38] sm:$0xff]
      %v234 = vld [vmem:[%s219 + $0x40] sm:$0xff]
      %v235 = vld [vmem:[%s219 + $0x48] sm:$0xff]
      %v236 = vld [vmem:[%s219 + $0x50] sm:$0xff]
      %v237 = vld [vmem:[%s219 + $0x58] sm:$0xff]
      %v238 = vld [vmem:[%s1] sm:$0xff]
      %v239 = vld [vmem:[%s1 + $0x8] sm:$0xff]
      %v240 = vld [vmem:[%s1 + $0x10] sm:$0xff]
      %v241 = vld [vmem:[%s1 + $0x18] sm:$0xff]
      %v242 = vld [vmem:[%s2] sm:$0xff]
      %v243 = vld [vmem:[%s2 + $0x8] sm:$0xff]
      %v244 = vld [vmem:[%s2 + $0x10] sm:$0xff]
      %v245 = vld [vmem:[%s2 + $0x18] sm:$0xff]
      %258 = vrot.lane.b32.xlu0 %v226, 127
      %v259 = vpop.permute.xlu0 %258
      %260 = vrot.lane.b32.xlu0 %v227, 127
      %v261 = vpop.permute.xlu0 %260
      %262 = vrot.lane.b32.xlu0 %v228, 127
      %v263 = vpop.permute.xlu0 %262
      %264 = vrot.lane.b32.xlu0 %v229, 127
      %v265 = vpop.permute.xlu0 %264
      %266 = vrot.lane.b32.xlu0 %v230, 127
      %v267 = vpop.permute.xlu0 %266
      %268 = vrot.lane.b32.xlu0 %v231, 127
      %v269 = vpop.permute.xlu0 %268
      %270 = vrot.lane.b32.xlu0 %v232, 127
      %v271 = vpop.permute.xlu0 %270
      %272 = vrot.lane.b32.xlu0 %v233, 127
      %v273 = vpop.permute.xlu0 %272
      %274 = vrot.lane.b32.xlu0 %v234, 127
      %v275 = vpop.permute.xlu0 %274
      %276 = vrot.lane.b32.xlu0 %v235, 127
      %v277 = vpop.permute.xlu0 %276
      %278 = vrot.lane.b32.xlu0 %v236, 127
      %v279 = vpop.permute.xlu0 %278
      %280 = vrot.lane.b32.xlu0 %v237, 127
      %v281 = vpop.permute.xlu0 %280
      %vm282 = vcmask 1039360
      %v283 = vsel %vm282, %v259, %v261
      %v284 = vsel %vm282, %v261, %v263
      %v285 = vsel %vm282, %v263, %v265
      %v286 = vsel %vm282, %v265, %v267
      %v287 = vsel %vm282, %v267, %v269
      %v288 = vsel %vm282, %v271, %v273
      %v289 = vsel %vm282, %v273, %v275
      %v290 = vsel %vm282, %v275, %v277
      %v291 = vsel %vm282, %v277, %v279
      %v292 = vsel %vm282, %v279, %v281
      %303 = vrot.lane.b32.xlu0 %v226, 126
      %v304 = vpop.permute.xlu0 %303
      %305 = vrot.lane.b32.xlu0 %v227, 126
      %v306 = vpop.permute.xlu0 %305
      %307 = vrot.lane.b32.xlu0 %v228, 126
      %v308 = vpop.permute.xlu0 %307
      %309 = vrot.lane.b32.xlu0 %v229, 126
      %v310 = vpop.permute.xlu0 %309
      %311 = vrot.lane.b32.xlu0 %v230, 126
      %v312 = vpop.permute.xlu0 %311
      %313 = vrot.lane.b32.xlu0 %v231, 126
      %v314 = vpop.permute.xlu0 %313
      %315 = vrot.lane.b32.xlu0 %v232, 126
      %v316 = vpop.permute.xlu0 %315
      %317 = vrot.lane.b32.xlu0 %v233, 126
      %v318 = vpop.permute.xlu0 %317
      %319 = vrot.lane.b32.xlu0 %v234, 126
      %v320 = vpop.permute.xlu0 %319
      %321 = vrot.lane.b32.xlu0 %v235, 126
      %v322 = vpop.permute.xlu0 %321
      %323 = vrot.lane.b32.xlu0 %v236, 126
      %v324 = vpop.permute.xlu0 %323
      %325 = vrot.lane.b32.xlu0 %v237, 126
      %v326 = vpop.permute.xlu0 %325
      %vm327 = vcmask 1031168
      %v328 = vsel %vm327, %v304, %v306
      %v329 = vsel %vm327, %v306, %v308
      %v330 = vsel %vm327, %v308, %v310
      %v331 = vsel %vm327, %v310, %v312
      %v332 = vsel %vm327, %v312, %v314
      %v333 = vsel %vm327, %v316, %v318
      %v334 = vsel %vm327, %v318, %v320
      %v335 = vsel %vm327, %v320, %v322
      %v336 = vsel %vm327, %v322, %v324
      %v337 = vsel %vm327, %v324, %v326
      %348 = vrot.lane.b32.xlu0 %v226, 106
      %v349 = vpop.permute.xlu0 %348
      %350 = vrot.lane.b32.xlu0 %v227, 106
      %v351 = vpop.permute.xlu0 %350
      %352 = vrot.lane.b32.xlu0 %v228, 106
      %v353 = vpop.permute.xlu0 %352
      %354 = vrot.lane.b32.xlu0 %v229, 106
      %v355 = vpop.permute.xlu0 %354
      %356 = vrot.lane.b32.xlu0 %v230, 106
      %v357 = vpop.permute.xlu0 %356
      %358 = vrot.lane.b32.xlu0 %v231, 106
      %v359 = vpop.permute.xlu0 %358
      %360 = vrot.lane.b32.xlu0 %v232, 106
      %v361 = vpop.permute.xlu0 %360
      %362 = vrot.lane.b32.xlu0 %v233, 106
      %v363 = vpop.permute.xlu0 %362
      %364 = vrot.lane.b32.xlu0 %v234, 106
      %v365 = vpop.permute.xlu0 %364
      %366 = vrot.lane.b32.xlu0 %v235, 106
      %v367 = vpop.permute.xlu0 %366
      %368 = vrot.lane.b32.xlu0 %v236, 106
      %v369 = vpop.permute.xlu0 %368
      %370 = vrot.lane.b32.xlu0 %v237, 106
      %v371 = vpop.permute.xlu0 %370
      %vm372 = vcmask 867328
      %v373 = vsel %vm372, %v349, %v351
      %v374 = vsel %vm372, %v351, %v353
      %v375 = vsel %vm372, %v353, %v355
      %v376 = vsel %vm372, %v355, %v357
      %v377 = vsel %vm372, %v357, %v359
      %v378 = vsel %vm372, %v361, %v363
      %v379 = vsel %vm372, %v363, %v365
      %v380 = vsel %vm372, %v365, %v367
      %v381 = vsel %vm372, %v367, %v369
      %v382 = vsel %vm372, %v369, %v371
      %393 = vrot.lane.b32.xlu0 %v226, 105
      %v394 = vpop.permute.xlu0 %393
      %395 = vrot.lane.b32.xlu0 %v227, 105
      %v396 = vpop.permute.xlu0 %395
      %397 = vrot.lane.b32.xlu0 %v228, 105
      %v398 = vpop.permute.xlu0 %397
      %399 = vrot.lane.b32.xlu0 %v229, 105
      %v400 = vpop.permute.xlu0 %399
      %401 = vrot.lane.b32.xlu0 %v230, 105
      %v402 = vpop.permute.xlu0 %401
      %403 = vrot.lane.b32.xlu0 %v231, 105
      %v404 = vpop.permute.xlu0 %403
      %405 = vrot.lane.b32.xlu0 %v232, 105
      %v406 = vpop.permute.xlu0 %405
      %407 = vrot.lane.b32.xlu0 %v233, 105
      %v408 = vpop.permute.xlu0 %407
      %409 = vrot.lane.b32.xlu0 %v234, 105
      %v410 = vpop.permute.xlu0 %409
      %411 = vrot.lane.b32.xlu0 %v235, 105
      %v412 = vpop.permute.xlu0 %411
      %413 = vrot.lane.b32.xlu0 %v236, 105
      %v414 = vpop.permute.xlu0 %413
      %415 = vrot.lane.b32.xlu0 %v237, 105
      %v416 = vpop.permute.xlu0 %415
      %vm417 = vcmask 859136
      %v418 = vsel %vm417, %v394, %v396
      %v419 = vsel %vm417, %v396, %v398
      %v420 = vsel %vm417, %v398, %v400
      %v421 = vsel %vm417, %v400, %v402
      %v422 = vsel %vm417, %v402, %v404
      %v423 = vsel %vm417, %v406, %v408
      %v424 = vsel %vm417, %v408, %v410
      %v425 = vsel %vm417, %v410, %v412
      %v426 = vsel %vm417, %v412, %v414
      %v427 = vsel %vm417, %v414, %v416
      %438 = vrot.lane.b32.xlu0 %v226, 104
      %v439 = vpop.permute.xlu0 %438
      %440 = vrot.lane.b32.xlu0 %v227, 104
      %v441 = vpop.permute.xlu0 %440
      %442 = vrot.lane.b32.xlu0 %v228, 104
      %v443 = vpop.permute.xlu0 %442
      %444 = vrot.lane.b32.xlu0 %v229, 104
      %v445 = vpop.permute.xlu0 %444
      %446 = vrot.lane.b32.xlu0 %v230, 104
      %v447 = vpop.permute.xlu0 %446
      %448 = vrot.lane.b32.xlu0 %v231, 104
      %v449 = vpop.permute.xlu0 %448
      %450 = vrot.lane.b32.xlu0 %v232, 104
      %v451 = vpop.permute.xlu0 %450
      %452 = vrot.lane.b32.xlu0 %v233, 104
      %v453 = vpop.permute.xlu0 %452
      %454 = vrot.lane.b32.xlu0 %v234, 104
      %v455 = vpop.permute.xlu0 %454
      %456 = vrot.lane.b32.xlu0 %v235, 104
      %v457 = vpop.permute.xlu0 %456
      %458 = vrot.lane.b32.xlu0 %v236, 104
      %v459 = vpop.permute.xlu0 %458
      %460 = vrot.lane.b32.xlu0 %v237, 104
      %v461 = vpop.permute.xlu0 %460
      %vm462 = vcmask 850944
      %v463 = vsel %vm462, %v439, %v441
      %v464 = vsel %vm462, %v441, %v443
      %v465 = vsel %vm462, %v443, %v445
      %v466 = vsel %vm462, %v445, %v447
      %v467 = vsel %vm462, %v447, %v449
      %v468 = vsel %vm462, %v451, %v453
      %v469 = vsel %vm462, %v453, %v455
      %v470 = vsel %vm462, %v455, %v457
      %v471 = vsel %vm462, %v457, %v459
      %v472 = vsel %vm462, %v459, %v461
      %483 = vrot.lane.b32.xlu0 %v226, 84
      %v484 = vpop.permute.xlu0 %483
      %485 = vrot.lane.b32.xlu0 %v227, 84
      %v486 = vpop.permute.xlu0 %485
      %487 = vrot.lane.b32.xlu0 %v228, 84
      %v488 = vpop.permute.xlu0 %487
      %489 = vrot.lane.b32.xlu0 %v229, 84
      %v490 = vpop.permute.xlu0 %489
      %491 = vrot.lane.b32.xlu0 %v230, 84
      %v492 = vpop.permute.xlu0 %491
      %493 = vrot.lane.b32.xlu0 %v231, 84
      %v494 = vpop.permute.xlu0 %493
      %495 = vrot.lane.b32.xlu0 %v232, 84
      %v496 = vpop.permute.xlu0 %495
      %497 = vrot.lane.b32.xlu0 %v233, 84
      %v498 = vpop.permute.xlu0 %497
      %499 = vrot.lane.b32.xlu0 %v234, 84
      %v500 = vpop.permute.xlu0 %499
      %501 = vrot.lane.b32.xlu0 %v235, 84
      %v502 = vpop.permute.xlu0 %501
      %503 = vrot.lane.b32.xlu0 %v236, 84
      %v504 = vpop.permute.xlu0 %503
      %505 = vrot.lane.b32.xlu0 %v237, 84
      %v506 = vpop.permute.xlu0 %505
      %vm507 = vcmask 687104
      %v508 = vsel %vm507, %v484, %v486
      %v509 = vsel %vm507, %v486, %v488
      %v510 = vsel %vm507, %v488, %v490
      %v511 = vsel %vm507, %v490, %v492
      %v512 = vsel %vm507, %v492, %v494
      %v513 = vsel %vm507, %v496, %v498
      %v514 = vsel %vm507, %v498, %v500
      %v515 = vsel %vm507, %v500, %v502
      %v516 = vsel %vm507, %v502, %v504
      %v517 = vsel %vm507, %v504, %v506
      %528 = vrot.lane.b32.xlu0 %v226, 83
      %v529 = vpop.permute.xlu0 %528
      %530 = vrot.lane.b32.xlu0 %v227, 83
      %v531 = vpop.permute.xlu0 %530
      %532 = vrot.lane.b32.xlu0 %v228, 83
      %v533 = vpop.permute.xlu0 %532
      %534 = vrot.lane.b32.xlu0 %v229, 83
      %v535 = vpop.permute.xlu0 %534
      %536 = vrot.lane.b32.xlu0 %v230, 83
      %v537 = vpop.permute.xlu0 %536
      %538 = vrot.lane.b32.xlu0 %v231, 83
      %v539 = vpop.permute.xlu0 %538
      %540 = vrot.lane.b32.xlu0 %v232, 83
      %v541 = vpop.permute.xlu0 %540
      %542 = vrot.lane.b32.xlu0 %v233, 83
      %v543 = vpop.permute.xlu0 %542
      %544 = vrot.lane.b32.xlu0 %v234, 83
      %v545 = vpop.permute.xlu0 %544
      %546 = vrot.lane.b32.xlu0 %v235, 83
      %v547 = vpop.permute.xlu0 %546
      %548 = vrot.lane.b32.xlu0 %v236, 83
      %v549 = vpop.permute.xlu0 %548
      %550 = vrot.lane.b32.xlu0 %v237, 83
      %v551 = vpop.permute.xlu0 %550
      %vm552 = vcmask 678912
      %v553 = vsel %vm552, %v529, %v531
      %v554 = vsel %vm552, %v531, %v533
      %v555 = vsel %vm552, %v533, %v535
      %v556 = vsel %vm552, %v535, %v537
      %v557 = vsel %vm552, %v537, %v539
      %v558 = vsel %vm552, %v541, %v543
      %v559 = vsel %vm552, %v543, %v545
      %v560 = vsel %vm552, %v545, %v547
      %v561 = vsel %vm552, %v547, %v549
      %v562 = vsel %vm552, %v549, %v551
      %573 = vrot.lane.b32.xlu0 %v226, 82
      %v574 = vpop.permute.xlu0 %573
      %575 = vrot.lane.b32.xlu0 %v227, 82
      %v576 = vpop.permute.xlu0 %575
      %577 = vrot.lane.b32.xlu0 %v228, 82
      %v578 = vpop.permute.xlu0 %577
      %579 = vrot.lane.b32.xlu0 %v229, 82
      %v580 = vpop.permute.xlu0 %579
      %581 = vrot.lane.b32.xlu0 %v230, 82
      %v582 = vpop.permute.xlu0 %581
      %583 = vrot.lane.b32.xlu0 %v231, 82
      %v584 = vpop.permute.xlu0 %583
      %585 = vrot.lane.b32.xlu0 %v232, 82
      %v586 = vpop.permute.xlu0 %585
      %587 = vrot.lane.b32.xlu0 %v233, 82
      %v588 = vpop.permute.xlu0 %587
      %589 = vrot.lane.b32.xlu0 %v234, 82
      %v590 = vpop.permute.xlu0 %589
      %591 = vrot.lane.b32.xlu0 %v235, 82
      %v592 = vpop.permute.xlu0 %591
      %593 = vrot.lane.b32.xlu0 %v236, 82
      %v594 = vpop.permute.xlu0 %593
      %595 = vrot.lane.b32.xlu0 %v237, 82
      %v596 = vpop.permute.xlu0 %595
      %vm597 = vcmask 670720
      %v598 = vsel %vm597, %v574, %v576
      %v599 = vsel %vm597, %v576, %v578
      %v600 = vsel %vm597, %v578, %v580
      %v601 = vsel %vm597, %v580, %v582
      %v602 = vsel %vm597, %v582, %v584
      %v603 = vsel %vm597, %v586, %v588
      %v604 = vsel %vm597, %v588, %v590
      %v605 = vsel %vm597, %v590, %v592
      %v606 = vsel %vm597, %v592, %v594
      %v607 = vsel %vm597, %v594, %v596
      %v618 = vpack.c.bf16 %v232, %v226
      %v619 = vpack.c.bf16 %v233, %v227
      %v620 = vpack.c.bf16 %v234, %v228
      %v621 = vpack.c.bf16 %v235, %v229
      %v622 = vpack.c.bf16 %v236, %v230
      %v623 = vpack.c.bf16 %v288, %v283
      %v624 = vpack.c.bf16 %v289, %v284
      %v625 = vpack.c.bf16 %v290, %v285
      %v626 = vpack.c.bf16 %v291, %v286
      %v627 = vpack.c.bf16 %v292, %v287
      %v628 = vpack.c.bf16 %v333, %v328
      %v629 = vpack.c.bf16 %v334, %v329
      %v630 = vpack.c.bf16 %v335, %v330
      %v631 = vpack.c.bf16 %v336, %v331
      %v632 = vpack.c.bf16 %v337, %v332
      %v633 = vpack.c.bf16 %v378, %v373
      %v634 = vpack.c.bf16 %v379, %v374
      %v635 = vpack.c.bf16 %v380, %v375
      %v636 = vpack.c.bf16 %v381, %v376
      %v637 = vpack.c.bf16 %v382, %v377
      %v638 = vpack.c.bf16 %v423, %v418
      %v639 = vpack.c.bf16 %v424, %v419
      %v640 = vpack.c.bf16 %v425, %v420
      %v641 = vpack.c.bf16 %v426, %v421
      %v642 = vpack.c.bf16 %v427, %v422
      %v643 = vpack.c.bf16 %v468, %v463
      %v644 = vpack.c.bf16 %v469, %v464
      %v645 = vpack.c.bf16 %v470, %v465
      %v646 = vpack.c.bf16 %v471, %v466
      %v647 = vpack.c.bf16 %v472, %v467
      %v648 = vpack.c.bf16 %v513, %v508
      %v649 = vpack.c.bf16 %v514, %v509
      %v650 = vpack.c.bf16 %v515, %v510
      %v651 = vpack.c.bf16 %v516, %v511
      %v652 = vpack.c.bf16 %v517, %v512
      %v653 = vpack.c.bf16 %v558, %v553
      %v654 = vpack.c.bf16 %v559, %v554
      %v655 = vpack.c.bf16 %v560, %v555
      %v656 = vpack.c.bf16 %v561, %v556
      %v657 = vpack.c.bf16 %v562, %v557
      %v658 = vpack.c.bf16 %v603, %v598
      %v659 = vpack.c.bf16 %v604, %v599
      %v660 = vpack.c.bf16 %v605, %v600
      %v661 = vpack.c.bf16 %v606, %v601
      %v662 = vpack.c.bf16 %v607, %v602
      %664 = vset.pattern.permute.xlu0 0
      %665 = vperm.xlu0 %664, %v242
      %v666 = vpop.permute.xlu0 %665
      %669 = vset.pattern.permute.xlu0 0
      %670 = vperm.xlu0 %669, %v243
      %v671 = vpop.permute.xlu0 %670
      %674 = vset.pattern.permute.xlu0 0
      %675 = vperm.xlu0 %674, %v244
      %v676 = vpop.permute.xlu0 %675
      %679 = vset.pattern.permute.xlu0 0
      %680 = vperm.xlu0 %679, %v245
      %v681 = vpop.permute.xlu0 %680
      %v687 = vunpack.c.l.b16 %v238
      %v688 = vunpack.c.h.b16 %v238
      %v689 = vunpack.c.l.b16 %v239
      %v690 = vunpack.c.h.b16 %v239
      %v691 = vunpack.c.l.b16 %v240
      %v692 = vunpack.c.h.b16 %v240
      %v693 = vunpack.c.l.b16 %v241
      %v694 = vunpack.c.h.b16 %v241
      %v695 = vpack.c.b16 %v689, %v687
      %v696 = vpack.c.b16 %v690, %v688
      %v697 = vpack.c.b16 %v693, %v691
      %v698 = vpack.c.b16 %v694, %v692
      %vm701 = vcmask 130048
      %v703 = vsel %vm701, %v696, 0
      %v706 = vsel %vm701, %v698, 0
      %708 = vmatprep.subr.bf16.mxu0 %v619
      %709 = vmatpush1.bf16.msra.mxu0 %v618
      %710 = vmatprep.subr.bf16.mxu0 %v624
      %711 = vmatpush1.bf16.msra.mxu0 %v623
      %712 = vmatprep.subr.bf16.mxu0 %v629
      %713 = vmatpush1.bf16.msra.mxu0 %v628
      %714 = vmatprep.subr.bf16.mxu0 %v634
      %715 = vmatpush1.bf16.msra.mxu0 %v633
      %716 = vmatprep.subr.bf16.mxu0 %v639
      %717 = vmatpush1.bf16.msra.mxu0 %v638
      %718 = vmatprep.subr.bf16.mxu0 %v644
      %719 = vmatpush1.bf16.msra.mxu0 %v643
      %720 = vmatprep.subr.bf16.mxu0 %v649
      %721 = vmatpush1.bf16.msra.mxu0 %v648
      %722 = vmatprep.subr.bf16.mxu0 %v654
      %723 = vmatpush1.bf16.msra.mxu0 %v653
      %724 = vmatprep.subr.bf16.mxu0 %v659
      %725 = vmatpush1.bf16.msra.mxu0 %v658
      %726 = vmatprep.subr.bf16.mxu0 0
      %727 = vmatpush1.bf16.msra.mxu0 0
      %728 = vmatprep.subr.bf16.mxu0 0
      %729 = vmatpush1.bf16.msra.mxu0 0
      %730 = vmatprep.subr.bf16.mxu0 0
      %731 = vmatpush1.bf16.msra.mxu0 0
      %732 = vmatprep.subr.bf16.mxu0 0
      %733 = vmatpush1.bf16.msra.mxu0 0
      %734 = vmatprep.subr.bf16.mxu0 0
      %735 = vmatpush1.bf16.msra.mxu0 0
      %736 = vmatprep.subr.bf16.mxu0 0
      %737 = vmatpush1.bf16.msra.mxu0 0
      %738 = vmatprep.subr.bf16.mxu0 0
      %739 = vmatpush1.bf16.msra.mxu0 0
      %740 = vmatprep.mubr.bf16.mxu0 %v703
      %741 = vmatmul.mubr.bf16.gmra.mrb[0].mxu0 %v695
      %v742 = vpop.f32.mrb[0].mxu0
      %v743 = vadd.f32 %v666, %v742
      %v744 = vpop.f32.mrb[0].mxu0
      %v745 = vadd.f32 %v666, %v744
      %v746 = vpop.f32.mrb[0].mxu0
      %v747 = vadd.f32 %v671, %v746
      %v748 = vpop.f32.mrb[0].mxu0
      %v749 = vadd.f32 %v671, %v748
      %750 = vmatprep.mubr.bf16.mxu0 %v706
      %751 = vmatmul.mubr.bf16.gmra.mrb[0].mxu0 %v697
      %v752 = vpop.f32.mrb[0].mxu0
      %v753 = vadd.f32 %v676, %v752
      %v754 = vpop.f32.mrb[0].mxu0
      %v755 = vadd.f32 %v676, %v754
      %v756 = vpop.f32.mrb[0].mxu0
      %v757 = vadd.f32 %v681, %v756
      %v758 = vpop.f32.mrb[0].mxu0
      %v759 = vadd.f32 %v681, %v758
      %760 = vdwg.mxu0
      %761 = vmatprep.subr.bf16.mxu0 %v621
      %762 = vmatpush1.bf16.msra.mxu0 %v620
      %763 = vmatprep.subr.bf16.mxu0 %v626
      %764 = vmatpush1.bf16.msra.mxu0 %v625
      %765 = vmatprep.subr.bf16.mxu0 %v631
      %766 = vmatpush1.bf16.msra.mxu0 %v630
      %767 = vmatprep.subr.bf16.mxu0 %v636
      %768 = vmatpush1.bf16.msra.mxu0 %v635
      %769 = vmatprep.subr.bf16.mxu0 %v641
      %770 = vmatpush1.bf16.msra.mxu0 %v640
      %771 = vmatprep.subr.bf16.mxu0 %v646
      %772 = vmatpush1.bf16.msra.mxu0 %v645
      %773 = vmatprep.subr.bf16.mxu0 %v651
      %774 = vmatpush1.bf16.msra.mxu0 %v650
      %775 = vmatprep.subr.bf16.mxu0 %v656
      %776 = vmatpush1.bf16.msra.mxu0 %v655
      %777 = vmatprep.subr.bf16.mxu0 %v661
      %778 = vmatpush1.bf16.msra.mxu0 %v660
      %779 = vmatprep.subr.bf16.mxu0 0
      %780 = vmatpush1.bf16.msra.mxu0 0
      %781 = vmatprep.subr.bf16.mxu0 0
      %782 = vmatpush1.bf16.msra.mxu0 0
      %783 = vmatprep.subr.bf16.mxu0 0
      %784 = vmatpush1.bf16.msra.mxu0 0
      %785 = vmatprep.subr.bf16.mxu0 0
      %786 = vmatpush1.bf16.msra.mxu0 0
      %787 = vmatprep.subr.bf16.mxu0 0
      %788 = vmatpush1.bf16.msra.mxu0 0
      %789 = vmatprep.subr.bf16.mxu0 0
      %790 = vmatpush1.bf16.msra.mxu0 0
      %791 = vmatprep.subr.bf16.mxu0 0
      %792 = vmatpush1.bf16.msra.mxu0 0
      %793 = vmatprep.mubr.bf16.mxu0 %v703
      %794 = vmatmul.mubr.bf16.gmra.mrb[0].mxu0 %v695
      %v795 = vpop.f32.mrb[0].mxu0
      %v796 = vadd.f32 %v666, %v795
      %v797 = vpop.f32.mrb[0].mxu0
      %v798 = vadd.f32 %v666, %v797
      %v799 = vpop.f32.mrb[0].mxu0
      %v800 = vadd.f32 %v671, %v799
      %v801 = vpop.f32.mrb[0].mxu0
      %v802 = vadd.f32 %v671, %v801
      %803 = vmatprep.mubr.bf16.mxu0 %v706
      %804 = vmatmul.mubr.bf16.gmra.mrb[0].mxu0 %v697
      %v805 = vpop.f32.mrb[0].mxu0
      %v806 = vadd.f32 %v676, %v805
      %v807 = vpop.f32.mrb[0].mxu0
      %v808 = vadd.f32 %v676, %v807
      %v809 = vpop.f32.mrb[0].mxu0
      %v810 = vadd.f32 %v681, %v809
      %v811 = vpop.f32.mrb[0].mxu0
      %v812 = vadd.f32 %v681, %v811
      %813 = vdwg.mxu0
      %814 = vmatprep.subr.bf16.mxu0 0
      %815 = vmatpush1.bf16.msra.mxu0 %v622
      %816 = vmatprep.subr.bf16.mxu0 0
      %817 = vmatpush1.bf16.msra.mxu0 %v627
      %818 = vmatprep.subr.bf16.mxu0 0
      %819 = vmatpush1.bf16.msra.mxu0 %v632
      %820 = vmatprep.subr.bf16.mxu0 0
      %821 = vmatpush1.bf16.msra.mxu0 %v637
      %822 = vmatprep.subr.bf16.mxu0 0
      %823 = vmatpush1.bf16.msra.mxu0 %v642
      %824 = vmatprep.subr.bf16.mxu0 0
      %825 = vmatpush1.bf16.msra.mxu0 %v647
      %826 = vmatprep.subr.bf16.mxu0 0
      %827 = vmatpush1.bf16.msra.mxu0 %v652
      %828 = vmatprep.subr.bf16.mxu0 0
      %829 = vmatpush1.bf16.msra.mxu0 %v657
      %830 = vmatprep.subr.bf16.mxu0 0
      %831 = vmatpush1.bf16.msra.mxu0 %v662
      %832 = vmatprep.subr.bf16.mxu0 0
      %833 = vmatpush1.bf16.msra.mxu0 0
      %834 = vmatprep.subr.bf16.mxu0 0
      %835 = vmatpush1.bf16.msra.mxu0 0
      %836 = vmatprep.subr.bf16.mxu0 0
      %837 = vmatpush1.bf16.msra.mxu0 0
      %838 = vmatprep.subr.bf16.mxu0 0
      %839 = vmatpush1.bf16.msra.mxu0 0
      %840 = vmatprep.subr.bf16.mxu0 0
      %841 = vmatpush1.bf16.msra.mxu0 0
      %842 = vmatprep.subr.bf16.mxu0 0
      %843 = vmatpush1.bf16.msra.mxu0 0
      %844 = vmatprep.subr.bf16.mxu0 0
      %845 = vmatpush1.bf16.msra.mxu0 0
      %846 = vmatprep.mubr.bf16.mxu0 %v703
      %847 = vmatmul.mubr.bf16.gmra.mrb[0].mxu0 %v695
      %v848 = vpop.f32.mrb[0].mxu0
      %v849 = vadd.f32 %v666, %v848
      %v850 = vpop.f32.mrb[0].mxu0
      %v851 = vpop.f32.mrb[0].mxu0
      %v852 = vadd.f32 %v671, %v851
      %v853 = vpop.f32.mrb[0].mxu0
      %854 = vmatprep.mubr.bf16.mxu0 %v706
      %855 = vmatmul.mubr.bf16.gmra.mrb[0].mxu0 %v697
      %v856 = vpop.f32.mrb[0].mxu0
      %v857 = vadd.f32 %v676, %v856
      %v858 = vpop.f32.mrb[0].mxu0
      %v859 = vpop.f32.mrb[0].mxu0
      %v860 = vadd.f32 %v681, %v859
      %v861 = vpop.f32.mrb[0].mxu0
      %862 = vdwg.mxu0
      %v863 = vmax.f32 %v743, 0.0
      %v864 = vmax.f32 %v745, 0.0
      %v865 = vmax.f32 %v796, 0.0
      %v866 = vmax.f32 %v798, 0.0
      %v867 = vmax.f32 %v849, 0.0
      %v868 = vmax.f32 %v747, 0.0
      %v869 = vmax.f32 %v749, 0.0
      %v870 = vmax.f32 %v800, 0.0
      %v871 = vmax.f32 %v802, 0.0
      %v872 = vmax.f32 %v852, 0.0
      %v873 = vmax.f32 %v753, 0.0
      %v874 = vmax.f32 %v755, 0.0
      %v875 = vmax.f32 %v806, 0.0
      %v876 = vmax.f32 %v808, 0.0
      %v877 = vmax.f32 %v857, 0.0
      %v878 = vmax.f32 %v757, 0.0
      %v879 = vmax.f32 %v759, 0.0
      %v880 = vmax.f32 %v810, 0.0
      %v881 = vmax.f32 %v812, 0.0
      %v882 = vmax.f32 %v860, 0.0
      %v883 = vld [vmem:[%s3] sm:$0xff]
      %v884 = vld [vmem:[%s3 + $0x8] sm:$0xf]
      %v885 = vld [vmem:[%s3 + $0xc] sm:$0xff]
      %v886 = vld [vmem:[%s3 + $0x14] sm:$0xf]
      %v887 = vld [vmem:[%s3 + $0x18] sm:$0xff]
      %v888 = vld [vmem:[%s3 + $0x20] sm:$0xf]
      %v889 = vld [vmem:[%s3 + $0x24] sm:$0xff]
      %v890 = vld [vmem:[%s3 + $0x2c] sm:$0xf]
      %v891 = vld [vmem:[%s4] sm:$0xff]
      %v892 = vld [vmem:[%s4 + $0x8] sm:$0xff]
      %v893 = vld [vmem:[%s4 + $0x10] sm:$0xff]
      %v894 = vld [vmem:[%s4 + $0x18] sm:$0xff]
      %915 = vrot.lane.b32.xlu0 %v863, 127
      %v916 = vpop.permute.xlu0 %915
      %917 = vrot.lane.b32.xlu0 %v864, 127
      %v918 = vpop.permute.xlu0 %917
      %919 = vrot.lane.b32.xlu0 %v865, 127
      %v920 = vpop.permute.xlu0 %919
      %921 = vrot.lane.b32.xlu0 %v866, 127
      %v922 = vpop.permute.xlu0 %921
      %923 = vrot.lane.b32.xlu0 %v867, 127
      %v924 = vpop.permute.xlu0 %923
      %925 = vrot.lane.b32.xlu0 %v868, 127
      %v926 = vpop.permute.xlu0 %925
      %927 = vrot.lane.b32.xlu0 %v869, 127
      %v928 = vpop.permute.xlu0 %927
      %929 = vrot.lane.b32.xlu0 %v870, 127
      %v930 = vpop.permute.xlu0 %929
      %931 = vrot.lane.b32.xlu0 %v871, 127
      %v932 = vpop.permute.xlu0 %931
      %933 = vrot.lane.b32.xlu0 %v872, 127
      %v934 = vpop.permute.xlu0 %933
      %935 = vrot.lane.b32.xlu0 %v873, 127
      %v936 = vpop.permute.xlu0 %935
      %937 = vrot.lane.b32.xlu0 %v874, 127
      %v938 = vpop.permute.xlu0 %937
      %939 = vrot.lane.b32.xlu0 %v875, 127
      %v940 = vpop.permute.xlu0 %939
      %941 = vrot.lane.b32.xlu0 %v876, 127
      %v942 = vpop.permute.xlu0 %941
      %943 = vrot.lane.b32.xlu0 %v877, 127
      %v944 = vpop.permute.xlu0 %943
      %945 = vrot.lane.b32.xlu0 %v878, 127
      %v946 = vpop.permute.xlu0 %945
      %947 = vrot.lane.b32.xlu0 %v879, 127
      %v948 = vpop.permute.xlu0 %947
      %949 = vrot.lane.b32.xlu0 %v880, 127
      %v950 = vpop.permute.xlu0 %949
      %951 = vrot.lane.b32.xlu0 %v881, 127
      %v952 = vpop.permute.xlu0 %951
      %953 = vrot.lane.b32.xlu0 %v882, 127
      %v954 = vpop.permute.xlu0 %953
      %v955 = vsel %vm282, %v916, %v918
      %v956 = vsel %vm282, %v918, %v920
      %v957 = vsel %vm282, %v920, %v922
      %v958 = vsel %vm282, %v922, %v924
      %v959 = vsel %vm282, %v926, %v928
      %v960 = vsel %vm282, %v928, %v930
      %v961 = vsel %vm282, %v930, %v932
      %v962 = vsel %vm282, %v932, %v934
      %v963 = vsel %vm282, %v936, %v938
      %v964 = vsel %vm282, %v938, %v940
      %v965 = vsel %vm282, %v940, %v942
      %v966 = vsel %vm282, %v942, %v944
      %v967 = vsel %vm282, %v946, %v948
      %v968 = vsel %vm282, %v948, %v950
      %v969 = vsel %vm282, %v950, %v952
      %v970 = vsel %vm282, %v952, %v954
      %987 = vrot.lane.b32.xlu0 %v863, 126
      %v988 = vpop.permute.xlu0 %987
      %989 = vrot.lane.b32.xlu0 %v864, 126
      %v990 = vpop.permute.xlu0 %989
      %991 = vrot.lane.b32.xlu0 %v865, 126
      %v992 = vpop.permute.xlu0 %991
      %993 = vrot.lane.b32.xlu0 %v866, 126
      %v994 = vpop.permute.xlu0 %993
      %995 = vrot.lane.b32.xlu0 %v867, 126
      %v996 = vpop.permute.xlu0 %995
      %997 = vrot.lane.b32.xlu0 %v868, 126
      %v998 = vpop.permute.xlu0 %997
      %999 = vrot.lane.b32.xlu0 %v869, 126
      %v1000 = vpop.permute.xlu0 %999
      %1001 = vrot.lane.b32.xlu0 %v870, 126
      %v1002 = vpop.permute.xlu0 %1001
      %1003 = vrot.lane.b32.xlu0 %v871, 126
      %v1004 = vpop.permute.xlu0 %1003
      %1005 = vrot.lane.b32.xlu0 %v872, 126
      %v1006 = vpop.permute.xlu0 %1005
      %1007 = vrot.lane.b32.xlu0 %v873, 126
      %v1008 = vpop.permute.xlu0 %1007
      %1009 = vrot.lane.b32.xlu0 %v874, 126
      %v1010 = vpop.permute.xlu0 %1009
      %1011 = vrot.lane.b32.xlu0 %v875, 126
      %v1012 = vpop.permute.xlu0 %1011
      %1013 = vrot.lane.b32.xlu0 %v876, 126
      %v1014 = vpop.permute.xlu0 %1013
      %1015 = vrot.lane.b32.xlu0 %v877, 126
      %v1016 = vpop.permute.xlu0 %1015
      %1017 = vrot.lane.b32.xlu0 %v878, 126
      %v1018 = vpop.permute.xlu0 %1017
      %1019 = vrot.lane.b32.xlu0 %v879, 126
      %v1020 = vpop.permute.xlu0 %1019
      %1021 = vrot.lane.b32.xlu0 %v880, 126
      %v1022 = vpop.permute.xlu0 %1021
      %1023 = vrot.lane.b32.xlu0 %v881, 126
      %v1024 = vpop.permute.xlu0 %1023
      %1025 = vrot.lane.b32.xlu0 %v882, 126
      %v1026 = vpop.permute.xlu0 %1025
      %v1027 = vsel %vm327, %v988, %v990
      %v1028 = vsel %vm327, %v990, %v992
      %v1029 = vsel %vm327, %v992, %v994
      %v1030 = vsel %vm327, %v994, %v996
      %v1031 = vsel %vm327, %v998, %v1000
      %v1032 = vsel %vm327, %v1000, %v1002
      %v1033 = vsel %vm327, %v1002, %v1004
      %v1034 = vsel %vm327, %v1004, %v1006
      %v1035 = vsel %vm327, %v1008, %v1010
      %v1036 = vsel %vm327, %v1010, %v1012
      %v1037 = vsel %vm327, %v1012, %v1014
      %v1038 = vsel %vm327, %v1014, %v1016
      %v1039 = vsel %vm327, %v1018, %v1020
      %v1040 = vsel %vm327, %v1020, %v1022
      %v1041 = vsel %vm327, %v1022, %v1024
      %v1042 = vsel %vm327, %v1024, %v1026
      %1059 = vrot.lane.b32.xlu0 %v863, 106
      %v1060 = vpop.permute.xlu0 %1059
      %1061 = vrot.lane.b32.xlu0 %v864, 106
      %v1062 = vpop.permute.xlu0 %1061
      %1063 = vrot.lane.b32.xlu0 %v865, 106
      %v1064 = vpop.permute.xlu0 %1063
      %1065 = vrot.lane.b32.xlu0 %v866, 106
      %v1066 = vpop.permute.xlu0 %1065
      %1067 = vrot.lane.b32.xlu0 %v867, 106
      %v1068 = vpop.permute.xlu0 %1067
      %1069 = vrot.lane.b32.xlu0 %v868, 106
      %v1070 = vpop.permute.xlu0 %1069
      %1071 = vrot.lane.b32.xlu0 %v869, 106
      %v1072 = vpop.permute.xlu0 %1071
      %1073 = vrot.lane.b32.xlu0 %v870, 106
      %v1074 = vpop.permute.xlu0 %1073
      %1075 = vrot.lane.b32.xlu0 %v871, 106
      %v1076 = vpop.permute.xlu0 %1075
      %1077 = vrot.lane.b32.xlu0 %v872, 106
      %v1078 = vpop.permute.xlu0 %1077
      %1079 = vrot.lane.b32.xlu0 %v873, 106
      %v1080 = vpop.permute.xlu0 %1079
      %1081 = vrot.lane.b32.xlu0 %v874, 106
      %v1082 = vpop.permute.xlu0 %1081
      %1083 = vrot.lane.b32.xlu0 %v875, 106
      %v1084 = vpop.permute.xlu0 %1083
      %1085 = vrot.lane.b32.xlu0 %v876, 106
      %v1086 = vpop.permute.xlu0 %1085
      %1087 = vrot.lane.b32.xlu0 %v877, 106
      %v1088 = vpop.permute.xlu0 %1087
      %1089 = vrot.lane.b32.xlu0 %v878, 106
      %v1090 = vpop.permute.xlu0 %1089
      %1091 = vrot.lane.b32.xlu0 %v879, 106
      %v1092 = vpop.permute.xlu0 %1091
      %1093 = vrot.lane.b32.xlu0 %v880, 106
      %v1094 = vpop.permute.xlu0 %1093
      %1095 = vrot.lane.b32.xlu0 %v881, 106
      %v1096 = vpop.permute.xlu0 %1095
      %1097 = vrot.lane.b32.xlu0 %v882, 106
      %v1098 = vpop.permute.xlu0 %1097
      %v1099 = vsel %vm372, %v1060, %v1062
      %v1100 = vsel %vm372, %v1062, %v1064
      %v1101 = vsel %vm372, %v1064, %v1066
      %v1102 = vsel %vm372, %v1066, %v1068
      %v1103 = vsel %vm372, %v1070, %v1072
      %v1104 = vsel %vm372, %v1072, %v1074
      %v1105 = vsel %vm372, %v1074, %v1076
      %v1106 = vsel %vm372, %v1076, %v1078
      %v1107 = vsel %vm372, %v1080, %v1082
      %v1108 = vsel %vm372, %v1082, %v1084
      %v1109 = vsel %vm372, %v1084, %v1086
      %v1110 = vsel %vm372, %v1086, %v1088
      %v1111 = vsel %vm372, %v1090, %v1092
      %v1112 = vsel %vm372, %v1092, %v1094
      %v1113 = vsel %vm372, %v1094, %v1096
      %v1114 = vsel %vm372, %v1096, %v1098
      %1131 = vrot.lane.b32.xlu0 %v863, 105
      %v1132 = vpop.permute.xlu0 %1131
      %1133 = vrot.lane.b32.xlu0 %v864, 105
      %v1134 = vpop.permute.xlu0 %1133
      %1135 = vrot.lane.b32.xlu0 %v865, 105
      %v1136 = vpop.permute.xlu0 %1135
      %1137 = vrot.lane.b32.xlu0 %v866, 105
      %v1138 = vpop.permute.xlu0 %1137
      %1139 = vrot.lane.b32.xlu0 %v867, 105
      %v1140 = vpop.permute.xlu0 %1139
      %1141 = vrot.lane.b32.xlu0 %v868, 105
      %v1142 = vpop.permute.xlu0 %1141
      %1143 = vrot.lane.b32.xlu0 %v869, 105
      %v1144 = vpop.permute.xlu0 %1143
      %1145 = vrot.lane.b32.xlu0 %v870, 105
      %v1146 = vpop.permute.xlu0 %1145
      %1147 = vrot.lane.b32.xlu0 %v871, 105
      %v1148 = vpop.permute.xlu0 %1147
      %1149 = vrot.lane.b32.xlu0 %v872, 105
      %v1150 = vpop.permute.xlu0 %1149
      %1151 = vrot.lane.b32.xlu0 %v873, 105
      %v1152 = vpop.permute.xlu0 %1151
      %1153 = vrot.lane.b32.xlu0 %v874, 105
      %v1154 = vpop.permute.xlu0 %1153
      %1155 = vrot.lane.b32.xlu0 %v875, 105
      %v1156 = vpop.permute.xlu0 %1155
      %1157 = vrot.lane.b32.xlu0 %v876, 105
      %v1158 = vpop.permute.xlu0 %1157
      %1159 = vrot.lane.b32.xlu0 %v877, 105
      %v1160 = vpop.permute.xlu0 %1159
      %1161 = vrot.lane.b32.xlu0 %v878, 105
      %v1162 = vpop.permute.xlu0 %1161
      %1163 = vrot.lane.b32.xlu0 %v879, 105
      %v1164 = vpop.permute.xlu0 %1163
      %1165 = vrot.lane.b32.xlu0 %v880, 105
      %v1166 = vpop.permute.xlu0 %1165
      %1167 = vrot.lane.b32.xlu0 %v881, 105
      %v1168 = vpop.permute.xlu0 %1167
      %1169 = vrot.lane.b32.xlu0 %v882, 105
      %v1170 = vpop.permute.xlu0 %1169
      %v1171 = vsel %vm417, %v1132, %v1134
      %v1172 = vsel %vm417, %v1134, %v1136
      %v1173 = vsel %vm417, %v1136, %v1138
      %v1174 = vsel %vm417, %v1138, %v1140
      %v1175 = vsel %vm417, %v1142, %v1144
      %v1176 = vsel %vm417, %v1144, %v1146
      %v1177 = vsel %vm417, %v1146, %v1148
      %v1178 = vsel %vm417, %v1148, %v1150
      %v1179 = vsel %vm417, %v1152, %v1154
      %v1180 = vsel %vm417, %v1154, %v1156
      %v1181 = vsel %vm417, %v1156, %v1158
      %v1182 = vsel %vm417, %v1158, %v1160
      %v1183 = vsel %vm417, %v1162, %v1164
      %v1184 = vsel %vm417, %v1164, %v1166
      %v1185 = vsel %vm417, %v1166, %v1168
      %v1186 = vsel %vm417, %v1168, %v1170
      %1203 = vrot.lane.b32.xlu0 %v863, 104
      %v1204 = vpop.permute.xlu0 %1203
      %1205 = vrot.lane.b32.xlu0 %v864, 104
      %v1206 = vpop.permute.xlu0 %1205
      %1207 = vrot.lane.b32.xlu0 %v865, 104
      %v1208 = vpop.permute.xlu0 %1207
      %1209 = vrot.lane.b32.xlu0 %v866, 104
      %v1210 = vpop.permute.xlu0 %1209
      %1211 = vrot.lane.b32.xlu0 %v867, 104
      %v1212 = vpop.permute.xlu0 %1211
      %1213 = vrot.lane.b32.xlu0 %v868, 104
      %v1214 = vpop.permute.xlu0 %1213
      %1215 = vrot.lane.b32.xlu0 %v869, 104
      %v1216 = vpop.permute.xlu0 %1215
      %1217 = vrot.lane.b32.xlu0 %v870, 104
      %v1218 = vpop.permute.xlu0 %1217
      %1219 = vrot.lane.b32.xlu0 %v871, 104
      %v1220 = vpop.permute.xlu0 %1219
      %1221 = vrot.lane.b32.xlu0 %v872, 104
      %v1222 = vpop.permute.xlu0 %1221
      %1223 = vrot.lane.b32.xlu0 %v873, 104
      %v1224 = vpop.permute.xlu0 %1223
      %1225 = vrot.lane.b32.xlu0 %v874, 104
      %v1226 = vpop.permute.xlu0 %1225
      %1227 = vrot.lane.b32.xlu0 %v875, 104
      %v1228 = vpop.permute.xlu0 %1227
      %1229 = vrot.lane.b32.xlu0 %v876, 104
      %v1230 = vpop.permute.xlu0 %1229
      %1231 = vrot.lane.b32.xlu0 %v877, 104
      %v1232 = vpop.permute.xlu0 %1231
      %1233 = vrot.lane.b32.xlu0 %v878, 104
      %v1234 = vpop.permute.xlu0 %1233
      %1235 = vrot.lane.b32.xlu0 %v879, 104
      %v1236 = vpop.permute.xlu0 %1235
      %1237 = vrot.lane.b32.xlu0 %v880, 104
      %v1238 = vpop.permute.xlu0 %1237
      %1239 = vrot.lane.b32.xlu0 %v881, 104
      %v1240 = vpop.permute.xlu0 %1239
      %1241 = vrot.lane.b32.xlu0 %v882, 104
      %v1242 = vpop.permute.xlu0 %1241
      %v1243 = vsel %vm462, %v1204, %v1206
      %v1244 = vsel %vm462, %v1206, %v1208
      %v1245 = vsel %vm462, %v1208, %v1210
      %v1246 = vsel %vm462, %v1210, %v1212
      %v1247 = vsel %vm462, %v1214, %v1216
      %v1248 = vsel %vm462, %v1216, %v1218
      %v1249 = vsel %vm462, %v1218, %v1220
      %v1250 = vsel %vm462, %v1220, %v1222
      %v1251 = vsel %vm462, %v1224, %v1226
      %v1252 = vsel %vm462, %v1226, %v1228
      %v1253 = vsel %vm462, %v1228, %v1230
      %v1254 = vsel %vm462, %v1230, %v1232
      %v1255 = vsel %vm462, %v1234, %v1236
      %v1256 = vsel %vm462, %v1236, %v1238
      %v1257 = vsel %vm462, %v1238, %v1240
      %v1258 = vsel %vm462, %v1240, %v1242
      %1275 = vrot.lane.b32.xlu0 %v863, 84
      %v1276 = vpop.permute.xlu0 %1275
      %1277 = vrot.lane.b32.xlu0 %v864, 84
      %v1278 = vpop.permute.xlu0 %1277
      %1279 = vrot.lane.b32.xlu0 %v865, 84
      %v1280 = vpop.permute.xlu0 %1279
      %1281 = vrot.lane.b32.xlu0 %v866, 84
      %v1282 = vpop.permute.xlu0 %1281
      %1283 = vrot.lane.b32.xlu0 %v867, 84
      %v1284 = vpop.permute.xlu0 %1283
      %1285 = vrot.lane.b32.xlu0 %v868, 84
      %v1286 = vpop.permute.xlu0 %1285
      %1287 = vrot.lane.b32.xlu0 %v869, 84
      %v1288 = vpop.permute.xlu0 %1287
      %1289 = vrot.lane.b32.xlu0 %v870, 84
      %v1290 = vpop.permute.xlu0 %1289
      %1291 = vrot.lane.b32.xlu0 %v871, 84
      %v1292 = vpop.permute.xlu0 %1291
      %1293 = vrot.lane.b32.xlu0 %v872, 84
      %v1294 = vpop.permute.xlu0 %1293
      %1295 = vrot.lane.b32.xlu0 %v873, 84
      %v1296 = vpop.permute.xlu0 %1295
      %1297 = vrot.lane.b32.xlu0 %v874, 84
      %v1298 = vpop.permute.xlu0 %1297
      %1299 = vrot.lane.b32.xlu0 %v875, 84
      %v1300 = vpop.permute.xlu0 %1299
      %1301 = vrot.lane.b32.xlu0 %v876, 84
      %v1302 = vpop.permute.xlu0 %1301
      %1303 = vrot.lane.b32.xlu0 %v877, 84
      %v1304 = vpop.permute.xlu0 %1303
      %1305 = vrot.lane.b32.xlu0 %v878, 84
      %v1306 = vpop.permute.xlu0 %1305
      %1307 = vrot.lane.b32.xlu0 %v879, 84
      %v1308 = vpop.permute.xlu0 %1307
      %1309 = vrot.lane.b32.xlu0 %v880, 84
      %v1310 = vpop.permute.xlu0 %1309
      %1311 = vrot.lane.b32.xlu0 %v881, 84
      %v1312 = vpop.permute.xlu0 %1311
      %1313 = vrot.lane.b32.xlu0 %v882, 84
      %v1314 = vpop.permute.xlu0 %1313
      %v1315 = vsel %vm507, %v1276, %v1278
      %v1316 = vsel %vm507, %v1278, %v1280
      %v1317 = vsel %vm507, %v1280, %v1282
      %v1318 = vsel %vm507, %v1282, %v1284
      %v1319 = vsel %vm507, %v1286, %v1288
      %v1320 = vsel %vm507, %v1288, %v1290
      %v1321 = vsel %vm507, %v1290, %v1292
      %v1322 = vsel %vm507, %v1292, %v1294
      %v1323 = vsel %vm507, %v1296, %v1298
      %v1324 = vsel %vm507, %v1298, %v1300
      %v1325 = vsel %vm507, %v1300, %v1302
      %v1326 = vsel %vm507, %v1302, %v1304
      %v1327 = vsel %vm507, %v1306, %v1308
      %v1328 = vsel %vm507, %v1308, %v1310
      %v1329 = vsel %vm507, %v1310, %v1312
      %v1330 = vsel %vm507, %v1312, %v1314
      %1347 = vrot.lane.b32.xlu0 %v863, 83
      %v1348 = vpop.permute.xlu0 %1347
      %1349 = vrot.lane.b32.xlu0 %v864, 83
      %v1350 = vpop.permute.xlu0 %1349
      %1351 = vrot.lane.b32.xlu0 %v865, 83
      %v1352 = vpop.permute.xlu0 %1351
      %1353 = vrot.lane.b32.xlu0 %v866, 83
      %v1354 = vpop.permute.xlu0 %1353
      %1355 = vrot.lane.b32.xlu0 %v867, 83
      %v1356 = vpop.permute.xlu0 %1355
      %1357 = vrot.lane.b32.xlu0 %v868, 83
      %v1358 = vpop.permute.xlu0 %1357
      %1359 = vrot.lane.b32.xlu0 %v869, 83
      %v1360 = vpop.permute.xlu0 %1359
      %1361 = vrot.lane.b32.xlu0 %v870, 83
      %v1362 = vpop.permute.xlu0 %1361
      %1363 = vrot.lane.b32.xlu0 %v871, 83
      %v1364 = vpop.permute.xlu0 %1363
      %1365 = vrot.lane.b32.xlu0 %v872, 83
      %v1366 = vpop.permute.xlu0 %1365
      %1367 = vrot.lane.b32.xlu0 %v873, 83
      %v1368 = vpop.permute.xlu0 %1367
      %1369 = vrot.lane.b32.xlu0 %v874, 83
      %v1370 = vpop.permute.xlu0 %1369
      %1371 = vrot.lane.b32.xlu0 %v875, 83
      %v1372 = vpop.permute.xlu0 %1371
      %1373 = vrot.lane.b32.xlu0 %v876, 83
      %v1374 = vpop.permute.xlu0 %1373
      %1375 = vrot.lane.b32.xlu0 %v877, 83
      %v1376 = vpop.permute.xlu0 %1375
      %1377 = vrot.lane.b32.xlu0 %v878, 83
      %v1378 = vpop.permute.xlu0 %1377
      %1379 = vrot.lane.b32.xlu0 %v879, 83
      %v1380 = vpop.permute.xlu0 %1379
      %1381 = vrot.lane.b32.xlu0 %v880, 83
      %v1382 = vpop.permute.xlu0 %1381
      %1383 = vrot.lane.b32.xlu0 %v881, 83
      %v1384 = vpop.permute.xlu0 %1383
      %1385 = vrot.lane.b32.xlu0 %v882, 83
      %v1386 = vpop.permute.xlu0 %1385
      %v1387 = vsel %vm552, %v1348, %v1350
      %v1388 = vsel %vm552, %v1350, %v1352
      %v1389 = vsel %vm552, %v1352, %v1354
      %v1390 = vsel %vm552, %v1354, %v1356
      %v1391 = vsel %vm552, %v1358, %v1360
      %v1392 = vsel %vm552, %v1360, %v1362
      %v1393 = vsel %vm552, %v1362, %v1364
      %v1394 = vsel %vm552, %v1364, %v1366
      %v1395 = vsel %vm552, %v1368, %v1370
      %v1396 = vsel %vm552, %v1370, %v1372
      %v1397 = vsel %vm552, %v1372, %v1374
      %v1398 = vsel %vm552, %v1374, %v1376
      %v1399 = vsel %vm552, %v1378, %v1380
      %v1400 = vsel %vm552, %v1380, %v1382
      %v1401 = vsel %vm552, %v1382, %v1384
      %v1402 = vsel %vm552, %v1384, %v1386
      %1419 = vrot.lane.b32.xlu0 %v863, 82
      %v1420 = vpop.permute.xlu0 %1419
      %1421 = vrot.lane.b32.xlu0 %v864, 82
      %v1422 = vpop.permute.xlu0 %1421
      %1423 = vrot.lane.b32.xlu0 %v865, 82
      %v1424 = vpop.permute.xlu0 %1423
      %1425 = vrot.lane.b32.xlu0 %v866, 82
      %v1426 = vpop.permute.xlu0 %1425
      %1427 = vrot.lane.b32.xlu0 %v867, 82
      %v1428 = vpop.permute.xlu0 %1427
      %1429 = vrot.lane.b32.xlu0 %v868, 82
      %v1430 = vpop.permute.xlu0 %1429
      %1431 = vrot.lane.b32.xlu0 %v869, 82
      %v1432 = vpop.permute.xlu0 %1431
      %1433 = vrot.lane.b32.xlu0 %v870, 82
      %v1434 = vpop.permute.xlu0 %1433
      %1435 = vrot.lane.b32.xlu0 %v871, 82
      %v1436 = vpop.permute.xlu0 %1435
      %1437 = vrot.lane.b32.xlu0 %v872, 82
      %v1438 = vpop.permute.xlu0 %1437
      %1439 = vrot.lane.b32.xlu0 %v873, 82
      %v1440 = vpop.permute.xlu0 %1439
      %1441 = vrot.lane.b32.xlu0 %v874, 82
      %v1442 = vpop.permute.xlu0 %1441
      %1443 = vrot.lane.b32.xlu0 %v875, 82
      %v1444 = vpop.permute.xlu0 %1443
      %1445 = vrot.lane.b32.xlu0 %v876, 82
      %v1446 = vpop.permute.xlu0 %1445
      %1447 = vrot.lane.b32.xlu0 %v877, 82
      %v1448 = vpop.permute.xlu0 %1447
      %1449 = vrot.lane.b32.xlu0 %v878, 82
      %v1450 = vpop.permute.xlu0 %1449
      %1451 = vrot.lane.b32.xlu0 %v879, 82
      %v1452 = vpop.permute.xlu0 %1451
      %1453 = vrot.lane.b32.xlu0 %v880, 82
      %v1454 = vpop.permute.xlu0 %1453
      %1455 = vrot.lane.b32.xlu0 %v881, 82
      %v1456 = vpop.permute.xlu0 %1455
      %1457 = vrot.lane.b32.xlu0 %v882, 82
      %v1458 = vpop.permute.xlu0 %1457
      %v1459 = vsel %vm597, %v1420, %v1422
      %v1460 = vsel %vm597, %v1422, %v1424
      %v1461 = vsel %vm597, %v1424, %v1426
      %v1462 = vsel %vm597, %v1426, %v1428
      %v1463 = vsel %vm597, %v1430, %v1432
      %v1464 = vsel %vm597, %v1432, %v1434
      %v1465 = vsel %vm597, %v1434, %v1436
      %v1466 = vsel %vm597, %v1436, %v1438
      %v1467 = vsel %vm597, %v1440, %v1442
      %v1468 = vsel %vm597, %v1442, %v1444
      %v1469 = vsel %vm597, %v1444, %v1446
      %v1470 = vsel %vm597, %v1446, %v1448
      %v1471 = vsel %vm597, %v1450, %v1452
      %v1472 = vsel %vm597, %v1452, %v1454
      %v1473 = vsel %vm597, %v1454, %v1456
      %v1474 = vsel %vm597, %v1456, %v1458
      %v1491 = vpack.c.bf16 %v868, %v863
      %v1492 = vpack.c.bf16 %v869, %v864
      %v1493 = vpack.c.bf16 %v870, %v865
      %v1494 = vpack.c.bf16 %v871, %v866
      %v1495 = vpack.c.bf16 %v878, %v873
      %v1496 = vpack.c.bf16 %v879, %v874
      %v1497 = vpack.c.bf16 %v880, %v875
      %v1498 = vpack.c.bf16 %v881, %v876
      %v1499 = vpack.c.bf16 %v959, %v955
      %v1500 = vpack.c.bf16 %v960, %v956
      %v1501 = vpack.c.bf16 %v961, %v957
      %v1502 = vpack.c.bf16 %v962, %v958
      %v1503 = vpack.c.bf16 %v967, %v963
      %v1504 = vpack.c.bf16 %v968, %v964
      %v1505 = vpack.c.bf16 %v969, %v965
      %v1506 = vpack.c.bf16 %v970, %v966
      %v1507 = vpack.c.bf16 %v1031, %v1027
      %v1508 = vpack.c.bf16 %v1032, %v1028
      %v1509 = vpack.c.bf16 %v1033, %v1029
      %v1510 = vpack.c.bf16 %v1034, %v1030
      %v1511 = vpack.c.bf16 %v1039, %v1035
      %v1512 = vpack.c.bf16 %v1040, %v1036
      %v1513 = vpack.c.bf16 %v1041, %v1037
      %v1514 = vpack.c.bf16 %v1042, %v1038
      %v1515 = vpack.c.bf16 %v1103, %v1099
      %v1516 = vpack.c.bf16 %v1104, %v1100
      %v1517 = vpack.c.bf16 %v1105, %v1101
      %v1518 = vpack.c.bf16 %v1106, %v1102
      %v1519 = vpack.c.bf16 %v1111, %v1107
      %v1520 = vpack.c.bf16 %v1112, %v1108
      %v1521 = vpack.c.bf16 %v1113, %v1109
      %v1522 = vpack.c.bf16 %v1114, %v1110
      %v1523 = vpack.c.bf16 %v1175, %v1171
      %v1524 = vpack.c.bf16 %v1176, %v1172
      %v1525 = vpack.c.bf16 %v1177, %v1173
      %v1526 = vpack.c.bf16 %v1178, %v1174
      %v1527 = vpack.c.bf16 %v1183, %v1179
      %v1528 = vpack.c.bf16 %v1184, %v1180
      %v1529 = vpack.c.bf16 %v1185, %v1181
      %v1530 = vpack.c.bf16 %v1186, %v1182
      %v1531 = vpack.c.bf16 %v1247, %v1243
      %v1532 = vpack.c.bf16 %v1248, %v1244
      %v1533 = vpack.c.bf16 %v1249, %v1245
      %v1534 = vpack.c.bf16 %v1250, %v1246
      %v1535 = vpack.c.bf16 %v1255, %v1251
      %v1536 = vpack.c.bf16 %v1256, %v1252
      %v1537 = vpack.c.bf16 %v1257, %v1253
      %v1538 = vpack.c.bf16 %v1258, %v1254
      %v1539 = vpack.c.bf16 %v1319, %v1315
      %v1540 = vpack.c.bf16 %v1320, %v1316
      %v1541 = vpack.c.bf16 %v1321, %v1317
      %v1542 = vpack.c.bf16 %v1322, %v1318
      %v1543 = vpack.c.bf16 %v1327, %v1323
      %v1544 = vpack.c.bf16 %v1328, %v1324
      %v1545 = vpack.c.bf16 %v1329, %v1325
      %v1546 = vpack.c.bf16 %v1330, %v1326
      %v1547 = vpack.c.bf16 %v1391, %v1387
      %v1548 = vpack.c.bf16 %v1392, %v1388
      %v1549 = vpack.c.bf16 %v1393, %v1389
      %v1550 = vpack.c.bf16 %v1394, %v1390
      %v1551 = vpack.c.bf16 %v1399, %v1395
      %v1552 = vpack.c.bf16 %v1400, %v1396
      %v1553 = vpack.c.bf16 %v1401, %v1397
      %v1554 = vpack.c.bf16 %v1402, %v1398
      %v1555 = vpack.c.bf16 %v1463, %v1459
      %v1556 = vpack.c.bf16 %v1464, %v1460
      %v1557 = vpack.c.bf16 %v1465, %v1461
      %v1558 = vpack.c.bf16 %v1466, %v1462
      %v1559 = vpack.c.bf16 %v1471, %v1467
      %v1560 = vpack.c.bf16 %v1472, %v1468
      %v1561 = vpack.c.bf16 %v1473, %v1469
      %v1562 = vpack.c.bf16 %v1474, %v1470
      %1564 = vset.pattern.permute.xlu0 0
      %1565 = vperm.xlu0 %1564, %v891
      %v1566 = vpop.permute.xlu0 %1565
      %1569 = vset.pattern.permute.xlu0 0
      %1570 = vperm.xlu0 %1569, %v892
      %v1571 = vpop.permute.xlu0 %1570
      %1574 = vset.pattern.permute.xlu0 0
      %1575 = vperm.xlu0 %1574, %v893
      %v1576 = vpop.permute.xlu0 %1575
      %1579 = vset.pattern.permute.xlu0 0
      %1580 = vperm.xlu0 %1579, %v894
      %v1581 = vpop.permute.xlu0 %1580
      %v1591 = vunpack.c.l.b16 %v883
      %v1592 = vunpack.c.h.b16 %v883
      %v1593 = vunpack.c.l.b16 %v884
      %v1594 = vunpack.c.l.b16 %v885
      %v1595 = vunpack.c.h.b16 %v885
      %v1596 = vunpack.c.l.b16 %v886
      %v1597 = vunpack.c.l.b16 %v887
      %v1598 = vunpack.c.h.b16 %v887
      %v1599 = vunpack.c.l.b16 %v888
      %v1600 = vunpack.c.l.b16 %v889
      %v1601 = vunpack.c.h.b16 %v889
      %v1602 = vunpack.c.l.b16 %v890
      %v1603 = vpack.c.b16 %v1594, %v1591
      %v1604 = vpack.c.b16 %v1595, %v1592
      %v1605 = vpack.c.b16 %v1596, %v1593
      %v1606 = vpack.c.b16 %v1600, %v1597
      %v1607 = vpack.c.b16 %v1601, %v1598
      %v1608 = vpack.c.b16 %v1602, %v1599
      %vm1613 = vcmask 261120
      %v1615 = vsel %vm1613, %v1605, 0
      %v1618 = vsel %vm1613, %v1608, 0
      %1620 = vmatprep.subr.bf16.mxu0 %v1492
      %1621 = vmatpush1.bf16.msra.mxu0 %v1491
      %1622 = vmatprep.subr.bf16.mxu0 %v1496
      %1623 = vmatpush1.bf16.msra.mxu0 %v1495
      %1624 = vmatprep.subr.bf16.mxu0 %v1500
      %1625 = vmatpush1.bf16.msra.mxu0 %v1499
      %1626 = vmatprep.subr.bf16.mxu0 %v1504
      %1627 = vmatpush1.bf16.msra.mxu0 %v1503
      %1628 = vmatprep.subr.bf16.mxu0 %v1508
      %1629 = vmatpush1.bf16.msra.mxu0 %v1507
      %1630 = vmatprep.subr.bf16.mxu0 %v1512
      %1631 = vmatpush1.bf16.msra.mxu0 %v1511
      %1632 = vmatprep.subr.bf16.mxu0 %v1516
      %1633 = vmatpush1.bf16.msra.mxu0 %v1515
      %1634 = vmatprep.subr.bf16.mxu0 %v1520
      %1635 = vmatpush1.bf16.msra.mxu0 %v1519
      %1636 = vmatprep.subr.bf16.mxu0 %v1524
      %1637 = vmatpush1.bf16.msra.mxu0 %v1523
      %1638 = vmatprep.subr.bf16.mxu0 %v1528
      %1639 = vmatpush1.bf16.msra.mxu0 %v1527
      %1640 = vmatprep.subr.bf16.mxu0 %v1532
      %1641 = vmatpush1.bf16.msra.mxu0 %v1531
      %1642 = vmatprep.subr.bf16.mxu0 %v1536
      %1643 = vmatpush1.bf16.msra.mxu0 %v1535
      %1644 = vmatprep.subr.bf16.mxu0 %v1540
      %1645 = vmatpush1.bf16.msra.mxu0 %v1539
      %1646 = vmatprep.subr.bf16.mxu0 %v1544
      %1647 = vmatpush1.bf16.msra.mxu0 %v1543
      %1648 = vmatprep.subr.bf16.mxu0 %v1548
      %1649 = vmatpush1.bf16.msra.mxu0 %v1547
      %1650 = vmatprep.subr.bf16.mxu0 %v1552
      %1651 = vmatpush1.bf16.msra.mxu0 %v1551
      %1652 = vmatprep.mubr.bf16.mxu0 %v1604
      %1653 = vmatmul.mubr.bf16.gmra.mrb[0].mxu0 %v1603
      %v1654 = vpop.f32.mrb[0].mxu0
      %v1655 = vadd.f32 %v1566, %v1654
      %v1656 = vpop.f32.mrb[0].mxu0
      %v1657 = vadd.f32 %v1566, %v1656
      %v1658 = vpop.f32.mrb[0].mxu0
      %v1659 = vadd.f32 %v1571, %v1658
      %v1660 = vpop.f32.mrb[0].mxu0
      %v1661 = vadd.f32 %v1571, %v1660
      %1662 = vmatprep.mubr.bf16.mxu0 %v1607
      %1663 = vmatmul.mubr.bf16.gmra.mrb[0].mxu0 %v1606
      %v1664 = vpop.f32.mrb[0].mxu0
      %v1665 = vadd.f32 %v1576, %v1664
      %v1666 = vpop.f32.mrb[0].mxu0
      %v1667 = vadd.f32 %v1576, %v1666
      %v1668 = vpop.f32.mrb[0].mxu0
      %v1669 = vadd.f32 %v1581, %v1668
      %v1670 = vpop.f32.mrb[0].mxu0
      %v1671 = vadd.f32 %v1581, %v1670
      %1672 = vdwg.mxu0
      %1673 = vmatprep.subr.bf16.mxu0 %v1556
      %1674 = vmatpush1.bf16.msra.mxu0 %v1555
      %1675 = vmatprep.subr.bf16.mxu0 %v1560
      %1676 = vmatpush1.bf16.msra.mxu0 %v1559
      %1677 = vmatprep.subr.bf16.mxu0 0
      %1678 = vmatpush1.bf16.msra.mxu0 0
      %1679 = vmatprep.subr.bf16.mxu0 0
      %1680 = vmatpush1.bf16.msra.mxu0 0
      %1681 = vmatprep.subr.bf16.mxu0 0
      %1682 = vmatpush1.bf16.msra.mxu0 0
      %1683 = vmatprep.subr.bf16.mxu0 0
      %1684 = vmatpush1.bf16.msra.mxu0 0
      %1685 = vmatprep.subr.bf16.mxu0 0
      %1686 = vmatpush1.bf16.msra.mxu0 0
      %1687 = vmatprep.subr.bf16.mxu0 0
      %1688 = vmatpush1.bf16.msra.mxu0 0
      %1689 = vmatprep.subr.bf16.mxu0 0
      %1690 = vmatpush1.bf16.msra.mxu0 0
      %1691 = vmatprep.subr.bf16.mxu0 0
      %1692 = vmatpush1.bf16.msra.mxu0 0
      %1693 = vmatprep.subr.bf16.mxu0 0
      %1694 = vmatpush1.bf16.msra.mxu0 0
      %1695 = vmatprep.subr.bf16.mxu0 0
      %1696 = vmatpush1.bf16.msra.mxu0 0
      %1697 = vmatprep.subr.bf16.mxu0 0
      %1698 = vmatpush1.bf16.msra.mxu0 0
      %1699 = vmatprep.subr.bf16.mxu0 0
      %1700 = vmatpush1.bf16.msra.mxu0 0
      %1701 = vmatprep.subr.bf16.mxu0 0
      %1702 = vmatpush1.bf16.msra.mxu0 0
      %1703 = vmatprep.subr.bf16.mxu0 0
      %1704 = vmatpush1.bf16.msra.mxu0 0
      %1705 = vmatprep.mubr.bf16.mxu0 0
      %1706 = vmatmul.mubr.bf16.gmra.mrb[0].mxu0 %v1615
      %v1707 = vpop.f32.mrb[0].mxu0
      %v1708 = vadd.f32 %v1655, %v1707
      %v1709 = vpop.f32.mrb[0].mxu0
      %v1710 = vadd.f32 %v1657, %v1709
      %v1711 = vpop.f32.mrb[0].mxu0
      %v1712 = vadd.f32 %v1659, %v1711
      %v1713 = vpop.f32.mrb[0].mxu0
      %v1714 = vadd.f32 %v1661, %v1713
      %1715 = vmatprep.mubr.bf16.mxu0 0
      %1716 = vmatmul.mubr.bf16.gmra.mrb[0].mxu0 %v1618
      %v1717 = vpop.f32.mrb[0].mxu0
      %v1718 = vadd.f32 %v1665, %v1717
      %v1719 = vpop.f32.mrb[0].mxu0
      %v1720 = vadd.f32 %v1667, %v1719
      %v1721 = vpop.f32.mrb[0].mxu0
      %v1722 = vadd.f32 %v1669, %v1721
      %v1723 = vpop.f32.mrb[0].mxu0
      %v1724 = vadd.f32 %v1671, %v1723
      %1725 = vdwg.mxu0
      %1726 = vmatprep.subr.bf16.mxu0 %v1494
      %1727 = vmatpush1.bf16.msra.mxu0 %v1493
      %1728 = vmatprep.subr.bf16.mxu0 %v1498
      %1729 = vmatpush1.bf16.msra.mxu0 %v1497
      %1730 = vmatprep.subr.bf16.mxu0 %v1502
      %1731 = vmatpush1.bf16.msra.mxu0 %v1501
      %1732 = vmatprep.subr.bf16.mxu0 %v1506
      %1733 = vmatpush1.bf16.msra.mxu0 %v1505
      %1734 = vmatprep.subr.bf16.mxu0 %v1510
      %1735 = vmatpush1.bf16.msra.mxu0 %v1509
      %1736 = vmatprep.subr.bf16.mxu0 %v1514
      %1737 = vmatpush1.bf16.msra.mxu0 %v1513
      %1738 = vmatprep.subr.bf16.mxu0 %v1518
      %1739 = vmatpush1.bf16.msra.mxu0 %v1517
      %1740 = vmatprep.subr.bf16.mxu0 %v1522
      %1741 = vmatpush1.bf16.msra.mxu0 %v1521
      %1742 = vmatprep.subr.bf16.mxu0 %v1526
      %1743 = vmatpush1.bf16.msra.mxu0 %v1525
      %1744 = vmatprep.subr.bf16.mxu0 %v1530
      %1745 = vmatpush1.bf16.msra.mxu0 %v1529
      %1746 = vmatprep.subr.bf16.mxu0 %v1534
      %1747 = vmatpush1.bf16.msra.mxu0 %v1533
      %1748 = vmatprep.subr.bf16.mxu0 %v1538
      %1749 = vmatpush1.bf16.msra.mxu0 %v1537
      %1750 = vmatprep.subr.bf16.mxu0 %v1542
      %1751 = vmatpush1.bf16.msra.mxu0 %v1541
      %1752 = vmatprep.subr.bf16.mxu0 %v1546
      %1753 = vmatpush1.bf16.msra.mxu0 %v1545
      %1754 = vmatprep.subr.bf16.mxu0 %v1550
      %1755 = vmatpush1.bf16.msra.mxu0 %v1549
      %1756 = vmatprep.subr.bf16.mxu0 %v1554
      %1757 = vmatpush1.bf16.msra.mxu0 %v1553
      %1758 = vmatprep.mubr.bf16.mxu0 %v1604
      %1759 = vmatmul.mubr.bf16.gmra.mrb[0].mxu0 %v1603
      %v1760 = vpop.f32.mrb[0].mxu0
      %v1761 = vadd.f32 %v1566, %v1760
      %v1762 = vpop.f32.mrb[0].mxu0
      %v1763 = vadd.f32 %v1566, %v1762
      %v1764 = vpop.f32.mrb[0].mxu0
      %v1765 = vadd.f32 %v1571, %v1764
      %v1766 = vpop.f32.mrb[0].mxu0
      %v1767 = vadd.f32 %v1571, %v1766
      %1768 = vmatprep.mubr.bf16.mxu0 %v1607
      %1769 = vmatmul.mubr.bf16.gmra.mrb[0].mxu0 %v1606
      %v1770 = vpop.f32.mrb[0].mxu0
      %v1771 = vadd.f32 %v1576, %v1770
      %v1772 = vpop.f32.mrb[0].mxu0
      %v1773 = vadd.f32 %v1576, %v1772
      %v1774 = vpop.f32.mrb[0].mxu0
      %v1775 = vadd.f32 %v1581, %v1774
      %v1776 = vpop.f32.mrb[0].mxu0
      %v1777 = vadd.f32 %v1581, %v1776
      %1778 = vdwg.mxu0
      %1779 = vmatprep.subr.bf16.mxu0 %v1558
      %1780 = vmatpush1.bf16.msra.mxu0 %v1557
      %1781 = vmatprep.subr.bf16.mxu0 %v1562
      %1782 = vmatpush1.bf16.msra.mxu0 %v1561
      %1783 = vmatprep.subr.bf16.mxu0 0
      %1784 = vmatpush1.bf16.msra.mxu0 0
      %1785 = vmatprep.subr.bf16.mxu0 0
      %1786 = vmatpush1.bf16.msra.mxu0 0
      %1787 = vmatprep.subr.bf16.mxu0 0
      %1788 = vmatpush1.bf16.msra.mxu0 0
      %1789 = vmatprep.subr.bf16.mxu0 0
      %1790 = vmatpush1.bf16.msra.mxu0 0
      %1791 = vmatprep.subr.bf16.mxu0 0
      %1792 = vmatpush1.bf16.msra.mxu0 0
      %1793 = vmatprep.subr.bf16.mxu0 0
      %1794 = vmatpush1.bf16.msra.mxu0 0
      %1795 = vmatprep.subr.bf16.mxu0 0
      %1796 = vmatpush1.bf16.msra.mxu0 0
      %1797 = vmatprep.subr.bf16.mxu0 0
      %1798 = vmatpush1.bf16.msra.mxu0 0
      %1799 = vmatprep.subr.bf16.mxu0 0
      %1800 = vmatpush1.bf16.msra.mxu0 0
      %1801 = vmatprep.subr.bf16.mxu0 0
      %1802 = vmatpush1.bf16.msra.mxu0 0
      %1803 = vmatprep.subr.bf16.mxu0 0
      %1804 = vmatpush1.bf16.msra.mxu0 0
      %1805 = vmatprep.subr.bf16.mxu0 0
      %1806 = vmatpush1.bf16.msra.mxu0 0
      %1807 = vmatprep.subr.bf16.mxu0 0
      %1808 = vmatpush1.bf16.msra.mxu0 0
      %1809 = vmatprep.subr.bf16.mxu0 0
      %1810 = vmatpush1.bf16.msra.mxu0 0
      %1811 = vmatprep.mubr.bf16.mxu0 0
      %1812 = vmatmul.mubr.bf16.gmra.mrb[0].mxu0 %v1615
      %v1813 = vpop.f32.mrb[0].mxu0
      %v1814 = vadd.f32 %v1761, %v1813
      %v1815 = vpop.f32.mrb[0].mxu0
      %v1816 = vadd.f32 %v1763, %v1815
      %v1817 = vpop.f32.mrb[0].mxu0
      %v1818 = vadd.f32 %v1765, %v1817
      %v1819 = vpop.f32.mrb[0].mxu0
      %v1820 = vadd.f32 %v1767, %v1819
      %1821 = vmatprep.mubr.bf16.mxu0 0
      %1822 = vmatmul.mubr.bf16.gmra.mrb[0].mxu0 %v1618
      %v1823 = vpop.f32.mrb[0].mxu0
      %v1824 = vadd.f32 %v1771, %v1823
      %v1825 = vpop.f32.mrb[0].mxu0
      %v1826 = vadd.f32 %v1773, %v1825
      %v1827 = vpop.f32.mrb[0].mxu0
      %v1828 = vadd.f32 %v1775, %v1827
      %v1829 = vpop.f32.mrb[0].mxu0
      %v1830 = vadd.f32 %v1777, %v1829
      %1831 = vdwg.mxu0
      %v1832 = vmax.f32 %v1708, 0.0
      %v1833 = vmax.f32 %v1710, 0.0
      %v1834 = vmax.f32 %v1814, 0.0
      %v1835 = vmax.f32 %v1816, 0.0
      %v1836 = vmax.f32 %v1712, 0.0
      %v1837 = vmax.f32 %v1714, 0.0
      %v1838 = vmax.f32 %v1818, 0.0
      %v1839 = vmax.f32 %v1820, 0.0
      %v1840 = vmax.f32 %v1718, 0.0
      %v1841 = vmax.f32 %v1720, 0.0
      %v1842 = vmax.f32 %v1824, 0.0
      %v1843 = vmax.f32 %v1826, 0.0
      %v1844 = vmax.f32 %v1722, 0.0
      %v1845 = vmax.f32 %v1724, 0.0
      %v1846 = vmax.f32 %v1828, 0.0
      %v1847 = vmax.f32 %v1830, 0.0
      %1848 = vst [vmem:[%s224] sm:$0xff] %v1832
      %1849 = vst [vmem:[%s224 + $0x8] sm:$0xff] %v1833
      %1850 = vst [vmem:[%s224 + $0x10] sm:$0xff] %v1834
      %1851 = vst [vmem:[%s224 + $0x18] sm:$0xff] %v1835
      %1852 = vst [vmem:[%s224 + $0x20] sm:$0xff] %v1836
      %1853 = vst [vmem:[%s224 + $0x28] sm:$0xff] %v1837
      %1854 = vst [vmem:[%s224 + $0x30] sm:$0xff] %v1838
      %1855 = vst [vmem:[%s224 + $0x38] sm:$0xff] %v1839
      %1856 = vst [vmem:[%s224 + $0x40] sm:$0xff] %v1840
      %1857 = vst [vmem:[%s224 + $0x48] sm:$0xff] %v1841
      %1858 = vst [vmem:[%s224 + $0x50] sm:$0xff] %v1842
      %1859 = vst [vmem:[%s224 + $0x58] sm:$0xff] %v1843
      %1860 = vst [vmem:[%s224 + $0x60] sm:$0xff] %v1844
      %1861 = vst [vmem:[%s224 + $0x68] sm:$0xff] %v1845
      %1862 = vst [vmem:[%s224 + $0x70] sm:$0xff] %v1846
      %1863 = vst [vmem:[%s224 + $0x78] sm:$0xff] %v1847
      %p1864 = scmp.lt.s32.totalorder %s16, 1
      %s1865 = scalar_select %p1864, %s16, 1
      %s1866 = smul.addr %s1865, 16
      %s1867 = smul.addr %s1866, 8
      %s1868 = scalar_lea.vmem %s5, %s1867
      // Predicated region
      $region41: #{unet_forward.6} parent=39 // pred_check
        %p1869 = pneg %p144
      $region42: #{unet_forward.6} parent=39 // pred_check_branch
        %1871 = sbr.rel (%p1869) target = $region44
      $region43: #{unet_forward.6} parent=39 // pred_region
        _
      $region44: #{unet_forward.6} parent=39 // pred_fallthru
        _
    $region40: #{unet_forward.6} parent=5 // pred_fallthru
      _
    %p1872 = scmp.le.s32.totalorder 2, %s11
    // Predicated region
    $region45: #{unet_forward.6} parent=5 // pred_check
      %p1873 = pneg %p1872
    $region46: #{unet_forward.6} parent=5 // pred_check_branch
      %1875 = sbr.rel (%p1873) target = $region48
    $region47: #{unet_forward.6} parent=5 // pred_region
      %s1876 = ssub.s32 %s11, 2
      // Predicated region
      $region49: #{unet_forward.6} parent=47 // pred_check
        %p1877 = pneg %p150
      $region50: #{unet_forward.6} parent=47 // pred_check_branch
        %1879 = sbr.rel (%p1877) target = $region52
      $region51: #{unet_forward.6} parent=47 // pred_region
        %p1880 = scmp.lt.s32.totalorder %s17, 1
        %s1881 = scalar_select %p1880, %s17, 1
        %s1882 = smul.addr %s1881, 16
        %s1883 = smul.addr %s1882, 8
        %s1884 = scalar_lea.vmem %s5, %s1883
      $region52: #{unet_forward.6} parent=47 // pred_fallthru
        _
    $region48: #{unet_forward.6} parent=5 // pred_fallthru
      _
  $region6: #{unet_forward.6} parent=0 // loop_footer
    %s15 = sadd.s32 1, %s11
  $region7: #{unet_forward.6} parent=0 // loop_footer_branch
    %10 = sbr.rel target = $region3
  $region8: #{unet_forward.6} parent=0 // loop_exit
    _

// kernel: tile.13
$region0: #{tile.13}
  #allocation0 [shape = 's32[1]{0}', space=sflag, size = 0x4, scoped, tag = 'scoped memory for tile.13']
  %s0 = inlined_call_operand.vmem [shape: f32[32], index: 0, kind: input, shape index: {}]
  %s1 = inlined_call_operand.vmem [shape: f32[4,32], index: 1, kind: output, shape index: {}]
  // Predicated region
  $region2: #{tile.13} parent=0 // pred_check
    _
  $region3: #{tile.13} parent=0 // pred_check_branch
    %3 = sbr.rel (0) target = $region5
  $region4: #{tile.13} parent=0 // pred_region
    _
  $region5: #{tile.13} parent=0 // pred_fallthru
    _
  %v4 = vld [vmem:[%s0] ss:$0 sm:$0xff]
  %5 = vst [vmem:[%s1] sm:$0xf] %v4

// kernel: tile.0
$region0: #{tile.0}
  %s0 = inlined_call_operand.vmem [shape: f32[4,32], index: 0, kind: input, shape index: {}]
  %s1 = inlined_call_operand.vmem [shape: f32[128,1], index: 1, kind: output, shape index: {}]
  $region1: #{tile.0} parent=0
    #allocation0 [shape = 'u8[4096]{0}', space=vmem, size = 0x1000, scoped, tag = 'scoped mem for input reshape']
    %s3 = sshllo.u32 0, 4
    %v4 = vld [vmem:[%s0] sm:%s3]
    %5 = vst [vmem:[#allocation0] sm:%s3] %v4
    %v6 = vld [vmem:[#allocation0] sm:$0xf]
    %vm7 = vcmask 7168
    %8 = vst.msk [vmem:[%s1] sm:$0x1] %vm7, %v6
    %s9 = scalar_lea.vmem %s1, 31
    %10 = vst.msk [vmem:[%s9] sm:$0x2] %vm7, %v6
    %s11 = scalar_lea.vmem %s1, 62
    %12 = vst.msk [vmem:[%s11] sm:$0x4] %vm7, %v6
    %s13 = scalar_lea.vmem %s1, 93
    %14 = vst.msk [vmem:[%s13] sm:$0x8] %vm7, %v6
    %v15 = vld [vmem:[#allocation0] sm:$0xf]
    %16 = vrot.lane.b32.xlu0 %v15, 127
    %v17 = vpop.permute.xlu0 %16
    %vm18 = vcmask 7168
    %s19 = scalar_lea.vmem %s1, 1
    %20 = vst.msk [vmem:[%s19] sm:$0x1] %vm18, %v17
    %s21 = scalar_lea.vmem %s1, 32
    %22 = vst.msk [vmem:[%s21] sm:$0x2] %vm18, %v17
    %s23 = scalar_lea.vmem %s1, 63
    %24 = vst.msk [vmem:[%s23] sm:$0x4] %vm18, %v17
    %s25 = scalar_lea.vmem %s1, 94
    %26 = vst.msk [vmem:[%s25] sm:$0x8] %vm18, %v17
    %v27 = vld [vmem:[#allocation0] sm:$0xf]
    %28 = vrot.lane.b32.xlu0 %v27, 126
    %v29 = vpop.permute.xlu0 %28
    %vm30 = vcmask 7168
    %s31 = scalar_lea.vmem %s1, 2
    %32 = vst.msk [vmem:[%s31] sm:$0x1] %vm30, %v29
    %s33 = scalar_lea.vmem %s1, 33
    %34 = vst.msk [vmem:[%s33] sm:$0x2] %vm30, %v29
    %s35 = scalar_lea.vmem %s1, 64
    %36 = vst.msk [vmem:[%s35] sm:$0x4] %vm30, %v29
    %s37 = scalar_lea.vmem %s1, 95
    %38 = vst.msk [vmem:[%s37] sm:$0x8] %vm30, %v29
    %v39 = vld [vmem:[#allocation0] sm:$0xf]
    %40 = vrot.lane.b32.xlu0 %v39, 125
    %v41 = vpop.permute.xlu0 %40
    %vm42 = vcmask 7168
    %s43 = scalar_lea.vmem %s1, 3
    %44 = vst.msk [vmem:[%s43] sm:$0x1] %vm42, %v41
    %s45 = scalar_lea.vmem %s1, 34
    %46 = vst.msk [vmem:[%s45] sm:$0x2] %vm42, %v41
    %s47 = scalar_lea.vmem %s1, 65
    %48 = vst.msk [vmem:[%s47] sm:$0x4] %vm42, %v41
    %s49 = scalar_lea.vmem %s1, 96
    %50 = vst.msk [vmem:[%s49] sm:$0x8] %vm42, %v41
    %v51 = vld [vmem:[#allocation0] sm:$0xf]
    %52 = vrot.lane.b32.xlu0 %v51, 124
    %v53 = vpop.permute.xlu0 %52
    %vm54 = vcmask 7168
    %s55 = scalar_lea.vmem %s1, 4
    %56 = vst.msk [vmem:[%s55] sm:$0x1] %vm54, %v53
    %s57 = scalar_lea.vmem %s1, 35
    %58 = vst.msk [vmem:[%s57] sm:$0x2] %vm54, %v53
    %s59 = scalar_lea.vmem %s1, 66
    %60 = vst.msk [vmem:[%s59] sm:$0x4] %vm54, %v53
    %s61 = scalar_lea.vmem %s1, 97
    %62 = vst.msk [vmem:[%s61] sm:$0x8] %vm54, %v53
    %v63 = vld [vmem:[#allocation0] sm:$0xf]
    %64 = vrot.lane.b32.xlu0 %v63, 123
    %v65 = vpop.permute.xlu0 %64
    %vm66 = vcmask 7168
    %s67 = scalar_lea.vmem %s1, 5
    %68 = vst.msk [vmem:[%s67] sm:$0x1] %vm66, %v65
    %s69 = scalar_lea.vmem %s1, 36
    %70 = vst.msk [vmem:[%s69] sm:$0x2] %vm66, %v65
    %s71 = scalar_lea.vmem %s1, 67
    %72 = vst.msk [vmem:[%s71] sm:$0x4] %vm66, %v65
    %s73 = scalar_lea.vmem %s1, 98
    %74 = vst.msk [vmem:[%s73] sm:$0x8] %vm66, %v65
    %v75 = vld [vmem:[#allocation0] sm:$0xf]
    %76 = vrot.lane.b32.xlu0 %v75, 122
    %v77 = vpop.permute.xlu0 %76
    %vm78 = vcmask 7168
    %s79 = scalar_lea.vmem %s1, 6
    %80 = vst.msk [vmem:[%s79] sm:$0x1] %vm78, %v77
    %s81 = scalar_lea.vmem %s1, 37
    %82 = vst.msk [vmem:[%s81] sm:$0x2] %vm78, %v77
    %s83 = scalar_lea.vmem %s1, 68
    %84 = vst.msk [vmem:[%s83] sm:$0x4] %vm78, %v77
    %s85 = scalar_lea.vmem %s1, 99
    %86 = vst.msk [vmem:[%s85] sm:$0x8] %vm78, %v77
    %v87 = vld [vmem:[#allocation0] sm:$0xf]
    %88 = vrot.lane.b32.xlu0 %v87, 121
    %v89 = vpop.permute.xlu0 %88
    %vm90 = vcmask 7168
    %s91 = scalar_lea.vmem %s1, 7
    %92 = vst.msk [vmem:[%s91] sm:$0x1] %vm90, %v89
    %s93 = scalar_lea.vmem %s1, 38
    %94 = vst.msk [vmem:[%s93] sm:$0x2] %vm90, %v89
    %s95 = scalar_lea.vmem %s1, 69
    %96 = vst.msk [vmem:[%s95] sm:$0x4] %vm90, %v89
    %s97 = scalar_lea.vmem %s1, 100
    %98 = vst.msk [vmem:[%s97] sm:$0x8] %vm90, %v89
    %v99 = vld [vmem:[#allocation0] sm:$0xf]
    %100 = vrot.lane.b32.xlu0 %v99, 120
    %v101 = vpop.permute.xlu0 %100
    %vm102 = vcmask 7168
    %s103 = scalar_lea.vmem %s1, 8
    %104 = vst.msk [vmem:[%s103] sm:$0x1] %vm102, %v101
    %s105 = scalar_lea.vmem %s1, 39
    %106 = vst.msk [vmem:[%s105] sm:$0x2] %vm102, %v101
    %s107 = scalar_lea.vmem %s1, 70
    %108 = vst.msk [vmem:[%s107] sm:$0x4] %vm102, %v101
    %s109 = scalar_lea.vmem %s1, 101
    %110 = vst.msk [vmem:[%s109] sm:$0x8] %vm102, %v101
    %v111 = vld [vmem:[#allocation0] sm:$0xf]
    %112 = vrot.lane.b32.xlu0 %v111, 119
    %v113 = vpop.permute.xlu0 %112
    %vm114 = vcmask 7168
    %s115 = scalar_lea.vmem %s1, 9
    %116 = vst.msk [vmem:[%s115] sm:$0x1] %vm114, %v113
    %s117 = scalar_lea.vmem %s1, 40
    %118 = vst.msk [vmem:[%s117] sm:$0x2] %vm114, %v113
    %s119 = scalar_lea.vmem %s1, 71
    %120 = vst.msk [vmem:[%s119] sm:$0x4] %vm114, %v113
    %s121 = scalar_lea.vmem %s1, 102
    %122 = vst.msk [vmem:[%s121] sm:$0x8] %vm114, %v113
    %v123 = vld [vmem:[#allocation0] sm:$0xf]
    %124 = vrot.lane.b32.xlu0 %v123, 118
    %v125 = vpop.permute.xlu0 %124
    %vm126 = vcmask 7168
    %s127 = scalar_lea.vmem %s1, 10
    %128 = vst.msk [vmem:[%s127] sm:$0x1] %vm126, %v125
    %s129 = scalar_lea.vmem %s1, 41
    %130 = vst.msk [vmem:[%s129] sm:$0x2] %vm126, %v125
    %s131 = scalar_lea.vmem %s1, 72
    %132 = vst.msk [vmem:[%s131] sm:$0x4] %vm126, %v125
    %s133 = scalar_lea.vmem %s1, 103
    %134 = vst.msk [vmem:[%s133] sm:$0x8] %vm126, %v125
    %v135 = vld [vmem:[#allocation0] sm:$0xf]
    %136 = vrot.lane.b32.xlu0 %v135, 117
    %v137 = vpop.permute.xlu0 %136
    %vm138 = vcmask 7168
    %s139 = scalar_lea.vmem %s1, 11
    %140 = vst.msk [vmem:[%s139] sm:$0x1] %vm138, %v137
    %s141 = scalar_lea.vmem %s1, 42
    %142 = vst.msk [vmem:[%s141] sm:$0x2] %vm138, %v137
    %s143 = scalar_lea.vmem %s1, 73
    %144 = vst.msk [vmem:[%s143] sm:$0x4] %vm138, %v137
    %s145 = scalar_lea.vmem %s1, 104
    %146 = vst.msk [vmem:[%s145] sm:$0x8] %vm138, %v137
    %v147 = vld [vmem:[#allocation0] sm:$0xf]
    %148 = vrot.lane.b32.xlu0 %v147, 116
    %v149 = vpop.permute.xlu0 %148
    %vm150 = vcmask 7168
    %s151 = scalar_lea.vmem %s1, 12
    %152 = vst.msk [vmem:[%s151] sm:$0x1] %vm150, %v149
    %s153 = scalar_lea.vmem %s1, 43
    %154 = vst.msk [vmem:[%s153] sm:$0x2] %vm150, %v149
    %s155 = scalar_lea.vmem %s1, 74
    %156 = vst.msk [vmem:[%s155] sm:$0x4] %vm150, %v149
    %s157 = scalar_lea.vmem %s1, 105
    %158 = vst.msk [vmem:[%s157] sm:$0x8] %vm150, %v149
    %v159 = vld [vmem:[#allocation0] sm:$0xf]
    %160 = vrot.lane.b32.xlu0 %v159, 115
    %v161 = vpop.permute.xlu0 %160
    %vm162 = vcmask 7168
    %s163 = scalar_lea.vmem %s1, 13
    %164 = vst.msk [vmem:[%s163] sm:$0x1] %vm162, %v161
    %s165 = scalar_lea.vmem %s1, 44
    %166 = vst.msk [vmem:[%s165] sm:$0x2] %vm162, %v161
    %s167 = scalar_lea.vmem %s1, 75
    %168 = vst.msk [vmem:[%s167] sm:$0x4] %vm162, %v161
    %s169 = scalar_lea.vmem %s1, 106
    %170 = vst.msk [vmem:[%s169] sm:$0x8] %vm162, %v161
    %v171 = vld [vmem:[#allocation0] sm:$0xf]
    %172 = vrot.lane.b32.xlu0 %v171, 114
    %v173 = vpop.permute.xlu0 %172
    %vm174 = vcmask 7168
    %s175 = scalar_lea.vmem %s1, 14
    %176 = vst.msk [vmem:[%s175] sm:$0x1] %vm174, %v173
    %s177 = scalar_lea.vmem %s1, 45
    %178 = vst.msk [vmem:[%s177] sm:$0x2] %vm174, %v173
    %s179 = scalar_lea.vmem %s1, 76
    %180 = vst.msk [vmem:[%s179] sm:$0x4] %vm174, %v173
    %s181 = scalar_lea.vmem %s1, 107
    %182 = vst.msk [vmem:[%s181] sm:$0x8] %vm174, %v173
    %v183 = vld [vmem:[#allocation0] sm:$0xf]
    %184 = vrot.lane.b32.xlu0 %v183, 113
    %v185 = vpop.permute.xlu0 %184
    %vm186 = vcmask 7168
    %s187 = scalar_lea.vmem %s1, 15
    %188 = vst.msk [vmem:[%s187] sm:$0x1] %vm186, %v185
    %s189 = scalar_lea.vmem %s1, 46
    %190 = vst.msk [vmem:[%s189] sm:$0x2] %vm186, %v185
    %s191 = scalar_lea.vmem %s1, 77
    %192 = vst.msk [vmem:[%s191] sm:$0x4] %vm186, %v185
    %s193 = scalar_lea.vmem %s1, 108
    %194 = vst.msk [vmem:[%s193] sm:$0x8] %vm186, %v185
    %v195 = vld [vmem:[#allocation0] sm:$0xf]
    %196 = vrot.lane.b32.xlu0 %v195, 112
    %v197 = vpop.permute.xlu0 %196
    %vm198 = vcmask 7168
    %s199 = scalar_lea.vmem %s1, 16
    %200 = vst.msk [vmem:[%s199] sm:$0x1] %vm198, %v197
    %s201 = scalar_lea.vmem %s1, 47
    %202 = vst.msk [vmem:[%s201] sm:$0x2] %vm198, %v197
    %s203 = scalar_lea.vmem %s1, 78
    %204 = vst.msk [vmem:[%s203] sm:$0x4] %vm198, %v197
    %s205 = scalar_lea.vmem %s1, 109
    %206 = vst.msk [vmem:[%s205] sm:$0x8] %vm198, %v197
    %v207 = vld [vmem:[#allocation0] sm:$0xf]
    %208 = vrot.lane.b32.xlu0 %v207, 111
    %v209 = vpop.permute.xlu0 %208
    %vm210 = vcmask 7168
    %s211 = scalar_lea.vmem %s1, 17
    %212 = vst.msk [vmem:[%s211] sm:$0x1] %vm210, %v209
    %s213 = scalar_lea.vmem %s1, 48
    %214 = vst.msk [vmem:[%s213] sm:$0x2] %vm210, %v209
    %s215 = scalar_lea.vmem %s1, 79
    %216 = vst.msk [vmem:[%s215] sm:$0x4] %vm210, %v209
    %s217 = scalar_lea.vmem %s1, 110
    %218 = vst.msk [vmem:[%s217] sm:$0x8] %vm210, %v209
    %v219 = vld [vmem:[#allocation0] sm:$0xf]
    %220 = vrot.lane.b32.xlu0 %v219, 110
    %v221 = vpop.permute.xlu0 %220
    %vm222 = vcmask 7168
    %s223 = scalar_lea.vmem %s1, 18
    %224 = vst.msk [vmem:[%s223] sm:$0x1] %vm222, %v221
    %s225 = scalar_lea.vmem %s1, 49
    %226 = vst.msk [vmem:[%s225] sm:$0x2] %vm222, %v221
    %s227 = scalar_lea.vmem %s1, 80
    %228 = vst.msk [vmem:[%s227] sm:$0x4] %vm222, %v221
    %s229 = scalar_lea.vmem %s1, 111
    %230 = vst.msk [vmem:[%s229] sm:$0x8] %vm222, %v221
    %v231 = vld [vmem:[#allocation0] sm:$0xf]
    %232 = vrot.lane.b32.xlu0 %v231, 109
    %v233 = vpop.permute.xlu0 %232
    %vm234 = vcmask 7168
    %s235 = scalar_lea.vmem %s1, 19
    %236 = vst.msk [vmem:[%s235] sm:$0x1] %vm234, %v233
    %s237 = scalar_lea.vmem %s1, 50
    %238 = vst.msk [vmem:[%s237] sm:$0x2] %vm234, %v233
    %s239 = scalar_lea.vmem %s1, 81
    %240 = vst.msk [vmem:[%s239] sm:$0x4] %vm234, %v233
    %s241 = scalar_lea.vmem %s1, 112
    %242 = vst.msk [vmem:[%s241] sm:$0x8] %vm234, %v233
    %v243 = vld [vmem:[#allocation0] sm:$0xf]
    %244 = vrot.lane.b32.xlu0 %v243, 108
    %v245 = vpop.permute.xlu0 %244
    %vm246 = vcmask 7168
    %s247 = scalar_lea.vmem %s1, 20
    %248 = vst.msk [vmem:[%s247] sm:$0x1] %vm246, %v245
    %s249 = scalar_lea.vmem %s1, 51
    %250 = vst.msk [vmem:[%s249] sm:$0x2] %vm246, %v245
    %s251 = scalar_lea.vmem %s1, 82
    %252 = vst.msk [vmem:[%s251] sm:$0x4] %vm246, %v245
    %s253 = scalar_lea.vmem %s1, 113
    %254 = vst.msk [vmem:[%s253] sm:$0x8] %vm246, %v245
    %v255 = vld [vmem:[#allocation0] sm:$0xf]
    %256 = vrot.lane.b32.xlu0 %v255, 107
    %v257 = vpop.permute.xlu0 %256
    %vm258 = vcmask 7168
    %s259 = scalar_lea.vmem %s1, 21
    %260 = vst.msk [vmem:[%s259] sm:$0x1] %vm258, %v257
    %s261 = scalar_lea.vmem %s1, 52
    %262 = vst.msk [vmem:[%s261] sm:$0x2] %vm258, %v257
    %s263 = scalar_lea.vmem %s1, 83
    %264 = vst.msk [vmem:[%s263] sm:$0x4] %vm258, %v257
    %s265 = scalar_lea.vmem %s1, 114
    %266 = vst.msk [vmem:[%s265] sm:$0x8] %vm258, %v257
    %v267 = vld [vmem:[#allocation0] sm:$0xf]
    %268 = vrot.lane.b32.xlu0 %v267, 106
    %v269 = vpop.permute.xlu0 %268
    %vm270 = vcmask 7168
    %s271 = scalar_lea.vmem %s1, 22
    %272 = vst.msk [vmem:[%s271] sm:$0x1] %vm270, %v269
    %s273 = scalar_lea.vmem %s1, 53
    %274 = vst.msk [vmem:[%s273] sm:$0x2] %vm270, %v269
    %s275 = scalar_lea.vmem %s1, 84
    %276 = vst.msk [vmem:[%s275] sm:$0x4] %vm270, %v269
    %s277 = scalar_lea.vmem %s1, 115
    %278 = vst.msk [vmem:[%s277] sm:$0x8] %vm270, %v269
    %v279 = vld [vmem:[#allocation0] sm:$0xf]
    %280 = vrot.lane.b32.xlu0 %v279, 105
    %v281 = vpop.permute.xlu0 %280
    %vm282 = vcmask 7168
    %s283 = scalar_lea.vmem %s1, 23
    %284 = vst.msk [vmem:[%s283] sm:$0x1] %vm282, %v281
    %s285 = scalar_lea.vmem %s1, 54
    %286 = vst.msk [vmem:[%s285] sm:$0x2] %vm282, %v281
    %s287 = scalar_lea.vmem %s1, 85
    %288 = vst.msk [vmem:[%s287] sm:$0x4] %vm282, %v281
    %s289 = scalar_lea.vmem %s1, 116
    %290 = vst.msk [vmem:[%s289] sm:$0x8] %vm282, %v281
    %v291 = vld [vmem:[#allocation0] sm:$0xf]
    %292 = vrot.lane.b32.xlu0 %v291, 104
    %v293 = vpop.permute.xlu0 %292
    %vm294 = vcmask 7168
    %s295 = scalar_lea.vmem %s1, 24
    %296 = vst.msk [vmem:[%s295] sm:$0x1] %vm294, %v293
    %s297 = scalar_lea.vmem %s1, 55
    %298 = vst.msk [vmem:[%s297] sm:$0x2] %vm294, %v293
    %s299 = scalar_lea.vmem %s1, 86
    %300 = vst.msk [vmem:[%s299] sm:$0x4] %vm294, %v293
    %s301 = scalar_lea.vmem %s1, 117
    %302 = vst.msk [vmem:[%s301] sm:$0x8] %vm294, %v293
    %v303 = vld [vmem:[#allocation0] sm:$0xf]
    %304 = vrot.lane.b32.xlu0 %v303, 103
    %v305 = vpop.permute.xlu0 %304
    %vm306 = vcmask 7168
    %s307 = scalar_lea.vmem %s1, 25
    %308 = vst.msk [vmem:[%s307] sm:$0x1] %vm306, %v305
    %s309 = scalar_lea.vmem %s1, 56
    %310 = vst.msk [vmem:[%s309] sm:$0x2] %vm306, %v305
    %s311 = scalar_lea.vmem %s1, 87
    %312 = vst.msk [vmem:[%s311] sm:$0x4] %vm306, %v305
    %s313 = scalar_lea.vmem %s1, 118
    %314 = vst.msk [vmem:[%s313] sm:$0x8] %vm306, %v305
    %v315 = vld [vmem:[#allocation0] sm:$0xf]
    %316 = vrot.lane.b32.xlu0 %v315, 102
    %v317 = vpop.permute.xlu0 %316
    %vm318 = vcmask 7168
    %s319 = scalar_lea.vmem %s1, 26
    %320 = vst.msk [vmem:[%s319] sm:$0x1] %vm318, %v317
    %s321 = scalar_lea.vmem %s1, 57
    %322 = vst.msk [vmem:[%s321] sm:$0x2] %vm318, %v317
    %s323 = scalar_lea.vmem %s1, 88
    %324 = vst.msk [vmem:[%s323] sm:$0x4] %vm318, %v317
    %s325 = scalar_lea.vmem %s1, 119
    %326 = vst.msk [vmem:[%s325] sm:$0x8] %vm318, %v317
    %v327 = vld [vmem:[#allocation0] sm:$0xf]
    %328 = vrot.lane.b32.xlu0 %v327, 101
    %v329 = vpop.permute.xlu0 %328
    %vm330 = vcmask 7168
    %s331 = scalar_lea.vmem %s1, 27
    %332 = vst.msk [vmem:[%s331] sm:$0x1] %vm330, %v329
    %s333 = scalar_lea.vmem %s1, 58
    %334 = vst.msk [vmem:[%s333] sm:$0x2] %vm330, %v329
    %s335 = scalar_lea.vmem %s1, 89
    %336 = vst.msk [vmem:[%s335] sm:$0x4] %vm330, %v329
    %s337 = scalar_lea.vmem %s1, 120
    %338 = vst.msk [vmem:[%s337] sm:$0x8] %vm330, %v329
    %v339 = vld [vmem:[#allocation0] sm:$0xf]
    %340 = vrot.lane.b32.xlu0 %v339, 100
    %v341 = vpop.permute.xlu0 %340
    %vm342 = vcmask 7168
    %s343 = scalar_lea.vmem %s1, 28
    %344 = vst.msk [vmem:[%s343] sm:$0x1] %vm342, %v341
    %s345 = scalar_lea.vmem %s1, 59
    %346 = vst.msk [vmem:[%s345] sm:$0x2] %vm342, %v341
    %s347 = scalar_lea.vmem %s1, 90
    %348 = vst.msk [vmem:[%s347] sm:$0x4] %vm342, %v341
    %s349 = scalar_lea.vmem %s1, 121
    %350 = vst.msk [vmem:[%s349] sm:$0x8] %vm342, %v341
    %v351 = vld [vmem:[#allocation0] sm:$0xf]
    %352 = vrot.lane.b32.xlu0 %v351, 99
    %v353 = vpop.permute.xlu0 %352
    %vm354 = vcmask 7168
    %s355 = scalar_lea.vmem %s1, 29
    %356 = vst.msk [vmem:[%s355] sm:$0x1] %vm354, %v353
    %s357 = scalar_lea.vmem %s1, 60
    %358 = vst.msk [vmem:[%s357] sm:$0x2] %vm354, %v353
    %s359 = scalar_lea.vmem %s1, 91
    %360 = vst.msk [vmem:[%s359] sm:$0x4] %vm354, %v353
    %s361 = scalar_lea.vmem %s1, 122
    %362 = vst.msk [vmem:[%s361] sm:$0x8] %vm354, %v353
    %v363 = vld [vmem:[#allocation0] sm:$0xf]
    %364 = vrot.lane.b32.xlu0 %v363, 98
    %v365 = vpop.permute.xlu0 %364
    %vm366 = vcmask 7168
    %s367 = scalar_lea.vmem %s1, 30
    %368 = vst.msk [vmem:[%s367] sm:$0x1] %vm366, %v365
    %s369 = scalar_lea.vmem %s1, 61
    %370 = vst.msk [vmem:[%s369] sm:$0x2] %vm366, %v365
    %s371 = scalar_lea.vmem %s1, 92
    %372 = vst.msk [vmem:[%s371] sm:$0x4] %vm366, %v365
    %s373 = scalar_lea.vmem %s1, 123
    %374 = vst.msk [vmem:[%s373] sm:$0x8] %vm366, %v365
    %v375 = vld [vmem:[#allocation0] sm:$0xf]
    %376 = vrot.lane.b32.xlu0 %v375, 97
    %v377 = vpop.permute.xlu0 %376
    %vm378 = vcmask 7168
    %s379 = scalar_lea.vmem %s1, 31
    %380 = vst.msk [vmem:[%s379] sm:$0x1] %vm378, %v377
    %s381 = scalar_lea.vmem %s1, 62
    %382 = vst.msk [vmem:[%s381] sm:$0x2] %vm378, %v377
    %s383 = scalar_lea.vmem %s1, 93
    %384 = vst.msk [vmem:[%s383] sm:$0x4] %vm378, %v377
    %s385 = scalar_lea.vmem %s1, 124
    %386 = vst.msk [vmem:[%s385] sm:$0x8] %vm378, %v377

// kernel: tile.18
$region0: #{tile.18}
  #allocation0 [shape = 's32[1]{0}', space=sflag, size = 0x4, scoped, tag = 'scoped memory for tile.18']
  %s0 = inlined_call_operand.vmem [shape: f32[16], index: 0, kind: input, shape index: {}]
  %s1 = inlined_call_operand.vmem [shape: f32[4,16], index: 1, kind: output, shape index: {}]
  // Predicated region
  $region2: #{tile.18} parent=0 // pred_check
    _
  $region3: #{tile.18} parent=0 // pred_check_branch
    %3 = sbr.rel (0) target = $region5
  $region4: #{tile.18} parent=0 // pred_region
    _
  $region5: #{tile.18} parent=0 // pred_fallthru
    _
  %v4 = vld [vmem:[%s0] ss:$0 sm:$0xff]
  %5 = vst [vmem:[%s1] sm:$0xf] %v4

// kernel: tile.1
$region0: #{tile.1}
  %s0 = inlined_call_operand.vmem [shape: f32[4,16], index: 0, kind: input, shape index: {}]
  %s1 = inlined_call_operand.vmem [shape: f32[64,1], index: 1, kind: output, shape index: {}]
  $region1: #{tile.1} parent=0
    #allocation0 [shape = 'u8[4096]{0}', space=vmem, size = 0x1000, scoped, tag = 'scoped mem for input reshape']
    %s3 = sshllo.u32 0, 4
    %v4 = vld [vmem:[%s0] sm:%s3]
    %5 = vst [vmem:[#allocation0] sm:%s3] %v4
    %v6 = vld [vmem:[#allocation0] sm:$0xf]
    %vm7 = vcmask 7168
    %8 = vst.msk [vmem:[%s1] ss:$16 sm:$0x3] %vm7, %v6
    %9 = vst.msk [vmem:[%s1] ss:$16 sm:$0xc] %vm7, %v6
    %v10 = vld [vmem:[#allocation0] sm:$0xf]
    %11 = vrot.lane.b32.xlu0 %v10, 127
    %v12 = vpop.permute.xlu0 %11
    %vm13 = vcmask 7168
    %s14 = scalar_lea.vmem %s1, 1
    %15 = vst.msk [vmem:[%s14] ss:$16 sm:$0x3] %vm13, %v12
    %s16 = scalar_lea.vmem %s1, 1
    %17 = vst.msk [vmem:[%s16] ss:$16 sm:$0xc] %vm13, %v12
    %v18 = vld [vmem:[#allocation0] sm:$0xf]
    %19 = vrot.lane.b32.xlu0 %v18, 126
    %v20 = vpop.permute.xlu0 %19
    %vm21 = vcmask 7168
    %s22 = scalar_lea.vmem %s1, 2
    %23 = vst.msk [vmem:[%s22] ss:$16 sm:$0x3] %vm21, %v20
    %s24 = scalar_lea.vmem %s1, 2
    %25 = vst.msk [vmem:[%s24] ss:$16 sm:$0xc] %vm21, %v20
    %v26 = vld [vmem:[#allocation0] sm:$0xf]
    %27 = vrot.lane.b32.xlu0 %v26, 125
    %v28 = vpop.permute.xlu0 %27
    %vm29 = vcmask 7168
    %s30 = scalar_lea.vmem %s1, 3
    %31 = vst.msk [vmem:[%s30] ss:$16 sm:$0x3] %vm29, %v28
    %s32 = scalar_lea.vmem %s1, 3
    %33 = vst.msk [vmem:[%s32] ss:$16 sm:$0xc] %vm29, %v28
    %v34 = vld [vmem:[#allocation0] sm:$0xf]
    %35 = vrot.lane.b32.xlu0 %v34, 124
    %v36 = vpop.permute.xlu0 %35
    %vm37 = vcmask 7168
    %s38 = scalar_lea.vmem %s1, 4
    %39 = vst.msk [vmem:[%s38] ss:$16 sm:$0x3] %vm37, %v36
    %s40 = scalar_lea.vmem %s1, 4
    %41 = vst.msk [vmem:[%s40] ss:$16 sm:$0xc] %vm37, %v36
    %v42 = vld [vmem:[#allocation0] sm:$0xf]
    %43 = vrot.lane.b32.xlu0 %v42, 123
    %v44 = vpop.permute.xlu0 %43
    %vm45 = vcmask 7168
    %s46 = scalar_lea.vmem %s1, 5
    %47 = vst.msk [vmem:[%s46] ss:$16 sm:$0x3] %vm45, %v44
    %s48 = scalar_lea.vmem %s1, 5
    %49 = vst.msk [vmem:[%s48] ss:$16 sm:$0xc] %vm45, %v44
    %v50 = vld [vmem:[#allocation0] sm:$0xf]
    %51 = vrot.lane.b32.xlu0 %v50, 122
    %v52 = vpop.permute.xlu0 %51
    %vm53 = vcmask 7168
    %s54 = scalar_lea.vmem %s1, 6
    %55 = vst.msk [vmem:[%s54] ss:$16 sm:$0x3] %vm53, %v52
    %s56 = scalar_lea.vmem %s1, 6
    %57 = vst.msk [vmem:[%s56] ss:$16 sm:$0xc] %vm53, %v52
    %v58 = vld [vmem:[#allocation0] sm:$0xf]
    %59 = vrot.lane.b32.xlu0 %v58, 121
    %v60 = vpop.permute.xlu0 %59
    %vm61 = vcmask 7168
    %s62 = scalar_lea.vmem %s1, 7
    %63 = vst.msk [vmem:[%s62] ss:$16 sm:$0x3] %vm61, %v60
    %s64 = scalar_lea.vmem %s1, 7
    %65 = vst.msk [vmem:[%s64] ss:$16 sm:$0xc] %vm61, %v60
    %v66 = vld [vmem:[#allocation0] sm:$0xf]
    %67 = vrot.lane.b32.xlu0 %v66, 120
    %v68 = vpop.permute.xlu0 %67
    %vm69 = vcmask 7168
    %s70 = scalar_lea.vmem %s1, 8
    %71 = vst.msk [vmem:[%s70] ss:$16 sm:$0x3] %vm69, %v68
    %s72 = scalar_lea.vmem %s1, 8
    %73 = vst.msk [vmem:[%s72] ss:$16 sm:$0xc] %vm69, %v68
    %v74 = vld [vmem:[#allocation0] sm:$0xf]
    %75 = vrot.lane.b32.xlu0 %v74, 119
    %v76 = vpop.permute.xlu0 %75
    %vm77 = vcmask 7168
    %s78 = scalar_lea.vmem %s1, 9
    %79 = vst.msk [vmem:[%s78] ss:$16 sm:$0x3] %vm77, %v76
    %s80 = scalar_lea.vmem %s1, 9
    %81 = vst.msk [vmem:[%s80] ss:$16 sm:$0xc] %vm77, %v76
    %v82 = vld [vmem:[#allocation0] sm:$0xf]
    %83 = vrot.lane.b32.xlu0 %v82, 118
    %v84 = vpop.permute.xlu0 %83
    %vm85 = vcmask 7168
    %s86 = scalar_lea.vmem %s1, 10
    %87 = vst.msk [vmem:[%s86] ss:$16 sm:$0x3] %vm85, %v84
    %s88 = scalar_lea.vmem %s1, 10
    %89 = vst.msk [vmem:[%s88] ss:$16 sm:$0xc] %vm85, %v84
    %v90 = vld [vmem:[#allocation0] sm:$0xf]
    %91 = vrot.lane.b32.xlu0 %v90, 117
    %v92 = vpop.permute.xlu0 %91
    %vm93 = vcmask 7168
    %s94 = scalar_lea.vmem %s1, 11
    %95 = vst.msk [vmem:[%s94] ss:$16 sm:$0x3] %vm93, %v92
    %s96 = scalar_lea.vmem %s1, 11
    %97 = vst.msk [vmem:[%s96] ss:$16 sm:$0xc] %vm93, %v92
    %v98 = vld [vmem:[#allocation0] sm:$0xf]
    %99 = vrot.lane.b32.xlu0 %v98, 116
    %v100 = vpop.permute.xlu0 %99
    %vm101 = vcmask 7168
    %s102 = scalar_lea.vmem %s1, 12
    %103 = vst.msk [vmem:[%s102] ss:$16 sm:$0x3] %vm101, %v100
    %s104 = scalar_lea.vmem %s1, 12
    %105 = vst.msk [vmem:[%s104] ss:$16 sm:$0xc] %vm101, %v100
    %v106 = vld [vmem:[#allocation0] sm:$0xf]
    %107 = vrot.lane.b32.xlu0 %v106, 115
    %v108 = vpop.permute.xlu0 %107
    %vm109 = vcmask 7168
    %s110 = scalar_lea.vmem %s1, 13
    %111 = vst.msk [vmem:[%s110] ss:$16 sm:$0x3] %vm109, %v108
    %s112 = scalar_lea.vmem %s1, 13
    %113 = vst.msk [vmem:[%s112] ss:$16 sm:$0xc] %vm109, %v108
    %v114 = vld [vmem:[#allocation0] sm:$0xf]
    %115 = vrot.lane.b32.xlu0 %v114, 114
    %v116 = vpop.permute.xlu0 %115
    %vm117 = vcmask 7168
    %s118 = scalar_lea.vmem %s1, 14
    %119 = vst.msk [vmem:[%s118] ss:$16 sm:$0x3] %vm117, %v116
    %s120 = scalar_lea.vmem %s1, 14
    %121 = vst.msk [vmem:[%s120] ss:$16 sm:$0xc] %vm117, %v116
    %v122 = vld [vmem:[#allocation0] sm:$0xf]
    %123 = vrot.lane.b32.xlu0 %v122, 113
    %v124 = vpop.permute.xlu0 %123
    %vm125 = vcmask 7168
    %s126 = scalar_lea.vmem %s1, 15
    %127 = vst.msk [vmem:[%s126] ss:$16 sm:$0x3] %vm125, %v124
    %s128 = scalar_lea.vmem %s1, 15
    %129 = vst.msk [vmem:[%s128] ss:$16 sm:$0xc] %vm125, %v124

// kernel: unet_forward.7
$region0: #{unet_forward.7}
  #allocation0 [shape = 'u32[]', space=smem, size = 0x4, offset = 0x4, fixed_abs, tag = 'smem constant byte address 0x4 - core index']
  #allocation1 [shape = 'u32[144,128]{1,0:T(1,128)}', space=vmem, size = 0x12000, scoped, tag = 'internal scratch']
  %s0 = inlined_call_operand.vmem [shape: f32[2,32,384], index: 0, kind: input, shape index: {}]
  %s1 = inlined_call_operand.vmem [shape: bf16[64,288], index: 1, kind: input, shape index: {}]
  %s2 = inlined_call_operand.vmem [shape: f32[64,1], index: 2, kind: input, shape index: {}]
  %s3 = inlined_call_operand.vmem [shape: bf16[64,576], index: 3, kind: input, shape index: {}]
  %s4 = inlined_call_operand.vmem [shape: f32[64,1], index: 4, kind: input, shape index: {}]
  %s5 = inlined_call_operand.vmem [shape: bf16[128,64], index: 5, kind: input, shape index: {}]
  %s6 = inlined_call_operand.vmem [shape: f32[128,1], index: 6, kind: input, shape index: {}]
  %s7 = inlined_call_operand.hbm [shape: f32[2,64,128], index: 7, kind: output, shape index: {0}]
  %s8 = inlined_call_operand.vmem [shape: f32[2,128,128], index: 8, kind: output, shape index: {1}]
  %9 = xla_tuple %s7, %s8
  %s10 = sld [smem:[#allocation0]]
  $region69: #{unet_forward.7} parent=0
    _
  %s12 = ssub.s32 1, %s10
  %s13 = scalar_select 0, %s12, %s10
  $region1: #{unet_forward.7} parent=0
    #allocation2 [shape = 'u8[65536]{0}', space=vmem, size = 0x10000, scoped, tag = 'output window, operand 0']
    #allocation3 [shape = 's32[2]{0}', space=sflag, size = 0x8, scoped, tag = 'scoped memory for unet_forward.7']
    %14 = vsyncpa [#allocation3], 0
    %s15 = scalar_lea.sflag [#allocation3], 1
    %16 = vsyncpa %s15, 0
    loop: start=0, step=1, limit=4
    $region2: #{unet_forward.7} parent=1 // loop_pre_header
      _
    $region3: #{unet_forward.7} parent=1 // loop_header
      %s18 = sphi 0, %s22
      %p19 = scmp.ge.s32.totalorder %s18, 4
      %s28 = sphi 0, %s30
      %s31 = sphi 0, %s28
      %s32 = sphi 0, %s31
      %s48 = sphi 0, %s32
      %s52 = sphi 0, %s52
      %s54 = sphi 0, %s52
      %s55 = sphi 0, %s54
      %s69 = sphi 0, %s55
      %s73 = sphi 0, %s73
      %s75 = sphi 0, %s73
      %s76 = sphi 0, %s75
      %s90 = sphi 0, %s76
      %s94 = sphi 0, %s94
      %s96 = sphi 0, %s94
      %s97 = sphi 0, %s96
      %s111 = sphi 0, %s97
      %s115 = sphi 0, %s115
      %s117 = sphi 0, %s115
      %s118 = sphi 0, %s117
      %s132 = sphi 0, %s118
      %s136 = sphi 0, %s136
      %s138 = sphi 0, %s136
      %s139 = sphi 0, %s138
      %s153 = sphi 0, %s139
      %s157 = sphi 0, %s157
      %s159 = sphi 0, %s157
      %s160 = sphi 0, %s159
      %s174 = sphi 0, %s160
      %s180 = sphi 0, %s182
      %s183 = sphi 0, %s180
      %s184 = sphi 0, %s183
      %s200 = sphi 0, %s184
      %s206 = sphi 0, %s208
      %s209 = sphi 0, %s206
      %s210 = sphi 0, %s209
      %s226 = sphi 0, %s210
    $region4: #{unet_forward.7} parent=1 // loop_header_branch
      %21 = sbr.rel (%p19) target = $region8
    $region5: #{unet_forward.7} parent=1 // loop_body
      %s23 = ssub.s32 %s18, 1
      %s24 = ssub.s32 %s18, 2
      %s25 = sadd.s32 %s18, 1
      %s26 = ssub.s32 %s18, %s25
      %p27 = scmp.eq.s32.totalorder %s26, 0
      %s29 = sadd.s32 %s28, 1
      %s30 = scalar_select %p27, %s28, %s29
      %p33 = pneg %p27
      %p34 = scmp.eq.s32.totalorder %s18, 1
      %p35 = por %p33, %p34
      %p36 = scmp.ne.s32.totalorder %s28, %s31
      %p37 = scmp.eq.s32.totalorder %s18, 0
      %p38 = por %p36, %p37
      %p39 = scmp.ne.s32.totalorder %s28, %s31
      %p40 = scmp.eq.s32.totalorder %s23, 1
      %p41 = por %p39, %p40
      %p42 = scmp.ne.s32.totalorder %s31, %s32
      %p43 = scmp.eq.s32.totalorder %s23, 0
      %p44 = por %p42, %p43
      %p45 = scmp.ne.s32.totalorder %s31, %s32
      %p46 = scmp.eq.s32.totalorder %s24, 1
      %p47 = por %p45, %p46
      %p49 = scmp.ne.s32.totalorder %s32, %s48
      %p50 = scmp.eq.s32.totalorder %s24, 0
      %p51 = por %p49, %p50
      %s53 = sadd.s32 %s52, 1
      %p56 = scmp.eq.s32.totalorder %s18, 1
      %p57 = scmp.ne.s32.totalorder %s52, %s54
      %p58 = scmp.eq.s32.totalorder %s18, 0
      %p59 = por %p57, %p58
      %p60 = scmp.ne.s32.totalorder %s52, %s54
      %p61 = scmp.eq.s32.totalorder %s23, 1
      %p62 = por %p60, %p61
      %p63 = scmp.ne.s32.totalorder %s54, %s55
      %p64 = scmp.eq.s32.totalorder %s23, 0
      %p65 = por %p63, %p64
      %p66 = scmp.ne.s32.totalorder %s54, %s55
      %p67 = scmp.eq.s32.totalorder %s24, 1
      %p68 = por %p66, %p67
      %p70 = scmp.ne.s32.totalorder %s55, %s69
      %p71 = scmp.eq.s32.totalorder %s24, 0
      %p72 = por %p70, %p71
      %s74 = sadd.s32 %s73, 1
      %p77 = scmp.eq.s32.totalorder %s18, 1
      %p78 = scmp.ne.s32.totalorder %s73, %s75
      %p79 = scmp.eq.s32.totalorder %s18, 0
      %p80 = por %p78, %p79
      %p81 = scmp.ne.s32.totalorder %s73, %s75
      %p82 = scmp.eq.s32.totalorder %s23, 1
      %p83 = por %p81, %p82
      %p84 = scmp.ne.s32.totalorder %s75, %s76
      %p85 = scmp.eq.s32.totalorder %s23, 0
      %p86 = por %p84, %p85
      %p87 = scmp.ne.s32.totalorder %s75, %s76
      %p88 = scmp.eq.s32.totalorder %s24, 1
      %p89 = por %p87, %p88
      %p91 = scmp.ne.s32.totalorder %s76, %s90
      %p92 = scmp.eq.s32.totalorder %s24, 0
      %p93 = por %p91, %p92
      %s95 = sadd.s32 %s94, 1
      %p98 = scmp.eq.s32.totalorder %s18, 1
      %p99 = scmp.ne.s32.totalorder %s94, %s96
      %p100 = scmp.eq.s32.totalorder %s18, 0
      %p101 = por %p99, %p100
      %p102 = scmp.ne.s32.totalorder %s94, %s96
      %p103 = scmp.eq.s32.totalorder %s23, 1
      %p104 = por %p102, %p103
      %p105 = scmp.ne.s32.totalorder %s96, %s97
      %p106 = scmp.eq.s32.totalorder %s23, 0
      %p107 = por %p105, %p106
      %p108 = scmp.ne.s32.totalorder %s96, %s97
      %p109 = scmp.eq.s32.totalorder %s24, 1
      %p110 = por %p108, %p109
      %p112 = scmp.ne.s32.totalorder %s97, %s111
      %p113 = scmp.eq.s32.totalorder %s24, 0
      %p114 = por %p112, %p113
      %s116 = sadd.s32 %s115, 1
      %p119 = scmp.eq.s32.totalorder %s18, 1
      %p120 = scmp.ne.s32.totalorder %s115, %s117
      %p121 = scmp.eq.s32.totalorder %s18, 0
      %p122 = por %p120, %p121
      %p123 = scmp.ne.s32.totalorder %s115, %s117
      %p124 = scmp.eq.s32.totalorder %s23, 1
      %p125 = por %p123, %p124
      %p126 = scmp.ne.s32.totalorder %s117, %s118
      %p127 = scmp.eq.s32.totalorder %s23, 0
      %p128 = por %p126, %p127
      %p129 = scmp.ne.s32.totalorder %s117, %s118
      %p130 = scmp.eq.s32.totalorder %s24, 1
      %p131 = por %p129, %p130
      %p133 = scmp.ne.s32.totalorder %s118, %s132
      %p134 = scmp.eq.s32.totalorder %s24, 0
      %p135 = por %p133, %p134
      %s137 = sadd.s32 %s136, 1
      %p140 = scmp.eq.s32.totalorder %s18, 1
      %p141 = scmp.ne.s32.totalorder %s136, %s138
      %p142 = scmp.eq.s32.totalorder %s18, 0
      %p143 = por %p141, %p142
      %p144 = scmp.ne.s32.totalorder %s136, %s138
      %p145 = scmp.eq.s32.totalorder %s23, 1
      %p146 = por %p144, %p145
      %p147 = scmp.ne.s32.totalorder %s138, %s139
      %p148 = scmp.eq.s32.totalorder %s23, 0
      %p149 = por %p147, %p148
      %p150 = scmp.ne.s32.totalorder %s138, %s139
      %p151 = scmp.eq.s32.totalorder %s24, 1
      %p152 = por %p150, %p151
      %p154 = scmp.ne.s32.totalorder %s139, %s153
      %p155 = scmp.eq.s32.totalorder %s24, 0
      %p156 = por %p154, %p155
      %s158 = sadd.s32 %s157, 1
      %p161 = scmp.eq.s32.totalorder %s18, 1
      %p162 = scmp.ne.s32.totalorder %s157, %s159
      %p163 = scmp.eq.s32.totalorder %s18, 0
      %p164 = por %p162, %p163
      %p165 = scmp.ne.s32.totalorder %s157, %s159
      %p166 = scmp.eq.s32.totalorder %s23, 1
      %p167 = por %p165, %p166
      %p168 = scmp.ne.s32.totalorder %s159, %s160
      %p169 = scmp.eq.s32.totalorder %s23, 0
      %p170 = por %p168, %p169
      %p171 = scmp.ne.s32.totalorder %s159, %s160
      %p172 = scmp.eq.s32.totalorder %s24, 1
      %p173 = por %p171, %p172
      %p175 = scmp.ne.s32.totalorder %s160, %s174
      %p176 = scmp.eq.s32.totalorder %s24, 0
      %p177 = por %p175, %p176
      %s178 = ssub.s32 %s18, %s25
      %p179 = scmp.eq.s32.totalorder %s178, 0
      %s181 = sadd.s32 %s180, 1
      %s182 = scalar_select %p179, %s180, %s181
      %p185 = pneg %p179
      %p186 = scmp.eq.s32.totalorder %s18, 1
      %p187 = por %p185, %p186
      %p188 = scmp.ne.s32.totalorder %s180, %s183
      %p189 = scmp.eq.s32.totalorder %s18, 0
      %p190 = por %p188, %p189
      %p191 = scmp.ne.s32.totalorder %s180, %s183
      %p192 = scmp.eq.s32.totalorder %s23, 1
      %p193 = por %p191, %p192
      %p194 = scmp.ne.s32.totalorder %s183, %s184
      %p195 = scmp.eq.s32.totalorder %s23, 0
      %p196 = por %p194, %p195
      %p197 = scmp.ne.s32.totalorder %s183, %s184
      %p198 = scmp.eq.s32.totalorder %s24, 1
      %p199 = por %p197, %p198
      %p201 = scmp.ne.s32.totalorder %s184, %s200
      %p202 = scmp.eq.s32.totalorder %s24, 0
      %p203 = por %p201, %p202
      %s204 = ssub.s32 %s18, %s25
      %p205 = scmp.eq.s32.totalorder %s204, 0
      %s207 = sadd.s32 %s206, 1
      %s208 = scalar_select %p205, %s206, %s207
      %p211 = pneg %p205
      %p212 = scmp.eq.s32.totalorder %s18, 1
      %p213 = por %p211, %p212
      %p214 = scmp.ne.s32.totalorder %s206, %s209
      %p215 = scmp.eq.s32.totalorder %s18, 0
      %p216 = por %p214, %p215
      %p217 = scmp.ne.s32.totalorder %s206, %s209
      %p218 = scmp.eq.s32.totalorder %s23, 1
      %p219 = por %p217, %p218
      %p220 = scmp.ne.s32.totalorder %s209, %s210
      %p221 = scmp.eq.s32.totalorder %s23, 0
      %p222 = por %p220, %p221
      %p223 = scmp.ne.s32.totalorder %s209, %s210
      %p224 = scmp.eq.s32.totalorder %s24, 1
      %p225 = por %p223, %p224
      %p227 = scmp.ne.s32.totalorder %s210, %s226
      %p228 = scmp.eq.s32.totalorder %s24, 0
      %p229 = por %p227, %p228
      %p230 = scmp.le.s32.totalorder 1, %s18
      %p231 = scmp.lt.s32.totalorder %s18, 3
      %p232 = pnand %p230, %p231
      %p233 = pneg %p232
      // Predicated region
      $region9: #{unet_forward.7} parent=5 // pred_check
        _
      $region10: #{unet_forward.7} parent=5 // pred_check_branch
        %235 = sbr.rel (%p232) target = $region12
      $region11: #{unet_forward.7} parent=5 // pred_region
        %s236 = ssub.s32 %s18, 1
        // Predicated region
        $region13: #{unet_forward.7} parent=11 // pred_check
          %p237 = pneg %p65
        $region14: #{unet_forward.7} parent=11 // pred_check_branch
          %239 = sbr.rel (%p237) target = $region16
        $region15: #{unet_forward.7} parent=11 // pred_region
          _
        $region16: #{unet_forward.7} parent=11 // pred_fallthru
          _
        // Predicated region
        $region17: #{unet_forward.7} parent=11 // pred_check
          %p240 = pneg %p86
        $region18: #{unet_forward.7} parent=11 // pred_check_branch
          %242 = sbr.rel (%p240) target = $region20
        $region19: #{unet_forward.7} parent=11 // pred_region
          _
        $region20: #{unet_forward.7} parent=11 // pred_fallthru
          _
        // Predicated region
        $region21: #{unet_forward.7} parent=11 // pred_check
          %p243 = pneg %p107
        $region22: #{unet_forward.7} parent=11 // pred_check_branch
          %245 = sbr.rel (%p243) target = $region24
        $region23: #{unet_forward.7} parent=11 // pred_region
          _
        $region24: #{unet_forward.7} parent=11 // pred_fallthru
          _
        // Predicated region
        $region25: #{unet_forward.7} parent=11 // pred_check
          %p246 = pneg %p128
        $region26: #{unet_forward.7} parent=11 // pred_check_branch
          %248 = sbr.rel (%p246) target = $region28
        $region27: #{unet_forward.7} parent=11 // pred_region
          _
        $region28: #{unet_forward.7} parent=11 // pred_fallthru
          _
        // Predicated region
        $region29: #{unet_forward.7} parent=11 // pred_check
          %p249 = pneg %p149
        $region30: #{unet_forward.7} parent=11 // pred_check_branch
          %251 = sbr.rel (%p249) target = $region32
        $region31: #{unet_forward.7} parent=11 // pred_region
          _
        $region32: #{unet_forward.7} parent=11 // pred_fallthru
          _
        // Predicated region
        $region33: #{unet_forward.7} parent=11 // pred_check
          %p252 = pneg %p170
        $region34: #{unet_forward.7} parent=11 // pred_check_branch
          %254 = sbr.rel (%p252) target = $region36
        $region35: #{unet_forward.7} parent=11 // pred_region
          _
        $region36: #{unet_forward.7} parent=11 // pred_fallthru
          _
      $region12: #{unet_forward.7} parent=5 // pred_fallthru
        _
      %p255 = scmp.lt.s32.totalorder %s18, 2
      // Predicated region
      $region37: #{unet_forward.7} parent=5 // pred_check
        %p256 = pneg %p255
      $region38: #{unet_forward.7} parent=5 // pred_check_branch
        %258 = sbr.rel (%p256) target = $region40
      $region39: #{unet_forward.7} parent=5 // pred_region
        // Predicated region
        $region41: #{unet_forward.7} parent=39 // pred_check
          %p259 = pneg %p38
        $region42: #{unet_forward.7} parent=39 // pred_check_branch
          %261 = sbr.rel (%p259) target = $region44
        $region43: #{unet_forward.7} parent=39 // pred_region
          %p262 = scmp.lt.s32.totalorder %s18, 1
          %s263 = scalar_select %p262, %s18, 1
          %s264 = smul.addr %s263, 12
          %s265 = smul.addr %s264, 8
          %s266 = scalar_lea.vmem %s0, %s265
        $region44: #{unet_forward.7} parent=39 // pred_fallthru
          _
      $region40: #{unet_forward.7} parent=5 // pred_fallthru
        _
      %p267 = scmp.le.s32.totalorder 1, %s18
      %p268 = scmp.lt.s32.totalorder %s18, 3
      %p269 = pnand %p267, %p268
      %p270 = pneg %p269
      // Predicated region
      $region45: #{unet_forward.7} parent=5 // pred_check
        _
      $region46: #{unet_forward.7} parent=5 // pred_check_branch
        %272 = sbr.rel (%p269) target = $region48
      $region47: #{unet_forward.7} parent=5 // pred_region
        %s273 = ssub.s32 %s18, 1
        %p274 = scmp.lt.s32.totalorder %s23, 1
        %s275 = scalar_select %p274, %s23, 1
        %s276 = smul.addr %s275, 12
        %s277 = smul.addr %s276, 8
        %s278 = scalar_lea.vmem %s0, %s277
        %p279 = pneg %p44
        %p280 = pneg %p41
        %p281 = pneg %p65
        %p282 = pneg %p62
        %p283 = pneg %p86
        %p284 = pneg %p83
        %p285 = pneg %p107
        %p286 = pneg %p104
        %p287 = pneg %p128
        %p288 = pneg %p125
        %p289 = pneg %p149
        %p290 = pneg %p146
        %p291 = pneg %p170
        %p292 = pneg %p167
        %p293 = pneg %p196
        %p294 = pneg %p193
        %s295 = sand.u32 %s183, 1
        %s296 = scalar_lea.sflag [#allocation3], %s295
        %s297 = sand.u32 %s183, 1
        %s298 = smul.addr %s297, 64
        %s299 = scalar_lea.vmem [#allocation2], %s298
        %p300 = pneg %p222
        %p301 = pneg %p219
        %p302 = scmp.lt.s32.totalorder %s23, 1
        %s303 = scalar_select %p302, %s23, 1
        %s304 = smul.addr %s303, 16
        %s305 = smul.addr %s304, 8
        %s306 = scalar_lea.vmem %s8, %s305
        %p307 = scmp.lt.s32.totalorder %s23, 1
        %s308 = scalar_select %p307, %s23, 1
        %s309 = smul.addr %s308, 12
        %s310 = smul.addr %s309, 8
        %s311 = scalar_lea.vmem %s0, %s310
        %p312 = scmp.lt.s32.totalorder %s23, 1
        %s313 = scalar_select %p312, %s23, 1
        %s314 = smul.addr %s313, 16
        %s315 = smul.addr %s314, 8
        %s316 = scalar_lea.vmem %s8, %s315
        %v318 = vld [vmem:[%s311] sm:$0xff]
        %v319 = vld [vmem:[%s311 + $0x8] sm:$0xff]
        %v320 = vld [vmem:[%s311 + $0x10] sm:$0xff]
        %v321 = vld [vmem:[%s311 + $0x18] sm:$0xff]
        %v322 = vld [vmem:[%s311 + $0x20] sm:$0xff]
        %v323 = vld [vmem:[%s311 + $0x28] sm:$0xff]
        %v324 = vld [vmem:[%s311 + $0x30] sm:$0xff]
        %v325 = vld [vmem:[%s311 + $0x38] sm:$0xff]
        %v326 = vld [vmem:[%s311 + $0x40] sm:$0xff]
        %v327 = vld [vmem:[%s311 + $0x48] sm:$0xff]
        %v328 = vld [vmem:[%s311 + $0x50] sm:$0xff]
        %v329 = vld [vmem:[%s311 + $0x58] sm:$0xff]
        %v330 = vld [vmem:[%s1] sm:$0xff]
        %v331 = vld [vmem:[%s1 + $0x8] sm:$0xf]
        %v332 = vld [vmem:[%s1 + $0xc] sm:$0xff]
        %v333 = vld [vmem:[%s1 + $0x14] sm:$0xf]
        %v334 = vld [vmem:[%s1 + $0x18] sm:$0xff]
        %v335 = vld [vmem:[%s1 + $0x20] sm:$0xf]
        %v336 = vld [vmem:[%s1 + $0x24] sm:$0xff]
        %v337 = vld [vmem:[%s1 + $0x2c] sm:$0xf]
        %v338 = vld [vmem:[%s1 + $0x30] sm:$0xff]
        %v339 = vld [vmem:[%s1 + $0x38] sm:$0xf]
        %v340 = vld [vmem:[%s1 + $0x3c] sm:$0xff]
        %v341 = vld [vmem:[%s1 + $0x44] sm:$0xf]
        %v342 = vld [vmem:[%s1 + $0x48] sm:$0xff]
        %v343 = vld [vmem:[%s1 + $0x50] sm:$0xf]
        %v344 = vld [vmem:[%s1 + $0x54] sm:$0xff]
        %v345 = vld [vmem:[%s1 + $0x5c] sm:$0xf]
        %v346 = vld [vmem:[%s2] sm:$0xff]
        %v347 = vld [vmem:[%s2 + $0x8] sm:$0xff]
        %v348 = vld [vmem:[%s2 + $0x10] sm:$0xff]
        %v349 = vld [vmem:[%s2 + $0x18] sm:$0xff]
        %v350 = vld [vmem:[%s2 + $0x20] sm:$0xff]
        %v351 = vld [vmem:[%s2 + $0x28] sm:$0xff]
        %v352 = vld [vmem:[%s2 + $0x30] sm:$0xff]
        %v353 = vld [vmem:[%s2 + $0x38] sm:$0xff]
        %366 = vrot.lane.b32.xlu0 %v318, 127
        %v367 = vpop.permute.xlu0 %366
        %368 = vrot.lane.b32.xlu0 %v319, 127
        %v369 = vpop.permute.xlu0 %368
        %370 = vrot.lane.b32.xlu0 %v320, 127
        %v371 = vpop.permute.xlu0 %370
        %372 = vrot.lane.b32.xlu0 %v321, 127
        %v373 = vpop.permute.xlu0 %372
        %374 = vrot.lane.b32.xlu0 %v322, 127
        %v375 = vpop.permute.xlu0 %374
        %376 = vrot.lane.b32.xlu0 %v323, 127
        %v377 = vpop.permute.xlu0 %376
        %378 = vrot.lane.b32.xlu0 %v324, 127
        %v379 = vpop.permute.xlu0 %378
        %380 = vrot.lane.b32.xlu0 %v325, 127
        %v381 = vpop.permute.xlu0 %380
        %382 = vrot.lane.b32.xlu0 %v326, 127
        %v383 = vpop.permute.xlu0 %382
        %384 = vrot.lane.b32.xlu0 %v327, 127
        %v385 = vpop.permute.xlu0 %384
        %386 = vrot.lane.b32.xlu0 %v328, 127
        %v387 = vpop.permute.xlu0 %386
        %388 = vrot.lane.b32.xlu0 %v329, 127
        %v389 = vpop.permute.xlu0 %388
        %vm390 = vcmask 1039360
        %v391 = vsel %vm390, %v367, %v369
        %v392 = vsel %vm390, %v369, %v371
        %v393 = vsel %vm390, %v373, %v375
        %v394 = vsel %vm390, %v375, %v377
        %v395 = vsel %vm390, %v379, %v381
        %v396 = vsel %vm390, %v381, %v383
        %v397 = vsel %vm390, %v385, %v387
        %v398 = vsel %vm390, %v387, %v389
        %407 = vrot.lane.b32.xlu0 %v318, 126
        %v408 = vpop.permute.xlu0 %407
        %409 = vrot.lane.b32.xlu0 %v319, 126
        %v410 = vpop.permute.xlu0 %409
        %411 = vrot.lane.b32.xlu0 %v320, 126
        %v412 = vpop.permute.xlu0 %411
        %413 = vrot.lane.b32.xlu0 %v321, 126
        %v414 = vpop.permute.xlu0 %413
        %415 = vrot.lane.b32.xlu0 %v322, 126
        %v416 = vpop.permute.xlu0 %415
        %417 = vrot.lane.b32.xlu0 %v323, 126
        %v418 = vpop.permute.xlu0 %417
        %419 = vrot.lane.b32.xlu0 %v324, 126
        %v420 = vpop.permute.xlu0 %419
        %421 = vrot.lane.b32.xlu0 %v325, 126
        %v422 = vpop.permute.xlu0 %421
        %423 = vrot.lane.b32.xlu0 %v326, 126
        %v424 = vpop.permute.xlu0 %423
        %425 = vrot.lane.b32.xlu0 %v327, 126
        %v426 = vpop.permute.xlu0 %425
        %427 = vrot.lane.b32.xlu0 %v328, 126
        %v428 = vpop.permute.xlu0 %427
        %429 = vrot.lane.b32.xlu0 %v329, 126
        %v430 = vpop.permute.xlu0 %429
        %vm431 = vcmask 1031168
        %v432 = vsel %vm431, %v408, %v410
        %v433 = vsel %vm431, %v410, %v412
        %v434 = vsel %vm431, %v414, %v416
        %v435 = vsel %vm431, %v416, %v418
        %v436 = vsel %vm431, %v420, %v422
        %v437 = vsel %vm431, %v422, %v424
        %v438 = vsel %vm431, %v426, %v428
        %v439 = vsel %vm431, %v428, %v430
        %448 = vrot.lane.b32.xlu0 %v318, 119
        %v449 = vpop.permute.xlu0 %448
        %450 = vrot.lane.b32.xlu0 %v319, 119
        %v451 = vpop.permute.xlu0 %450
        %452 = vrot.lane.b32.xlu0 %v320, 119
        %v453 = vpop.permute.xlu0 %452
        %454 = vrot.lane.b32.xlu0 %v321, 119
        %v455 = vpop.permute.xlu0 %454
        %456 = vrot.lane.b32.xlu0 %v322, 119
        %v457 = vpop.permute.xlu0 %456
        %458 = vrot.lane.b32.xlu0 %v323, 119
        %v459 = vpop.permute.xlu0 %458
        %460 = vrot.lane.b32.xlu0 %v324, 119
        %v461 = vpop.permute.xlu0 %460
        %462 = vrot.lane.b32.xlu0 %v325, 119
        %v463 = vpop.permute.xlu0 %462
        %464 = vrot.lane.b32.xlu0 %v326, 119
        %v465 = vpop.permute.xlu0 %464
        %466 = vrot.lane.b32.xlu0 %v327, 119
        %v467 = vpop.permute.xlu0 %466
        %468 = vrot.lane.b32.xlu0 %v328, 119
        %v469 = vpop.permute.xlu0 %468
        %470 = vrot.lane.b32.xlu0 %v329, 119
        %v471 = vpop.permute.xlu0 %470
        %vm472 = vcmask 973824
        %v473 = vsel %vm472, %v449, %v451
        %v474 = vsel %vm472, %v451, %v453
        %v475 = vsel %vm472, %v455, %v457
        %v476 = vsel %vm472, %v457, %v459
        %v477 = vsel %vm472, %v461, %v463
        %v478 = vsel %vm472, %v463, %v465
        %v479 = vsel %vm472, %v467, %v469
        %v480 = vsel %vm472, %v469, %v471
        %489 = vrot.lane.b32.xlu0 %v318, 118
        %v490 = vpop.permute.xlu0 %489
        %491 = vrot.lane.b32.xlu0 %v319, 118
        %v492 = vpop.permute.xlu0 %491
        %493 = vrot.lane.b32.xlu0 %v320, 118
        %v494 = vpop.permute.xlu0 %493
        %495 = vrot.lane.b32.xlu0 %v321, 118
        %v496 = vpop.permute.xlu0 %495
        %497 = vrot.lane.b32.xlu0 %v322, 118
        %v498 = vpop.permute.xlu0 %497
        %499 = vrot.lane.b32.xlu0 %v323, 118
        %v500 = vpop.permute.xlu0 %499
        %501 = vrot.lane.b32.xlu0 %v324, 118
        %v502 = vpop.permute.xlu0 %501
        %503 = vrot.lane.b32.xlu0 %v325, 118
        %v504 = vpop.permute.xlu0 %503
        %505 = vrot.lane.b32.xlu0 %v326, 118
        %v506 = vpop.permute.xlu0 %505
        %507 = vrot.lane.b32.xlu0 %v327, 118
        %v508 = vpop.permute.xlu0 %507
        %509 = vrot.lane.b32.xlu0 %v328, 118
        %v510 = vpop.permute.xlu0 %509
        %511 = vrot.lane.b32.xlu0 %v329, 118
        %v512 = vpop.permute.xlu0 %511
        %vm513 = vcmask 965632
        %v514 = vsel %vm513, %v490, %v492
        %v515 = vsel %vm513, %v492, %v494
        %v516 = vsel %vm513, %v496, %v498
        %v517 = vsel %vm513, %v498, %v500
        %v518 = vsel %vm513, %v502, %v504
        %v519 = vsel %vm513, %v504, %v506
        %v520 = vsel %vm513, %v508, %v510
        %v521 = vsel %vm513, %v510, %v512
        %530 = vrot.lane.b32.xlu0 %v318, 117
        %v531 = vpop.permute.xlu0 %530
        %532 = vrot.lane.b32.xlu0 %v319, 117
        %v533 = vpop.permute.xlu0 %532
        %534 = vrot.lane.b32.xlu0 %v320, 117
        %v535 = vpop.permute.xlu0 %534
        %536 = vrot.lane.b32.xlu0 %v321, 117
        %v537 = vpop.permute.xlu0 %536
        %538 = vrot.lane.b32.xlu0 %v322, 117
        %v539 = vpop.permute.xlu0 %538
        %540 = vrot.lane.b32.xlu0 %v323, 117
        %v541 = vpop.permute.xlu0 %540
        %542 = vrot.lane.b32.xlu0 %v324, 117
        %v543 = vpop.permute.xlu0 %542
        %544 = vrot.lane.b32.xlu0 %v325, 117
        %v545 = vpop.permute.xlu0 %544
        %546 = vrot.lane.b32.xlu0 %v326, 117
        %v547 = vpop.permute.xlu0 %546
        %548 = vrot.lane.b32.xlu0 %v327, 117
        %v549 = vpop.permute.xlu0 %548
        %550 = vrot.lane.b32.xlu0 %v328, 117
        %v551 = vpop.permute.xlu0 %550
        %552 = vrot.lane.b32.xlu0 %v329, 117
        %v553 = vpop.permute.xlu0 %552
        %vm554 = vcmask 957440
        %v555 = vsel %vm554, %v531, %v533
        %v556 = vsel %vm554, %v533, %v535
        %v557 = vsel %vm554, %v537, %v539
        %v558 = vsel %vm554, %v539, %v541
        %v559 = vsel %vm554, %v543, %v545
        %v560 = vsel %vm554, %v545, %v547
        %v561 = vsel %vm554, %v549, %v551
        %v562 = vsel %vm554, %v551, %v553
        %571 = vrot.lane.b32.xlu0 %v318, 110
        %v572 = vpop.permute.xlu0 %571
        %573 = vrot.lane.b32.xlu0 %v319, 110
        %v574 = vpop.permute.xlu0 %573
        %575 = vrot.lane.b32.xlu0 %v320, 110
        %v576 = vpop.permute.xlu0 %575
        %577 = vrot.lane.b32.xlu0 %v321, 110
        %v578 = vpop.permute.xlu0 %577
        %579 = vrot.lane.b32.xlu0 %v322, 110
        %v580 = vpop.permute.xlu0 %579
        %581 = vrot.lane.b32.xlu0 %v323, 110
        %v582 = vpop.permute.xlu0 %581
        %583 = vrot.lane.b32.xlu0 %v324, 110
        %v584 = vpop.permute.xlu0 %583
        %585 = vrot.lane.b32.xlu0 %v325, 110
        %v586 = vpop.permute.xlu0 %585
        %587 = vrot.lane.b32.xlu0 %v326, 110
        %v588 = vpop.permute.xlu0 %587
        %589 = vrot.lane.b32.xlu0 %v327, 110
        %v590 = vpop.permute.xlu0 %589
        %591 = vrot.lane.b32.xlu0 %v328, 110
        %v592 = vpop.permute.xlu0 %591
        %593 = vrot.lane.b32.xlu0 %v329, 110
        %v594 = vpop.permute.xlu0 %593
        %vm595 = vcmask 900096
        %v596 = vsel %vm595, %v572, %v574
        %v597 = vsel %vm595, %v574, %v576
        %v598 = vsel %vm595, %v578, %v580
        %v599 = vsel %vm595, %v580, %v582
        %v600 = vsel %vm595, %v584, %v586
        %v601 = vsel %vm595, %v586, %v588
        %v602 = vsel %vm595, %v590, %v592
        %v603 = vsel %vm595, %v592, %v594
        %612 = vrot.lane.b32.xlu0 %v318, 109
        %v613 = vpop.permute.xlu0 %612
        %614 = vrot.lane.b32.xlu0 %v319, 109
        %v615 = vpop.permute.xlu0 %614
        %616 = vrot.lane.b32.xlu0 %v320, 109
        %v617 = vpop.permute.xlu0 %616
        %618 = vrot.lane.b32.xlu0 %v321, 109
        %v619 = vpop.permute.xlu0 %618
        %620 = vrot.lane.b32.xlu0 %v322, 109
        %v621 = vpop.permute.xlu0 %620
        %622 = vrot.lane.b32.xlu0 %v323, 109
        %v623 = vpop.permute.xlu0 %622
        %624 = vrot.lane.b32.xlu0 %v324, 109
        %v625 = vpop.permute.xlu0 %624
        %626 = vrot.lane.b32.xlu0 %v325, 109
        %v627 = vpop.permute.xlu0 %626
        %628 = vrot.lane.b32.xlu0 %v326, 109
        %v629 = vpop.permute.xlu0 %628
        %630 = vrot.lane.b32.xlu0 %v327, 109
        %v631 = vpop.permute.xlu0 %630
        %632 = vrot.lane.b32.xlu0 %v328, 109
        %v633 = vpop.permute.xlu0 %632
        %634 = vrot.lane.b32.xlu0 %v329, 109
        %v635 = vpop.permute.xlu0 %634
        %vm636 = vcmask 891904
        %v637 = vsel %vm636, %v613, %v615
        %v638 = vsel %vm636, %v615, %v617
        %v639 = vsel %vm636, %v619, %v621
        %v640 = vsel %vm636, %v621, %v623
        %v641 = vsel %vm636, %v625, %v627
        %v642 = vsel %vm636, %v627, %v629
        %v643 = vsel %vm636, %v631, %v633
        %v644 = vsel %vm636, %v633, %v635
        %653 = vrot.lane.b32.xlu0 %v318, 108
        %v654 = vpop.permute.xlu0 %653
        %655 = vrot.lane.b32.xlu0 %v319, 108
        %v656 = vpop.permute.xlu0 %655
        %657 = vrot.lane.b32.xlu0 %v320, 108
        %v658 = vpop.permute.xlu0 %657
        %659 = vrot.lane.b32.xlu0 %v321, 108
        %v660 = vpop.permute.xlu0 %659
        %661 = vrot.lane.b32.xlu0 %v322, 108
        %v662 = vpop.permute.xlu0 %661
        %663 = vrot.lane.b32.xlu0 %v323, 108
        %v664 = vpop.permute.xlu0 %663
        %665 = vrot.lane.b32.xlu0 %v324, 108
        %v666 = vpop.permute.xlu0 %665
        %667 = vrot.lane.b32.xlu0 %v325, 108
        %v668 = vpop.permute.xlu0 %667
        %669 = vrot.lane.b32.xlu0 %v326, 108
        %v670 = vpop.permute.xlu0 %669
        %671 = vrot.lane.b32.xlu0 %v327, 108
        %v672 = vpop.permute.xlu0 %671
        %673 = vrot.lane.b32.xlu0 %v328, 108
        %v674 = vpop.permute.xlu0 %673
        %675 = vrot.lane.b32.xlu0 %v329, 108
        %v676 = vpop.permute.xlu0 %675
        %vm677 = vcmask 883712
        %v678 = vsel %vm677, %v654, %v656
        %v679 = vsel %vm677, %v656, %v658
        %v680 = vsel %vm677, %v660, %v662
        %v681 = vsel %vm677, %v662, %v664
        %v682 = vsel %vm677, %v666, %v668
        %v683 = vsel %vm677, %v668, %v670
        %v684 = vsel %vm677, %v672, %v674
        %v685 = vsel %vm677, %v674, %v676
        %v694 = vpack.c.bf16 %v321, %v318
        %v695 = vpack.c.bf16 %v322, %v319
        %v696 = vpack.c.bf16 %v327, %v324
        %v697 = vpack.c.bf16 %v328, %v325
        %v698 = vpack.c.bf16 %v393, %v391
        %v699 = vpack.c.bf16 %v394, %v392
        %v700 = vpack.c.bf16 %v397, %v395
        %v701 = vpack.c.bf16 %v398, %v396
        %v702 = vpack.c.bf16 %v434, %v432
        %v703 = vpack.c.bf16 %v435, %v433
        %v704 = vpack.c.bf16 %v438, %v436
        %v705 = vpack.c.bf16 %v439, %v437
        %v706 = vpack.c.bf16 %v475, %v473
        %v707 = vpack.c.bf16 %v476, %v474
        %v708 = vpack.c.bf16 %v479, %v477
        %v709 = vpack.c.bf16 %v480, %v478
        %v710 = vpack.c.bf16 %v516, %v514
        %v711 = vpack.c.bf16 %v517, %v515
        %v712 = vpack.c.bf16 %v520, %v518
        %v713 = vpack.c.bf16 %v521, %v519
        %v714 = vpack.c.bf16 %v557, %v555
        %v715 = vpack.c.bf16 %v558, %v556
        %v716 = vpack.c.bf16 %v561, %v559
        %v717 = vpack.c.bf16 %v562, %v560
        %v718 = vpack.c.bf16 %v598, %v596
        %v719 = vpack.c.bf16 %v599, %v597
        %v720 = vpack.c.bf16 %v602, %v600
        %v721 = vpack.c.bf16 %v603, %v601
        %v722 = vpack.c.bf16 %v639, %v637
        %v723 = vpack.c.bf16 %v640, %v638
        %v724 = vpack.c.bf16 %v643, %v641
        %v725 = vpack.c.bf16 %v644, %v642
        %v726 = vpack.c.bf16 %v680, %v678
        %v727 = vpack.c.bf16 %v681, %v679
        %v728 = vpack.c.bf16 %v684, %v682
        %v729 = vpack.c.bf16 %v685, %v683
        %731 = vset.pattern.permute.xlu0 0
        %732 = vperm.xlu0 %731, %v346
        %v733 = vpop.permute.xlu0 %732
        %736 = vset.pattern.permute.xlu0 0
        %737 = vperm.xlu0 %736, %v347
        %v738 = vpop.permute.xlu0 %737
        %741 = vset.pattern.permute.xlu0 0
        %742 = vperm.xlu0 %741, %v348
        %v743 = vpop.permute.xlu0 %742
        %746 = vset.pattern.permute.xlu0 0
        %747 = vperm.xlu0 %746, %v349
        %v748 = vpop.permute.xlu0 %747
        %751 = vset.pattern.permute.xlu0 0
        %752 = vperm.xlu0 %751, %v350
        %v753 = vpop.permute.xlu0 %752
        %756 = vset.pattern.permute.xlu0 0
        %757 = vperm.xlu0 %756, %v351
        %v758 = vpop.permute.xlu0 %757
        %761 = vset.pattern.permute.xlu0 0
        %762 = vperm.xlu0 %761, %v352
        %v763 = vpop.permute.xlu0 %762
        %766 = vset.pattern.permute.xlu0 0
        %767 = vperm.xlu0 %766, %v353
        %v768 = vpop.permute.xlu0 %767
        %v786 = vunpack.c.l.b16 %v330
        %v787 = vunpack.c.h.b16 %v330
        %v788 = vunpack.c.l.b16 %v331
        %v789 = vunpack.c.l.b16 %v332
        %v790 = vunpack.c.h.b16 %v332
        %v791 = vunpack.c.l.b16 %v333
        %v792 = vunpack.c.l.b16 %v334
        %v793 = vunpack.c.h.b16 %v334
        %v794 = vunpack.c.l.b16 %v335
        %v795 = vunpack.c.l.b16 %v336
        %v796 = vunpack.c.h.b16 %v336
        %v797 = vunpack.c.l.b16 %v337
        %v798 = vunpack.c.l.b16 %v338
        %v799 = vunpack.c.h.b16 %v338
        %v800 = vunpack.c.l.b16 %v339
        %v801 = vunpack.c.l.b16 %v340
        %v802 = vunpack.c.h.b16 %v340
        %v803 = vunpack.c.l.b16 %v341
        %v804 = vunpack.c.l.b16 %v342
        %v805 = vunpack.c.h.b16 %v342
        %v806 = vunpack.c.l.b16 %v343
        %v807 = vunpack.c.l.b16 %v344
        %v808 = vunpack.c.h.b16 %v344
        %v809 = vunpack.c.l.b16 %v345
        %v810 = vpack.c.b16 %v789, %v786
        %v811 = vpack.c.b16 %v790, %v787
        %v812 = vpack.c.b16 %v791, %v788
        %v813 = vpack.c.b16 %v795, %v792
        %v814 = vpack.c.b16 %v796, %v793
        %v815 = vpack.c.b16 %v797, %v794
        %v816 = vpack.c.b16 %v801, %v798
        %v817 = vpack.c.b16 %v802, %v799
        %v818 = vpack.c.b16 %v803, %v800
        %v819 = vpack.c.b16 %v807, %v804
        %v820 = vpack.c.b16 %v808, %v805
        %v821 = vpack.c.b16 %v809, %v806
        %vm830 = vcmask 261120
        %v832 = vsel %vm830, %v812, 0
        %v835 = vsel %vm830, %v815, 0
        %v838 = vsel %vm830, %v818, 0
        %v841 = vsel %vm830, %v821, 0
        %843 = vmatprep.subr.bf16.mxu0 %v695
        %844 = vmatpush1.bf16.msra.mxu0 %v694
        %845 = vmatprep.subr.bf16.mxu0 %v697
        %846 = vmatpush1.bf16.msra.mxu0 %v696
        %847 = vmatprep.subr.bf16.mxu0 %v699
        %848 = vmatpush1.bf16.msra.mxu0 %v698
        %849 = vmatprep.subr.bf16.mxu0 %v701
        %850 = vmatpush1.bf16.msra.mxu0 %v700
        %851 = vmatprep.subr.bf16.mxu0 %v703
        %852 = vmatpush1.bf16.msra.mxu0 %v702
        %853 = vmatprep.subr.bf16.mxu0 %v705
        %854 = vmatpush1.bf16.msra.mxu0 %v704
        %855 = vmatprep.subr.bf16.mxu0 %v707
        %856 = vmatpush1.bf16.msra.mxu0 %v706
        %857 = vmatprep.subr.bf16.mxu0 %v709
        %858 = vmatpush1.bf16.msra.mxu0 %v708
        %859 = vmatprep.subr.bf16.mxu0 %v711
        %860 = vmatpush1.bf16.msra.mxu0 %v710
        %861 = vmatprep.subr.bf16.mxu0 %v713
        %862 = vmatpush1.bf16.msra.mxu0 %v712
        %863 = vmatprep.subr.bf16.mxu0 %v715
        %864 = vmatpush1.bf16.msra.mxu0 %v714
        %865 = vmatprep.subr.bf16.mxu0 %v717
        %866 = vmatpush1.bf16.msra.mxu0 %v716
        %867 = vmatprep.subr.bf16.mxu0 %v719
        %868 = vmatpush1.bf16.msra.mxu0 %v718
        %869 = vmatprep.subr.bf16.mxu0 %v721
        %870 = vmatpush1.bf16.msra.mxu0 %v720
        %871 = vmatprep.subr.bf16.mxu0 %v723
        %872 = vmatpush1.bf16.msra.mxu0 %v722
        %873 = vmatprep.subr.bf16.mxu0 %v725
        %874 = vmatpush1.bf16.msra.mxu0 %v724
        %875 = vmatprep.mubr.bf16.mxu0 %v811
        %876 = vmatmul.mubr.bf16.gmra.mrb[0].mxu0 %v810
        %v877 = vpop.f32.mrb[0].mxu0
        %v878 = vadd.f32 %v733, %v877
        %v879 = vpop.f32.mrb[0].mxu0
        %v880 = vadd.f32 %v733, %v879
        %v881 = vpop.f32.mrb[0].mxu0
        %v882 = vadd.f32 %v738, %v881
        %v883 = vpop.f32.mrb[0].mxu0
        %v884 = vadd.f32 %v738, %v883
        %885 = vmatprep.mubr.bf16.mxu0 %v814
        %886 = vmatmul.mubr.bf16.gmra.mrb[0].mxu0 %v813
        %v887 = vpop.f32.mrb[0].mxu0
        %v888 = vadd.f32 %v743, %v887
        %v889 = vpop.f32.mrb[0].mxu0
        %v890 = vadd.f32 %v743, %v889
        %v891 = vpop.f32.mrb[0].mxu0
        %v892 = vadd.f32 %v748, %v891
        %v893 = vpop.f32.mrb[0].mxu0
        %v894 = vadd.f32 %v748, %v893
        %895 = vmatprep.mubr.bf16.mxu0 %v817
        %896 = vmatmul.mubr.bf16.gmra.mrb[0].mxu0 %v816
        %v897 = vpop.f32.mrb[0].mxu0
        %v898 = vadd.f32 %v753, %v897
        %v899 = vpop.f32.mrb[0].mxu0
        %v900 = vadd.f32 %v753, %v899
        %v901 = vpop.f32.mrb[0].mxu0
        %v902 = vadd.f32 %v758, %v901
        %v903 = vpop.f32.mrb[0].mxu0
        %v904 = vadd.f32 %v758, %v903
        %905 = vmatprep.mubr.bf16.mxu0 %v820
        %906 = vmatmul.mubr.bf16.gmra.mrb[0].mxu0 %v819
        %v907 = vpop.f32.mrb[0].mxu0
        %v908 = vadd.f32 %v763, %v907
        %v909 = vpop.f32.mrb[0].mxu0
        %v910 = vadd.f32 %v763, %v909
        %v911 = vpop.f32.mrb[0].mxu0
        %v912 = vadd.f32 %v768, %v911
        %v913 = vpop.f32.mrb[0].mxu0
        %v914 = vadd.f32 %v768, %v913
        %915 = vdwg.mxu0
        %916 = vmatprep.subr.bf16.mxu0 %v727
        %917 = vmatpush1.bf16.msra.mxu0 %v726
        %918 = vmatprep.subr.bf16.mxu0 %v729
        %919 = vmatpush1.bf16.msra.mxu0 %v728
        %920 = vmatprep.subr.bf16.mxu0 0
        %921 = vmatpush1.bf16.msra.mxu0 0
        %922 = vmatprep.subr.bf16.mxu0 0
        %923 = vmatpush1.bf16.msra.mxu0 0
        %924 = vmatprep.subr.bf16.mxu0 0
        %925 = vmatpush1.bf16.msra.mxu0 0
        %926 = vmatprep.subr.bf16.mxu0 0
        %927 = vmatpush1.bf16.msra.mxu0 0
        %928 = vmatprep.subr.bf16.mxu0 0
        %929 = vmatpush1.bf16.msra.mxu0 0
        %930 = vmatprep.subr.bf16.mxu0 0
        %931 = vmatpush1.bf16.msra.mxu0 0
        %932 = vmatprep.subr.bf16.mxu0 0
        %933 = vmatpush1.bf16.msra.mxu0 0
        %934 = vmatprep.subr.bf16.mxu0 0
        %935 = vmatpush1.bf16.msra.mxu0 0
        %936 = vmatprep.subr.bf16.mxu0 0
        %937 = vmatpush1.bf16.msra.mxu0 0
        %938 = vmatprep.subr.bf16.mxu0 0
        %939 = vmatpush1.bf16.msra.mxu0 0
        %940 = vmatprep.subr.bf16.mxu0 0
        %941 = vmatpush1.bf16.msra.mxu0 0
        %942 = vmatprep.subr.bf16.mxu0 0
        %943 = vmatpush1.bf16.msra.mxu0 0
        %944 = vmatprep.subr.bf16.mxu0 0
        %945 = vmatpush1.bf16.msra.mxu0 0
        %946 = vmatprep.subr.bf16.mxu0 0
        %947 = vmatpush1.bf16.msra.mxu0 0
        %948 = vmatprep.mubr.bf16.mxu0 0
        %949 = vmatmul.mubr.bf16.gmra.mrb[0].mxu0 %v832
        %v950 = vpop.f32.mrb[0].mxu0
        %v951 = vadd.f32 %v878, %v950
        %v952 = vpop.f32.mrb[0].mxu0
        %v953 = vadd.f32 %v880, %v952
        %v954 = vpop.f32.mrb[0].mxu0
        %v955 = vadd.f32 %v882, %v954
        %v956 = vpop.f32.mrb[0].mxu0
        %v957 = vadd.f32 %v884, %v956
        %958 = vmatprep.mubr.bf16.mxu0 0
        %959 = vmatmul.mubr.bf16.gmra.mrb[0].mxu0 %v835
        %v960 = vpop.f32.mrb[0].mxu0
        %v961 = vadd.f32 %v888, %v960
        %v962 = vpop.f32.mrb[0].mxu0
        %v963 = vadd.f32 %v890, %v962
        %v964 = vpop.f32.mrb[0].mxu0
        %v965 = vadd.f32 %v892, %v964
        %v966 = vpop.f32.mrb[0].mxu0
        %v967 = vadd.f32 %v894, %v966
        %968 = vmatprep.mubr.bf16.mxu0 0
        %969 = vmatmul.mubr.bf16.gmra.mrb[0].mxu0 %v838
        %v970 = vpop.f32.mrb[0].mxu0
        %v971 = vadd.f32 %v898, %v970
        %v972 = vpop.f32.mrb[0].mxu0
        %v973 = vadd.f32 %v900, %v972
        %v974 = vpop.f32.mrb[0].mxu0
        %v975 = vadd.f32 %v902, %v974
        %v976 = vpop.f32.mrb[0].mxu0
        %v977 = vadd.f32 %v904, %v976
        %978 = vmatprep.mubr.bf16.mxu0 0
        %979 = vmatmul.mubr.bf16.gmra.mrb[0].mxu0 %v841
        %v980 = vpop.f32.mrb[0].mxu0
        %v981 = vadd.f32 %v908, %v980
        %v982 = vpop.f32.mrb[0].mxu0
        %v983 = vadd.f32 %v910, %v982
        %v984 = vpop.f32.mrb[0].mxu0
        %v985 = vadd.f32 %v912, %v984
        %v986 = vpop.f32.mrb[0].mxu0
        %v987 = vadd.f32 %v914, %v986
        %988 = vdwg.mxu0
        %v989 = vmax.f32 %v951, 0.0
        %v990 = vmax.f32 %v953, 0.0
        %v991 = vmax.f32 %v955, 0.0
        %v992 = vmax.f32 %v957, 0.0
        %v993 = vmax.f32 %v961, 0.0
        %v994 = vmax.f32 %v963, 0.0
        %v995 = vmax.f32 %v965, 0.0
        %v996 = vmax.f32 %v967, 0.0
        %v997 = vmax.f32 %v971, 0.0
        %v998 = vmax.f32 %v973, 0.0
        %v999 = vmax.f32 %v975, 0.0
        %v1000 = vmax.f32 %v977, 0.0
        %v1001 = vmax.f32 %v981, 0.0
        %v1002 = vmax.f32 %v983, 0.0
        %v1003 = vmax.f32 %v985, 0.0
        %v1004 = vmax.f32 %v987, 0.0
        %v1005 = vld [vmem:[%s3] sm:$0xff]
        %v1006 = vld [vmem:[%s3 + $0x8] sm:$0xff]
        %v1007 = vld [vmem:[%s3 + $0x10] sm:$0xf]
        %v1008 = vld [vmem:[%s3 + $0x14] sm:$0xff]
        %v1009 = vld [vmem:[%s3 + $0x1c] sm:$0xff]
        %v1010 = vld [vmem:[%s3 + $0x24] sm:$0xf]
        %v1011 = vld [vmem:[%s3 + $0x28] sm:$0xff]
        %v1012 = vld [vmem:[%s3 + $0x30] sm:$0xff]
        %v1013 = vld [vmem:[%s3 + $0x38] sm:$0xf]
        %v1014 = vld [vmem:[%s3 + $0x3c] sm:$0xff]
        %v1015 = vld [vmem:[%s3 + $0x44] sm:$0xff]
        %v1016 = vld [vmem:[%s3 + $0x4c] sm:$0xf]
        %v1017 = vld [vmem:[%s3 + $0x50] sm:$0xff]
        %v1018 = vld [vmem:[%s3 + $0x58] sm:$0xff]
        %v1019 = vld [vmem:[%s3 + $0x60] sm:$0xf]
        %v1020 = vld [vmem:[%s3 + $0x64] sm:$0xff]
        %v1021 = vld [vmem:[%s3 + $0x6c] sm:$0xff]
        %v1022 = vld [vmem:[%s3 + $0x74] sm:$0xf]
        %v1023 = vld [vmem:[%s3 + $0x78] sm:$0xff]
        %v1024 = vld [vmem:[%s3 + $0x80] sm:$0xff]
        %v1025 = vld [vmem:[%s3 + $0x88] sm:$0xf]
        %v1026 = vld [vmem:[%s3 + $0x8c] sm:$0xff]
        %v1027 = vld [vmem:[%s3 + $0x94] sm:$0xff]
        %v1028 = vld [vmem:[%s3 + $0x9c] sm:$0xf]
        %v1029 = vld [vmem:[%s4] sm:$0xff]
        %v1030 = vld [vmem:[%s4 + $0x8] sm:$0xff]
        %v1031 = vld [vmem:[%s4 + $0x10] sm:$0xff]
        %v1032 = vld [vmem:[%s4 + $0x18] sm:$0xff]
        %v1033 = vld [vmem:[%s4 + $0x20] sm:$0xff]
        %v1034 = vld [vmem:[%s4 + $0x28] sm:$0xff]
        %v1035 = vld [vmem:[%s4 + $0x30] sm:$0xff]
        %v1036 = vld [vmem:[%s4 + $0x38] sm:$0xff]
        %1053 = vrot.lane.b32.xlu0 %v989, 127
        %v1054 = vpop.permute.xlu0 %1053
        %1055 = vrot.lane.b32.xlu0 %v990, 127
        %v1056 = vpop.permute.xlu0 %1055
        %1057 = vrot.lane.b32.xlu0 %v991, 127
        %v1058 = vpop.permute.xlu0 %1057
        %1059 = vrot.lane.b32.xlu0 %v992, 127
        %v1060 = vpop.permute.xlu0 %1059
        %1061 = vrot.lane.b32.xlu0 %v993, 127
        %v1062 = vpop.permute.xlu0 %1061
        %1063 = vrot.lane.b32.xlu0 %v994, 127
        %v1064 = vpop.permute.xlu0 %1063
        %1065 = vrot.lane.b32.xlu0 %v995, 127
        %v1066 = vpop.permute.xlu0 %1065
        %1067 = vrot.lane.b32.xlu0 %v996, 127
        %v1068 = vpop.permute.xlu0 %1067
        %1069 = vrot.lane.b32.xlu0 %v997, 127
        %v1070 = vpop.permute.xlu0 %1069
        %1071 = vrot.lane.b32.xlu0 %v998, 127
        %v1072 = vpop.permute.xlu0 %1071
        %1073 = vrot.lane.b32.xlu0 %v999, 127
        %v1074 = vpop.permute.xlu0 %1073
        %1075 = vrot.lane.b32.xlu0 %v1000, 127
        %v1076 = vpop.permute.xlu0 %1075
        %1077 = vrot.lane.b32.xlu0 %v1001, 127
        %v1078 = vpop.permute.xlu0 %1077
        %1079 = vrot.lane.b32.xlu0 %v1002, 127
        %v1080 = vpop.permute.xlu0 %1079
        %1081 = vrot.lane.b32.xlu0 %v1003, 127
        %v1082 = vpop.permute.xlu0 %1081
        %1083 = vrot.lane.b32.xlu0 %v1004, 127
        %v1084 = vpop.permute.xlu0 %1083
        %v1085 = vsel %vm390, %v1054, %v1056
        %v1086 = vsel %vm390, %v1058, %v1060
        %v1087 = vsel %vm390, %v1062, %v1064
        %v1088 = vsel %vm390, %v1066, %v1068
        %v1089 = vsel %vm390, %v1070, %v1072
        %v1090 = vsel %vm390, %v1074, %v1076
        %v1091 = vsel %vm390, %v1078, %v1080
        %v1092 = vsel %vm390, %v1082, %v1084
        %1101 = vrot.lane.b32.xlu0 %v989, 126
        %v1102 = vpop.permute.xlu0 %1101
        %1103 = vrot.lane.b32.xlu0 %v990, 126
        %v1104 = vpop.permute.xlu0 %1103
        %1105 = vrot.lane.b32.xlu0 %v991, 126
        %v1106 = vpop.permute.xlu0 %1105
        %1107 = vrot.lane.b32.xlu0 %v992, 126
        %v1108 = vpop.permute.xlu0 %1107
        %1109 = vrot.lane.b32.xlu0 %v993, 126
        %v1110 = vpop.permute.xlu0 %1109
        %1111 = vrot.lane.b32.xlu0 %v994, 126
        %v1112 = vpop.permute.xlu0 %1111
        %1113 = vrot.lane.b32.xlu0 %v995, 126
        %v1114 = vpop.permute.xlu0 %1113
        %1115 = vrot.lane.b32.xlu0 %v996, 126
        %v1116 = vpop.permute.xlu0 %1115
        %1117 = vrot.lane.b32.xlu0 %v997, 126
        %v1118 = vpop.permute.xlu0 %1117
        %1119 = vrot.lane.b32.xlu0 %v998, 126
        %v1120 = vpop.permute.xlu0 %1119
        %1121 = vrot.lane.b32.xlu0 %v999, 126
        %v1122 = vpop.permute.xlu0 %1121
        %1123 = vrot.lane.b32.xlu0 %v1000, 126
        %v1124 = vpop.permute.xlu0 %1123
        %1125 = vrot.lane.b32.xlu0 %v1001, 126
        %v1126 = vpop.permute.xlu0 %1125
        %1127 = vrot.lane.b32.xlu0 %v1002, 126
        %v1128 = vpop.permute.xlu0 %1127
        %1129 = vrot.lane.b32.xlu0 %v1003, 126
        %v1130 = vpop.permute.xlu0 %1129
        %1131 = vrot.lane.b32.xlu0 %v1004, 126
        %v1132 = vpop.permute.xlu0 %1131
        %v1133 = vsel %vm431, %v1102, %v1104
        %v1134 = vsel %vm431, %v1106, %v1108
        %v1135 = vsel %vm431, %v1110, %v1112
        %v1136 = vsel %vm431, %v1114, %v1116
        %v1137 = vsel %vm431, %v1118, %v1120
        %v1138 = vsel %vm431, %v1122, %v1124
        %v1139 = vsel %vm431, %v1126, %v1128
        %v1140 = vsel %vm431, %v1130, %v1132
        %1149 = vrot.lane.b32.xlu0 %v989, 119
        %v1150 = vpop.permute.xlu0 %1149
        %1151 = vrot.lane.b32.xlu0 %v990, 119
        %v1152 = vpop.permute.xlu0 %1151
        %1153 = vrot.lane.b32.xlu0 %v991, 119
        %v1154 = vpop.permute.xlu0 %1153
        %1155 = vrot.lane.b32.xlu0 %v992, 119
        %v1156 = vpop.permute.xlu0 %1155
        %1157 = vrot.lane.b32.xlu0 %v993, 119
        %v1158 = vpop.permute.xlu0 %1157
        %1159 = vrot.lane.b32.xlu0 %v994, 119
        %v1160 = vpop.permute.xlu0 %1159
        %1161 = vrot.lane.b32.xlu0 %v995, 119
        %v1162 = vpop.permute.xlu0 %1161
        %1163 = vrot.lane.b32.xlu0 %v996, 119
        %v1164 = vpop.permute.xlu0 %1163
        %1165 = vrot.lane.b32.xlu0 %v997, 119
        %v1166 = vpop.permute.xlu0 %1165
        %1167 = vrot.lane.b32.xlu0 %v998, 119
        %v1168 = vpop.permute.xlu0 %1167
        %1169 = vrot.lane.b32.xlu0 %v999, 119
        %v1170 = vpop.permute.xlu0 %1169
        %1171 = vrot.lane.b32.xlu0 %v1000, 119
        %v1172 = vpop.permute.xlu0 %1171
        %1173 = vrot.lane.b32.xlu0 %v1001, 119
        %v1174 = vpop.permute.xlu0 %1173
        %1175 = vrot.lane.b32.xlu0 %v1002, 119
        %v1176 = vpop.permute.xlu0 %1175
        %1177 = vrot.lane.b32.xlu0 %v1003, 119
        %v1178 = vpop.permute.xlu0 %1177
        %1179 = vrot.lane.b32.xlu0 %v1004, 119
        %v1180 = vpop.permute.xlu0 %1179
        %v1181 = vsel %vm472, %v1150, %v1152
        %v1182 = vsel %vm472, %v1154, %v1156
        %v1183 = vsel %vm472, %v1158, %v1160
        %v1184 = vsel %vm472, %v1162, %v1164
        %v1185 = vsel %vm472, %v1166, %v1168
        %v1186 = vsel %vm472, %v1170, %v1172
        %v1187 = vsel %vm472, %v1174, %v1176
        %v1188 = vsel %vm472, %v1178, %v1180
        %1197 = vrot.lane.b32.xlu0 %v989, 118
        %v1198 = vpop.permute.xlu0 %1197
        %1199 = vrot.lane.b32.xlu0 %v990, 118
        %v1200 = vpop.permute.xlu0 %1199
        %1201 = vrot.lane.b32.xlu0 %v991, 118
        %v1202 = vpop.permute.xlu0 %1201
        %1203 = vrot.lane.b32.xlu0 %v992, 118
        %v1204 = vpop.permute.xlu0 %1203
        %1205 = vrot.lane.b32.xlu0 %v993, 118
        %v1206 = vpop.permute.xlu0 %1205
        %1207 = vrot.lane.b32.xlu0 %v994, 118
        %v1208 = vpop.permute.xlu0 %1207
        %1209 = vrot.lane.b32.xlu0 %v995, 118
        %v1210 = vpop.permute.xlu0 %1209
        %1211 = vrot.lane.b32.xlu0 %v996, 118
        %v1212 = vpop.permute.xlu0 %1211
        %1213 = vrot.lane.b32.xlu0 %v997, 118
        %v1214 = vpop.permute.xlu0 %1213
        %1215 = vrot.lane.b32.xlu0 %v998, 118
        %v1216 = vpop.permute.xlu0 %1215
        %1217 = vrot.lane.b32.xlu0 %v999, 118
        %v1218 = vpop.permute.xlu0 %1217
        %1219 = vrot.lane.b32.xlu0 %v1000, 118
        %v1220 = vpop.permute.xlu0 %1219
        %1221 = vrot.lane.b32.xlu0 %v1001, 118
        %v1222 = vpop.permute.xlu0 %1221
        %1223 = vrot.lane.b32.xlu0 %v1002, 118
        %v1224 = vpop.permute.xlu0 %1223
        %1225 = vrot.lane.b32.xlu0 %v1003, 118
        %v1226 = vpop.permute.xlu0 %1225
        %1227 = vrot.lane.b32.xlu0 %v1004, 118
        %v1228 = vpop.permute.xlu0 %1227
        %v1229 = vsel %vm513, %v1198, %v1200
        %v1230 = vsel %vm513, %v1202, %v1204
        %v1231 = vsel %vm513, %v1206, %v1208
        %v1232 = vsel %vm513, %v1210, %v1212
        %v1233 = vsel %vm513, %v1214, %v1216
        %v1234 = vsel %vm513, %v1218, %v1220
        %v1235 = vsel %vm513, %v1222, %v1224
        %v1236 = vsel %vm513, %v1226, %v1228
        %1245 = vrot.lane.b32.xlu0 %v989, 117
        %v1246 = vpop.permute.xlu0 %1245
        %1247 = vrot.lane.b32.xlu0 %v990, 117
        %v1248 = vpop.permute.xlu0 %1247
        %1249 = vrot.lane.b32.xlu0 %v991, 117
        %v1250 = vpop.permute.xlu0 %1249
        %1251 = vrot.lane.b32.xlu0 %v992, 117
        %v1252 = vpop.permute.xlu0 %1251
        %1253 = vrot.lane.b32.xlu0 %v993, 117
        %v1254 = vpop.permute.xlu0 %1253
        %1255 = vrot.lane.b32.xlu0 %v994, 117
        %v1256 = vpop.permute.xlu0 %1255
        %1257 = vrot.lane.b32.xlu0 %v995, 117
        %v1258 = vpop.permute.xlu0 %1257
        %1259 = vrot.lane.b32.xlu0 %v996, 117
        %v1260 = vpop.permute.xlu0 %1259
        %1261 = vrot.lane.b32.xlu0 %v997, 117
        %v1262 = vpop.permute.xlu0 %1261
        %1263 = vrot.lane.b32.xlu0 %v998, 117
        %v1264 = vpop.permute.xlu0 %1263
        %1265 = vrot.lane.b32.xlu0 %v999, 117
        %v1266 = vpop.permute.xlu0 %1265
        %1267 = vrot.lane.b32.xlu0 %v1000, 117
        %v1268 = vpop.permute.xlu0 %1267
        %1269 = vrot.lane.b32.xlu0 %v1001, 117
        %v1270 = vpop.permute.xlu0 %1269
        %1271 = vrot.lane.b32.xlu0 %v1002, 117
        %v1272 = vpop.permute.xlu0 %1271
        %1273 = vrot.lane.b32.xlu0 %v1003, 117
        %v1274 = vpop.permute.xlu0 %1273
        %1275 = vrot.lane.b32.xlu0 %v1004, 117
        %v1276 = vpop.permute.xlu0 %1275
        %v1277 = vsel %vm554, %v1246, %v1248
        %v1278 = vsel %vm554, %v1250, %v1252
        %v1279 = vsel %vm554, %v1254, %v1256
        %v1280 = vsel %vm554, %v1258, %v1260
        %v1281 = vsel %vm554, %v1262, %v1264
        %v1282 = vsel %vm554, %v1266, %v1268
        %v1283 = vsel %vm554, %v1270, %v1272
        %v1284 = vsel %vm554, %v1274, %v1276
        %1293 = vrot.lane.b32.xlu0 %v989, 110
        %v1294 = vpop.permute.xlu0 %1293
        %1295 = vrot.lane.b32.xlu0 %v990, 110
        %v1296 = vpop.permute.xlu0 %1295
        %1297 = vrot.lane.b32.xlu0 %v991, 110
        %v1298 = vpop.permute.xlu0 %1297
        %1299 = vrot.lane.b32.xlu0 %v992, 110
        %v1300 = vpop.permute.xlu0 %1299
        %1301 = vrot.lane.b32.xlu0 %v993, 110
        %v1302 = vpop.permute.xlu0 %1301
        %1303 = vrot.lane.b32.xlu0 %v994, 110
        %v1304 = vpop.permute.xlu0 %1303
        %1305 = vrot.lane.b32.xlu0 %v995, 110
        %v1306 = vpop.permute.xlu0 %1305
        %1307 = vrot.lane.b32.xlu0 %v996, 110
        %v1308 = vpop.permute.xlu0 %1307
        %1309 = vrot.lane.b32.xlu0 %v997, 110
        %v1310 = vpop.permute.xlu0 %1309
        %1311 = vrot.lane.b32.xlu0 %v998, 110
        %v1312 = vpop.permute.xlu0 %1311
        %1313 = vrot.lane.b32.xlu0 %v999, 110
        %v1314 = vpop.permute.xlu0 %1313
        %1315 = vrot.lane.b32.xlu0 %v1000, 110
        %v1316 = vpop.permute.xlu0 %1315
        %1317 = vrot.lane.b32.xlu0 %v1001, 110
        %v1318 = vpop.permute.xlu0 %1317
        %1319 = vrot.lane.b32.xlu0 %v1002, 110
        %v1320 = vpop.permute.xlu0 %1319
        %1321 = vrot.lane.b32.xlu0 %v1003, 110
        %v1322 = vpop.permute.xlu0 %1321
        %1323 = vrot.lane.b32.xlu0 %v1004, 110
        %v1324 = vpop.permute.xlu0 %1323
        %v1325 = vsel %vm595, %v1294, %v1296
        %v1326 = vsel %vm595, %v1298, %v1300
        %v1327 = vsel %vm595, %v1302, %v1304
        %v1328 = vsel %vm595, %v1306, %v1308
        %v1329 = vsel %vm595, %v1310, %v1312
        %v1330 = vsel %vm595, %v1314, %v1316
        %v1331 = vsel %vm595, %v1318, %v1320
        %v1332 = vsel %vm595, %v1322, %v1324
        %1341 = vrot.lane.b32.xlu0 %v989, 109
        %v1342 = vpop.permute.xlu0 %1341
        %1343 = vrot.lane.b32.xlu0 %v990, 109
        %v1344 = vpop.permute.xlu0 %1343
        %1345 = vrot.lane.b32.xlu0 %v991, 109
        %v1346 = vpop.permute.xlu0 %1345
        %1347 = vrot.lane.b32.xlu0 %v992, 109
        %v1348 = vpop.permute.xlu0 %1347
        %1349 = vrot.lane.b32.xlu0 %v993, 109
        %v1350 = vpop.permute.xlu0 %1349
        %1351 = vrot.lane.b32.xlu0 %v994, 109
        %v1352 = vpop.permute.xlu0 %1351
        %1353 = vrot.lane.b32.xlu0 %v995, 109
        %v1354 = vpop.permute.xlu0 %1353
        %1355 = vrot.lane.b32.xlu0 %v996, 109
        %v1356 = vpop.permute.xlu0 %1355
        %1357 = vrot.lane.b32.xlu0 %v997, 109
        %v1358 = vpop.permute.xlu0 %1357
        %1359 = vrot.lane.b32.xlu0 %v998, 109
        %v1360 = vpop.permute.xlu0 %1359
        %1361 = vrot.lane.b32.xlu0 %v999, 109
        %v1362 = vpop.permute.xlu0 %1361
        %1363 = vrot.lane.b32.xlu0 %v1000, 109
        %v1364 = vpop.permute.xlu0 %1363
        %1365 = vrot.lane.b32.xlu0 %v1001, 109
        %v1366 = vpop.permute.xlu0 %1365
        %1367 = vrot.lane.b32.xlu0 %v1002, 109
        %v1368 = vpop.permute.xlu0 %1367
        %1369 = vrot.lane.b32.xlu0 %v1003, 109
        %v1370 = vpop.permute.xlu0 %1369
        %1371 = vrot.lane.b32.xlu0 %v1004, 109
        %v1372 = vpop.permute.xlu0 %1371
        %v1373 = vsel %vm636, %v1342, %v1344
        %v1374 = vsel %vm636, %v1346, %v1348
        %v1375 = vsel %vm636, %v1350, %v1352
        %v1376 = vsel %vm636, %v1354, %v1356
        %v1377 = vsel %vm636, %v1358, %v1360
        %v1378 = vsel %vm636, %v1362, %v1364
        %v1379 = vsel %vm636, %v1366, %v1368
        %v1380 = vsel %vm636, %v1370, %v1372
        %1389 = vrot.lane.b32.xlu0 %v989, 108
        %v1390 = vpop.permute.xlu0 %1389
        %1391 = vrot.lane.b32.xlu0 %v990, 108
        %v1392 = vpop.permute.xlu0 %1391
        %1393 = vrot.lane.b32.xlu0 %v991, 108
        %v1394 = vpop.permute.xlu0 %1393
        %1395 = vrot.lane.b32.xlu0 %v992, 108
        %v1396 = vpop.permute.xlu0 %1395
        %1397 = vrot.lane.b32.xlu0 %v993, 108
        %v1398 = vpop.permute.xlu0 %1397
        %1399 = vrot.lane.b32.xlu0 %v994, 108
        %v1400 = vpop.permute.xlu0 %1399
        %1401 = vrot.lane.b32.xlu0 %v995, 108
        %v1402 = vpop.permute.xlu0 %1401
        %1403 = vrot.lane.b32.xlu0 %v996, 108
        %v1404 = vpop.permute.xlu0 %1403
        %1405 = vrot.lane.b32.xlu0 %v997, 108
        %v1406 = vpop.permute.xlu0 %1405
        %1407 = vrot.lane.b32.xlu0 %v998, 108
        %v1408 = vpop.permute.xlu0 %1407
        %1409 = vrot.lane.b32.xlu0 %v999, 108
        %v1410 = vpop.permute.xlu0 %1409
        %1411 = vrot.lane.b32.xlu0 %v1000, 108
        %v1412 = vpop.permute.xlu0 %1411
        %1413 = vrot.lane.b32.xlu0 %v1001, 108
        %v1414 = vpop.permute.xlu0 %1413
        %1415 = vrot.lane.b32.xlu0 %v1002, 108
        %v1416 = vpop.permute.xlu0 %1415
        %1417 = vrot.lane.b32.xlu0 %v1003, 108
        %v1418 = vpop.permute.xlu0 %1417
        %1419 = vrot.lane.b32.xlu0 %v1004, 108
        %v1420 = vpop.permute.xlu0 %1419
        %v1421 = vsel %vm677, %v1390, %v1392
        %v1422 = vsel %vm677, %v1394, %v1396
        %v1423 = vsel %vm677, %v1398, %v1400
        %v1424 = vsel %vm677, %v1402, %v1404
        %v1425 = vsel %vm677, %v1406, %v1408
        %v1426 = vsel %vm677, %v1410, %v1412
        %v1427 = vsel %vm677, %v1414, %v1416
        %v1428 = vsel %vm677, %v1418, %v1420
        %v1437 = vpack.c.bf16 %v991, %v989
        %v1438 = vpack.c.bf16 %v995, %v993
        %v1439 = vpack.c.bf16 %v999, %v997
        %v1440 = vpack.c.bf16 %v1003, %v1001
        %v1441 = vpack.c.bf16 %v1086, %v1085
        %v1442 = vpack.c.bf16 %v1088, %v1087
        %v1443 = vpack.c.bf16 %v1090, %v1089
        %v1444 = vpack.c.bf16 %v1092, %v1091
        %v1445 = vpack.c.bf16 %v1134, %v1133
        %v1446 = vpack.c.bf16 %v1136, %v1135
        %v1447 = vpack.c.bf16 %v1138, %v1137
        %v1448 = vpack.c.bf16 %v1140, %v1139
        %v1449 = vpack.c.bf16 %v1182, %v1181
        %v1450 = vpack.c.bf16 %v1184, %v1183
        %v1451 = vpack.c.bf16 %v1186, %v1185
        %v1452 = vpack.c.bf16 %v1188, %v1187
        %v1453 = vpack.c.bf16 %v1230, %v1229
        %v1454 = vpack.c.bf16 %v1232, %v1231
        %v1455 = vpack.c.bf16 %v1234, %v1233
        %v1456 = vpack.c.bf16 %v1236, %v1235
        %v1457 = vpack.c.bf16 %v1278, %v1277
        %v1458 = vpack.c.bf16 %v1280, %v1279
        %v1459 = vpack.c.bf16 %v1282, %v1281
        %v1460 = vpack.c.bf16 %v1284, %v1283
        %v1461 = vpack.c.bf16 %v1326, %v1325
        %v1462 = vpack.c.bf16 %v1328, %v1327
        %v1463 = vpack.c.bf16 %v1330, %v1329
        %v1464 = vpack.c.bf16 %v1332, %v1331
        %v1465 = vpack.c.bf16 %v1374, %v1373
        %v1466 = vpack.c.bf16 %v1376, %v1375
        %v1467 = vpack.c.bf16 %v1378, %v1377
        %v1468 = vpack.c.bf16 %v1380, %v1379
        %v1469 = vpack.c.bf16 %v1422, %v1421
        %v1470 = vpack.c.bf16 %v1424, %v1423
        %v1471 = vpack.c.bf16 %v1426, %v1425
        %v1472 = vpack.c.bf16 %v1428, %v1427
        %1474 = vset.pattern.permute.xlu0 0
        %1475 = vperm.xlu0 %1474, %v1029
        %v1476 = vpop.permute.xlu0 %1475
        %1479 = vset.pattern.permute.xlu0 0
        %1480 = vperm.xlu0 %1479, %v1030
        %v1481 = vpop.permute.xlu0 %1480
        %1484 = vset.pattern.permute.xlu0 0
        %1485 = vperm.xlu0 %1484, %v1031
        %v1486 = vpop.permute.xlu0 %1485
        %1489 = vset.pattern.permute.xlu0 0
        %1490 = vperm.xlu0 %1489, %v1032
        %v1491 = vpop.permute.xlu0 %1490
        %1494 = vset.pattern.permute.xlu0 0
        %1495 = vperm.xlu0 %1494, %v1033
        %v1496 = vpop.permute.xlu0 %1495
        %1499 = vset.pattern.permute.xlu0 0
        %1500 = vperm.xlu0 %1499, %v1034
        %v1501 = vpop.permute.xlu0 %1500
        %1504 = vset.pattern.permute.xlu0 0
        %1505 = vperm.xlu0 %1504, %v1035
        %v1506 = vpop.permute.xlu0 %1505
        %1509 = vset.pattern.permute.xlu0 0
        %1510 = vperm.xlu0 %1509, %v1036
        %v1511 = vpop.permute.xlu0 %1510
        %v1537 = vunpack.c.l.b16 %v1005
        %v1538 = vunpack.c.h.b16 %v1005
        %v1539 = vunpack.c.l.b16 %v1006
        %v1540 = vunpack.c.h.b16 %v1006
        %v1541 = vunpack.c.l.b16 %v1007
        %v1542 = vunpack.c.l.b16 %v1008
        %v1543 = vunpack.c.h.b16 %v1008
        %v1544 = vunpack.c.l.b16 %v1009
        %v1545 = vunpack.c.h.b16 %v1009
        %v1546 = vunpack.c.l.b16 %v1010
        %v1547 = vunpack.c.l.b16 %v1011
        %v1548 = vunpack.c.h.b16 %v1011
        %v1549 = vunpack.c.l.b16 %v1012
        %v1550 = vunpack.c.h.b16 %v1012
        %v1551 = vunpack.c.l.b16 %v1013
        %v1552 = vunpack.c.l.b16 %v1014
        %v1553 = vunpack.c.h.b16 %v1014
        %v1554 = vunpack.c.l.b16 %v1015
        %v1555 = vunpack.c.h.b16 %v1015
        %v1556 = vunpack.c.l.b16 %v1016
        %v1557 = vunpack.c.l.b16 %v1017
        %v1558 = vunpack.c.h.b16 %v1017
        %v1559 = vunpack.c.l.b16 %v1018
        %v1560 = vunpack.c.h.b16 %v1018
        %v1561 = vunpack.c.l.b16 %v1019
        %v1562 = vunpack.c.l.b16 %v1020
        %v1563 = vunpack.c.h.b16 %v1020
        %v1564 = vunpack.c.l.b16 %v1021
        %v1565 = vunpack.c.h.b16 %v1021
        %v1566 = vunpack.c.l.b16 %v1022
        %v1567 = vunpack.c.l.b16 %v1023
        %v1568 = vunpack.c.h.b16 %v1023
        %v1569 = vunpack.c.l.b16 %v1024
        %v1570 = vunpack.c.h.b16 %v1024
        %v1571 = vunpack.c.l.b16 %v1025
        %v1572 = vunpack.c.l.b16 %v1026
        %v1573 = vunpack.c.h.b16 %v1026
        %v1574 = vunpack.c.l.b16 %v1027
        %v1575 = vunpack.c.h.b16 %v1027
        %v1576 = vunpack.c.l.b16 %v1028
        %v1577 = vpack.c.b16 %v1542, %v1537
        %v1578 = vpack.c.b16 %v1543, %v1538
        %v1579 = vpack.c.b16 %v1544, %v1539
        %v1580 = vpack.c.b16 %v1545, %v1540
        %v1581 = vpack.c.b16 %v1546, %v1541
        %v1582 = vpack.c.b16 %v1552, %v1547
        %v1583 = vpack.c.b16 %v1553, %v1548
        %v1584 = vpack.c.b16 %v1554, %v1549
        %v1585 = vpack.c.b16 %v1555, %v1550
        %v1586 = vpack.c.b16 %v1556, %v1551
        %v1587 = vpack.c.b16 %v1562, %v1557
        %v1588 = vpack.c.b16 %v1563, %v1558
        %v1589 = vpack.c.b16 %v1564, %v1559
        %v1590 = vpack.c.b16 %v1565, %v1560
        %v1591 = vpack.c.b16 %v1566, %v1561
        %v1592 = vpack.c.b16 %v1572, %v1567
        %v1593 = vpack.c.b16 %v1573, %v1568
        %v1594 = vpack.c.b16 %v1574, %v1569
        %v1595 = vpack.c.b16 %v1575, %v1570
        %v1596 = vpack.c.b16 %v1576, %v1571
        %vm1613 = vcmask 523264
        %v1615 = vsel %vm1613, %v1581, 0
        %v1618 = vsel %vm1613, %v1586, 0
        %v1621 = vsel %vm1613, %v1591, 0
        %v1624 = vsel %vm1613, %v1596, 0
        %1626 = vmatprep.subr.bf16.mxu0 0
        %1627 = vmatpush1.bf16.msra.mxu0 %v1437
        %1628 = vmatprep.subr.bf16.mxu0 0
        %1629 = vmatpush1.bf16.msra.mxu0 %v1438
        %1630 = vmatprep.subr.bf16.mxu0 0
        %1631 = vmatpush1.bf16.msra.mxu0 %v1439
        %1632 = vmatprep.subr.bf16.mxu0 0
        %1633 = vmatpush1.bf16.msra.mxu0 %v1440
        %1634 = vmatprep.subr.bf16.mxu0 0
        %1635 = vmatpush1.bf16.msra.mxu0 %v1441
        %1636 = vmatprep.subr.bf16.mxu0 0
        %1637 = vmatpush1.bf16.msra.mxu0 %v1442
        %1638 = vmatprep.subr.bf16.mxu0 0
        %1639 = vmatpush1.bf16.msra.mxu0 %v1443
        %1640 = vmatprep.subr.bf16.mxu0 0
        %1641 = vmatpush1.bf16.msra.mxu0 %v1444
        %1642 = vmatprep.subr.bf16.mxu0 0
        %1643 = vmatpush1.bf16.msra.mxu0 %v1445
        %1644 = vmatprep.subr.bf16.mxu0 0
        %1645 = vmatpush1.bf16.msra.mxu0 %v1446
        %1646 = vmatprep.subr.bf16.mxu0 0
        %1647 = vmatpush1.bf16.msra.mxu0 %v1447
        %1648 = vmatprep.subr.bf16.mxu0 0
        %1649 = vmatpush1.bf16.msra.mxu0 %v1448
        %1650 = vmatprep.subr.bf16.mxu0 0
        %1651 = vmatpush1.bf16.msra.mxu0 %v1449
        %1652 = vmatprep.subr.bf16.mxu0 0
        %1653 = vmatpush1.bf16.msra.mxu0 %v1450
        %1654 = vmatprep.subr.bf16.mxu0 0
        %1655 = vmatpush1.bf16.msra.mxu0 %v1451
        %1656 = vmatprep.subr.bf16.mxu0 0
        %1657 = vmatpush1.bf16.msra.mxu0 %v1452
        %1658 = vmatprep.mubr.bf16.mxu0 %v1578
        %1659 = vmatmul.mubr.bf16.gmra.mrb[0].mxu0 %v1577
        %v1660 = vpop.f32.mrb[0].mxu0
        %v1661 = vadd.f32 %v1476, %v1660
        %v1662 = vpop.f32.mrb[0].mxu0
        %v1663 = vpop.f32.mrb[0].mxu0
        %v1664 = vadd.f32 %v1481, %v1663
        %v1665 = vpop.f32.mrb[0].mxu0
        %1666 = vmatprep.mubr.bf16.mxu0 %v1583
        %1667 = vmatmul.mubr.bf16.gmra.mrb[0].mxu0 %v1582
        %v1668 = vpop.f32.mrb[0].mxu0
        %v1669 = vadd.f32 %v1486, %v1668
        %v1670 = vpop.f32.mrb[0].mxu0
        %v1671 = vpop.f32.mrb[0].mxu0
        %v1672 = vadd.f32 %v1491, %v1671
        %v1673 = vpop.f32.mrb[0].mxu0
        %1674 = vmatprep.mubr.bf16.mxu0 %v1588
        %1675 = vmatmul.mubr.bf16.gmra.mrb[0].mxu0 %v1587
        %v1676 = vpop.f32.mrb[0].mxu0
        %v1677 = vadd.f32 %v1496, %v1676
        %v1678 = vpop.f32.mrb[0].mxu0
        %v1679 = vpop.f32.mrb[0].mxu0
        %v1680 = vadd.f32 %v1501, %v1679
        %v1681 = vpop.f32.mrb[0].mxu0
        %1682 = vmatprep.mubr.bf16.mxu0 %v1593
        %1683 = vmatmul.mubr.bf16.gmra.mrb[0].mxu0 %v1592
        %v1684 = vpop.f32.mrb[0].mxu0
        %v1685 = vadd.f32 %v1506, %v1684
        %v1686 = vpop.f32.mrb[0].mxu0
        %v1687 = vpop.f32.mrb[0].mxu0
        %v1688 = vadd.f32 %v1511, %v1687
        %v1689 = vpop.f32.mrb[0].mxu0
        %1690 = vdwg.mxu0
        %1691 = vmatprep.subr.bf16.mxu0 0
        %1692 = vmatpush1.bf16.msra.mxu0 %v1453
        %1693 = vmatprep.subr.bf16.mxu0 0
        %1694 = vmatpush1.bf16.msra.mxu0 %v1454
        %1695 = vmatprep.subr.bf16.mxu0 0
        %1696 = vmatpush1.bf16.msra.mxu0 %v1455
        %1697 = vmatprep.subr.bf16.mxu0 0
        %1698 = vmatpush1.bf16.msra.mxu0 %v1456
        %1699 = vmatprep.subr.bf16.mxu0 0
        %1700 = vmatpush1.bf16.msra.mxu0 %v1457
        %1701 = vmatprep.subr.bf16.mxu0 0
        %1702 = vmatpush1.bf16.msra.mxu0 %v1458
        %1703 = vmatprep.subr.bf16.mxu0 0
        %1704 = vmatpush1.bf16.msra.mxu0 %v1459
        %1705 = vmatprep.subr.bf16.mxu0 0
        %1706 = vmatpush1.bf16.msra.mxu0 %v1460
        %1707 = vmatprep.subr.bf16.mxu0 0
        %1708 = vmatpush1.bf16.msra.mxu0 %v1461
        %1709 = vmatprep.subr.bf16.mxu0 0
        %1710 = vmatpush1.bf16.msra.mxu0 %v1462
        %1711 = vmatprep.subr.bf16.mxu0 0
        %1712 = vmatpush1.bf16.msra.mxu0 %v1463
        %1713 = vmatprep.subr.bf16.mxu0 0
        %1714 = vmatpush1.bf16.msra.mxu0 %v1464
        %1715 = vmatprep.subr.bf16.mxu0 0
        %1716 = vmatpush1.bf16.msra.mxu0 %v1465
        %1717 = vmatprep.subr.bf16.mxu0 0
        %1718 = vmatpush1.bf16.msra.mxu0 %v1466
        %1719 = vmatprep.subr.bf16.mxu0 0
        %1720 = vmatpush1.bf16.msra.mxu0 %v1467
        %1721 = vmatprep.subr.bf16.mxu0 0
        %1722 = vmatpush1.bf16.msra.mxu0 %v1468
        %1723 = vmatprep.mubr.bf16.mxu0 %v1580
        %1724 = vmatmul.mubr.bf16.gmra.mrb[0].mxu0 %v1579
        %v1725 = vpop.f32.mrb[0].mxu0
        %v1726 = vadd.f32 %v1661, %v1725
        %v1727 = vpop.f32.mrb[0].mxu0
        %v1728 = vpop.f32.mrb[0].mxu0
        %v1729 = vadd.f32 %v1664, %v1728
        %v1730 = vpop.f32.mrb[0].mxu0
        %1731 = vmatprep.mubr.bf16.mxu0 %v1585
        %1732 = vmatmul.mubr.bf16.gmra.mrb[0].mxu0 %v1584
        %v1733 = vpop.f32.mrb[0].mxu0
        %v1734 = vadd.f32 %v1669, %v1733
        %v1735 = vpop.f32.mrb[0].mxu0
        %v1736 = vpop.f32.mrb[0].mxu0
        %v1737 = vadd.f32 %v1672, %v1736
        %v1738 = vpop.f32.mrb[0].mxu0
        %1739 = vmatprep.mubr.bf16.mxu0 %v1590
        %1740 = vmatmul.mubr.bf16.gmra.mrb[0].mxu0 %v1589
        %v1741 = vpop.f32.mrb[0].mxu0
        %v1742 = vadd.f32 %v1677, %v1741
        %v1743 = vpop.f32.mrb[0].mxu0
        %v1744 = vpop.f32.mrb[0].mxu0
        %v1745 = vadd.f32 %v1680, %v1744
        %v1746 = vpop.f32.mrb[0].mxu0
        %1747 = vmatprep.mubr.bf16.mxu0 %v1595
        %1748 = vmatmul.mubr.bf16.gmra.mrb[0].mxu0 %v1594
        %v1749 = vpop.f32.mrb[0].mxu0
        %v1750 = vadd.f32 %v1685, %v1749
        %v1751 = vpop.f32.mrb[0].mxu0
        %v1752 = vpop.f32.mrb[0].mxu0
        %v1753 = vadd.f32 %v1688, %v1752
        %v1754 = vpop.f32.mrb[0].mxu0
        %1755 = vdwg.mxu0
        %1756 = vmatprep.subr.bf16.mxu0 0
        %1757 = vmatpush1.bf16.msra.mxu0 %v1469
        %1758 = vmatprep.subr.bf16.mxu0 0
        %1759 = vmatpush1.bf16.msra.mxu0 %v1470
        %1760 = vmatprep.subr.bf16.mxu0 0
        %1761 = vmatpush1.bf16.msra.mxu0 %v1471
        %1762 = vmatprep.subr.bf16.mxu0 0
        %1763 = vmatpush1.bf16.msra.mxu0 %v1472
        %1764 = vmatprep.subr.bf16.mxu0 0
        %1765 = vmatpush1.bf16.msra.mxu0 0
        %1766 = vmatprep.subr.bf16.mxu0 0
        %1767 = vmatpush1.bf16.msra.mxu0 0
        %1768 = vmatprep.subr.bf16.mxu0 0
        %1769 = vmatpush1.bf16.msra.mxu0 0
        %1770 = vmatprep.subr.bf16.mxu0 0
        %1771 = vmatpush1.bf16.msra.mxu0 0
        %1772 = vmatprep.subr.bf16.mxu0 0
        %1773 = vmatpush1.bf16.msra.mxu0 0
        %1774 = vmatprep.subr.bf16.mxu0 0
        %1775 = vmatpush1.bf16.msra.mxu0 0
        %1776 = vmatprep.subr.bf16.mxu0 0
        %1777 = vmatpush1.bf16.msra.mxu0 0
        %1778 = vmatprep.subr.bf16.mxu0 0
        %1779 = vmatpush1.bf16.msra.mxu0 0
        %1780 = vmatprep.subr.bf16.mxu0 0
        %1781 = vmatpush1.bf16.msra.mxu0 0
        %1782 = vmatprep.subr.bf16.mxu0 0
        %1783 = vmatpush1.bf16.msra.mxu0 0
        %1784 = vmatprep.subr.bf16.mxu0 0
        %1785 = vmatpush1.bf16.msra.mxu0 0
        %1786 = vmatprep.subr.bf16.mxu0 0
        %1787 = vmatpush1.bf16.msra.mxu0 0
        %1788 = vmatprep.mubr.bf16.mxu0 0
        %1789 = vmatmul.mubr.bf16.gmra.mrb[0].mxu0 %v1615
        %v1790 = vpop.f32.mrb[0].mxu0
        %v1791 = vadd.f32 %v1726, %v1790
        %v1792 = vpop.f32.mrb[0].mxu0
        %v1793 = vpop.f32.mrb[0].mxu0
        %v1794 = vadd.f32 %v1729, %v1793
        %v1795 = vpop.f32.mrb[0].mxu0
        %1796 = vmatprep.mubr.bf16.mxu0 0
        %1797 = vmatmul.mubr.bf16.gmra.mrb[0].mxu0 %v1618
        %v1798 = vpop.f32.mrb[0].mxu0
        %v1799 = vadd.f32 %v1734, %v1798
        %v1800 = vpop.f32.mrb[0].mxu0
        %v1801 = vpop.f32.mrb[0].mxu0
        %v1802 = vadd.f32 %v1737, %v1801
        %v1803 = vpop.f32.mrb[0].mxu0
        %1804 = vmatprep.mubr.bf16.mxu0 0
        %1805 = vmatmul.mubr.bf16.gmra.mrb[0].mxu0 %v1621
        %v1806 = vpop.f32.mrb[0].mxu0
        %v1807 = vadd.f32 %v1742, %v1806
        %v1808 = vpop.f32.mrb[0].mxu0
        %v1809 = vpop.f32.mrb[0].mxu0
        %v1810 = vadd.f32 %v1745, %v1809
        %v1811 = vpop.f32.mrb[0].mxu0
        %1812 = vmatprep.mubr.bf16.mxu0 0
        %1813 = vmatmul.mubr.bf16.gmra.mrb[0].mxu0 %v1624
        %v1814 = vpop.f32.mrb[0].mxu0
        %v1815 = vadd.f32 %v1750, %v1814
        %v1816 = vpop.f32.mrb[0].mxu0
        %v1817 = vpop.f32.mrb[0].mxu0
        %v1818 = vadd.f32 %v1753, %v1817
        %v1819 = vpop.f32.mrb[0].mxu0
        %1820 = vdwg.mxu0
        %v1821 = vmax.f32 %v1791, 0.0
        %v1822 = vmax.f32 %v1794, 0.0
        %v1823 = vmax.f32 %v1799, 0.0
        %v1824 = vmax.f32 %v1802, 0.0
        %v1825 = vmax.f32 %v1807, 0.0
        %v1826 = vmax.f32 %v1810, 0.0
        %v1827 = vmax.f32 %v1815, 0.0
        %v1828 = vmax.f32 %v1818, 0.0
        %1829 = vst [vmem:[%s299] sm:$0xff] %v1821
        %1830 = vst [vmem:[%s299 + $0x8] sm:$0xff] %v1822
        %1831 = vst [vmem:[%s299 + $0x10] sm:$0xff] %v1823
        %1832 = vst [vmem:[%s299 + $0x18] sm:$0xff] %v1824
        %1833 = vst [vmem:[%s299 + $0x20] sm:$0xff] %v1825
        %1834 = vst [vmem:[%s299 + $0x28] sm:$0xff] %v1826
        %1835 = vst [vmem:[%s299 + $0x30] sm:$0xff] %v1827
        %1836 = vst [vmem:[%s299 + $0x38] sm:$0xff] %v1828
        %v1837 = vld [vmem:[%s5] sm:$0xf]
        %v1838 = vld [vmem:[%s5 + $0x4] sm:$0xf]
        %v1839 = vld [vmem:[%s5 + $0x8] sm:$0xf]
        %v1840 = vld [vmem:[%s5 + $0xc] sm:$0xf]
        %v1841 = vld [vmem:[%s5 + $0x10] sm:$0xf]
        %v1842 = vld [vmem:[%s5 + $0x14] sm:$0xf]
        %v1843 = vld [vmem:[%s5 + $0x18] sm:$0xf]
        %v1844 = vld [vmem:[%s5 + $0x1c] sm:$0xf]
        %v1845 = vld [vmem:[%s5 + $0x20] sm:$0xf]
        %v1846 = vld [vmem:[%s5 + $0x24] sm:$0xf]
        %v1847 = vld [vmem:[%s5 + $0x28] sm:$0xf]
        %v1848 = vld [vmem:[%s5 + $0x2c] sm:$0xf]
        %v1849 = vld [vmem:[%s5 + $0x30] sm:$0xf]
        %v1850 = vld [vmem:[%s5 + $0x34] sm:$0xf]
        %v1851 = vld [vmem:[%s5 + $0x38] sm:$0xf]
        %v1852 = vld [vmem:[%s5 + $0x3c] sm:$0xf]
        %v1853 = vpack.c.bf16 %v1822, %v1821
        %v1854 = vpack.c.bf16 %v1824, %v1823
        %v1855 = vpack.c.bf16 %v1826, %v1825
        %v1856 = vpack.c.bf16 %v1828, %v1827
        %v1857 = vld [vmem:[%s6] sm:$0xff]
        %v1858 = vld [vmem:[%s6 + $0x8] sm:$0xff]
        %v1859 = vld [vmem:[%s6 + $0x10] sm:$0xff]
        %v1860 = vld [vmem:[%s6 + $0x18] sm:$0xff]
        %v1861 = vld [vmem:[%s6 + $0x20] sm:$0xff]
        %v1862 = vld [vmem:[%s6 + $0x28] sm:$0xff]
        %v1863 = vld [vmem:[%s6 + $0x30] sm:$0xff]
        %v1864 = vld [vmem:[%s6 + $0x38] sm:$0xff]
        %v1865 = vld [vmem:[%s6 + $0x40] sm:$0xff]
        %v1866 = vld [vmem:[%s6 + $0x48] sm:$0xff]
        %v1867 = vld [vmem:[%s6 + $0x50] sm:$0xff]
        %v1868 = vld [vmem:[%s6 + $0x58] sm:$0xff]
        %v1869 = vld [vmem:[%s6 + $0x60] sm:$0xff]
        %v1870 = vld [vmem:[%s6 + $0x68] sm:$0xff]
        %v1871 = vld [vmem:[%s6 + $0x70] sm:$0xff]
        %v1872 = vld [vmem:[%s6 + $0x78] sm:$0xff]
        %1874 = vset.pattern.permute.xlu0 0
        %1875 = vperm.xlu0 %1874, %v1857
        %v1876 = vpop.permute.xlu0 %1875
        %1879 = vset.pattern.permute.xlu0 0
        %1880 = vperm.xlu0 %1879, %v1858
        %v1881 = vpop.permute.xlu0 %1880
        %1884 = vset.pattern.permute.xlu0 0
        %1885 = vperm.xlu0 %1884, %v1859
        %v1886 = vpop.permute.xlu0 %1885
        %1889 = vset.pattern.permute.xlu0 0
        %1890 = vperm.xlu0 %1889, %v1860
        %v1891 = vpop.permute.xlu0 %1890
        %1894 = vset.pattern.permute.xlu0 0
        %1895 = vperm.xlu0 %1894, %v1861
        %v1896 = vpop.permute.xlu0 %1895
        %1899 = vset.pattern.permute.xlu0 0
        %1900 = vperm.xlu0 %1899, %v1862
        %v1901 = vpop.permute.xlu0 %1900
        %1904 = vset.pattern.permute.xlu0 0
        %1905 = vperm.xlu0 %1904, %v1863
        %v1906 = vpop.permute.xlu0 %1905
        %1909 = vset.pattern.permute.xlu0 0
        %1910 = vperm.xlu0 %1909, %v1864
        %v1911 = vpop.permute.xlu0 %1910
        %1914 = vset.pattern.permute.xlu0 0
        %1915 = vperm.xlu0 %1914, %v1865
        %v1916 = vpop.permute.xlu0 %1915
        %1919 = vset.pattern.permute.xlu0 0
        %1920 = vperm.xlu0 %1919, %v1866
        %v1921 = vpop.permute.xlu0 %1920
        %1924 = vset.pattern.permute.xlu0 0
        %1925 = vperm.xlu0 %1924, %v1867
        %v1926 = vpop.permute.xlu0 %1925
        %1929 = vset.pattern.permute.xlu0 0
        %1930 = vperm.xlu0 %1929, %v1868
        %v1931 = vpop.permute.xlu0 %1930
        %1934 = vset.pattern.permute.xlu0 0
        %1935 = vperm.xlu0 %1934, %v1869
        %v1936 = vpop.permute.xlu0 %1935
        %1939 = vset.pattern.permute.xlu0 0
        %1940 = vperm.xlu0 %1939, %v1870
        %v1941 = vpop.permute.xlu0 %1940
        %1944 = vset.pattern.permute.xlu0 0
        %1945 = vperm.xlu0 %1944, %v1871
        %v1946 = vpop.permute.xlu0 %1945
        %1949 = vset.pattern.permute.xlu0 0
        %1950 = vperm.xlu0 %1949, %v1872
        %v1951 = vpop.permute.xlu0 %1950
        %v1969 = vunpack.c.l.b16 %v1837
        %v1970 = vunpack.c.l.b16 %v1838
        %v1971 = vunpack.c.l.b16 %v1839
        %v1972 = vunpack.c.l.b16 %v1840
        %v1973 = vunpack.c.l.b16 %v1841
        %v1974 = vunpack.c.l.b16 %v1842
        %v1975 = vunpack.c.l.b16 %v1843
        %v1976 = vunpack.c.l.b16 %v1844
        %v1977 = vunpack.c.l.b16 %v1845
        %v1978 = vunpack.c.l.b16 %v1846
        %v1979 = vunpack.c.l.b16 %v1847
        %v1980 = vunpack.c.l.b16 %v1848
        %v1981 = vunpack.c.l.b16 %v1849
        %v1982 = vunpack.c.l.b16 %v1850
        %v1983 = vunpack.c.l.b16 %v1851
        %v1984 = vunpack.c.l.b16 %v1852
        %v1985 = vpack.c.b16 %v1970, %v1969
        %v1986 = vpack.c.b16 %v1972, %v1971
        %v1987 = vpack.c.b16 %v1974, %v1973
        %v1988 = vpack.c.b16 %v1976, %v1975
        %v1989 = vpack.c.b16 %v1978, %v1977
        %v1990 = vpack.c.b16 %v1980, %v1979
        %v1991 = vpack.c.b16 %v1982, %v1981
        %v1992 = vpack.c.b16 %v1984, %v1983
        %v1994 = vsel %vm1613, %v1985, 0
        %v1997 = vsel %vm1613, %v1986, 0
        %v2000 = vsel %vm1613, %v1987, 0
        %v2003 = vsel %vm1613, %v1988, 0
        %v2006 = vsel %vm1613, %v1989, 0
        %v2009 = vsel %vm1613, %v1990, 0
        %v2012 = vsel %vm1613, %v1991, 0
        %v2015 = vsel %vm1613, %v1992, 0
        %2017 = vmatprep.subr.bf16.mxu0 0
        %2018 = vmatpush1.bf16.msra.mxu0 %v1853
        %2019 = vmatprep.subr.bf16.mxu0 0
        %2020 = vmatpush1.bf16.msra.mxu0 %v1854
        %2021 = vmatprep.subr.bf16.mxu0 0
        %2022 = vmatpush1.bf16.msra.mxu0 %v1855
        %2023 = vmatprep.subr.bf16.mxu0 0
        %2024 = vmatpush1.bf16.msra.mxu0 %v1856
        %2025 = vmatprep.subr.bf16.mxu0 0
        %2026 = vmatpush1.bf16.msra.mxu0 0
        %2027 = vmatprep.subr.bf16.mxu0 0
        %2028 = vmatpush1.bf16.msra.mxu0 0
        %2029 = vmatprep.subr.bf16.mxu0 0
        %2030 = vmatpush1.bf16.msra.mxu0 0
        %2031 = vmatprep.subr.bf16.mxu0 0
        %2032 = vmatpush1.bf16.msra.mxu0 0
        %2033 = vmatprep.subr.bf16.mxu0 0
        %2034 = vmatpush1.bf16.msra.mxu0 0
        %2035 = vmatprep.subr.bf16.mxu0 0
        %2036 = vmatpush1.bf16.msra.mxu0 0
        %2037 = vmatprep.subr.bf16.mxu0 0
        %2038 = vmatpush1.bf16.msra.mxu0 0
        %2039 = vmatprep.subr.bf16.mxu0 0
        %2040 = vmatpush1.bf16.msra.mxu0 0
        %2041 = vmatprep.subr.bf16.mxu0 0
        %2042 = vmatpush1.bf16.msra.mxu0 0
        %2043 = vmatprep.subr.bf16.mxu0 0
        %2044 = vmatpush1.bf16.msra.mxu0 0
        %2045 = vmatprep.subr.bf16.mxu0 0
        %2046 = vmatpush1.bf16.msra.mxu0 0
        %2047 = vmatprep.subr.bf16.mxu0 0
        %2048 = vmatpush1.bf16.msra.mxu0 0
        %2049 = vmatprep.mubr.bf16.mxu0 0
        %2050 = vmatmul.mubr.bf16.gmra.mrb[0].mxu0 %v1994
        %v2051 = vpop.f32.mrb[0].mxu0
        %v2052 = vadd.f32 %v1876, %v2051
        %v2053 = vpop.f32.mrb[0].mxu0
        %v2054 = vpop.f32.mrb[0].mxu0
        %v2055 = vadd.f32 %v1881, %v2054
        %v2056 = vpop.f32.mrb[0].mxu0
        %2057 = vmatprep.mubr.bf16.mxu0 0
        %2058 = vmatmul.mubr.bf16.gmra.mrb[0].mxu0 %v1997
        %v2059 = vpop.f32.mrb[0].mxu0
        %v2060 = vadd.f32 %v1886, %v2059
        %v2061 = vpop.f32.mrb[0].mxu0
        %v2062 = vpop.f32.mrb[0].mxu0
        %v2063 = vadd.f32 %v1891, %v2062
        %v2064 = vpop.f32.mrb[0].mxu0
        %2065 = vmatprep.mubr.bf16.mxu0 0
        %2066 = vmatmul.mubr.bf16.gmra.mrb[0].mxu0 %v2000
        %v2067 = vpop.f32.mrb[0].mxu0
        %v2068 = vadd.f32 %v1896, %v2067
        %v2069 = vpop.f32.mrb[0].mxu0
        %v2070 = vpop.f32.mrb[0].mxu0
        %v2071 = vadd.f32 %v1901, %v2070
        %v2072 = vpop.f32.mrb[0].mxu0
        %2073 = vmatprep.mubr.bf16.mxu0 0
        %2074 = vmatmul.mubr.bf16.gmra.mrb[0].mxu0 %v2003
        %v2075 = vpop.f32.mrb[0].mxu0
        %v2076 = vadd.f32 %v1906, %v2075
        %v2077 = vpop.f32.mrb[0].mxu0
        %v2078 = vpop.f32.mrb[0].mxu0
        %v2079 = vadd.f32 %v1911, %v2078
        %v2080 = vpop.f32.mrb[0].mxu0
        %2081 = vmatprep.mubr.bf16.mxu0 0
        %2082 = vmatmul.mubr.bf16.gmra.mrb[0].mxu0 %v2006
        %v2083 = vpop.f32.mrb[0].mxu0
        %v2084 = vadd.f32 %v1916, %v2083
        %v2085 = vpop.f32.mrb[0].mxu0
        %v2086 = vpop.f32.mrb[0].mxu0
        %v2087 = vadd.f32 %v1921, %v2086
        %v2088 = vpop.f32.mrb[0].mxu0
        %2089 = vmatprep.mubr.bf16.mxu0 0
        %2090 = vmatmul.mubr.bf16.gmra.mrb[0].mxu0 %v2009
        %v2091 = vpop.f32.mrb[0].mxu0
        %v2092 = vadd.f32 %v1926, %v2091
        %v2093 = vpop.f32.mrb[0].mxu0
        %v2094 = vpop.f32.mrb[0].mxu0
        %v2095 = vadd.f32 %v1931, %v2094
        %v2096 = vpop.f32.mrb[0].mxu0
        %2097 = vmatprep.mubr.bf16.mxu0 0
        %2098 = vmatmul.mubr.bf16.gmra.mrb[0].mxu0 %v2012
        %v2099 = vpop.f32.mrb[0].mxu0
        %v2100 = vadd.f32 %v1936, %v2099
        %v2101 = vpop.f32.mrb[0].mxu0
        %v2102 = vpop.f32.mrb[0].mxu0
        %v2103 = vadd.f32 %v1941, %v2102
        %v2104 = vpop.f32.mrb[0].mxu0
        %2105 = vmatprep.mubr.bf16.mxu0 0
        %2106 = vmatmul.mubr.bf16.gmra.mrb[0].mxu0 %v2015
        %v2107 = vpop.f32.mrb[0].mxu0
        %v2108 = vadd.f32 %v1946, %v2107
        %v2109 = vpop.f32.mrb[0].mxu0
        %v2110 = vpop.f32.mrb[0].mxu0
        %v2111 = vadd.f32 %v1951, %v2110
        %v2112 = vpop.f32.mrb[0].mxu0
        %2113 = vdwg.mxu0
        %2114 = vst [vmem:[%s316] sm:$0xff] %v2052
        %2115 = vst [vmem:[%s316 + $0x8] sm:$0xff] %v2055
        %2116 = vst [vmem:[%s316 + $0x10] sm:$0xff] %v2060
        %2117 = vst [vmem:[%s316 + $0x18] sm:$0xff] %v2063
        %2118 = vst [vmem:[%s316 + $0x20] sm:$0xff] %v2068
        %2119 = vst [vmem:[%s316 + $0x28] sm:$0xff] %v2071
        %2120 = vst [vmem:[%s316 + $0x30] sm:$0xff] %v2076
        %2121 = vst [vmem:[%s316 + $0x38] sm:$0xff] %v2079
        %2122 = vst [vmem:[%s316 + $0x40] sm:$0xff] %v2084
        %2123 = vst [vmem:[%s316 + $0x48] sm:$0xff] %v2087
        %2124 = vst [vmem:[%s316 + $0x50] sm:$0xff] %v2092
        %2125 = vst [vmem:[%s316 + $0x58] sm:$0xff] %v2095
        %2126 = vst [vmem:[%s316 + $0x60] sm:$0xff] %v2100
        %2127 = vst [vmem:[%s316 + $0x68] sm:$0xff] %v2103
        %2128 = vst [vmem:[%s316 + $0x70] sm:$0xff] %v2108
        %2129 = vst [vmem:[%s316 + $0x78] sm:$0xff] %v2111
        %s2130 = sand.u32 %s183, 1
        %s2131 = scalar_lea.sflag [#allocation3], %s2130
        %s2132 = sand.u32 %s183, 1
        %s2133 = smul.addr %s2132, 64
        %s2134 = scalar_lea.vmem [#allocation2], %s2133
        %p2135 = scmp.lt.s32.totalorder %s23, 1
        %s2136 = scalar_select %p2135, %s23, 1
        %s2137 = smul.addr %s2136, 16
        %s2138 = smul.addr %s2137, 8
        %s2139 = scalar_lea.vmem %s8, %s2138
        // Predicated region
        $region49: #{unet_forward.7} parent=47 // pred_check
          %p2140 = pneg %p193
        $region50: #{unet_forward.7} parent=47 // pred_check_branch
          %2142 = sbr.rel (%p2140) target = $region52
        $region51: #{unet_forward.7} parent=47 // pred_region
          %s2144 = ssub.s32 1024, 1024
          %2145 = vsyncadd %s2131, %s2144
          %s2146 = smul.addr %s23, 8
          %s2147 = smul.addr %s2146, 128
          %s2148 = scalar_lea.hbm %s7, %s2147
          %s2149 = sshll.u32 %s2134, 4
          %s2150 = int_to_ptr.vmem [resolvable:$true] %s2149
          %2155 = dma.vmem_to_hbm [thread:$0]  %s2150, 1024, %s2148, %s2131, 128, 128, 8
        $region52: #{unet_forward.7} parent=47 // pred_fallthru
          _
        // Predicated region
        $region53: #{unet_forward.7} parent=47 // pred_check
          %p2156 = pneg %p219
        $region54: #{unet_forward.7} parent=47 // pred_check_branch
          %2158 = sbr.rel (%p2156) target = $region56
        $region55: #{unet_forward.7} parent=47 // pred_region
          _
        $region56: #{unet_forward.7} parent=47 // pred_fallthru
          _
      $region48: #{unet_forward.7} parent=5 // pred_fallthru
        _
      %p2159 = scmp.le.s32.totalorder 2, %s18
      // Predicated region
      $region57: #{unet_forward.7} parent=5 // pred_check
        %p2160 = pneg %p2159
      $region58: #{unet_forward.7} parent=5 // pred_check_branch
        %2162 = sbr.rel (%p2160) target = $region60
      $region59: #{unet_forward.7} parent=5 // pred_region
        %s2163 = ssub.s32 %s18, 2
        // Predicated region
        $region61: #{unet_forward.7} parent=59 // pred_check
          %p2164 = pneg %p199
        $region62: #{unet_forward.7} parent=59 // pred_check_branch
          %2166 = sbr.rel (%p2164) target = $region64
        $region63: #{unet_forward.7} parent=59 // pred_region
          %s2167 = sand.u32 %s184, 1
          %s2168 = scalar_lea.sflag [#allocation3], %s2167
          %s2169 = sand.u32 %s184, 1
          %s2170 = smul.addr %s2169, 64
          %s2171 = scalar_lea.vmem [#allocation2], %s2170
          %2172 = dma.done %s2168, 1024
        $region64: #{unet_forward.7} parent=59 // pred_fallthru
          _
        // Predicated region
        $region65: #{unet_forward.7} parent=59 // pred_check
          %p2173 = pneg %p225
        $region66: #{unet_forward.7} parent=59 // pred_check_branch
          %2175 = sbr.rel (%p2173) target = $region68
        $region67: #{unet_forward.7} parent=59 // pred_region
          %p2176 = scmp.lt.s32.totalorder %s24, 1
          %s2177 = scalar_select %p2176, %s24, 1
          %s2178 = smul.addr %s2177, 16
          %s2179 = smul.addr %s2178, 8
          %s2180 = scalar_lea.vmem %s8, %s2179
        $region68: #{unet_forward.7} parent=59 // pred_fallthru
          _
      $region60: #{unet_forward.7} parent=5 // pred_fallthru
        _
    $region6: #{unet_forward.7} parent=1 // loop_footer
      %s22 = sadd.s32 1, %s18
    $region7: #{unet_forward.7} parent=1 // loop_footer_branch
      %17 = sbr.rel target = $region3
    $region8: #{unet_forward.7} parent=1 // loop_exit
      _
    %2181 = vsyncpa [#allocation3], 1
    %s2182 = scalar_lea.sflag [#allocation3], 1
    %2183 = vsyncpa %s2182, 1

// kernel: unet_forward.8
$region0: #{unet_forward.8}
  #allocation0 [shape = 'u32[]', space=smem, size = 0x4, offset = 0x4, fixed_abs, tag = 'smem constant byte address 0x4 - core index']
  #allocation1 [shape = 'u32[144,128]{1,0:T(1,128)}', space=vmem, size = 0x12000, scoped, tag = 'internal scratch']
  %s0 = inlined_call_operand.vmem [shape: f32[2,64,384], index: 0, kind: input, shape index: {}]
  %s1 = inlined_call_operand.vmem [shape: bf16[32,576], index: 1, kind: input, shape index: {}]
  %s2 = inlined_call_operand.vmem [shape: f32[32,1], index: 2, kind: input, shape index: {}]
  %s3 = inlined_call_operand.vmem [shape: bf16[32,288], index: 3, kind: input, shape index: {}]
  %s4 = inlined_call_operand.vmem [shape: f32[32,1], index: 4, kind: input, shape index: {}]
  %s5 = inlined_call_operand.vmem [shape: bf16[64,32], index: 5, kind: input, shape index: {}]
  %s6 = inlined_call_operand.vmem [shape: f32[64,1], index: 6, kind: input, shape index: {}]
  %s7 = inlined_call_operand.hbm [shape: f32[2,32,128], index: 7, kind: output, shape index: {0}]
  %s8 = inlined_call_operand.vmem [shape: f32[2,64,128], index: 8, kind: output, shape index: {1}]
  %9 = xla_tuple %s7, %s8
  %s10 = sld [smem:[#allocation0]]
  $region69: #{unet_forward.8} parent=0
    _
  %s12 = ssub.s32 1, %s10
  %s13 = scalar_select 0, %s12, %s10
  $region1: #{unet_forward.8} parent=0
    #allocation2 [shape = 'u8[32768]{0}', space=vmem, size = 0x8000, scoped, tag = 'output window, operand 0']
    #allocation3 [shape = 's32[2]{0}', space=sflag, size = 0x8, scoped, tag = 'scoped memory for unet_forward.8']
    %14 = vsyncpa [#allocation3], 0
    %s15 = scalar_lea.sflag [#allocation3], 1
    %16 = vsyncpa %s15, 0
    loop: start=0, step=1, limit=4
    $region2: #{unet_forward.8} parent=1 // loop_pre_header
      _
    $region3: #{unet_forward.8} parent=1 // loop_header
      %s18 = sphi 0, %s22
      %p19 = scmp.ge.s32.totalorder %s18, 4
      %s28 = sphi 0, %s30
      %s31 = sphi 0, %s28
      %s32 = sphi 0, %s31
      %s48 = sphi 0, %s32
      %s52 = sphi 0, %s52
      %s54 = sphi 0, %s52
      %s55 = sphi 0, %s54
      %s69 = sphi 0, %s55
      %s73 = sphi 0, %s73
      %s75 = sphi 0, %s73
      %s76 = sphi 0, %s75
      %s90 = sphi 0, %s76
      %s94 = sphi 0, %s94
      %s96 = sphi 0, %s94
      %s97 = sphi 0, %s96
      %s111 = sphi 0, %s97
      %s115 = sphi 0, %s115
      %s117 = sphi 0, %s115
      %s118 = sphi 0, %s117
      %s132 = sphi 0, %s118
      %s136 = sphi 0, %s136
      %s138 = sphi 0, %s136
      %s139 = sphi 0, %s138
      %s153 = sphi 0, %s139
      %s157 = sphi 0, %s157
      %s159 = sphi 0, %s157
      %s160 = sphi 0, %s159
      %s174 = sphi 0, %s160
      %s180 = sphi 0, %s182
      %s183 = sphi 0, %s180
      %s184 = sphi 0, %s183
      %s200 = sphi 0, %s184
      %s206 = sphi 0, %s208
      %s209 = sphi 0, %s206
      %s210 = sphi 0, %s209
      %s226 = sphi 0, %s210
    $region4: #{unet_forward.8} parent=1 // loop_header_branch
      %21 = sbr.rel (%p19) target = $region8
    $region5: #{unet_forward.8} parent=1 // loop_body
      %s23 = ssub.s32 %s18, 1
      %s24 = ssub.s32 %s18, 2
      %s25 = sadd.s32 %s18, 1
      %s26 = ssub.s32 %s18, %s25
      %p27 = scmp.eq.s32.totalorder %s26, 0
      %s29 = sadd.s32 %s28, 1
      %s30 = scalar_select %p27, %s28, %s29
      %p33 = pneg %p27
      %p34 = scmp.eq.s32.totalorder %s18, 1
      %p35 = por %p33, %p34
      %p36 = scmp.ne.s32.totalorder %s28, %s31
      %p37 = scmp.eq.s32.totalorder %s18, 0
      %p38 = por %p36, %p37
      %p39 = scmp.ne.s32.totalorder %s28, %s31
      %p40 = scmp.eq.s32.totalorder %s23, 1
      %p41 = por %p39, %p40
      %p42 = scmp.ne.s32.totalorder %s31, %s32
      %p43 = scmp.eq.s32.totalorder %s23, 0
      %p44 = por %p42, %p43
      %p45 = scmp.ne.s32.totalorder %s31, %s32
      %p46 = scmp.eq.s32.totalorder %s24, 1
      %p47 = por %p45, %p46
      %p49 = scmp.ne.s32.totalorder %s32, %s48
      %p50 = scmp.eq.s32.totalorder %s24, 0
      %p51 = por %p49, %p50
      %s53 = sadd.s32 %s52, 1
      %p56 = scmp.eq.s32.totalorder %s18, 1
      %p57 = scmp.ne.s32.totalorder %s52, %s54
      %p58 = scmp.eq.s32.totalorder %s18, 0
      %p59 = por %p57, %p58
      %p60 = scmp.ne.s32.totalorder %s52, %s54
      %p61 = scmp.eq.s32.totalorder %s23, 1
      %p62 = por %p60, %p61
      %p63 = scmp.ne.s32.totalorder %s54, %s55
      %p64 = scmp.eq.s32.totalorder %s23, 0
      %p65 = por %p63, %p64
      %p66 = scmp.ne.s32.totalorder %s54, %s55
      %p67 = scmp.eq.s32.totalorder %s24, 1
      %p68 = por %p66, %p67
      %p70 = scmp.ne.s32.totalorder %s55, %s69
      %p71 = scmp.eq.s32.totalorder %s24, 0
      %p72 = por %p70, %p71
      %s74 = sadd.s32 %s73, 1
      %p77 = scmp.eq.s32.totalorder %s18, 1
      %p78 = scmp.ne.s32.totalorder %s73, %s75
      %p79 = scmp.eq.s32.totalorder %s18, 0
      %p80 = por %p78, %p79
      %p81 = scmp.ne.s32.totalorder %s73, %s75
      %p82 = scmp.eq.s32.totalorder %s23, 1
      %p83 = por %p81, %p82
      %p84 = scmp.ne.s32.totalorder %s75, %s76
      %p85 = scmp.eq.s32.totalorder %s23, 0
      %p86 = por %p84, %p85
      %p87 = scmp.ne.s32.totalorder %s75, %s76
      %p88 = scmp.eq.s32.totalorder %s24, 1
      %p89 = por %p87, %p88
      %p91 = scmp.ne.s32.totalorder %s76, %s90
      %p92 = scmp.eq.s32.totalorder %s24, 0
      %p93 = por %p91, %p92
      %s95 = sadd.s32 %s94, 1
      %p98 = scmp.eq.s32.totalorder %s18, 1
      %p99 = scmp.ne.s32.totalorder %s94, %s96
      %p100 = scmp.eq.s32.totalorder %s18, 0
      %p101 = por %p99, %p100
      %p102 = scmp.ne.s32.totalorder %s94, %s96
      %p103 = scmp.eq.s32.totalorder %s23, 1
      %p104 = por %p102, %p103
      %p105 = scmp.ne.s32.totalorder %s96, %s97
      %p106 = scmp.eq.s32.totalorder %s23, 0
      %p107 = por %p105, %p106
      %p108 = scmp.ne.s32.totalorder %s96, %s97
      %p109 = scmp.eq.s32.totalorder %s24, 1
      %p110 = por %p108, %p109
      %p112 = scmp.ne.s32.totalorder %s97, %s111
      %p113 = scmp.eq.s32.totalorder %s24, 0
      %p114 = por %p112, %p113
      %s116 = sadd.s32 %s115, 1
      %p119 = scmp.eq.s32.totalorder %s18, 1
      %p120 = scmp.ne.s32.totalorder %s115, %s117
      %p121 = scmp.eq.s32.totalorder %s18, 0
      %p122 = por %p120, %p121
      %p123 = scmp.ne.s32.totalorder %s115, %s117
      %p124 = scmp.eq.s32.totalorder %s23, 1
      %p125 = por %p123, %p124
      %p126 = scmp.ne.s32.totalorder %s117, %s118
      %p127 = scmp.eq.s32.totalorder %s23, 0
      %p128 = por %p126, %p127
      %p129 = scmp.ne.s32.totalorder %s117, %s118
      %p130 = scmp.eq.s32.totalorder %s24, 1
      %p131 = por %p129, %p130
      %p133 = scmp.ne.s32.totalorder %s118, %s132
      %p134 = scmp.eq.s32.totalorder %s24, 0
      %p135 = por %p133, %p134
      %s137 = sadd.s32 %s136, 1
      %p140 = scmp.eq.s32.totalorder %s18, 1
      %p141 = scmp.ne.s32.totalorder %s136, %s138
      %p142 = scmp.eq.s32.totalorder %s18, 0
      %p143 = por %p141, %p142
      %p144 = scmp.ne.s32.totalorder %s136, %s138
      %p145 = scmp.eq.s32.totalorder %s23, 1
      %p146 = por %p144, %p145
      %p147 = scmp.ne.s32.totalorder %s138, %s139
      %p148 = scmp.eq.s32.totalorder %s23, 0
      %p149 = por %p147, %p148
      %p150 = scmp.ne.s32.totalorder %s138, %s139
      %p151 = scmp.eq.s32.totalorder %s24, 1
      %p152 = por %p150, %p151
      %p154 = scmp.ne.s32.totalorder %s139, %s153
      %p155 = scmp.eq.s32.totalorder %s24, 0
      %p156 = por %p154, %p155
      %s158 = sadd.s32 %s157, 1
      %p161 = scmp.eq.s32.totalorder %s18, 1
      %p162 = scmp.ne.s32.totalorder %s157, %s159
      %p163 = scmp.eq.s32.totalorder %s18, 0
      %p164 = por %p162, %p163
      %p165 = scmp.ne.s32.totalorder %s157, %s159
      %p166 = scmp.eq.s32.totalorder %s23, 1
      %p167 = por %p165, %p166
      %p168 = scmp.ne.s32.totalorder %s159, %s160
      %p169 = scmp.eq.s32.totalorder %s23, 0
      %p170 = por %p168, %p169
      %p171 = scmp.ne.s32.totalorder %s159, %s160
      %p172 = scmp.eq.s32.totalorder %s24, 1
      %p173 = por %p171, %p172
      %p175 = scmp.ne.s32.totalorder %s160, %s174
      %p176 = scmp.eq.s32.totalorder %s24, 0
      %p177 = por %p175, %p176
      %s178 = ssub.s32 %s18, %s25
      %p179 = scmp.eq.s32.totalorder %s178, 0
      %s181 = sadd.s32 %s180, 1
      %s182 = scalar_select %p179, %s180, %s181
      %p185 = pneg %p179
      %p186 = scmp.eq.s32.totalorder %s18, 1
      %p187 = por %p185, %p186
      %p188 = scmp.ne.s32.totalorder %s180, %s183
      %p189 = scmp.eq.s32.totalorder %s18, 0
      %p190 = por %p188, %p189
      %p191 = scmp.ne.s32.totalorder %s180, %s183
      %p192 = scmp.eq.s32.totalorder %s23, 1
      %p193 = por %p191, %p192
      %p194 = scmp.ne.s32.totalorder %s183, %s184
      %p195 = scmp.eq.s32.totalorder %s23, 0
      %p196 = por %p194, %p195
      %p197 = scmp.ne.s32.totalorder %s183, %s184
      %p198 = scmp.eq.s32.totalorder %s24, 1
      %p199 = por %p197, %p198
      %p201 = scmp.ne.s32.totalorder %s184, %s200
      %p202 = scmp.eq.s32.totalorder %s24, 0
      %p203 = por %p201, %p202
      %s204 = ssub.s32 %s18, %s25
      %p205 = scmp.eq.s32.totalorder %s204, 0
      %s207 = sadd.s32 %s206, 1
      %s208 = scalar_select %p205, %s206, %s207
      %p211 = pneg %p205
      %p212 = scmp.eq.s32.totalorder %s18, 1
      %p213 = por %p211, %p212
      %p214 = scmp.ne.s32.totalorder %s206, %s209
      %p215 = scmp.eq.s32.totalorder %s18, 0
      %p216 = por %p214, %p215
      %p217 = scmp.ne.s32.totalorder %s206, %s209
      %p218 = scmp.eq.s32.totalorder %s23, 1
      %p219 = por %p217, %p218
      %p220 = scmp.ne.s32.totalorder %s209, %s210
      %p221 = scmp.eq.s32.totalorder %s23, 0
      %p222 = por %p220, %p221
      %p223 = scmp.ne.s32.totalorder %s209, %s210
      %p224 = scmp.eq.s32.totalorder %s24, 1
      %p225 = por %p223, %p224
      %p227 = scmp.ne.s32.totalorder %s210, %s226
      %p228 = scmp.eq.s32.totalorder %s24, 0
      %p229 = por %p227, %p228
      %p230 = scmp.le.s32.totalorder 1, %s18
      %p231 = scmp.lt.s32.totalorder %s18, 3
      %p232 = pnand %p230, %p231
      %p233 = pneg %p232
      // Predicated region
      $region9: #{unet_forward.8} parent=5 // pred_check
        _
      $region10: #{unet_forward.8} parent=5 // pred_check_branch
        %235 = sbr.rel (%p232) target = $region12
      $region11: #{unet_forward.8} parent=5 // pred_region
        %s236 = ssub.s32 %s18, 1
        // Predicated region
        $region13: #{unet_forward.8} parent=11 // pred_check
          %p237 = pneg %p65
        $region14: #{unet_forward.8} parent=11 // pred_check_branch
          %239 = sbr.rel (%p237) target = $region16
        $region15: #{unet_forward.8} parent=11 // pred_region
          _
        $region16: #{unet_forward.8} parent=11 // pred_fallthru
          _
        // Predicated region
        $region17: #{unet_forward.8} parent=11 // pred_check
          %p240 = pneg %p86
        $region18: #{unet_forward.8} parent=11 // pred_check_branch
          %242 = sbr.rel (%p240) target = $region20
        $region19: #{unet_forward.8} parent=11 // pred_region
          _
        $region20: #{unet_forward.8} parent=11 // pred_fallthru
          _
        // Predicated region
        $region21: #{unet_forward.8} parent=11 // pred_check
          %p243 = pneg %p107
        $region22: #{unet_forward.8} parent=11 // pred_check_branch
          %245 = sbr.rel (%p243) target = $region24
        $region23: #{unet_forward.8} parent=11 // pred_region
          _
        $region24: #{unet_forward.8} parent=11 // pred_fallthru
          _
        // Predicated region
        $region25: #{unet_forward.8} parent=11 // pred_check
          %p246 = pneg %p128
        $region26: #{unet_forward.8} parent=11 // pred_check_branch
          %248 = sbr.rel (%p246) target = $region28
        $region27: #{unet_forward.8} parent=11 // pred_region
          _
        $region28: #{unet_forward.8} parent=11 // pred_fallthru
          _
        // Predicated region
        $region29: #{unet_forward.8} parent=11 // pred_check
          %p249 = pneg %p149
        $region30: #{unet_forward.8} parent=11 // pred_check_branch
          %251 = sbr.rel (%p249) target = $region32
        $region31: #{unet_forward.8} parent=11 // pred_region
          _
        $region32: #{unet_forward.8} parent=11 // pred_fallthru
          _
        // Predicated region
        $region33: #{unet_forward.8} parent=11 // pred_check
          %p252 = pneg %p170
        $region34: #{unet_forward.8} parent=11 // pred_check_branch
          %254 = sbr.rel (%p252) target = $region36
        $region35: #{unet_forward.8} parent=11 // pred_region
          _
        $region36: #{unet_forward.8} parent=11 // pred_fallthru
          _
      $region12: #{unet_forward.8} parent=5 // pred_fallthru
        _
      %p255 = scmp.lt.s32.totalorder %s18, 2
      // Predicated region
      $region37: #{unet_forward.8} parent=5 // pred_check
        %p256 = pneg %p255
      $region38: #{unet_forward.8} parent=5 // pred_check_branch
        %258 = sbr.rel (%p256) target = $region40
      $region39: #{unet_forward.8} parent=5 // pred_region
        // Predicated region
        $region41: #{unet_forward.8} parent=39 // pred_check
          %p259 = pneg %p38
        $region42: #{unet_forward.8} parent=39 // pred_check_branch
          %261 = sbr.rel (%p259) target = $region44
        $region43: #{unet_forward.8} parent=39 // pred_region
          %p262 = scmp.lt.s32.totalorder %s18, 1
          %s263 = scalar_select %p262, %s18, 1
          %s264 = smul.addr %s263, 24
          %s265 = smul.addr %s264, 8
          %s266 = scalar_lea.vmem %s0, %s265
        $region44: #{unet_forward.8} parent=39 // pred_fallthru
          _
      $region40: #{unet_forward.8} parent=5 // pred_fallthru
        _
      %p267 = scmp.le.s32.totalorder 1, %s18
      %p268 = scmp.lt.s32.totalorder %s18, 3
      %p269 = pnand %p267, %p268
      %p270 = pneg %p269
      // Predicated region
      $region45: #{unet_forward.8} parent=5 // pred_check
        _
      $region46: #{unet_forward.8} parent=5 // pred_check_branch
        %272 = sbr.rel (%p269) target = $region48
      $region47: #{unet_forward.8} parent=5 // pred_region
        %s273 = ssub.s32 %s18, 1
        %p274 = scmp.lt.s32.totalorder %s23, 1
        %s275 = scalar_select %p274, %s23, 1
        %s276 = smul.addr %s275, 24
        %s277 = smul.addr %s276, 8
        %s278 = scalar_lea.vmem %s0, %s277
        %p279 = pneg %p44
        %p280 = pneg %p41
        %p281 = pneg %p65
        %p282 = pneg %p62
        %p283 = pneg %p86
        %p284 = pneg %p83
        %p285 = pneg %p107
        %p286 = pneg %p104
        %p287 = pneg %p128
        %p288 = pneg %p125
        %p289 = pneg %p149
        %p290 = pneg %p146
        %p291 = pneg %p170
        %p292 = pneg %p167
        %p293 = pneg %p196
        %p294 = pneg %p193
        %s295 = sand.u32 %s183, 1
        %s296 = scalar_lea.sflag [#allocation3], %s295
        %s297 = sand.u32 %s183, 1
        %s298 = smul.addr %s297, 32
        %s299 = scalar_lea.vmem [#allocation2], %s298
        %p300 = pneg %p222
        %p301 = pneg %p219
        %p302 = scmp.lt.s32.totalorder %s23, 1
        %s303 = scalar_select %p302, %s23, 1
        %s304 = smul.addr %s303, 8
        %s305 = smul.addr %s304, 8
        %s306 = scalar_lea.vmem %s8, %s305
        %p307 = scmp.lt.s32.totalorder %s23, 1
        %s308 = scalar_select %p307, %s23, 1
        %s309 = smul.addr %s308, 24
        %s310 = smul.addr %s309, 8
        %s311 = scalar_lea.vmem %s0, %s310
        %p312 = scmp.lt.s32.totalorder %s23, 1
        %s313 = scalar_select %p312, %s23, 1
        %s314 = smul.addr %s313, 8
        %s315 = smul.addr %s314, 8
        %s316 = scalar_lea.vmem %s8, %s315
        %v318 = vld [vmem:[%s311] sm:$0xff]
        %v319 = vld [vmem:[%s311 + $0x8] sm:$0xff]
        %v320 = vld [vmem:[%s311 + $0x10] sm:$0xff]
        %v321 = vld [vmem:[%s311 + $0x18] sm:$0xff]
        %v322 = vld [vmem:[%s311 + $0x20] sm:$0xff]
        %v323 = vld [vmem:[%s311 + $0x28] sm:$0xff]
        %v324 = vld [vmem:[%s311 + $0x30] sm:$0xff]
        %v325 = vld [vmem:[%s311 + $0x38] sm:$0xff]
        %v326 = vld [vmem:[%s311 + $0x40] sm:$0xff]
        %v327 = vld [vmem:[%s311 + $0x48] sm:$0xff]
        %v328 = vld [vmem:[%s311 + $0x50] sm:$0xff]
        %v329 = vld [vmem:[%s311 + $0x58] sm:$0xff]
        %v330 = vld [vmem:[%s311 + $0x60] sm:$0xff]
        %v331 = vld [vmem:[%s311 + $0x68] sm:$0xff]
        %v332 = vld [vmem:[%s311 + $0x70] sm:$0xff]
        %v333 = vld [vmem:[%s311 + $0x78] sm:$0xff]
        %v334 = vld [vmem:[%s311 + $0x80] sm:$0xff]
        %v335 = vld [vmem:[%s311 + $0x88] sm:$0xff]
        %v336 = vld [vmem:[%s311 + $0x90] sm:$0xff]
        %v337 = vld [vmem:[%s311 + $0x98] sm:$0xff]
        %v338 = vld [vmem:[%s311 + $0xa0] sm:$0xff]
        %v339 = vld [vmem:[%s311 + $0xa8] sm:$0xff]
        %v340 = vld [vmem:[%s311 + $0xb0] sm:$0xff]
        %v341 = vld [vmem:[%s311 + $0xb8] sm:$0xff]
        %v342 = vld [vmem:[%s1] sm:$0xff]
        %v343 = vld [vmem:[%s1 + $0x8] sm:$0xff]
        %v344 = vld [vmem:[%s1 + $0x10] sm:$0xf]
        %v345 = vld [vmem:[%s1 + $0x14] sm:$0xff]
        %v346 = vld [vmem:[%s1 + $0x1c] sm:$0xff]
        %v347 = vld [vmem:[%s1 + $0x24] sm:$0xf]
        %v348 = vld [vmem:[%s1 + $0x28] sm:$0xff]
        %v349 = vld [vmem:[%s1 + $0x30] sm:$0xff]
        %v350 = vld [vmem:[%s1 + $0x38] sm:$0xf]
        %v351 = vld [vmem:[%s1 + $0x3c] sm:$0xff]
        %v352 = vld [vmem:[%s1 + $0x44] sm:$0xff]
        %v353 = vld [vmem:[%s1 + $0x4c] sm:$0xf]
        %v354 = vld [vmem:[%s2] sm:$0xff]
        %v355 = vld [vmem:[%s2 + $0x8] sm:$0xff]
        %v356 = vld [vmem:[%s2 + $0x10] sm:$0xff]
        %v357 = vld [vmem:[%s2 + $0x18] sm:$0xff]
        %382 = vrot.lane.b32.xlu0 %v318, 127
        %v383 = vpop.permute.xlu0 %382
        %384 = vrot.lane.b32.xlu0 %v319, 127
        %v385 = vpop.permute.xlu0 %384
        %386 = vrot.lane.b32.xlu0 %v320, 127
        %v387 = vpop.permute.xlu0 %386
        %388 = vrot.lane.b32.xlu0 %v321, 127
        %v389 = vpop.permute.xlu0 %388
        %390 = vrot.lane.b32.xlu0 %v322, 127
        %v391 = vpop.permute.xlu0 %390
        %392 = vrot.lane.b32.xlu0 %v323, 127
        %v393 = vpop.permute.xlu0 %392
        %394 = vrot.lane.b32.xlu0 %v324, 127
        %v395 = vpop.permute.xlu0 %394
        %396 = vrot.lane.b32.xlu0 %v325, 127
        %v397 = vpop.permute.xlu0 %396
        %398 = vrot.lane.b32.xlu0 %v326, 127
        %v399 = vpop.permute.xlu0 %398
        %400 = vrot.lane.b32.xlu0 %v327, 127
        %v401 = vpop.permute.xlu0 %400
        %402 = vrot.lane.b32.xlu0 %v328, 127
        %v403 = vpop.permute.xlu0 %402
        %404 = vrot.lane.b32.xlu0 %v329, 127
        %v405 = vpop.permute.xlu0 %404
        %406 = vrot.lane.b32.xlu0 %v330, 127
        %v407 = vpop.permute.xlu0 %406
        %408 = vrot.lane.b32.xlu0 %v331, 127
        %v409 = vpop.permute.xlu0 %408
        %410 = vrot.lane.b32.xlu0 %v332, 127
        %v411 = vpop.permute.xlu0 %410
        %412 = vrot.lane.b32.xlu0 %v333, 127
        %v413 = vpop.permute.xlu0 %412
        %414 = vrot.lane.b32.xlu0 %v334, 127
        %v415 = vpop.permute.xlu0 %414
        %416 = vrot.lane.b32.xlu0 %v335, 127
        %v417 = vpop.permute.xlu0 %416
        %418 = vrot.lane.b32.xlu0 %v336, 127
        %v419 = vpop.permute.xlu0 %418
        %420 = vrot.lane.b32.xlu0 %v337, 127
        %v421 = vpop.permute.xlu0 %420
        %422 = vrot.lane.b32.xlu0 %v338, 127
        %v423 = vpop.permute.xlu0 %422
        %424 = vrot.lane.b32.xlu0 %v339, 127
        %v425 = vpop.permute.xlu0 %424
        %426 = vrot.lane.b32.xlu0 %v340, 127
        %v427 = vpop.permute.xlu0 %426
        %428 = vrot.lane.b32.xlu0 %v341, 127
        %v429 = vpop.permute.xlu0 %428
        %vm430 = vcmask 1039360
        %v431 = vsel %vm430, %v383, %v385
        %v432 = vsel %vm430, %v385, %v387
        %v433 = vsel %vm430, %v389, %v391
        %v434 = vsel %vm430, %v391, %v393
        %v435 = vsel %vm430, %v395, %v397
        %v436 = vsel %vm430, %v397, %v399
        %v437 = vsel %vm430, %v401, %v403
        %v438 = vsel %vm430, %v403, %v405
        %v439 = vsel %vm430, %v407, %v409
        %v440 = vsel %vm430, %v409, %v411
        %v441 = vsel %vm430, %v413, %v415
        %v442 = vsel %vm430, %v415, %v417
        %v443 = vsel %vm430, %v419, %v421
        %v444 = vsel %vm430, %v421, %v423
        %v445 = vsel %vm430, %v425, %v427
        %v446 = vsel %vm430, %v427, %v429
        %463 = vrot.lane.b32.xlu0 %v318, 126
        %v464 = vpop.permute.xlu0 %463
        %465 = vrot.lane.b32.xlu0 %v319, 126
        %v466 = vpop.permute.xlu0 %465
        %467 = vrot.lane.b32.xlu0 %v320, 126
        %v468 = vpop.permute.xlu0 %467
        %469 = vrot.lane.b32.xlu0 %v321, 126
        %v470 = vpop.permute.xlu0 %469
        %471 = vrot.lane.b32.xlu0 %v322, 126
        %v472 = vpop.permute.xlu0 %471
        %473 = vrot.lane.b32.xlu0 %v323, 126
        %v474 = vpop.permute.xlu0 %473
        %475 = vrot.lane.b32.xlu0 %v324, 126
        %v476 = vpop.permute.xlu0 %475
        %477 = vrot.lane.b32.xlu0 %v325, 126
        %v478 = vpop.permute.xlu0 %477
        %479 = vrot.lane.b32.xlu0 %v326, 126
        %v480 = vpop.permute.xlu0 %479
        %481 = vrot.lane.b32.xlu0 %v327, 126
        %v482 = vpop.permute.xlu0 %481
        %483 = vrot.lane.b32.xlu0 %v328, 126
        %v484 = vpop.permute.xlu0 %483
        %485 = vrot.lane.b32.xlu0 %v329, 126
        %v486 = vpop.permute.xlu0 %485
        %487 = vrot.lane.b32.xlu0 %v330, 126
        %v488 = vpop.permute.xlu0 %487
        %489 = vrot.lane.b32.xlu0 %v331, 126
        %v490 = vpop.permute.xlu0 %489
        %491 = vrot.lane.b32.xlu0 %v332, 126
        %v492 = vpop.permute.xlu0 %491
        %493 = vrot.lane.b32.xlu0 %v333, 126
        %v494 = vpop.permute.xlu0 %493
        %495 = vrot.lane.b32.xlu0 %v334, 126
        %v496 = vpop.permute.xlu0 %495
        %497 = vrot.lane.b32.xlu0 %v335, 126
        %v498 = vpop.permute.xlu0 %497
        %499 = vrot.lane.b32.xlu0 %v336, 126
        %v500 = vpop.permute.xlu0 %499
        %501 = vrot.lane.b32.xlu0 %v337, 126
        %v502 = vpop.permute.xlu0 %501
        %503 = vrot.lane.b32.xlu0 %v338, 126
        %v504 = vpop.permute.xlu0 %503
        %505 = vrot.lane.b32.xlu0 %v339, 126
        %v506 = vpop.permute.xlu0 %505
        %507 = vrot.lane.b32.xlu0 %v340, 126
        %v508 = vpop.permute.xlu0 %507
        %509 = vrot.lane.b32.xlu0 %v341, 126
        %v510 = vpop.permute.xlu0 %509
        %vm511 = vcmask 1031168
        %v512 = vsel %vm511, %v464, %v466
        %v513 = vsel %vm511, %v466, %v468
        %v514 = vsel %vm511, %v470, %v472
        %v515 = vsel %vm511, %v472, %v474
        %v516 = vsel %vm511, %v476, %v478
        %v517 = vsel %vm511, %v478, %v480
        %v518 = vsel %vm511, %v482, %v484
        %v519 = vsel %vm511, %v484, %v486
        %v520 = vsel %vm511, %v488, %v490
        %v521 = vsel %vm511, %v490, %v492
        %v522 = vsel %vm511, %v494, %v496
        %v523 = vsel %vm511, %v496, %v498
        %v524 = vsel %vm511, %v500, %v502
        %v525 = vsel %vm511, %v502, %v504
        %v526 = vsel %vm511, %v506, %v508
        %v527 = vsel %vm511, %v508, %v510
        %544 = vrot.lane.b32.xlu0 %v318, 118
        %v545 = vpop.permute.xlu0 %544
        %546 = vrot.lane.b32.xlu0 %v319, 118
        %v547 = vpop.permute.xlu0 %546
        %548 = vrot.lane.b32.xlu0 %v320, 118
        %v549 = vpop.permute.xlu0 %548
        %550 = vrot.lane.b32.xlu0 %v321, 118
        %v551 = vpop.permute.xlu0 %550
        %552 = vrot.lane.b32.xlu0 %v322, 118
        %v553 = vpop.permute.xlu0 %552
        %554 = vrot.lane.b32.xlu0 %v323, 118
        %v555 = vpop.permute.xlu0 %554
        %556 = vrot.lane.b32.xlu0 %v324, 118
        %v557 = vpop.permute.xlu0 %556
        %558 = vrot.lane.b32.xlu0 %v325, 118
        %v559 = vpop.permute.xlu0 %558
        %560 = vrot.lane.b32.xlu0 %v326, 118
        %v561 = vpop.permute.xlu0 %560
        %562 = vrot.lane.b32.xlu0 %v327, 118
        %v563 = vpop.permute.xlu0 %562
        %564 = vrot.lane.b32.xlu0 %v328, 118
        %v565 = vpop.permute.xlu0 %564
        %566 = vrot.lane.b32.xlu0 %v329, 118
        %v567 = vpop.permute.xlu0 %566
        %568 = vrot.lane.b32.xlu0 %v330, 118
        %v569 = vpop.permute.xlu0 %568
        %570 = vrot.lane.b32.xlu0 %v331, 118
        %v571 = vpop.permute.xlu0 %570
        %572 = vrot.lane.b32.xlu0 %v332, 118
        %v573 = vpop.permute.xlu0 %572
        %574 = vrot.lane.b32.xlu0 %v333, 118
        %v575 = vpop.permute.xlu0 %574
        %576 = vrot.lane.b32.xlu0 %v334, 118
        %v577 = vpop.permute.xlu0 %576
        %578 = vrot.lane.b32.xlu0 %v335, 118
        %v579 = vpop.permute.xlu0 %578
        %580 = vrot.lane.b32.xlu0 %v336, 118
        %v581 = vpop.permute.xlu0 %580
        %582 = vrot.lane.b32.xlu0 %v337, 118
        %v583 = vpop.permute.xlu0 %582
        %584 = vrot.lane.b32.xlu0 %v338, 118
        %v585 = vpop.permute.xlu0 %584
        %586 = vrot.lane.b32.xlu0 %v339, 118
        %v587 = vpop.permute.xlu0 %586
        %588 = vrot.lane.b32.xlu0 %v340, 118
        %v589 = vpop.permute.xlu0 %588
        %590 = vrot.lane.b32.xlu0 %v341, 118
        %v591 = vpop.permute.xlu0 %590
        %vm592 = vcmask 965632
        %v593 = vsel %vm592, %v545, %v547
        %v594 = vsel %vm592, %v547, %v549
        %v595 = vsel %vm592, %v551, %v553
        %v596 = vsel %vm592, %v553, %v555
        %v597 = vsel %vm592, %v557, %v559
        %v598 = vsel %vm592, %v559, %v561
        %v599 = vsel %vm592, %v563, %v565
        %v600 = vsel %vm592, %v565, %v567
        %v601 = vsel %vm592, %v569, %v571
        %v602 = vsel %vm592, %v571, %v573
        %v603 = vsel %vm592, %v575, %v577
        %v604 = vsel %vm592, %v577, %v579
        %v605 = vsel %vm592, %v581, %v583
        %v606 = vsel %vm592, %v583, %v585
        %v607 = vsel %vm592, %v587, %v589
        %v608 = vsel %vm592, %v589, %v591
        %625 = vrot.lane.b32.xlu0 %v318, 117
        %v626 = vpop.permute.xlu0 %625
        %627 = vrot.lane.b32.xlu0 %v319, 117
        %v628 = vpop.permute.xlu0 %627
        %629 = vrot.lane.b32.xlu0 %v320, 117
        %v630 = vpop.permute.xlu0 %629
        %631 = vrot.lane.b32.xlu0 %v321, 117
        %v632 = vpop.permute.xlu0 %631
        %633 = vrot.lane.b32.xlu0 %v322, 117
        %v634 = vpop.permute.xlu0 %633
        %635 = vrot.lane.b32.xlu0 %v323, 117
        %v636 = vpop.permute.xlu0 %635
        %637 = vrot.lane.b32.xlu0 %v324, 117
        %v638 = vpop.permute.xlu0 %637
        %639 = vrot.lane.b32.xlu0 %v325, 117
        %v640 = vpop.permute.xlu0 %639
        %641 = vrot.lane.b32.xlu0 %v326, 117
        %v642 = vpop.permute.xlu0 %641
        %643 = vrot.lane.b32.xlu0 %v327, 117
        %v644 = vpop.permute.xlu0 %643
        %645 = vrot.lane.b32.xlu0 %v328, 117
        %v646 = vpop.permute.xlu0 %645
        %647 = vrot.lane.b32.xlu0 %v329, 117
        %v648 = vpop.permute.xlu0 %647
        %649 = vrot.lane.b32.xlu0 %v330, 117
        %v650 = vpop.permute.xlu0 %649
        %651 = vrot.lane.b32.xlu0 %v331, 117
        %v652 = vpop.permute.xlu0 %651
        %653 = vrot.lane.b32.xlu0 %v332, 117
        %v654 = vpop.permute.xlu0 %653
        %655 = vrot.lane.b32.xlu0 %v333, 117
        %v656 = vpop.permute.xlu0 %655
        %657 = vrot.lane.b32.xlu0 %v334, 117
        %v658 = vpop.permute.xlu0 %657
        %659 = vrot.lane.b32.xlu0 %v335, 117
        %v660 = vpop.permute.xlu0 %659
        %661 = vrot.lane.b32.xlu0 %v336, 117
        %v662 = vpop.permute.xlu0 %661
        %663 = vrot.lane.b32.xlu0 %v337, 117
        %v664 = vpop.permute.xlu0 %663
        %665 = vrot.lane.b32.xlu0 %v338, 117
        %v666 = vpop.permute.xlu0 %665
        %667 = vrot.lane.b32.xlu0 %v339, 117
        %v668 = vpop.permute.xlu0 %667
        %669 = vrot.lane.b32.xlu0 %v340, 117
        %v670 = vpop.permute.xlu0 %669
        %671 = vrot.lane.b32.xlu0 %v341, 117
        %v672 = vpop.permute.xlu0 %671
        %vm673 = vcmask 957440
        %v674 = vsel %vm673, %v626, %v628
        %v675 = vsel %vm673, %v628, %v630
        %v676 = vsel %vm673, %v632, %v634
        %v677 = vsel %vm673, %v634, %v636
        %v678 = vsel %vm673, %v638, %v640
        %v679 = vsel %vm673, %v640, %v642
        %v680 = vsel %vm673, %v644, %v646
        %v681 = vsel %vm673, %v646, %v648
        %v682 = vsel %vm673, %v650, %v652
        %v683 = vsel %vm673, %v652, %v654
        %v684 = vsel %vm673, %v656, %v658
        %v685 = vsel %vm673, %v658, %v660
        %v686 = vsel %vm673, %v662, %v664
        %v687 = vsel %vm673, %v664, %v666
        %v688 = vsel %vm673, %v668, %v670
        %v689 = vsel %vm673, %v670, %v672
        %706 = vrot.lane.b32.xlu0 %v318, 116
        %v707 = vpop.permute.xlu0 %706
        %708 = vrot.lane.b32.xlu0 %v319, 116
        %v709 = vpop.permute.xlu0 %708
        %710 = vrot.lane.b32.xlu0 %v320, 116
        %v711 = vpop.permute.xlu0 %710
        %712 = vrot.lane.b32.xlu0 %v321, 116
        %v713 = vpop.permute.xlu0 %712
        %714 = vrot.lane.b32.xlu0 %v322, 116
        %v715 = vpop.permute.xlu0 %714
        %716 = vrot.lane.b32.xlu0 %v323, 116
        %v717 = vpop.permute.xlu0 %716
        %718 = vrot.lane.b32.xlu0 %v324, 116
        %v719 = vpop.permute.xlu0 %718
        %720 = vrot.lane.b32.xlu0 %v325, 116
        %v721 = vpop.permute.xlu0 %720
        %722 = vrot.lane.b32.xlu0 %v326, 116
        %v723 = vpop.permute.xlu0 %722
        %724 = vrot.lane.b32.xlu0 %v327, 116
        %v725 = vpop.permute.xlu0 %724
        %726 = vrot.lane.b32.xlu0 %v328, 116
        %v727 = vpop.permute.xlu0 %726
        %728 = vrot.lane.b32.xlu0 %v329, 116
        %v729 = vpop.permute.xlu0 %728
        %730 = vrot.lane.b32.xlu0 %v330, 116
        %v731 = vpop.permute.xlu0 %730
        %732 = vrot.lane.b32.xlu0 %v331, 116
        %v733 = vpop.permute.xlu0 %732
        %734 = vrot.lane.b32.xlu0 %v332, 116
        %v735 = vpop.permute.xlu0 %734
        %736 = vrot.lane.b32.xlu0 %v333, 116
        %v737 = vpop.permute.xlu0 %736
        %738 = vrot.lane.b32.xlu0 %v334, 116
        %v739 = vpop.permute.xlu0 %738
        %740 = vrot.lane.b32.xlu0 %v335, 116
        %v741 = vpop.permute.xlu0 %740
        %742 = vrot.lane.b32.xlu0 %v336, 116
        %v743 = vpop.permute.xlu0 %742
        %744 = vrot.lane.b32.xlu0 %v337, 116
        %v745 = vpop.permute.xlu0 %744
        %746 = vrot.lane.b32.xlu0 %v338, 116
        %v747 = vpop.permute.xlu0 %746
        %748 = vrot.lane.b32.xlu0 %v339, 116
        %v749 = vpop.permute.xlu0 %748
        %750 = vrot.lane.b32.xlu0 %v340, 116
        %v751 = vpop.permute.xlu0 %750
        %752 = vrot.lane.b32.xlu0 %v341, 116
        %v753 = vpop.permute.xlu0 %752
        %vm754 = vcmask 949248
        %v755 = vsel %vm754, %v707, %v709
        %v756 = vsel %vm754, %v709, %v711
        %v757 = vsel %vm754, %v713, %v715
        %v758 = vsel %vm754, %v715, %v717
        %v759 = vsel %vm754, %v719, %v721
        %v760 = vsel %vm754, %v721, %v723
        %v761 = vsel %vm754, %v725, %v727
        %v762 = vsel %vm754, %v727, %v729
        %v763 = vsel %vm754, %v731, %v733
        %v764 = vsel %vm754, %v733, %v735
        %v765 = vsel %vm754, %v737, %v739
        %v766 = vsel %vm754, %v739, %v741
        %v767 = vsel %vm754, %v743, %v745
        %v768 = vsel %vm754, %v745, %v747
        %v769 = vsel %vm754, %v749, %v751
        %v770 = vsel %vm754, %v751, %v753
        %787 = vrot.lane.b32.xlu0 %v318, 108
        %v788 = vpop.permute.xlu0 %787
        %789 = vrot.lane.b32.xlu0 %v319, 108
        %v790 = vpop.permute.xlu0 %789
        %791 = vrot.lane.b32.xlu0 %v320, 108
        %v792 = vpop.permute.xlu0 %791
        %793 = vrot.lane.b32.xlu0 %v321, 108
        %v794 = vpop.permute.xlu0 %793
        %795 = vrot.lane.b32.xlu0 %v322, 108
        %v796 = vpop.permute.xlu0 %795
        %797 = vrot.lane.b32.xlu0 %v323, 108
        %v798 = vpop.permute.xlu0 %797
        %799 = vrot.lane.b32.xlu0 %v324, 108
        %v800 = vpop.permute.xlu0 %799
        %801 = vrot.lane.b32.xlu0 %v325, 108
        %v802 = vpop.permute.xlu0 %801
        %803 = vrot.lane.b32.xlu0 %v326, 108
        %v804 = vpop.permute.xlu0 %803
        %805 = vrot.lane.b32.xlu0 %v327, 108
        %v806 = vpop.permute.xlu0 %805
        %807 = vrot.lane.b32.xlu0 %v328, 108
        %v808 = vpop.permute.xlu0 %807
        %809 = vrot.lane.b32.xlu0 %v329, 108
        %v810 = vpop.permute.xlu0 %809
        %811 = vrot.lane.b32.xlu0 %v330, 108
        %v812 = vpop.permute.xlu0 %811
        %813 = vrot.lane.b32.xlu0 %v331, 108
        %v814 = vpop.permute.xlu0 %813
        %815 = vrot.lane.b32.xlu0 %v332, 108
        %v816 = vpop.permute.xlu0 %815
        %817 = vrot.lane.b32.xlu0 %v333, 108
        %v818 = vpop.permute.xlu0 %817
        %819 = vrot.lane.b32.xlu0 %v334, 108
        %v820 = vpop.permute.xlu0 %819
        %821 = vrot.lane.b32.xlu0 %v335, 108
        %v822 = vpop.permute.xlu0 %821
        %823 = vrot.lane.b32.xlu0 %v336, 108
        %v824 = vpop.permute.xlu0 %823
        %825 = vrot.lane.b32.xlu0 %v337, 108
        %v826 = vpop.permute.xlu0 %825
        %827 = vrot.lane.b32.xlu0 %v338, 108
        %v828 = vpop.permute.xlu0 %827
        %829 = vrot.lane.b32.xlu0 %v339, 108
        %v830 = vpop.permute.xlu0 %829
        %831 = vrot.lane.b32.xlu0 %v340, 108
        %v832 = vpop.permute.xlu0 %831
        %833 = vrot.lane.b32.xlu0 %v341, 108
        %v834 = vpop.permute.xlu0 %833
        %vm835 = vcmask 883712
        %v836 = vsel %vm835, %v788, %v790
        %v837 = vsel %vm835, %v790, %v792
        %v838 = vsel %vm835, %v794, %v796
        %v839 = vsel %vm835, %v796, %v798
        %v840 = vsel %vm835, %v800, %v802
        %v841 = vsel %vm835, %v802, %v804
        %v842 = vsel %vm835, %v806, %v808
        %v843 = vsel %vm835, %v808, %v810
        %v844 = vsel %vm835, %v812, %v814
        %v845 = vsel %vm835, %v814, %v816
        %v846 = vsel %vm835, %v818, %v820
        %v847 = vsel %vm835, %v820, %v822
        %v848 = vsel %vm835, %v824, %v826
        %v849 = vsel %vm835, %v826, %v828
        %v850 = vsel %vm835, %v830, %v832
        %v851 = vsel %vm835, %v832, %v834
        %868 = vrot.lane.b32.xlu0 %v318, 107
        %v869 = vpop.permute.xlu0 %868
        %870 = vrot.lane.b32.xlu0 %v319, 107
        %v871 = vpop.permute.xlu0 %870
        %872 = vrot.lane.b32.xlu0 %v320, 107
        %v873 = vpop.permute.xlu0 %872
        %874 = vrot.lane.b32.xlu0 %v321, 107
        %v875 = vpop.permute.xlu0 %874
        %876 = vrot.lane.b32.xlu0 %v322, 107
        %v877 = vpop.permute.xlu0 %876
        %878 = vrot.lane.b32.xlu0 %v323, 107
        %v879 = vpop.permute.xlu0 %878
        %880 = vrot.lane.b32.xlu0 %v324, 107
        %v881 = vpop.permute.xlu0 %880
        %882 = vrot.lane.b32.xlu0 %v325, 107
        %v883 = vpop.permute.xlu0 %882
        %884 = vrot.lane.b32.xlu0 %v326, 107
        %v885 = vpop.permute.xlu0 %884
        %886 = vrot.lane.b32.xlu0 %v327, 107
        %v887 = vpop.permute.xlu0 %886
        %888 = vrot.lane.b32.xlu0 %v328, 107
        %v889 = vpop.permute.xlu0 %888
        %890 = vrot.lane.b32.xlu0 %v329, 107
        %v891 = vpop.permute.xlu0 %890
        %892 = vrot.lane.b32.xlu0 %v330, 107
        %v893 = vpop.permute.xlu0 %892
        %894 = vrot.lane.b32.xlu0 %v331, 107
        %v895 = vpop.permute.xlu0 %894
        %896 = vrot.lane.b32.xlu0 %v332, 107
        %v897 = vpop.permute.xlu0 %896
        %898 = vrot.lane.b32.xlu0 %v333, 107
        %v899 = vpop.permute.xlu0 %898
        %900 = vrot.lane.b32.xlu0 %v334, 107
        %v901 = vpop.permute.xlu0 %900
        %902 = vrot.lane.b32.xlu0 %v335, 107
        %v903 = vpop.permute.xlu0 %902
        %904 = vrot.lane.b32.xlu0 %v336, 107
        %v905 = vpop.permute.xlu0 %904
        %906 = vrot.lane.b32.xlu0 %v337, 107
        %v907 = vpop.permute.xlu0 %906
        %908 = vrot.lane.b32.xlu0 %v338, 107
        %v909 = vpop.permute.xlu0 %908
        %910 = vrot.lane.b32.xlu0 %v339, 107
        %v911 = vpop.permute.xlu0 %910
        %912 = vrot.lane.b32.xlu0 %v340, 107
        %v913 = vpop.permute.xlu0 %912
        %914 = vrot.lane.b32.xlu0 %v341, 107
        %v915 = vpop.permute.xlu0 %914
        %vm916 = vcmask 875520
        %v917 = vsel %vm916, %v869, %v871
        %v918 = vsel %vm916, %v871, %v873
        %v919 = vsel %vm916, %v875, %v877
        %v920 = vsel %vm916, %v877, %v879
        %v921 = vsel %vm916, %v881, %v883
        %v922 = vsel %vm916, %v883, %v885
        %v923 = vsel %vm916, %v887, %v889
        %v924 = vsel %vm916, %v889, %v891
        %v925 = vsel %vm916, %v893, %v895
        %v926 = vsel %vm916, %v895, %v897
        %v927 = vsel %vm916, %v899, %v901
        %v928 = vsel %vm916, %v901, %v903
        %v929 = vsel %vm916, %v905, %v907
        %v930 = vsel %vm916, %v907, %v909
        %v931 = vsel %vm916, %v911, %v913
        %v932 = vsel %vm916, %v913, %v915
        %949 = vrot.lane.b32.xlu0 %v318, 106
        %v950 = vpop.permute.xlu0 %949
        %951 = vrot.lane.b32.xlu0 %v319, 106
        %v952 = vpop.permute.xlu0 %951
        %953 = vrot.lane.b32.xlu0 %v320, 106
        %v954 = vpop.permute.xlu0 %953
        %955 = vrot.lane.b32.xlu0 %v321, 106
        %v956 = vpop.permute.xlu0 %955
        %957 = vrot.lane.b32.xlu0 %v322, 106
        %v958 = vpop.permute.xlu0 %957
        %959 = vrot.lane.b32.xlu0 %v323, 106
        %v960 = vpop.permute.xlu0 %959
        %961 = vrot.lane.b32.xlu0 %v324, 106
        %v962 = vpop.permute.xlu0 %961
        %963 = vrot.lane.b32.xlu0 %v325, 106
        %v964 = vpop.permute.xlu0 %963
        %965 = vrot.lane.b32.xlu0 %v326, 106
        %v966 = vpop.permute.xlu0 %965
        %967 = vrot.lane.b32.xlu0 %v327, 106
        %v968 = vpop.permute.xlu0 %967
        %969 = vrot.lane.b32.xlu0 %v328, 106
        %v970 = vpop.permute.xlu0 %969
        %971 = vrot.lane.b32.xlu0 %v329, 106
        %v972 = vpop.permute.xlu0 %971
        %973 = vrot.lane.b32.xlu0 %v330, 106
        %v974 = vpop.permute.xlu0 %973
        %975 = vrot.lane.b32.xlu0 %v331, 106
        %v976 = vpop.permute.xlu0 %975
        %977 = vrot.lane.b32.xlu0 %v332, 106
        %v978 = vpop.permute.xlu0 %977
        %979 = vrot.lane.b32.xlu0 %v333, 106
        %v980 = vpop.permute.xlu0 %979
        %981 = vrot.lane.b32.xlu0 %v334, 106
        %v982 = vpop.permute.xlu0 %981
        %983 = vrot.lane.b32.xlu0 %v335, 106
        %v984 = vpop.permute.xlu0 %983
        %985 = vrot.lane.b32.xlu0 %v336, 106
        %v986 = vpop.permute.xlu0 %985
        %987 = vrot.lane.b32.xlu0 %v337, 106
        %v988 = vpop.permute.xlu0 %987
        %989 = vrot.lane.b32.xlu0 %v338, 106
        %v990 = vpop.permute.xlu0 %989
        %991 = vrot.lane.b32.xlu0 %v339, 106
        %v992 = vpop.permute.xlu0 %991
        %993 = vrot.lane.b32.xlu0 %v340, 106
        %v994 = vpop.permute.xlu0 %993
        %995 = vrot.lane.b32.xlu0 %v341, 106
        %v996 = vpop.permute.xlu0 %995
        %vm997 = vcmask 867328
        %v998 = vsel %vm997, %v950, %v952
        %v999 = vsel %vm997, %v952, %v954
        %v1000 = vsel %vm997, %v956, %v958
        %v1001 = vsel %vm997, %v958, %v960
        %v1002 = vsel %vm997, %v962, %v964
        %v1003 = vsel %vm997, %v964, %v966
        %v1004 = vsel %vm997, %v968, %v970
        %v1005 = vsel %vm997, %v970, %v972
        %v1006 = vsel %vm997, %v974, %v976
        %v1007 = vsel %vm997, %v976, %v978
        %v1008 = vsel %vm997, %v980, %v982
        %v1009 = vsel %vm997, %v982, %v984
        %v1010 = vsel %vm997, %v986, %v988
        %v1011 = vsel %vm997, %v988, %v990
        %v1012 = vsel %vm997, %v992, %v994
        %v1013 = vsel %vm997, %v994, %v996
        %v1030 = vpack.c.bf16 %v321, %v318
        %v1031 = vpack.c.bf16 %v322, %v319
        %v1032 = vpack.c.bf16 %v327, %v324
        %v1033 = vpack.c.bf16 %v328, %v325
        %v1034 = vpack.c.bf16 %v333, %v330
        %v1035 = vpack.c.bf16 %v334, %v331
        %v1036 = vpack.c.bf16 %v339, %v336
        %v1037 = vpack.c.bf16 %v340, %v337
        %v1038 = vpack.c.bf16 %v433, %v431
        %v1039 = vpack.c.bf16 %v434, %v432
        %v1040 = vpack.c.bf16 %v437, %v435
        %v1041 = vpack.c.bf16 %v438, %v436
        %v1042 = vpack.c.bf16 %v441, %v439
        %v1043 = vpack.c.bf16 %v442, %v440
        %v1044 = vpack.c.bf16 %v445, %v443
        %v1045 = vpack.c.bf16 %v446, %v444
        %v1046 = vpack.c.bf16 %v514, %v512
        %v1047 = vpack.c.bf16 %v515, %v513
        %v1048 = vpack.c.bf16 %v518, %v516
        %v1049 = vpack.c.bf16 %v519, %v517
        %v1050 = vpack.c.bf16 %v522, %v520
        %v1051 = vpack.c.bf16 %v523, %v521
        %v1052 = vpack.c.bf16 %v526, %v524
        %v1053 = vpack.c.bf16 %v527, %v525
        %v1054 = vpack.c.bf16 %v595, %v593
        %v1055 = vpack.c.bf16 %v596, %v594
        %v1056 = vpack.c.bf16 %v599, %v597
        %v1057 = vpack.c.bf16 %v600, %v598
        %v1058 = vpack.c.bf16 %v603, %v601
        %v1059 = vpack.c.bf16 %v604, %v602
        %v1060 = vpack.c.bf16 %v607, %v605
        %v1061 = vpack.c.bf16 %v608, %v606
        %v1062 = vpack.c.bf16 %v676, %v674
        %v1063 = vpack.c.bf16 %v677, %v675
        %v1064 = vpack.c.bf16 %v680, %v678
        %v1065 = vpack.c.bf16 %v681, %v679
        %v1066 = vpack.c.bf16 %v684, %v682
        %v1067 = vpack.c.bf16 %v685, %v683
        %v1068 = vpack.c.bf16 %v688, %v686
        %v1069 = vpack.c.bf16 %v689, %v687
        %v1070 = vpack.c.bf16 %v757, %v755
        %v1071 = vpack.c.bf16 %v758, %v756
        %v1072 = vpack.c.bf16 %v761, %v759
        %v1073 = vpack.c.bf16 %v762, %v760
        %v1074 = vpack.c.bf16 %v765, %v763
        %v1075 = vpack.c.bf16 %v766, %v764
        %v1076 = vpack.c.bf16 %v769, %v767
        %v1077 = vpack.c.bf16 %v770, %v768
        %v1078 = vpack.c.bf16 %v838, %v836
        %v1079 = vpack.c.bf16 %v839, %v837
        %v1080 = vpack.c.bf16 %v842, %v840
        %v1081 = vpack.c.bf16 %v843, %v841
        %v1082 = vpack.c.bf16 %v846, %v844
        %v1083 = vpack.c.bf16 %v847, %v845
        %v1084 = vpack.c.bf16 %v850, %v848
        %v1085 = vpack.c.bf16 %v851, %v849
        %v1086 = vpack.c.bf16 %v919, %v917
        %v1087 = vpack.c.bf16 %v920, %v918
        %v1088 = vpack.c.bf16 %v923, %v921
        %v1089 = vpack.c.bf16 %v924, %v922
        %v1090 = vpack.c.bf16 %v927, %v925
        %v1091 = vpack.c.bf16 %v928, %v926
        %v1092 = vpack.c.bf16 %v931, %v929
        %v1093 = vpack.c.bf16 %v932, %v930
        %v1094 = vpack.c.bf16 %v1000, %v998
        %v1095 = vpack.c.bf16 %v1001, %v999
        %v1096 = vpack.c.bf16 %v1004, %v1002
        %v1097 = vpack.c.bf16 %v1005, %v1003
        %v1098 = vpack.c.bf16 %v1008, %v1006
        %v1099 = vpack.c.bf16 %v1009, %v1007
        %v1100 = vpack.c.bf16 %v1012, %v1010
        %v1101 = vpack.c.bf16 %v1013, %v1011
        %1103 = vset.pattern.permute.xlu0 0
        %1104 = vperm.xlu0 %1103, %v354
        %v1105 = vpop.permute.xlu0 %1104
        %1108 = vset.pattern.permute.xlu0 0
        %1109 = vperm.xlu0 %1108, %v355
        %v1110 = vpop.permute.xlu0 %1109
        %1113 = vset.pattern.permute.xlu0 0
        %1114 = vperm.xlu0 %1113, %v356
        %v1115 = vpop.permute.xlu0 %1114
        %1118 = vset.pattern.permute.xlu0 0
        %1119 = vperm.xlu0 %1118, %v357
        %v1120 = vpop.permute.xlu0 %1119
        %v1134 = vunpack.c.l.b16 %v342
        %v1135 = vunpack.c.h.b16 %v342
        %v1136 = vunpack.c.l.b16 %v343
        %v1137 = vunpack.c.h.b16 %v343
        %v1138 = vunpack.c.l.b16 %v344
        %v1139 = vunpack.c.l.b16 %v345
        %v1140 = vunpack.c.h.b16 %v345
        %v1141 = vunpack.c.l.b16 %v346
        %v1142 = vunpack.c.h.b16 %v346
        %v1143 = vunpack.c.l.b16 %v347
        %v1144 = vunpack.c.l.b16 %v348
        %v1145 = vunpack.c.h.b16 %v348
        %v1146 = vunpack.c.l.b16 %v349
        %v1147 = vunpack.c.h.b16 %v349
        %v1148 = vunpack.c.l.b16 %v350
        %v1149 = vunpack.c.l.b16 %v351
        %v1150 = vunpack.c.h.b16 %v351
        %v1151 = vunpack.c.l.b16 %v352
        %v1152 = vunpack.c.h.b16 %v352
        %v1153 = vunpack.c.l.b16 %v353
        %v1154 = vpack.c.b16 %v1139, %v1134
        %v1155 = vpack.c.b16 %v1140, %v1135
        %v1156 = vpack.c.b16 %v1141, %v1136
        %v1157 = vpack.c.b16 %v1142, %v1137
        %v1158 = vpack.c.b16 %v1143, %v1138
        %v1159 = vpack.c.b16 %v1149, %v1144
        %v1160 = vpack.c.b16 %v1150, %v1145
        %v1161 = vpack.c.b16 %v1151, %v1146
        %v1162 = vpack.c.b16 %v1152, %v1147
        %v1163 = vpack.c.b16 %v1153, %v1148
        %vm1172 = vcmask 523264
        %v1174 = vsel %vm1172, %v1158, 0
        %v1177 = vsel %vm1172, %v1163, 0
        %1179 = vmatprep.subr.bf16.mxu0 %v1031
        %1180 = vmatpush1.bf16.msra.mxu0 %v1030
        %1181 = vmatprep.subr.bf16.mxu0 %v1033
        %1182 = vmatpush1.bf16.msra.mxu0 %v1032
        %1183 = vmatprep.subr.bf16.mxu0 %v1035
        %1184 = vmatpush1.bf16.msra.mxu0 %v1034
        %1185 = vmatprep.subr.bf16.mxu0 %v1037
        %1186 = vmatpush1.bf16.msra.mxu0 %v1036
        %1187 = vmatprep.subr.bf16.mxu0 %v1039
        %1188 = vmatpush1.bf16.msra.mxu0 %v1038
        %1189 = vmatprep.subr.bf16.mxu0 %v1041
        %1190 = vmatpush1.bf16.msra.mxu0 %v1040
        %1191 = vmatprep.subr.bf16.mxu0 %v1043
        %1192 = vmatpush1.bf16.msra.mxu0 %v1042
        %1193 = vmatprep.subr.bf16.mxu0 %v1045
        %1194 = vmatpush1.bf16.msra.mxu0 %v1044
        %1195 = vmatprep.subr.bf16.mxu0 %v1047
        %1196 = vmatpush1.bf16.msra.mxu0 %v1046
        %1197 = vmatprep.subr.bf16.mxu0 %v1049
        %1198 = vmatpush1.bf16.msra.mxu0 %v1048
        %1199 = vmatprep.subr.bf16.mxu0 %v1051
        %1200 = vmatpush1.bf16.msra.mxu0 %v1050
        %1201 = vmatprep.subr.bf16.mxu0 %v1053
        %1202 = vmatpush1.bf16.msra.mxu0 %v1052
        %1203 = vmatprep.subr.bf16.mxu0 %v1055
        %1204 = vmatpush1.bf16.msra.mxu0 %v1054
        %1205 = vmatprep.subr.bf16.mxu0 %v1057
        %1206 = vmatpush1.bf16.msra.mxu0 %v1056
        %1207 = vmatprep.subr.bf16.mxu0 %v1059
        %1208 = vmatpush1.bf16.msra.mxu0 %v1058
        %1209 = vmatprep.subr.bf16.mxu0 %v1061
        %1210 = vmatpush1.bf16.msra.mxu0 %v1060
        %1211 = vmatprep.mubr.bf16.mxu0 %v1155
        %1212 = vmatmul.mubr.bf16.gmra.mrb[0].mxu0 %v1154
        %v1213 = vpop.f32.mrb[0].mxu0
        %v1214 = vadd.f32 %v1105, %v1213
        %v1215 = vpop.f32.mrb[0].mxu0
        %v1216 = vadd.f32 %v1105, %v1215
        %v1217 = vpop.f32.mrb[0].mxu0
        %v1218 = vadd.f32 %v1110, %v1217
        %v1219 = vpop.f32.mrb[0].mxu0
        %v1220 = vadd.f32 %v1110, %v1219
        %1221 = vmatprep.mubr.bf16.mxu0 %v1160
        %1222 = vmatmul.mubr.bf16.gmra.mrb[0].mxu0 %v1159
        %v1223 = vpop.f32.mrb[0].mxu0
        %v1224 = vadd.f32 %v1115, %v1223
        %v1225 = vpop.f32.mrb[0].mxu0
        %v1226 = vadd.f32 %v1115, %v1225
        %v1227 = vpop.f32.mrb[0].mxu0
        %v1228 = vadd.f32 %v1120, %v1227
        %v1229 = vpop.f32.mrb[0].mxu0
        %v1230 = vadd.f32 %v1120, %v1229
        %1231 = vdwg.mxu0
        %1232 = vmatprep.subr.bf16.mxu0 %v1063
        %1233 = vmatpush1.bf16.msra.mxu0 %v1062
        %1234 = vmatprep.subr.bf16.mxu0 %v1065
        %1235 = vmatpush1.bf16.msra.mxu0 %v1064
        %1236 = vmatprep.subr.bf16.mxu0 %v1067
        %1237 = vmatpush1.bf16.msra.mxu0 %v1066
        %1238 = vmatprep.subr.bf16.mxu0 %v1069
        %1239 = vmatpush1.bf16.msra.mxu0 %v1068
        %1240 = vmatprep.subr.bf16.mxu0 %v1071
        %1241 = vmatpush1.bf16.msra.mxu0 %v1070
        %1242 = vmatprep.subr.bf16.mxu0 %v1073
        %1243 = vmatpush1.bf16.msra.mxu0 %v1072
        %1244 = vmatprep.subr.bf16.mxu0 %v1075
        %1245 = vmatpush1.bf16.msra.mxu0 %v1074
        %1246 = vmatprep.subr.bf16.mxu0 %v1077
        %1247 = vmatpush1.bf16.msra.mxu0 %v1076
        %1248 = vmatprep.subr.bf16.mxu0 %v1079
        %1249 = vmatpush1.bf16.msra.mxu0 %v1078
        %1250 = vmatprep.subr.bf16.mxu0 %v1081
        %1251 = vmatpush1.bf16.msra.mxu0 %v1080
        %1252 = vmatprep.subr.bf16.mxu0 %v1083
        %1253 = vmatpush1.bf16.msra.mxu0 %v1082
        %1254 = vmatprep.subr.bf16.mxu0 %v1085
        %1255 = vmatpush1.bf16.msra.mxu0 %v1084
        %1256 = vmatprep.subr.bf16.mxu0 %v1087
        %1257 = vmatpush1.bf16.msra.mxu0 %v1086
        %1258 = vmatprep.subr.bf16.mxu0 %v1089
        %1259 = vmatpush1.bf16.msra.mxu0 %v1088
        %1260 = vmatprep.subr.bf16.mxu0 %v1091
        %1261 = vmatpush1.bf16.msra.mxu0 %v1090
        %1262 = vmatprep.subr.bf16.mxu0 %v1093
        %1263 = vmatpush1.bf16.msra.mxu0 %v1092
        %1264 = vmatprep.mubr.bf16.mxu0 %v1157
        %1265 = vmatmul.mubr.bf16.gmra.mrb[0].mxu0 %v1156
        %v1266 = vpop.f32.mrb[0].mxu0
        %v1267 = vadd.f32 %v1214, %v1266
        %v1268 = vpop.f32.mrb[0].mxu0
        %v1269 = vadd.f32 %v1216, %v1268
        %v1270 = vpop.f32.mrb[0].mxu0
        %v1271 = vadd.f32 %v1218, %v1270
        %v1272 = vpop.f32.mrb[0].mxu0
        %v1273 = vadd.f32 %v1220, %v1272
        %1274 = vmatprep.mubr.bf16.mxu0 %v1162
        %1275 = vmatmul.mubr.bf16.gmra.mrb[0].mxu0 %v1161
        %v1276 = vpop.f32.mrb[0].mxu0
        %v1277 = vadd.f32 %v1224, %v1276
        %v1278 = vpop.f32.mrb[0].mxu0
        %v1279 = vadd.f32 %v1226, %v1278
        %v1280 = vpop.f32.mrb[0].mxu0
        %v1281 = vadd.f32 %v1228, %v1280
        %v1282 = vpop.f32.mrb[0].mxu0
        %v1283 = vadd.f32 %v1230, %v1282
        %1284 = vdwg.mxu0
        %1285 = vmatprep.subr.bf16.mxu0 %v1095
        %1286 = vmatpush1.bf16.msra.mxu0 %v1094
        %1287 = vmatprep.subr.bf16.mxu0 %v1097
        %1288 = vmatpush1.bf16.msra.mxu0 %v1096
        %1289 = vmatprep.subr.bf16.mxu0 %v1099
        %1290 = vmatpush1.bf16.msra.mxu0 %v1098
        %1291 = vmatprep.subr.bf16.mxu0 %v1101
        %1292 = vmatpush1.bf16.msra.mxu0 %v1100
        %1293 = vmatprep.subr.bf16.mxu0 0
        %1294 = vmatpush1.bf16.msra.mxu0 0
        %1295 = vmatprep.subr.bf16.mxu0 0
        %1296 = vmatpush1.bf16.msra.mxu0 0
        %1297 = vmatprep.subr.bf16.mxu0 0
        %1298 = vmatpush1.bf16.msra.mxu0 0
        %1299 = vmatprep.subr.bf16.mxu0 0
        %1300 = vmatpush1.bf16.msra.mxu0 0
        %1301 = vmatprep.subr.bf16.mxu0 0
        %1302 = vmatpush1.bf16.msra.mxu0 0
        %1303 = vmatprep.subr.bf16.mxu0 0
        %1304 = vmatpush1.bf16.msra.mxu0 0
        %1305 = vmatprep.subr.bf16.mxu0 0
        %1306 = vmatpush1.bf16.msra.mxu0 0
        %1307 = vmatprep.subr.bf16.mxu0 0
        %1308 = vmatpush1.bf16.msra.mxu0 0
        %1309 = vmatprep.subr.bf16.mxu0 0
        %1310 = vmatpush1.bf16.msra.mxu0 0
        %1311 = vmatprep.subr.bf16.mxu0 0
        %1312 = vmatpush1.bf16.msra.mxu0 0
        %1313 = vmatprep.subr.bf16.mxu0 0
        %1314 = vmatpush1.bf16.msra.mxu0 0
        %1315 = vmatprep.subr.bf16.mxu0 0
        %1316 = vmatpush1.bf16.msra.mxu0 0
        %1317 = vmatprep.mubr.bf16.mxu0 0
        %1318 = vmatmul.mubr.bf16.gmra.mrb[0].mxu0 %v1174
        %v1319 = vpop.f32.mrb[0].mxu0
        %v1320 = vadd.f32 %v1267, %v1319
        %v1321 = vpop.f32.mrb[0].mxu0
        %v1322 = vadd.f32 %v1269, %v1321
        %v1323 = vpop.f32.mrb[0].mxu0
        %v1324 = vadd.f32 %v1271, %v1323
        %v1325 = vpop.f32.mrb[0].mxu0
        %v1326 = vadd.f32 %v1273, %v1325
        %1327 = vmatprep.mubr.bf16.mxu0 0
        %1328 = vmatmul.mubr.bf16.gmra.mrb[0].mxu0 %v1177
        %v1329 = vpop.f32.mrb[0].mxu0
        %v1330 = vadd.f32 %v1277, %v1329
        %v1331 = vpop.f32.mrb[0].mxu0
        %v1332 = vadd.f32 %v1279, %v1331
        %v1333 = vpop.f32.mrb[0].mxu0
        %v1334 = vadd.f32 %v1281, %v1333
        %v1335 = vpop.f32.mrb[0].mxu0
        %v1336 = vadd.f32 %v1283, %v1335
        %1337 = vdwg.mxu0
        %v1338 = vmax.f32 %v1320, 0.0
        %v1339 = vmax.f32 %v1322, 0.0
        %v1340 = vmax.f32 %v1324, 0.0
        %v1341 = vmax.f32 %v1326, 0.0
        %v1342 = vmax.f32 %v1330, 0.0
        %v1343 = vmax.f32 %v1332, 0.0
        %v1344 = vmax.f32 %v1334, 0.0
        %v1345 = vmax.f32 %v1336, 0.0
        %v1346 = vld [vmem:[%s3] sm:$0xff]
        %v1347 = vld [vmem:[%s3 + $0x8] sm:$0xf]
        %v1348 = vld [vmem:[%s3 + $0xc] sm:$0xff]
        %v1349 = vld [vmem:[%s3 + $0x14] sm:$0xf]
        %v1350 = vld [vmem:[%s3 + $0x18] sm:$0xff]
        %v1351 = vld [vmem:[%s3 + $0x20] sm:$0xf]
        %v1352 = vld [vmem:[%s3 + $0x24] sm:$0xff]
        %v1353 = vld [vmem:[%s3 + $0x2c] sm:$0xf]
        %v1354 = vld [vmem:[%s4] sm:$0xff]
        %v1355 = vld [vmem:[%s4 + $0x8] sm:$0xff]
        %v1356 = vld [vmem:[%s4 + $0x10] sm:$0xff]
        %v1357 = vld [vmem:[%s4 + $0x18] sm:$0xff]
        %1366 = vrot.lane.b32.xlu0 %v1338, 127
        %v1367 = vpop.permute.xlu0 %1366
        %1368 = vrot.lane.b32.xlu0 %v1339, 127
        %v1369 = vpop.permute.xlu0 %1368
        %1370 = vrot.lane.b32.xlu0 %v1340, 127
        %v1371 = vpop.permute.xlu0 %1370
        %1372 = vrot.lane.b32.xlu0 %v1341, 127
        %v1373 = vpop.permute.xlu0 %1372
        %1374 = vrot.lane.b32.xlu0 %v1342, 127
        %v1375 = vpop.permute.xlu0 %1374
        %1376 = vrot.lane.b32.xlu0 %v1343, 127
        %v1377 = vpop.permute.xlu0 %1376
        %1378 = vrot.lane.b32.xlu0 %v1344, 127
        %v1379 = vpop.permute.xlu0 %1378
        %1380 = vrot.lane.b32.xlu0 %v1345, 127
        %v1381 = vpop.permute.xlu0 %1380
        %v1382 = vsel %vm430, %v1367, %v1369
        %v1383 = vsel %vm430, %v1371, %v1373
        %v1384 = vsel %vm430, %v1375, %v1377
        %v1385 = vsel %vm430, %v1379, %v1381
        %1390 = vrot.lane.b32.xlu0 %v1338, 126
        %v1391 = vpop.permute.xlu0 %1390
        %1392 = vrot.lane.b32.xlu0 %v1339, 126
        %v1393 = vpop.permute.xlu0 %1392
        %1394 = vrot.lane.b32.xlu0 %v1340, 126
        %v1395 = vpop.permute.xlu0 %1394
        %1396 = vrot.lane.b32.xlu0 %v1341, 126
        %v1397 = vpop.permute.xlu0 %1396
        %1398 = vrot.lane.b32.xlu0 %v1342, 126
        %v1399 = vpop.permute.xlu0 %1398
        %1400 = vrot.lane.b32.xlu0 %v1343, 126
        %v1401 = vpop.permute.xlu0 %1400
        %1402 = vrot.lane.b32.xlu0 %v1344, 126
        %v1403 = vpop.permute.xlu0 %1402
        %1404 = vrot.lane.b32.xlu0 %v1345, 126
        %v1405 = vpop.permute.xlu0 %1404
        %v1406 = vsel %vm511, %v1391, %v1393
        %v1407 = vsel %vm511, %v1395, %v1397
        %v1408 = vsel %vm511, %v1399, %v1401
        %v1409 = vsel %vm511, %v1403, %v1405
        %1414 = vrot.lane.b32.xlu0 %v1338, 118
        %v1415 = vpop.permute.xlu0 %1414
        %1416 = vrot.lane.b32.xlu0 %v1339, 118
        %v1417 = vpop.permute.xlu0 %1416
        %1418 = vrot.lane.b32.xlu0 %v1340, 118
        %v1419 = vpop.permute.xlu0 %1418
        %1420 = vrot.lane.b32.xlu0 %v1341, 118
        %v1421 = vpop.permute.xlu0 %1420
        %1422 = vrot.lane.b32.xlu0 %v1342, 118
        %v1423 = vpop.permute.xlu0 %1422
        %1424 = vrot.lane.b32.xlu0 %v1343, 118
        %v1425 = vpop.permute.xlu0 %1424
        %1426 = vrot.lane.b32.xlu0 %v1344, 118
        %v1427 = vpop.permute.xlu0 %1426
        %1428 = vrot.lane.b32.xlu0 %v1345, 118
        %v1429 = vpop.permute.xlu0 %1428
        %v1430 = vsel %vm592, %v1415, %v1417
        %v1431 = vsel %vm592, %v1419, %v1421
        %v1432 = vsel %vm592, %v1423, %v1425
        %v1433 = vsel %vm592, %v1427, %v1429
        %1438 = vrot.lane.b32.xlu0 %v1338, 117
        %v1439 = vpop.permute.xlu0 %1438
        %1440 = vrot.lane.b32.xlu0 %v1339, 117
        %v1441 = vpop.permute.xlu0 %1440
        %1442 = vrot.lane.b32.xlu0 %v1340, 117
        %v1443 = vpop.permute.xlu0 %1442
        %1444 = vrot.lane.b32.xlu0 %v1341, 117
        %v1445 = vpop.permute.xlu0 %1444
        %1446 = vrot.lane.b32.xlu0 %v1342, 117
        %v1447 = vpop.permute.xlu0 %1446
        %1448 = vrot.lane.b32.xlu0 %v1343, 117
        %v1449 = vpop.permute.xlu0 %1448
        %1450 = vrot.lane.b32.xlu0 %v1344, 117
        %v1451 = vpop.permute.xlu0 %1450
        %1452 = vrot.lane.b32.xlu0 %v1345, 117
        %v1453 = vpop.permute.xlu0 %1452
        %v1454 = vsel %vm673, %v1439, %v1441
        %v1455 = vsel %vm673, %v1443, %v1445
        %v1456 = vsel %vm673, %v1447, %v1449
        %v1457 = vsel %vm673, %v1451, %v1453
        %1462 = vrot.lane.b32.xlu0 %v1338, 116
        %v1463 = vpop.permute.xlu0 %1462
        %1464 = vrot.lane.b32.xlu0 %v1339, 116
        %v1465 = vpop.permute.xlu0 %1464
        %1466 = vrot.lane.b32.xlu0 %v1340, 116
        %v1467 = vpop.permute.xlu0 %1466
        %1468 = vrot.lane.b32.xlu0 %v1341, 116
        %v1469 = vpop.permute.xlu0 %1468
        %1470 = vrot.lane.b32.xlu0 %v1342, 116
        %v1471 = vpop.permute.xlu0 %1470
        %1472 = vrot.lane.b32.xlu0 %v1343, 116
        %v1473 = vpop.permute.xlu0 %1472
        %1474 = vrot.lane.b32.xlu0 %v1344, 116
        %v1475 = vpop.permute.xlu0 %1474
        %1476 = vrot.lane.b32.xlu0 %v1345, 116
        %v1477 = vpop.permute.xlu0 %1476
        %v1478 = vsel %vm754, %v1463, %v1465
        %v1479 = vsel %vm754, %v1467, %v1469
        %v1480 = vsel %vm754, %v1471, %v1473
        %v1481 = vsel %vm754, %v1475, %v1477
        %1486 = vrot.lane.b32.xlu0 %v1338, 108
        %v1487 = vpop.permute.xlu0 %1486
        %1488 = vrot.lane.b32.xlu0 %v1339, 108
        %v1489 = vpop.permute.xlu0 %1488
        %1490 = vrot.lane.b32.xlu0 %v1340, 108
        %v1491 = vpop.permute.xlu0 %1490
        %1492 = vrot.lane.b32.xlu0 %v1341, 108
        %v1493 = vpop.permute.xlu0 %1492
        %1494 = vrot.lane.b32.xlu0 %v1342, 108
        %v1495 = vpop.permute.xlu0 %1494
        %1496 = vrot.lane.b32.xlu0 %v1343, 108
        %v1497 = vpop.permute.xlu0 %1496
        %1498 = vrot.lane.b32.xlu0 %v1344, 108
        %v1499 = vpop.permute.xlu0 %1498
        %1500 = vrot.lane.b32.xlu0 %v1345, 108
        %v1501 = vpop.permute.xlu0 %1500
        %v1502 = vsel %vm835, %v1487, %v1489
        %v1503 = vsel %vm835, %v1491, %v1493
        %v1504 = vsel %vm835, %v1495, %v1497
        %v1505 = vsel %vm835, %v1499, %v1501
        %1510 = vrot.lane.b32.xlu0 %v1338, 107
        %v1511 = vpop.permute.xlu0 %1510
        %1512 = vrot.lane.b32.xlu0 %v1339, 107
        %v1513 = vpop.permute.xlu0 %1512
        %1514 = vrot.lane.b32.xlu0 %v1340, 107
        %v1515 = vpop.permute.xlu0 %1514
        %1516 = vrot.lane.b32.xlu0 %v1341, 107
        %v1517 = vpop.permute.xlu0 %1516
        %1518 = vrot.lane.b32.xlu0 %v1342, 107
        %v1519 = vpop.permute.xlu0 %1518
        %1520 = vrot.lane.b32.xlu0 %v1343, 107
        %v1521 = vpop.permute.xlu0 %1520
        %1522 = vrot.lane.b32.xlu0 %v1344, 107
        %v1523 = vpop.permute.xlu0 %1522
        %1524 = vrot.lane.b32.xlu0 %v1345, 107
        %v1525 = vpop.permute.xlu0 %1524
        %v1526 = vsel %vm916, %v1511, %v1513
        %v1527 = vsel %vm916, %v1515, %v1517
        %v1528 = vsel %vm916, %v1519, %v1521
        %v1529 = vsel %vm916, %v1523, %v1525
        %1534 = vrot.lane.b32.xlu0 %v1338, 106
        %v1535 = vpop.permute.xlu0 %1534
        %1536 = vrot.lane.b32.xlu0 %v1339, 106
        %v1537 = vpop.permute.xlu0 %1536
        %1538 = vrot.lane.b32.xlu0 %v1340, 106
        %v1539 = vpop.permute.xlu0 %1538
        %1540 = vrot.lane.b32.xlu0 %v1341, 106
        %v1541 = vpop.permute.xlu0 %1540
        %1542 = vrot.lane.b32.xlu0 %v1342, 106
        %v1543 = vpop.permute.xlu0 %1542
        %1544 = vrot.lane.b32.xlu0 %v1343, 106
        %v1545 = vpop.permute.xlu0 %1544
        %1546 = vrot.lane.b32.xlu0 %v1344, 106
        %v1547 = vpop.permute.xlu0 %1546
        %1548 = vrot.lane.b32.xlu0 %v1345, 106
        %v1549 = vpop.permute.xlu0 %1548
        %v1550 = vsel %vm997, %v1535, %v1537
        %v1551 = vsel %vm997, %v1539, %v1541
        %v1552 = vsel %vm997, %v1543, %v1545
        %v1553 = vsel %vm997, %v1547, %v1549
        %v1558 = vpack.c.bf16 %v1340, %v1338
        %v1559 = vpack.c.bf16 %v1344, %v1342
        %v1560 = vpack.c.bf16 %v1383, %v1382
        %v1561 = vpack.c.bf16 %v1385, %v1384
        %v1562 = vpack.c.bf16 %v1407, %v1406
        %v1563 = vpack.c.bf16 %v1409, %v1408
        %v1564 = vpack.c.bf16 %v1431, %v1430
        %v1565 = vpack.c.bf16 %v1433, %v1432
        %v1566 = vpack.c.bf16 %v1455, %v1454
        %v1567 = vpack.c.bf16 %v1457, %v1456
        %v1568 = vpack.c.bf16 %v1479, %v1478
        %v1569 = vpack.c.bf16 %v1481, %v1480
        %v1570 = vpack.c.bf16 %v1503, %v1502
        %v1571 = vpack.c.bf16 %v1505, %v1504
        %v1572 = vpack.c.bf16 %v1527, %v1526
        %v1573 = vpack.c.bf16 %v1529, %v1528
        %v1574 = vpack.c.bf16 %v1551, %v1550
        %v1575 = vpack.c.bf16 %v1553, %v1552
        %1577 = vset.pattern.permute.xlu0 0
        %1578 = vperm.xlu0 %1577, %v1354
        %v1579 = vpop.permute.xlu0 %1578
        %1582 = vset.pattern.permute.xlu0 0
        %1583 = vperm.xlu0 %1582, %v1355
        %v1584 = vpop.permute.xlu0 %1583
        %1587 = vset.pattern.permute.xlu0 0
        %1588 = vperm.xlu0 %1587, %v1356
        %v1589 = vpop.permute.xlu0 %1588
        %1592 = vset.pattern.permute.xlu0 0
        %1593 = vperm.xlu0 %1592, %v1357
        %v1594 = vpop.permute.xlu0 %1593
        %v1604 = vunpack.c.l.b16 %v1346
        %v1605 = vunpack.c.h.b16 %v1346
        %v1606 = vunpack.c.l.b16 %v1347
        %v1607 = vunpack.c.l.b16 %v1348
        %v1608 = vunpack.c.h.b16 %v1348
        %v1609 = vunpack.c.l.b16 %v1349
        %v1610 = vunpack.c.l.b16 %v1350
        %v1611 = vunpack.c.h.b16 %v1350
        %v1612 = vunpack.c.l.b16 %v1351
        %v1613 = vunpack.c.l.b16 %v1352
        %v1614 = vunpack.c.h.b16 %v1352
        %v1615 = vunpack.c.l.b16 %v1353
        %v1616 = vpack.c.b16 %v1607, %v1604
        %v1617 = vpack.c.b16 %v1608, %v1605
        %v1618 = vpack.c.b16 %v1609, %v1606
        %v1619 = vpack.c.b16 %v1613, %v1610
        %v1620 = vpack.c.b16 %v1614, %v1611
        %v1621 = vpack.c.b16 %v1615, %v1612
        %vm1626 = vcmask 261120
        %v1628 = vsel %vm1626, %v1618, 0
        %v1631 = vsel %vm1626, %v1621, 0
        %1633 = vmatprep.subr.bf16.mxu0 0
        %1634 = vmatpush1.bf16.msra.mxu0 %v1558
        %1635 = vmatprep.subr.bf16.mxu0 0
        %1636 = vmatpush1.bf16.msra.mxu0 %v1559
        %1637 = vmatprep.subr.bf16.mxu0 0
        %1638 = vmatpush1.bf16.msra.mxu0 %v1560
        %1639 = vmatprep.subr.bf16.mxu0 0
        %1640 = vmatpush1.bf16.msra.mxu0 %v1561
        %1641 = vmatprep.subr.bf16.mxu0 0
        %1642 = vmatpush1.bf16.msra.mxu0 %v1562
        %1643 = vmatprep.subr.bf16.mxu0 0
        %1644 = vmatpush1.bf16.msra.mxu0 %v1563
        %1645 = vmatprep.subr.bf16.mxu0 0
        %1646 = vmatpush1.bf16.msra.mxu0 %v1564
        %1647 = vmatprep.subr.bf16.mxu0 0
        %1648 = vmatpush1.bf16.msra.mxu0 %v1565
        %1649 = vmatprep.subr.bf16.mxu0 0
        %1650 = vmatpush1.bf16.msra.mxu0 %v1566
        %1651 = vmatprep.subr.bf16.mxu0 0
        %1652 = vmatpush1.bf16.msra.mxu0 %v1567
        %1653 = vmatprep.subr.bf16.mxu0 0
        %1654 = vmatpush1.bf16.msra.mxu0 %v1568
        %1655 = vmatprep.subr.bf16.mxu0 0
        %1656 = vmatpush1.bf16.msra.mxu0 %v1569
        %1657 = vmatprep.subr.bf16.mxu0 0
        %1658 = vmatpush1.bf16.msra.mxu0 %v1570
        %1659 = vmatprep.subr.bf16.mxu0 0
        %1660 = vmatpush1.bf16.msra.mxu0 %v1571
        %1661 = vmatprep.subr.bf16.mxu0 0
        %1662 = vmatpush1.bf16.msra.mxu0 %v1572
        %1663 = vmatprep.subr.bf16.mxu0 0
        %1664 = vmatpush1.bf16.msra.mxu0 %v1573
        %1665 = vmatprep.mubr.bf16.mxu0 %v1617
        %1666 = vmatmul.mubr.bf16.gmra.mrb[0].mxu0 %v1616
        %v1667 = vpop.f32.mrb[0].mxu0
        %v1668 = vadd.f32 %v1579, %v1667
        %v1669 = vpop.f32.mrb[0].mxu0
        %v1670 = vpop.f32.mrb[0].mxu0
        %v1671 = vadd.f32 %v1584, %v1670
        %v1672 = vpop.f32.mrb[0].mxu0
        %1673 = vmatprep.mubr.bf16.mxu0 %v1620
        %1674 = vmatmul.mubr.bf16.gmra.mrb[0].mxu0 %v1619
        %v1675 = vpop.f32.mrb[0].mxu0
        %v1676 = vadd.f32 %v1589, %v1675
        %v1677 = vpop.f32.mrb[0].mxu0
        %v1678 = vpop.f32.mrb[0].mxu0
        %v1679 = vadd.f32 %v1594, %v1678
        %v1680 = vpop.f32.mrb[0].mxu0
        %1681 = vdwg.mxu0
        %1682 = vmatprep.subr.bf16.mxu0 0
        %1683 = vmatpush1.bf16.msra.mxu0 %v1574
        %1684 = vmatprep.subr.bf16.mxu0 0
        %1685 = vmatpush1.bf16.msra.mxu0 %v1575
        %1686 = vmatprep.subr.bf16.mxu0 0
        %1687 = vmatpush1.bf16.msra.mxu0 0
        %1688 = vmatprep.subr.bf16.mxu0 0
        %1689 = vmatpush1.bf16.msra.mxu0 0
        %1690 = vmatprep.subr.bf16.mxu0 0
        %1691 = vmatpush1.bf16.msra.mxu0 0
        %1692 = vmatprep.subr.bf16.mxu0 0
        %1693 = vmatpush1.bf16.msra.mxu0 0
        %1694 = vmatprep.subr.bf16.mxu0 0
        %1695 = vmatpush1.bf16.msra.mxu0 0
        %1696 = vmatprep.subr.bf16.mxu0 0
        %1697 = vmatpush1.bf16.msra.mxu0 0
        %1698 = vmatprep.subr.bf16.mxu0 0
        %1699 = vmatpush1.bf16.msra.mxu0 0
        %1700 = vmatprep.subr.bf16.mxu0 0
        %1701 = vmatpush1.bf16.msra.mxu0 0
        %1702 = vmatprep.subr.bf16.mxu0 0
        %1703 = vmatpush1.bf16.msra.mxu0 0
        %1704 = vmatprep.subr.bf16.mxu0 0
        %1705 = vmatpush1.bf16.msra.mxu0 0
        %1706 = vmatprep.subr.bf16.mxu0 0
        %1707 = vmatpush1.bf16.msra.mxu0 0
        %1708 = vmatprep.subr.bf16.mxu0 0
        %1709 = vmatpush1.bf16.msra.mxu0 0
        %1710 = vmatprep.subr.bf16.mxu0 0
        %1711 = vmatpush1.bf16.msra.mxu0 0
        %1712 = vmatprep.subr.bf16.mxu0 0
        %1713 = vmatpush1.bf16.msra.mxu0 0
        %1714 = vmatprep.mubr.bf16.mxu0 0
        %1715 = vmatmul.mubr.bf16.gmra.mrb[0].mxu0 %v1628
        %v1716 = vpop.f32.mrb[0].mxu0
        %v1717 = vadd.f32 %v1668, %v1716
        %v1718 = vpop.f32.mrb[0].mxu0
        %v1719 = vpop.f32.mrb[0].mxu0
        %v1720 = vadd.f32 %v1671, %v1719
        %v1721 = vpop.f32.mrb[0].mxu0
        %1722 = vmatprep.mubr.bf16.mxu0 0
        %1723 = vmatmul.mubr.bf16.gmra.mrb[0].mxu0 %v1631
        %v1724 = vpop.f32.mrb[0].mxu0
        %v1725 = vadd.f32 %v1676, %v1724
        %v1726 = vpop.f32.mrb[0].mxu0
        %v1727 = vpop.f32.mrb[0].mxu0
        %v1728 = vadd.f32 %v1679, %v1727
        %v1729 = vpop.f32.mrb[0].mxu0
        %1730 = vdwg.mxu0
        %v1731 = vmax.f32 %v1717, 0.0
        %v1732 = vmax.f32 %v1720, 0.0
        %v1733 = vmax.f32 %v1725, 0.0
        %v1734 = vmax.f32 %v1728, 0.0
        %1735 = vst [vmem:[%s299] sm:$0xff] %v1731
        %1736 = vst [vmem:[%s299 + $0x8] sm:$0xff] %v1732
        %1737 = vst [vmem:[%s299 + $0x10] sm:$0xff] %v1733
        %1738 = vst [vmem:[%s299 + $0x18] sm:$0xff] %v1734
        %v1739 = vld [vmem:[%s5] sm:$0xf]
        %v1740 = vld [vmem:[%s5 + $0x4] sm:$0xf]
        %v1741 = vld [vmem:[%s5 + $0x8] sm:$0xf]
        %v1742 = vld [vmem:[%s5 + $0xc] sm:$0xf]
        %v1743 = vld [vmem:[%s5 + $0x10] sm:$0xf]
        %v1744 = vld [vmem:[%s5 + $0x14] sm:$0xf]
        %v1745 = vld [vmem:[%s5 + $0x18] sm:$0xf]
        %v1746 = vld [vmem:[%s5 + $0x1c] sm:$0xf]
        %v1747 = vpack.c.bf16 %v1732, %v1731
        %v1748 = vpack.c.bf16 %v1734, %v1733
        %v1749 = vld [vmem:[%s6] sm:$0xff]
        %v1750 = vld [vmem:[%s6 + $0x8] sm:$0xff]
        %v1751 = vld [vmem:[%s6 + $0x10] sm:$0xff]
        %v1752 = vld [vmem:[%s6 + $0x18] sm:$0xff]
        %v1753 = vld [vmem:[%s6 + $0x20] sm:$0xff]
        %v1754 = vld [vmem:[%s6 + $0x28] sm:$0xff]
        %v1755 = vld [vmem:[%s6 + $0x30] sm:$0xff]
        %v1756 = vld [vmem:[%s6 + $0x38] sm:$0xff]
        %1758 = vset.pattern.permute.xlu0 0
        %1759 = vperm.xlu0 %1758, %v1749
        %v1760 = vpop.permute.xlu0 %1759
        %1763 = vset.pattern.permute.xlu0 0
        %1764 = vperm.xlu0 %1763, %v1750
        %v1765 = vpop.permute.xlu0 %1764
        %1768 = vset.pattern.permute.xlu0 0
        %1769 = vperm.xlu0 %1768, %v1751
        %v1770 = vpop.permute.xlu0 %1769
        %1773 = vset.pattern.permute.xlu0 0
        %1774 = vperm.xlu0 %1773, %v1752
        %v1775 = vpop.permute.xlu0 %1774
        %1778 = vset.pattern.permute.xlu0 0
        %1779 = vperm.xlu0 %1778, %v1753
        %v1780 = vpop.permute.xlu0 %1779
        %1783 = vset.pattern.permute.xlu0 0
        %1784 = vperm.xlu0 %1783, %v1754
        %v1785 = vpop.permute.xlu0 %1784
        %1788 = vset.pattern.permute.xlu0 0
        %1789 = vperm.xlu0 %1788, %v1755
        %v1790 = vpop.permute.xlu0 %1789
        %1793 = vset.pattern.permute.xlu0 0
        %1794 = vperm.xlu0 %1793, %v1756
        %v1795 = vpop.permute.xlu0 %1794
        %v1805 = vunpack.c.l.b16 %v1739
        %v1806 = vunpack.c.l.b16 %v1740
        %v1807 = vunpack.c.l.b16 %v1741
        %v1808 = vunpack.c.l.b16 %v1742
        %v1809 = vunpack.c.l.b16 %v1743
        %v1810 = vunpack.c.l.b16 %v1744
        %v1811 = vunpack.c.l.b16 %v1745
        %v1812 = vunpack.c.l.b16 %v1746
        %v1813 = vpack.c.b16 %v1806, %v1805
        %v1814 = vpack.c.b16 %v1808, %v1807
        %v1815 = vpack.c.b16 %v1810, %v1809
        %v1816 = vpack.c.b16 %v1812, %v1811
        %v1818 = vsel %vm1626, %v1813, 0
        %v1821 = vsel %vm1626, %v1814, 0
        %v1824 = vsel %vm1626, %v1815, 0
        %v1827 = vsel %vm1626, %v1816, 0
        %1829 = vmatprep.subr.bf16.mxu0 0
        %1830 = vmatpush1.bf16.msra.mxu0 %v1747
        %1831 = vmatprep.subr.bf16.mxu0 0
        %1832 = vmatpush1.bf16.msra.mxu0 %v1748
        %1833 = vmatprep.subr.bf16.mxu0 0
        %1834 = vmatpush1.bf16.msra.mxu0 0
        %1835 = vmatprep.subr.bf16.mxu0 0
        %1836 = vmatpush1.bf16.msra.mxu0 0
        %1837 = vmatprep.subr.bf16.mxu0 0
        %1838 = vmatpush1.bf16.msra.mxu0 0
        %1839 = vmatprep.subr.bf16.mxu0 0
        %1840 = vmatpush1.bf16.msra.mxu0 0
        %1841 = vmatprep.subr.bf16.mxu0 0
        %1842 = vmatpush1.bf16.msra.mxu0 0
        %1843 = vmatprep.subr.bf16.mxu0 0
        %1844 = vmatpush1.bf16.msra.mxu0 0
        %1845 = vmatprep.subr.bf16.mxu0 0
        %1846 = vmatpush1.bf16.msra.mxu0 0
        %1847 = vmatprep.subr.bf16.mxu0 0
        %1848 = vmatpush1.bf16.msra.mxu0 0
        %1849 = vmatprep.subr.bf16.mxu0 0
        %1850 = vmatpush1.bf16.msra.mxu0 0
        %1851 = vmatprep.subr.bf16.mxu0 0
        %1852 = vmatpush1.bf16.msra.mxu0 0
        %1853 = vmatprep.subr.bf16.mxu0 0
        %1854 = vmatpush1.bf16.msra.mxu0 0
        %1855 = vmatprep.subr.bf16.mxu0 0
        %1856 = vmatpush1.bf16.msra.mxu0 0
        %1857 = vmatprep.subr.bf16.mxu0 0
        %1858 = vmatpush1.bf16.msra.mxu0 0
        %1859 = vmatprep.subr.bf16.mxu0 0
        %1860 = vmatpush1.bf16.msra.mxu0 0
        %1861 = vmatprep.mubr.bf16.mxu0 0
        %1862 = vmatmul.mubr.bf16.gmra.mrb[0].mxu0 %v1818
        %v1863 = vpop.f32.mrb[0].mxu0
        %v1864 = vadd.f32 %v1760, %v1863
        %v1865 = vpop.f32.mrb[0].mxu0
        %v1866 = vpop.f32.mrb[0].mxu0
        %v1867 = vadd.f32 %v1765, %v1866
        %v1868 = vpop.f32.mrb[0].mxu0
        %1869 = vmatprep.mubr.bf16.mxu0 0
        %1870 = vmatmul.mubr.bf16.gmra.mrb[0].mxu0 %v1821
        %v1871 = vpop.f32.mrb[0].mxu0
        %v1872 = vadd.f32 %v1770, %v1871
        %v1873 = vpop.f32.mrb[0].mxu0
        %v1874 = vpop.f32.mrb[0].mxu0
        %v1875 = vadd.f32 %v1775, %v1874
        %v1876 = vpop.f32.mrb[0].mxu0
        %1877 = vmatprep.mubr.bf16.mxu0 0
        %1878 = vmatmul.mubr.bf16.gmra.mrb[0].mxu0 %v1824
        %v1879 = vpop.f32.mrb[0].mxu0
        %v1880 = vadd.f32 %v1780, %v1879
        %v1881 = vpop.f32.mrb[0].mxu0
        %v1882 = vpop.f32.mrb[0].mxu0
        %v1883 = vadd.f32 %v1785, %v1882
        %v1884 = vpop.f32.mrb[0].mxu0
        %1885 = vmatprep.mubr.bf16.mxu0 0
        %1886 = vmatmul.mubr.bf16.gmra.mrb[0].mxu0 %v1827
        %v1887 = vpop.f32.mrb[0].mxu0
        %v1888 = vadd.f32 %v1790, %v1887
        %v1889 = vpop.f32.mrb[0].mxu0
        %v1890 = vpop.f32.mrb[0].mxu0
        %v1891 = vadd.f32 %v1795, %v1890
        %v1892 = vpop.f32.mrb[0].mxu0
        %1893 = vdwg.mxu0
        %1894 = vst [vmem:[%s316] sm:$0xff] %v1864
        %1895 = vst [vmem:[%s316 + $0x8] sm:$0xff] %v1867
        %1896 = vst [vmem:[%s316 + $0x10] sm:$0xff] %v1872
        %1897 = vst [vmem:[%s316 + $0x18] sm:$0xff] %v1875
        %1898 = vst [vmem:[%s316 + $0x20] sm:$0xff] %v1880
        %1899 = vst [vmem:[%s316 + $0x28] sm:$0xff] %v1883
        %1900 = vst [vmem:[%s316 + $0x30] sm:$0xff] %v1888
        %1901 = vst [vmem:[%s316 + $0x38] sm:$0xff] %v1891
        %s1902 = sand.u32 %s183, 1
        %s1903 = scalar_lea.sflag [#allocation3], %s1902
        %s1904 = sand.u32 %s183, 1
        %s1905 = smul.addr %s1904, 32
        %s1906 = scalar_lea.vmem [#allocation2], %s1905
        %p1907 = scmp.lt.s32.totalorder %s23, 1
        %s1908 = scalar_select %p1907, %s23, 1
        %s1909 = smul.addr %s1908, 8
        %s1910 = smul.addr %s1909, 8
        %s1911 = scalar_lea.vmem %s8, %s1910
        // Predicated region
        $region49: #{unet_forward.8} parent=47 // pred_check
          %p1912 = pneg %p193
        $region50: #{unet_forward.8} parent=47 // pred_check_branch
          %1914 = sbr.rel (%p1912) target = $region52
        $region51: #{unet_forward.8} parent=47 // pred_region
          %s1916 = ssub.s32 512, 512
          %1917 = vsyncadd %s1903, %s1916
          %s1918 = smul.addr %s23, 4
          %s1919 = smul.addr %s1918, 128
          %s1920 = scalar_lea.hbm %s7, %s1919
          %s1921 = sshll.u32 %s1906, 4
          %s1922 = int_to_ptr.vmem [resolvable:$true] %s1921
          %1927 = dma.vmem_to_hbm [thread:$0]  %s1922, 512, %s1920, %s1903, 128, 128, 8
        $region52: #{unet_forward.8} parent=47 // pred_fallthru
          _
        // Predicated region
        $region53: #{unet_forward.8} parent=47 // pred_check
          %p1928 = pneg %p219
        $region54: #{unet_forward.8} parent=47 // pred_check_branch
          %1930 = sbr.rel (%p1928) target = $region56
        $region55: #{unet_forward.8} parent=47 // pred_region
          _
        $region56: #{unet_forward.8} parent=47 // pred_fallthru
          _
      $region48: #{unet_forward.8} parent=5 // pred_fallthru
        _
      %p1931 = scmp.le.s32.totalorder 2, %s18
      // Predicated region
      $region57: #{unet_forward.8} parent=5 // pred_check
        %p1932 = pneg %p1931
      $region58: #{unet_forward.8} parent=5 // pred_check_branch
        %1934 = sbr.rel (%p1932) target = $region60
      $region59: #{unet_forward.8} parent=5 // pred_region
        %s1935 = ssub.s32 %s18, 2
        // Predicated region
        $region61: #{unet_forward.8} parent=59 // pred_check
          %p1936 = pneg %p199
        $region62: #{unet_forward.8} parent=59 // pred_check_branch
          %1938 = sbr.rel (%p1936) target = $region64
        $region63: #{unet_forward.8} parent=59 // pred_region
          %s1939 = sand.u32 %s184, 1
          %s1940 = scalar_lea.sflag [#allocation3], %s1939
          %s1941 = sand.u32 %s184, 1
          %s1942 = smul.addr %s1941, 32
          %s1943 = scalar_lea.vmem [#allocation2], %s1942
          %1944 = dma.done %s1940, 512
        $region64: #{unet_forward.8} parent=59 // pred_fallthru
          _
        // Predicated region
        $region65: #{unet_forward.8} parent=59 // pred_check
          %p1945 = pneg %p225
        $region66: #{unet_forward.8} parent=59 // pred_check_branch
          %1947 = sbr.rel (%p1945) target = $region68
        $region67: #{unet_forward.8} parent=59 // pred_region
          %p1948 = scmp.lt.s32.totalorder %s24, 1
          %s1949 = scalar_select %p1948, %s24, 1
          %s1950 = smul.addr %s1949, 8
          %s1951 = smul.addr %s1950, 8
          %s1952 = scalar_lea.vmem %s8, %s1951
        $region68: #{unet_forward.8} parent=59 // pred_fallthru
          _
      $region60: #{unet_forward.8} parent=5 // pred_fallthru
        _
    $region6: #{unet_forward.8} parent=1 // loop_footer
      %s22 = sadd.s32 1, %s18
    $region7: #{unet_forward.8} parent=1 // loop_footer_branch
      %17 = sbr.rel target = $region3
    $region8: #{unet_forward.8} parent=1 // loop_exit
      _
    %1953 = vsyncpa [#allocation3], 1
    %s1954 = scalar_lea.sflag [#allocation3], 1
    %1955 = vsyncpa %s1954, 1

// kernel: unet_forward.9
$region0: #{unet_forward.9}
  #allocation0 [shape = 'u32[]', space=smem, size = 0x4, offset = 0x4, fixed_abs, tag = 'smem constant byte address 0x4 - core index']
  #allocation1 [shape = 'u32[144,128]{1,0:T(1,128)}', space=vmem, size = 0x12000, scoped, tag = 'internal scratch']
  #allocation2 [shape = 'f32[1,1]{1,0:T(1,128)S(1)}', space=vmem, size = 0x200, scoped, tag = 'scoped memory for unet_forward.9']
  %s0 = inlined_call_operand.vmem [shape: f32[2,32,512], index: 0, kind: input, shape index: {}]
  %s1 = inlined_call_operand.vmem [shape: bf16[16,288], index: 1, kind: input, shape index: {}]
  %s2 = inlined_call_operand.vmem [shape: f32[16,1], index: 2, kind: input, shape index: {}]
  %s3 = inlined_call_operand.vmem [shape: bf16[16,144], index: 3, kind: input, shape index: {}]
  %s4 = inlined_call_operand.vmem [shape: f32[16,1], index: 4, kind: input, shape index: {}]
  %s5 = inlined_call_operand.vmem [shape: bf16[1,16], index: 5, kind: input, shape index: {}]
  %s6 = inlined_call_operand.<no memory space> [shape: f32[1,1], index: 6, kind: input, shape index: {}]
  %s7 = inlined_call_operand.hbm [shape: f32[2,16,256], index: 7, kind: output, shape index: {0}]
  %s8 = inlined_call_operand.vmem [shape: f32[2,1,256], index: 8, kind: output, shape index: {1}]
  %9 = xla_tuple %s7, %s8
  %s10 = sld [smem:[#allocation0]]
  $region69: #{unet_forward.9} parent=0
    _
  %s12 = ssub.s32 1, %s10
  %s13 = scalar_select 0, %s12, %s10
  %v14 = vstv %s6
  %15 = vst [vmem:[#allocation2] sm:$0x1] %v14
  $region1: #{unet_forward.9} parent=0
    #allocation3 [shape = 'u8[32768]{0}', space=vmem, size = 0x8000, scoped, tag = 'output window, operand 0']
    #allocation4 [shape = 's32[2]{0}', space=sflag, size = 0x8, scoped, tag = 'scoped memory for unet_forward.9']
    %16 = vsyncpa [#allocation4], 0
    %s17 = scalar_lea.sflag [#allocation4], 1
    %18 = vsyncpa %s17, 0
    loop: start=0, step=1, limit=4
    $region2: #{unet_forward.9} parent=1 // loop_pre_header
      _
    $region3: #{unet_forward.9} parent=1 // loop_header
      %s20 = sphi 0, %s24
      %p21 = scmp.ge.s32.totalorder %s20, 4
      %s30 = sphi 0, %s32
      %s33 = sphi 0, %s30
      %s34 = sphi 0, %s33
      %s50 = sphi 0, %s34
      %s54 = sphi 0, %s54
      %s56 = sphi 0, %s54
      %s57 = sphi 0, %s56
      %s71 = sphi 0, %s57
      %s75 = sphi 0, %s75
      %s77 = sphi 0, %s75
      %s78 = sphi 0, %s77
      %s92 = sphi 0, %s78
      %s96 = sphi 0, %s96
      %s98 = sphi 0, %s96
      %s99 = sphi 0, %s98
      %s113 = sphi 0, %s99
      %s117 = sphi 0, %s117
      %s119 = sphi 0, %s117
      %s120 = sphi 0, %s119
      %s134 = sphi 0, %s120
      %s138 = sphi 0, %s138
      %s140 = sphi 0, %s138
      %s141 = sphi 0, %s140
      %s155 = sphi 0, %s141
      %s159 = sphi 0, %s159
      %s161 = sphi 0, %s159
      %s162 = sphi 0, %s161
      %s176 = sphi 0, %s162
      %s182 = sphi 0, %s184
      %s185 = sphi 0, %s182
      %s186 = sphi 0, %s185
      %s202 = sphi 0, %s186
      %s208 = sphi 0, %s210
      %s211 = sphi 0, %s208
      %s212 = sphi 0, %s211
      %s228 = sphi 0, %s212
    $region4: #{unet_forward.9} parent=1 // loop_header_branch
      %23 = sbr.rel (%p21) target = $region8
    $region5: #{unet_forward.9} parent=1 // loop_body
      %s25 = ssub.s32 %s20, 1
      %s26 = ssub.s32 %s20, 2
      %s27 = sadd.s32 %s20, 1
      %s28 = ssub.s32 %s20, %s27
      %p29 = scmp.eq.s32.totalorder %s28, 0
      %s31 = sadd.s32 %s30, 1
      %s32 = scalar_select %p29, %s30, %s31
      %p35 = pneg %p29
      %p36 = scmp.eq.s32.totalorder %s20, 1
      %p37 = por %p35, %p36
      %p38 = scmp.ne.s32.totalorder %s30, %s33
      %p39 = scmp.eq.s32.totalorder %s20, 0
      %p40 = por %p38, %p39
      %p41 = scmp.ne.s32.totalorder %s30, %s33
      %p42 = scmp.eq.s32.totalorder %s25, 1
      %p43 = por %p41, %p42
      %p44 = scmp.ne.s32.totalorder %s33, %s34
      %p45 = scmp.eq.s32.totalorder %s25, 0
      %p46 = por %p44, %p45
      %p47 = scmp.ne.s32.totalorder %s33, %s34
      %p48 = scmp.eq.s32.totalorder %s26, 1
      %p49 = por %p47, %p48
      %p51 = scmp.ne.s32.totalorder %s34, %s50
      %p52 = scmp.eq.s32.totalorder %s26, 0
      %p53 = por %p51, %p52
      %s55 = sadd.s32 %s54, 1
      %p58 = scmp.eq.s32.totalorder %s20, 1
      %p59 = scmp.ne.s32.totalorder %s54, %s56
      %p60 = scmp.eq.s32.totalorder %s20, 0
      %p61 = por %p59, %p60
      %p62 = scmp.ne.s32.totalorder %s54, %s56
      %p63 = scmp.eq.s32.totalorder %s25, 1
      %p64 = por %p62, %p63
      %p65 = scmp.ne.s32.totalorder %s56, %s57
      %p66 = scmp.eq.s32.totalorder %s25, 0
      %p67 = por %p65, %p66
      %p68 = scmp.ne.s32.totalorder %s56, %s57
      %p69 = scmp.eq.s32.totalorder %s26, 1
      %p70 = por %p68, %p69
      %p72 = scmp.ne.s32.totalorder %s57, %s71
      %p73 = scmp.eq.s32.totalorder %s26, 0
      %p74 = por %p72, %p73
      %s76 = sadd.s32 %s75, 1
      %p79 = scmp.eq.s32.totalorder %s20, 1
      %p80 = scmp.ne.s32.totalorder %s75, %s77
      %p81 = scmp.eq.s32.totalorder %s20, 0
      %p82 = por %p80, %p81
      %p83 = scmp.ne.s32.totalorder %s75, %s77
      %p84 = scmp.eq.s32.totalorder %s25, 1
      %p85 = por %p83, %p84
      %p86 = scmp.ne.s32.totalorder %s77, %s78
      %p87 = scmp.eq.s32.totalorder %s25, 0
      %p88 = por %p86, %p87
      %p89 = scmp.ne.s32.totalorder %s77, %s78
      %p90 = scmp.eq.s32.totalorder %s26, 1
      %p91 = por %p89, %p90
      %p93 = scmp.ne.s32.totalorder %s78, %s92
      %p94 = scmp.eq.s32.totalorder %s26, 0
      %p95 = por %p93, %p94
      %s97 = sadd.s32 %s96, 1
      %p100 = scmp.eq.s32.totalorder %s20, 1
      %p101 = scmp.ne.s32.totalorder %s96, %s98
      %p102 = scmp.eq.s32.totalorder %s20, 0
      %p103 = por %p101, %p102
      %p104 = scmp.ne.s32.totalorder %s96, %s98
      %p105 = scmp.eq.s32.totalorder %s25, 1
      %p106 = por %p104, %p105
      %p107 = scmp.ne.s32.totalorder %s98, %s99
      %p108 = scmp.eq.s32.totalorder %s25, 0
      %p109 = por %p107, %p108
      %p110 = scmp.ne.s32.totalorder %s98, %s99
      %p111 = scmp.eq.s32.totalorder %s26, 1
      %p112 = por %p110, %p111
      %p114 = scmp.ne.s32.totalorder %s99, %s113
      %p115 = scmp.eq.s32.totalorder %s26, 0
      %p116 = por %p114, %p115
      %s118 = sadd.s32 %s117, 1
      %p121 = scmp.eq.s32.totalorder %s20, 1
      %p122 = scmp.ne.s32.totalorder %s117, %s119
      %p123 = scmp.eq.s32.totalorder %s20, 0
      %p124 = por %p122, %p123
      %p125 = scmp.ne.s32.totalorder %s117, %s119
      %p126 = scmp.eq.s32.totalorder %s25, 1
      %p127 = por %p125, %p126
      %p128 = scmp.ne.s32.totalorder %s119, %s120
      %p129 = scmp.eq.s32.totalorder %s25, 0
      %p130 = por %p128, %p129
      %p131 = scmp.ne.s32.totalorder %s119, %s120
      %p132 = scmp.eq.s32.totalorder %s26, 1
      %p133 = por %p131, %p132
      %p135 = scmp.ne.s32.totalorder %s120, %s134
      %p136 = scmp.eq.s32.totalorder %s26, 0
      %p137 = por %p135, %p136
      %s139 = sadd.s32 %s138, 1
      %p142 = scmp.eq.s32.totalorder %s20, 1
      %p143 = scmp.ne.s32.totalorder %s138, %s140
      %p144 = scmp.eq.s32.totalorder %s20, 0
      %p145 = por %p143, %p144
      %p146 = scmp.ne.s32.totalorder %s138, %s140
      %p147 = scmp.eq.s32.totalorder %s25, 1
      %p148 = por %p146, %p147
      %p149 = scmp.ne.s32.totalorder %s140, %s141
      %p150 = scmp.eq.s32.totalorder %s25, 0
      %p151 = por %p149, %p150
      %p152 = scmp.ne.s32.totalorder %s140, %s141
      %p153 = scmp.eq.s32.totalorder %s26, 1
      %p154 = por %p152, %p153
      %p156 = scmp.ne.s32.totalorder %s141, %s155
      %p157 = scmp.eq.s32.totalorder %s26, 0
      %p158 = por %p156, %p157
      %s160 = sadd.s32 %s159, 1
      %p163 = scmp.eq.s32.totalorder %s20, 1
      %p164 = scmp.ne.s32.totalorder %s159, %s161
      %p165 = scmp.eq.s32.totalorder %s20, 0
      %p166 = por %p164, %p165
      %p167 = scmp.ne.s32.totalorder %s159, %s161
      %p168 = scmp.eq.s32.totalorder %s25, 1
      %p169 = por %p167, %p168
      %p170 = scmp.ne.s32.totalorder %s161, %s162
      %p171 = scmp.eq.s32.totalorder %s25, 0
      %p172 = por %p170, %p171
      %p173 = scmp.ne.s32.totalorder %s161, %s162
      %p174 = scmp.eq.s32.totalorder %s26, 1
      %p175 = por %p173, %p174
      %p177 = scmp.ne.s32.totalorder %s162, %s176
      %p178 = scmp.eq.s32.totalorder %s26, 0
      %p179 = por %p177, %p178
      %s180 = ssub.s32 %s20, %s27
      %p181 = scmp.eq.s32.totalorder %s180, 0
      %s183 = sadd.s32 %s182, 1
      %s184 = scalar_select %p181, %s182, %s183
      %p187 = pneg %p181
      %p188 = scmp.eq.s32.totalorder %s20, 1
      %p189 = por %p187, %p188
      %p190 = scmp.ne.s32.totalorder %s182, %s185
      %p191 = scmp.eq.s32.totalorder %s20, 0
      %p192 = por %p190, %p191
      %p193 = scmp.ne.s32.totalorder %s182, %s185
      %p194 = scmp.eq.s32.totalorder %s25, 1
      %p195 = por %p193, %p194
      %p196 = scmp.ne.s32.totalorder %s185, %s186
      %p197 = scmp.eq.s32.totalorder %s25, 0
      %p198 = por %p196, %p197
      %p199 = scmp.ne.s32.totalorder %s185, %s186
      %p200 = scmp.eq.s32.totalorder %s26, 1
      %p201 = por %p199, %p200
      %p203 = scmp.ne.s32.totalorder %s186, %s202
      %p204 = scmp.eq.s32.totalorder %s26, 0
      %p205 = por %p203, %p204
      %s206 = ssub.s32 %s20, %s27
      %p207 = scmp.eq.s32.totalorder %s206, 0
      %s209 = sadd.s32 %s208, 1
      %s210 = scalar_select %p207, %s208, %s209
      %p213 = pneg %p207
      %p214 = scmp.eq.s32.totalorder %s20, 1
      %p215 = por %p213, %p214
      %p216 = scmp.ne.s32.totalorder %s208, %s211
      %p217 = scmp.eq.s32.totalorder %s20, 0
      %p218 = por %p216, %p217
      %p219 = scmp.ne.s32.totalorder %s208, %s211
      %p220 = scmp.eq.s32.totalorder %s25, 1
      %p221 = por %p219, %p220
      %p222 = scmp.ne.s32.totalorder %s211, %s212
      %p223 = scmp.eq.s32.totalorder %s25, 0
      %p224 = por %p222, %p223
      %p225 = scmp.ne.s32.totalorder %s211, %s212
      %p226 = scmp.eq.s32.totalorder %s26, 1
      %p227 = por %p225, %p226
      %p229 = scmp.ne.s32.totalorder %s212, %s228
      %p230 = scmp.eq.s32.totalorder %s26, 0
      %p231 = por %p229, %p230
      %p232 = scmp.le.s32.totalorder 1, %s20
      %p233 = scmp.lt.s32.totalorder %s20, 3
      %p234 = pnand %p232, %p233
      %p235 = pneg %p234
      // Predicated region
      $region9: #{unet_forward.9} parent=5 // pred_check
        _
      $region10: #{unet_forward.9} parent=5 // pred_check_branch
        %237 = sbr.rel (%p234) target = $region12
      $region11: #{unet_forward.9} parent=5 // pred_region
        %s238 = ssub.s32 %s20, 1
        // Predicated region
        $region13: #{unet_forward.9} parent=11 // pred_check
          %p239 = pneg %p67
        $region14: #{unet_forward.9} parent=11 // pred_check_branch
          %241 = sbr.rel (%p239) target = $region16
        $region15: #{unet_forward.9} parent=11 // pred_region
          _
        $region16: #{unet_forward.9} parent=11 // pred_fallthru
          _
        // Predicated region
        $region17: #{unet_forward.9} parent=11 // pred_check
          %p242 = pneg %p88
        $region18: #{unet_forward.9} parent=11 // pred_check_branch
          %244 = sbr.rel (%p242) target = $region20
        $region19: #{unet_forward.9} parent=11 // pred_region
          _
        $region20: #{unet_forward.9} parent=11 // pred_fallthru
          _
        // Predicated region
        $region21: #{unet_forward.9} parent=11 // pred_check
          %p245 = pneg %p109
        $region22: #{unet_forward.9} parent=11 // pred_check_branch
          %247 = sbr.rel (%p245) target = $region24
        $region23: #{unet_forward.9} parent=11 // pred_region
          _
        $region24: #{unet_forward.9} parent=11 // pred_fallthru
          _
        // Predicated region
        $region25: #{unet_forward.9} parent=11 // pred_check
          %p248 = pneg %p130
        $region26: #{unet_forward.9} parent=11 // pred_check_branch
          %250 = sbr.rel (%p248) target = $region28
        $region27: #{unet_forward.9} parent=11 // pred_region
          _
        $region28: #{unet_forward.9} parent=11 // pred_fallthru
          _
        // Predicated region
        $region29: #{unet_forward.9} parent=11 // pred_check
          %p251 = pneg %p151
        $region30: #{unet_forward.9} parent=11 // pred_check_branch
          %253 = sbr.rel (%p251) target = $region32
        $region31: #{unet_forward.9} parent=11 // pred_region
          _
        $region32: #{unet_forward.9} parent=11 // pred_fallthru
          _
        // Predicated region
        $region33: #{unet_forward.9} parent=11 // pred_check
          %p254 = pneg %p172
        $region34: #{unet_forward.9} parent=11 // pred_check_branch
          %256 = sbr.rel (%p254) target = $region36
        $region35: #{unet_forward.9} parent=11 // pred_region
          _
        $region36: #{unet_forward.9} parent=11 // pred_fallthru
          _
      $region12: #{unet_forward.9} parent=5 // pred_fallthru
        _
      %p257 = scmp.lt.s32.totalorder %s20, 2
      // Predicated region
      $region37: #{unet_forward.9} parent=5 // pred_check
        %p258 = pneg %p257
      $region38: #{unet_forward.9} parent=5 // pred_check_branch
        %260 = sbr.rel (%p258) target = $region40
      $region39: #{unet_forward.9} parent=5 // pred_region
        // Predicated region
        $region41: #{unet_forward.9} parent=39 // pred_check
          %p261 = pneg %p40
        $region42: #{unet_forward.9} parent=39 // pred_check_branch
          %263 = sbr.rel (%p261) target = $region44
        $region43: #{unet_forward.9} parent=39 // pred_region
          %p264 = scmp.lt.s32.totalorder %s20, 1
          %s265 = scalar_select %p264, %s20, 1
          %s266 = smul.addr %s265, 16
          %s267 = smul.addr %s266, 8
          %s268 = scalar_lea.vmem %s0, %s267
        $region44: #{unet_forward.9} parent=39 // pred_fallthru
          _
      $region40: #{unet_forward.9} parent=5 // pred_fallthru
        _
      %p269 = scmp.le.s32.totalorder 1, %s20
      %p270 = scmp.lt.s32.totalorder %s20, 3
      %p271 = pnand %p269, %p270
      %p272 = pneg %p271
      // Predicated region
      $region45: #{unet_forward.9} parent=5 // pred_check
        _
      $region46: #{unet_forward.9} parent=5 // pred_check_branch
        %274 = sbr.rel (%p271) target = $region48
      $region47: #{unet_forward.9} parent=5 // pred_region
        %s275 = ssub.s32 %s20, 1
        %p276 = scmp.lt.s32.totalorder %s25, 1
        %s277 = scalar_select %p276, %s25, 1
        %s278 = smul.addr %s277, 16
        %s279 = smul.addr %s278, 8
        %s280 = scalar_lea.vmem %s0, %s279
        %p281 = pneg %p46
        %p282 = pneg %p43
        %p283 = pneg %p67
        %p284 = pneg %p64
        %p285 = pneg %p88
        %p286 = pneg %p85
        %p287 = pneg %p109
        %p288 = pneg %p106
        %p289 = pneg %p130
        %p290 = pneg %p127
        %p291 = pneg %p151
        %p292 = pneg %p148
        %p293 = pneg %p172
        %p294 = pneg %p169
        %p295 = pneg %p198
        %p296 = pneg %p195
        %s297 = sand.u32 %s185, 1
        %s298 = scalar_lea.sflag [#allocation4], %s297
        %s299 = sand.u32 %s185, 1
        %s300 = smul.addr %s299, 32
        %s301 = scalar_lea.vmem [#allocation3], %s300
        %p302 = pneg %p224
        %p303 = pneg %p221
        %p304 = scmp.lt.s32.totalorder %s25, 1
        %s305 = scalar_select %p304, %s25, 1
        %s306 = smul.addr %s305, 2
        %s307 = scalar_lea.vmem %s8, %s306
        %p308 = scmp.lt.s32.totalorder %s25, 1
        %s309 = scalar_select %p308, %s25, 1
        %s310 = smul.addr %s309, 16
        %s311 = smul.addr %s310, 8
        %s312 = scalar_lea.vmem %s0, %s311
        %p313 = scmp.lt.s32.totalorder %s25, 1
        %s314 = scalar_select %p313, %s25, 1
        %s315 = smul.addr %s314, 2
        %s316 = scalar_lea.vmem %s8, %s315
        %v318 = vld [vmem:[%s312] sm:$0xff]
        %v319 = vld [vmem:[%s312 + $0x8] sm:$0xff]
        %v320 = vld [vmem:[%s312 + $0x10] sm:$0xff]
        %v321 = vld [vmem:[%s312 + $0x18] sm:$0xff]
        %v322 = vld [vmem:[%s312 + $0x20] sm:$0xff]
        %v323 = vld [vmem:[%s312 + $0x28] sm:$0xff]
        %v324 = vld [vmem:[%s312 + $0x30] sm:$0xff]
        %v325 = vld [vmem:[%s312 + $0x38] sm:$0xff]
        %v326 = vld [vmem:[%s312 + $0x40] sm:$0xff]
        %v327 = vld [vmem:[%s312 + $0x48] sm:$0xff]
        %v328 = vld [vmem:[%s312 + $0x50] sm:$0xff]
        %v329 = vld [vmem:[%s312 + $0x58] sm:$0xff]
        %v330 = vld [vmem:[%s312 + $0x60] sm:$0xff]
        %v331 = vld [vmem:[%s312 + $0x68] sm:$0xff]
        %v332 = vld [vmem:[%s312 + $0x70] sm:$0xff]
        %v333 = vld [vmem:[%s312 + $0x78] sm:$0xff]
        %v334 = vld [vmem:[%s1] sm:$0xff]
        %v335 = vld [vmem:[%s1 + $0x8] sm:$0xf]
        %v336 = vld [vmem:[%s1 + $0xc] sm:$0xff]
        %v337 = vld [vmem:[%s1 + $0x14] sm:$0xf]
        %v338 = vld [vmem:[%s2] sm:$0xff]
        %v339 = vld [vmem:[%s2 + $0x8] sm:$0xff]
        %356 = vrot.lane.b32.xlu0 %v318, 127
        %v357 = vpop.permute.xlu0 %356
        %358 = vrot.lane.b32.xlu0 %v319, 127
        %v359 = vpop.permute.xlu0 %358
        %360 = vrot.lane.b32.xlu0 %v320, 127
        %v361 = vpop.permute.xlu0 %360
        %362 = vrot.lane.b32.xlu0 %v321, 127
        %v363 = vpop.permute.xlu0 %362
        %364 = vrot.lane.b32.xlu0 %v322, 127
        %v365 = vpop.permute.xlu0 %364
        %366 = vrot.lane.b32.xlu0 %v323, 127
        %v367 = vpop.permute.xlu0 %366
        %368 = vrot.lane.b32.xlu0 %v324, 127
        %v369 = vpop.permute.xlu0 %368
        %370 = vrot.lane.b32.xlu0 %v325, 127
        %v371 = vpop.permute.xlu0 %370
        %372 = vrot.lane.b32.xlu0 %v326, 127
        %v373 = vpop.permute.xlu0 %372
        %374 = vrot.lane.b32.xlu0 %v327, 127
        %v375 = vpop.permute.xlu0 %374
        %376 = vrot.lane.b32.xlu0 %v328, 127
        %v377 = vpop.permute.xlu0 %376
        %378 = vrot.lane.b32.xlu0 %v329, 127
        %v379 = vpop.permute.xlu0 %378
        %380 = vrot.lane.b32.xlu0 %v330, 127
        %v381 = vpop.permute.xlu0 %380
        %382 = vrot.lane.b32.xlu0 %v331, 127
        %v383 = vpop.permute.xlu0 %382
        %384 = vrot.lane.b32.xlu0 %v332, 127
        %v385 = vpop.permute.xlu0 %384
        %386 = vrot.lane.b32.xlu0 %v333, 127
        %v387 = vpop.permute.xlu0 %386
        %vm388 = vcmask 1039360
        %v389 = vsel %vm388, %v357, %v359
        %v390 = vsel %vm388, %v359, %v361
        %v391 = vsel %vm388, %v361, %v363
        %v392 = vsel %vm388, %v365, %v367
        %v393 = vsel %vm388, %v367, %v369
        %v394 = vsel %vm388, %v369, %v371
        %v395 = vsel %vm388, %v373, %v375
        %v396 = vsel %vm388, %v375, %v377
        %v397 = vsel %vm388, %v377, %v379
        %v398 = vsel %vm388, %v381, %v383
        %v399 = vsel %vm388, %v383, %v385
        %v400 = vsel %vm388, %v385, %v387
        %413 = vrot.lane.b32.xlu0 %v318, 126
        %v414 = vpop.permute.xlu0 %413
        %415 = vrot.lane.b32.xlu0 %v319, 126
        %v416 = vpop.permute.xlu0 %415
        %417 = vrot.lane.b32.xlu0 %v320, 126
        %v418 = vpop.permute.xlu0 %417
        %419 = vrot.lane.b32.xlu0 %v321, 126
        %v420 = vpop.permute.xlu0 %419
        %421 = vrot.lane.b32.xlu0 %v322, 126
        %v422 = vpop.permute.xlu0 %421
        %423 = vrot.lane.b32.xlu0 %v323, 126
        %v424 = vpop.permute.xlu0 %423
        %425 = vrot.lane.b32.xlu0 %v324, 126
        %v426 = vpop.permute.xlu0 %425
        %427 = vrot.lane.b32.xlu0 %v325, 126
        %v428 = vpop.permute.xlu0 %427
        %429 = vrot.lane.b32.xlu0 %v326, 126
        %v430 = vpop.permute.xlu0 %429
        %431 = vrot.lane.b32.xlu0 %v327, 126
        %v432 = vpop.permute.xlu0 %431
        %433 = vrot.lane.b32.xlu0 %v328, 126
        %v434 = vpop.permute.xlu0 %433
        %435 = vrot.lane.b32.xlu0 %v329, 126
        %v436 = vpop.permute.xlu0 %435
        %437 = vrot.lane.b32.xlu0 %v330, 126
        %v438 = vpop.permute.xlu0 %437
        %439 = vrot.lane.b32.xlu0 %v331, 126
        %v440 = vpop.permute.xlu0 %439
        %441 = vrot.lane.b32.xlu0 %v332, 126
        %v442 = vpop.permute.xlu0 %441
        %443 = vrot.lane.b32.xlu0 %v333, 126
        %v444 = vpop.permute.xlu0 %443
        %vm445 = vcmask 1031168
        %v446 = vsel %vm445, %v414, %v416
        %v447 = vsel %vm445, %v416, %v418
        %v448 = vsel %vm445, %v418, %v420
        %v449 = vsel %vm445, %v422, %v424
        %v450 = vsel %vm445, %v424, %v426
        %v451 = vsel %vm445, %v426, %v428
        %v452 = vsel %vm445, %v430, %v432
        %v453 = vsel %vm445, %v432, %v434
        %v454 = vsel %vm445, %v434, %v436
        %v455 = vsel %vm445, %v438, %v440
        %v456 = vsel %vm445, %v440, %v442
        %v457 = vsel %vm445, %v442, %v444
        %470 = vrot.lane.b32.xlu0 %v318, 116
        %v471 = vpop.permute.xlu0 %470
        %472 = vrot.lane.b32.xlu0 %v319, 116
        %v473 = vpop.permute.xlu0 %472
        %474 = vrot.lane.b32.xlu0 %v320, 116
        %v475 = vpop.permute.xlu0 %474
        %476 = vrot.lane.b32.xlu0 %v321, 116
        %v477 = vpop.permute.xlu0 %476
        %478 = vrot.lane.b32.xlu0 %v322, 116
        %v479 = vpop.permute.xlu0 %478
        %480 = vrot.lane.b32.xlu0 %v323, 116
        %v481 = vpop.permute.xlu0 %480
        %482 = vrot.lane.b32.xlu0 %v324, 116
        %v483 = vpop.permute.xlu0 %482
        %484 = vrot.lane.b32.xlu0 %v325, 116
        %v485 = vpop.permute.xlu0 %484
        %486 = vrot.lane.b32.xlu0 %v326, 116
        %v487 = vpop.permute.xlu0 %486
        %488 = vrot.lane.b32.xlu0 %v327, 116
        %v489 = vpop.permute.xlu0 %488
        %490 = vrot.lane.b32.xlu0 %v328, 116
        %v491 = vpop.permute.xlu0 %490
        %492 = vrot.lane.b32.xlu0 %v329, 116
        %v493 = vpop.permute.xlu0 %492
        %494 = vrot.lane.b32.xlu0 %v330, 116
        %v495 = vpop.permute.xlu0 %494
        %496 = vrot.lane.b32.xlu0 %v331, 116
        %v497 = vpop.permute.xlu0 %496
        %498 = vrot.lane.b32.xlu0 %v332, 116
        %v499 = vpop.permute.xlu0 %498
        %500 = vrot.lane.b32.xlu0 %v333, 116
        %v501 = vpop.permute.xlu0 %500
        %vm502 = vcmask 949248
        %v503 = vsel %vm502, %v471, %v473
        %v504 = vsel %vm502, %v473, %v475
        %v505 = vsel %vm502, %v475, %v477
        %v506 = vsel %vm502, %v479, %v481
        %v507 = vsel %vm502, %v481, %v483
        %v508 = vsel %vm502, %v483, %v485
        %v509 = vsel %vm502, %v487, %v489
        %v510 = vsel %vm502, %v489, %v491
        %v511 = vsel %vm502, %v491, %v493
        %v512 = vsel %vm502, %v495, %v497
        %v513 = vsel %vm502, %v497, %v499
        %v514 = vsel %vm502, %v499, %v501
        %527 = vrot.lane.b32.xlu0 %v318, 115
        %v528 = vpop.permute.xlu0 %527
        %529 = vrot.lane.b32.xlu0 %v319, 115
        %v530 = vpop.permute.xlu0 %529
        %531 = vrot.lane.b32.xlu0 %v320, 115
        %v532 = vpop.permute.xlu0 %531
        %533 = vrot.lane.b32.xlu0 %v321, 115
        %v534 = vpop.permute.xlu0 %533
        %535 = vrot.lane.b32.xlu0 %v322, 115
        %v536 = vpop.permute.xlu0 %535
        %537 = vrot.lane.b32.xlu0 %v323, 115
        %v538 = vpop.permute.xlu0 %537
        %539 = vrot.lane.b32.xlu0 %v324, 115
        %v540 = vpop.permute.xlu0 %539
        %541 = vrot.lane.b32.xlu0 %v325, 115
        %v542 = vpop.permute.xlu0 %541
        %543 = vrot.lane.b32.xlu0 %v326, 115
        %v544 = vpop.permute.xlu0 %543
        %545 = vrot.lane.b32.xlu0 %v327, 115
        %v546 = vpop.permute.xlu0 %545
        %547 = vrot.lane.b32.xlu0 %v328, 115
        %v548 = vpop.permute.xlu0 %547
        %549 = vrot.lane.b32.xlu0 %v329, 115
        %v550 = vpop.permute.xlu0 %549
        %551 = vrot.lane.b32.xlu0 %v330, 115
        %v552 = vpop.permute.xlu0 %551
        %553 = vrot.lane.b32.xlu0 %v331, 115
        %v554 = vpop.permute.xlu0 %553
        %555 = vrot.lane.b32.xlu0 %v332, 115
        %v556 = vpop.permute.xlu0 %555
        %557 = vrot.lane.b32.xlu0 %v333, 115
        %v558 = vpop.permute.xlu0 %557
        %vm559 = vcmask 941056
        %v560 = vsel %vm559, %v528, %v530
        %v561 = vsel %vm559, %v530, %v532
        %v562 = vsel %vm559, %v532, %v534
        %v563 = vsel %vm559, %v536, %v538
        %v564 = vsel %vm559, %v538, %v540
        %v565 = vsel %vm559, %v540, %v542
        %v566 = vsel %vm559, %v544, %v546
        %v567 = vsel %vm559, %v546, %v548
        %v568 = vsel %vm559, %v548, %v550
        %v569 = vsel %vm559, %v552, %v554
        %v570 = vsel %vm559, %v554, %v556
        %v571 = vsel %vm559, %v556, %v558
        %584 = vrot.lane.b32.xlu0 %v318, 114
        %v585 = vpop.permute.xlu0 %584
        %586 = vrot.lane.b32.xlu0 %v319, 114
        %v587 = vpop.permute.xlu0 %586
        %588 = vrot.lane.b32.xlu0 %v320, 114
        %v589 = vpop.permute.xlu0 %588
        %590 = vrot.lane.b32.xlu0 %v321, 114
        %v591 = vpop.permute.xlu0 %590
        %592 = vrot.lane.b32.xlu0 %v322, 114
        %v593 = vpop.permute.xlu0 %592
        %594 = vrot.lane.b32.xlu0 %v323, 114
        %v595 = vpop.permute.xlu0 %594
        %596 = vrot.lane.b32.xlu0 %v324, 114
        %v597 = vpop.permute.xlu0 %596
        %598 = vrot.lane.b32.xlu0 %v325, 114
        %v599 = vpop.permute.xlu0 %598
        %600 = vrot.lane.b32.xlu0 %v326, 114
        %v601 = vpop.permute.xlu0 %600
        %602 = vrot.lane.b32.xlu0 %v327, 114
        %v603 = vpop.permute.xlu0 %602
        %604 = vrot.lane.b32.xlu0 %v328, 114
        %v605 = vpop.permute.xlu0 %604
        %606 = vrot.lane.b32.xlu0 %v329, 114
        %v607 = vpop.permute.xlu0 %606
        %608 = vrot.lane.b32.xlu0 %v330, 114
        %v609 = vpop.permute.xlu0 %608
        %610 = vrot.lane.b32.xlu0 %v331, 114
        %v611 = vpop.permute.xlu0 %610
        %612 = vrot.lane.b32.xlu0 %v332, 114
        %v613 = vpop.permute.xlu0 %612
        %614 = vrot.lane.b32.xlu0 %v333, 114
        %v615 = vpop.permute.xlu0 %614
        %vm616 = vcmask 932864
        %v617 = vsel %vm616, %v585, %v587
        %v618 = vsel %vm616, %v587, %v589
        %v619 = vsel %vm616, %v589, %v591
        %v620 = vsel %vm616, %v593, %v595
        %v621 = vsel %vm616, %v595, %v597
        %v622 = vsel %vm616, %v597, %v599
        %v623 = vsel %vm616, %v601, %v603
        %v624 = vsel %vm616, %v603, %v605
        %v625 = vsel %vm616, %v605, %v607
        %v626 = vsel %vm616, %v609, %v611
        %v627 = vsel %vm616, %v611, %v613
        %v628 = vsel %vm616, %v613, %v615
        %641 = vrot.lane.b32.xlu0 %v318, 104
        %v642 = vpop.permute.xlu0 %641
        %643 = vrot.lane.b32.xlu0 %v319, 104
        %v644 = vpop.permute.xlu0 %643
        %645 = vrot.lane.b32.xlu0 %v320, 104
        %v646 = vpop.permute.xlu0 %645
        %647 = vrot.lane.b32.xlu0 %v321, 104
        %v648 = vpop.permute.xlu0 %647
        %649 = vrot.lane.b32.xlu0 %v322, 104
        %v650 = vpop.permute.xlu0 %649
        %651 = vrot.lane.b32.xlu0 %v323, 104
        %v652 = vpop.permute.xlu0 %651
        %653 = vrot.lane.b32.xlu0 %v324, 104
        %v654 = vpop.permute.xlu0 %653
        %655 = vrot.lane.b32.xlu0 %v325, 104
        %v656 = vpop.permute.xlu0 %655
        %657 = vrot.lane.b32.xlu0 %v326, 104
        %v658 = vpop.permute.xlu0 %657
        %659 = vrot.lane.b32.xlu0 %v327, 104
        %v660 = vpop.permute.xlu0 %659
        %661 = vrot.lane.b32.xlu0 %v328, 104
        %v662 = vpop.permute.xlu0 %661
        %663 = vrot.lane.b32.xlu0 %v329, 104
        %v664 = vpop.permute.xlu0 %663
        %665 = vrot.lane.b32.xlu0 %v330, 104
        %v666 = vpop.permute.xlu0 %665
        %667 = vrot.lane.b32.xlu0 %v331, 104
        %v668 = vpop.permute.xlu0 %667
        %669 = vrot.lane.b32.xlu0 %v332, 104
        %v670 = vpop.permute.xlu0 %669
        %671 = vrot.lane.b32.xlu0 %v333, 104
        %v672 = vpop.permute.xlu0 %671
        %vm673 = vcmask 850944
        %v674 = vsel %vm673, %v642, %v644
        %v675 = vsel %vm673, %v644, %v646
        %v676 = vsel %vm673, %v646, %v648
        %v677 = vsel %vm673, %v650, %v652
        %v678 = vsel %vm673, %v652, %v654
        %v679 = vsel %vm673, %v654, %v656
        %v680 = vsel %vm673, %v658, %v660
        %v681 = vsel %vm673, %v660, %v662
        %v682 = vsel %vm673, %v662, %v664
        %v683 = vsel %vm673, %v666, %v668
        %v684 = vsel %vm673, %v668, %v670
        %v685 = vsel %vm673, %v670, %v672
        %698 = vrot.lane.b32.xlu0 %v318, 103
        %v699 = vpop.permute.xlu0 %698
        %700 = vrot.lane.b32.xlu0 %v319, 103
        %v701 = vpop.permute.xlu0 %700
        %702 = vrot.lane.b32.xlu0 %v320, 103
        %v703 = vpop.permute.xlu0 %702
        %704 = vrot.lane.b32.xlu0 %v321, 103
        %v705 = vpop.permute.xlu0 %704
        %706 = vrot.lane.b32.xlu0 %v322, 103
        %v707 = vpop.permute.xlu0 %706
        %708 = vrot.lane.b32.xlu0 %v323, 103
        %v709 = vpop.permute.xlu0 %708
        %710 = vrot.lane.b32.xlu0 %v324, 103
        %v711 = vpop.permute.xlu0 %710
        %712 = vrot.lane.b32.xlu0 %v325, 103
        %v713 = vpop.permute.xlu0 %712
        %714 = vrot.lane.b32.xlu0 %v326, 103
        %v715 = vpop.permute.xlu0 %714
        %716 = vrot.lane.b32.xlu0 %v327, 103
        %v717 = vpop.permute.xlu0 %716
        %718 = vrot.lane.b32.xlu0 %v328, 103
        %v719 = vpop.permute.xlu0 %718
        %720 = vrot.lane.b32.xlu0 %v329, 103
        %v721 = vpop.permute.xlu0 %720
        %722 = vrot.lane.b32.xlu0 %v330, 103
        %v723 = vpop.permute.xlu0 %722
        %724 = vrot.lane.b32.xlu0 %v331, 103
        %v725 = vpop.permute.xlu0 %724
        %726 = vrot.lane.b32.xlu0 %v332, 103
        %v727 = vpop.permute.xlu0 %726
        %728 = vrot.lane.b32.xlu0 %v333, 103
        %v729 = vpop.permute.xlu0 %728
        %vm730 = vcmask 842752
        %v731 = vsel %vm730, %v699, %v701
        %v732 = vsel %vm730, %v701, %v703
        %v733 = vsel %vm730, %v703, %v705
        %v734 = vsel %vm730, %v707, %v709
        %v735 = vsel %vm730, %v709, %v711
        %v736 = vsel %vm730, %v711, %v713
        %v737 = vsel %vm730, %v715, %v717
        %v738 = vsel %vm730, %v717, %v719
        %v739 = vsel %vm730, %v719, %v721
        %v740 = vsel %vm730, %v723, %v725
        %v741 = vsel %vm730, %v725, %v727
        %v742 = vsel %vm730, %v727, %v729
        %755 = vrot.lane.b32.xlu0 %v318, 102
        %v756 = vpop.permute.xlu0 %755
        %757 = vrot.lane.b32.xlu0 %v319, 102
        %v758 = vpop.permute.xlu0 %757
        %759 = vrot.lane.b32.xlu0 %v320, 102
        %v760 = vpop.permute.xlu0 %759
        %761 = vrot.lane.b32.xlu0 %v321, 102
        %v762 = vpop.permute.xlu0 %761
        %763 = vrot.lane.b32.xlu0 %v322, 102
        %v764 = vpop.permute.xlu0 %763
        %765 = vrot.lane.b32.xlu0 %v323, 102
        %v766 = vpop.permute.xlu0 %765
        %767 = vrot.lane.b32.xlu0 %v324, 102
        %v768 = vpop.permute.xlu0 %767
        %769 = vrot.lane.b32.xlu0 %v325, 102
        %v770 = vpop.permute.xlu0 %769
        %771 = vrot.lane.b32.xlu0 %v326, 102
        %v772 = vpop.permute.xlu0 %771
        %773 = vrot.lane.b32.xlu0 %v327, 102
        %v774 = vpop.permute.xlu0 %773
        %775 = vrot.lane.b32.xlu0 %v328, 102
        %v776 = vpop.permute.xlu0 %775
        %777 = vrot.lane.b32.xlu0 %v329, 102
        %v778 = vpop.permute.xlu0 %777
        %779 = vrot.lane.b32.xlu0 %v330, 102
        %v780 = vpop.permute.xlu0 %779
        %781 = vrot.lane.b32.xlu0 %v331, 102
        %v782 = vpop.permute.xlu0 %781
        %783 = vrot.lane.b32.xlu0 %v332, 102
        %v784 = vpop.permute.xlu0 %783
        %785 = vrot.lane.b32.xlu0 %v333, 102
        %v786 = vpop.permute.xlu0 %785
        %vm787 = vcmask 834560
        %v788 = vsel %vm787, %v756, %v758
        %v789 = vsel %vm787, %v758, %v760
        %v790 = vsel %vm787, %v760, %v762
        %v791 = vsel %vm787, %v764, %v766
        %v792 = vsel %vm787, %v766, %v768
        %v793 = vsel %vm787, %v768, %v770
        %v794 = vsel %vm787, %v772, %v774
        %v795 = vsel %vm787, %v774, %v776
        %v796 = vsel %vm787, %v776, %v778
        %v797 = vsel %vm787, %v780, %v782
        %v798 = vsel %vm787, %v782, %v784
        %v799 = vsel %vm787, %v784, %v786
        %v812 = vpack.c.bf16 %v322, %v318
        %v813 = vpack.c.bf16 %v323, %v319
        %v814 = vpack.c.bf16 %v324, %v320
        %v815 = vpack.c.bf16 %v330, %v326
        %v816 = vpack.c.bf16 %v331, %v327
        %v817 = vpack.c.bf16 %v332, %v328
        %v818 = vpack.c.bf16 %v392, %v389
        %v819 = vpack.c.bf16 %v393, %v390
        %v820 = vpack.c.bf16 %v394, %v391
        %v821 = vpack.c.bf16 %v398, %v395
        %v822 = vpack.c.bf16 %v399, %v396
        %v823 = vpack.c.bf16 %v400, %v397
        %v824 = vpack.c.bf16 %v449, %v446
        %v825 = vpack.c.bf16 %v450, %v447
        %v826 = vpack.c.bf16 %v451, %v448
        %v827 = vpack.c.bf16 %v455, %v452
        %v828 = vpack.c.bf16 %v456, %v453
        %v829 = vpack.c.bf16 %v457, %v454
        %v830 = vpack.c.bf16 %v506, %v503
        %v831 = vpack.c.bf16 %v507, %v504
        %v832 = vpack.c.bf16 %v508, %v505
        %v833 = vpack.c.bf16 %v512, %v509
        %v834 = vpack.c.bf16 %v513, %v510
        %v835 = vpack.c.bf16 %v514, %v511
        %v836 = vpack.c.bf16 %v563, %v560
        %v837 = vpack.c.bf16 %v564, %v561
        %v838 = vpack.c.bf16 %v565, %v562
        %v839 = vpack.c.bf16 %v569, %v566
        %v840 = vpack.c.bf16 %v570, %v567
        %v841 = vpack.c.bf16 %v571, %v568
        %v842 = vpack.c.bf16 %v620, %v617
        %v843 = vpack.c.bf16 %v621, %v618
        %v844 = vpack.c.bf16 %v622, %v619
        %v845 = vpack.c.bf16 %v626, %v623
        %v846 = vpack.c.bf16 %v627, %v624
        %v847 = vpack.c.bf16 %v628, %v625
        %v848 = vpack.c.bf16 %v677, %v674
        %v849 = vpack.c.bf16 %v678, %v675
        %v850 = vpack.c.bf16 %v679, %v676
        %v851 = vpack.c.bf16 %v683, %v680
        %v852 = vpack.c.bf16 %v684, %v681
        %v853 = vpack.c.bf16 %v685, %v682
        %v854 = vpack.c.bf16 %v734, %v731
        %v855 = vpack.c.bf16 %v735, %v732
        %v856 = vpack.c.bf16 %v736, %v733
        %v857 = vpack.c.bf16 %v740, %v737
        %v858 = vpack.c.bf16 %v741, %v738
        %v859 = vpack.c.bf16 %v742, %v739
        %v860 = vpack.c.bf16 %v791, %v788
        %v861 = vpack.c.bf16 %v792, %v789
        %v862 = vpack.c.bf16 %v793, %v790
        %v863 = vpack.c.bf16 %v797, %v794
        %v864 = vpack.c.bf16 %v798, %v795
        %v865 = vpack.c.bf16 %v799, %v796
        %867 = vset.pattern.permute.xlu0 0
        %868 = vperm.xlu0 %867, %v338
        %v869 = vpop.permute.xlu0 %868
        %872 = vset.pattern.permute.xlu0 0
        %873 = vperm.xlu0 %872, %v339
        %v874 = vpop.permute.xlu0 %873
        %v880 = vunpack.c.l.b16 %v334
        %v881 = vunpack.c.h.b16 %v334
        %v882 = vunpack.c.l.b16 %v335
        %v883 = vunpack.c.l.b16 %v336
        %v884 = vunpack.c.h.b16 %v336
        %v885 = vunpack.c.l.b16 %v337
        %v886 = vpack.c.b16 %v883, %v880
        %v887 = vpack.c.b16 %v884, %v881
        %v888 = vpack.c.b16 %v885, %v882
        %vm891 = vcmask 261120
        %v893 = vsel %vm891, %v888, 0
        %895 = vmatprep.subr.bf16.mxu0 %v813
        %896 = vmatpush1.bf16.msra.mxu0 %v812
        %897 = vmatprep.subr.bf16.mxu0 %v816
        %898 = vmatpush1.bf16.msra.mxu0 %v815
        %899 = vmatprep.subr.bf16.mxu0 %v819
        %900 = vmatpush1.bf16.msra.mxu0 %v818
        %901 = vmatprep.subr.bf16.mxu0 %v822
        %902 = vmatpush1.bf16.msra.mxu0 %v821
        %903 = vmatprep.subr.bf16.mxu0 %v825
        %904 = vmatpush1.bf16.msra.mxu0 %v824
        %905 = vmatprep.subr.bf16.mxu0 %v828
        %906 = vmatpush1.bf16.msra.mxu0 %v827
        %907 = vmatprep.subr.bf16.mxu0 %v831
        %908 = vmatpush1.bf16.msra.mxu0 %v830
        %909 = vmatprep.subr.bf16.mxu0 %v834
        %910 = vmatpush1.bf16.msra.mxu0 %v833
        %911 = vmatprep.subr.bf16.mxu0 %v837
        %912 = vmatpush1.bf16.msra.mxu0 %v836
        %913 = vmatprep.subr.bf16.mxu0 %v840
        %914 = vmatpush1.bf16.msra.mxu0 %v839
        %915 = vmatprep.subr.bf16.mxu0 %v843
        %916 = vmatpush1.bf16.msra.mxu0 %v842
        %917 = vmatprep.subr.bf16.mxu0 %v846
        %918 = vmatpush1.bf16.msra.mxu0 %v845
        %919 = vmatprep.subr.bf16.mxu0 %v849
        %920 = vmatpush1.bf16.msra.mxu0 %v848
        %921 = vmatprep.subr.bf16.mxu0 %v852
        %922 = vmatpush1.bf16.msra.mxu0 %v851
        %923 = vmatprep.subr.bf16.mxu0 %v855
        %924 = vmatpush1.bf16.msra.mxu0 %v854
        %925 = vmatprep.subr.bf16.mxu0 %v858
        %926 = vmatpush1.bf16.msra.mxu0 %v857
        %927 = vmatprep.mubr.bf16.mxu0 %v887
        %928 = vmatmul.mubr.bf16.gmra.mrb[0].mxu0 %v886
        %v929 = vpop.f32.mrb[0].mxu0
        %v930 = vadd.f32 %v869, %v929
        %v931 = vpop.f32.mrb[0].mxu0
        %v932 = vadd.f32 %v869, %v931
        %v933 = vpop.f32.mrb[0].mxu0
        %v934 = vadd.f32 %v874, %v933
        %v935 = vpop.f32.mrb[0].mxu0
        %v936 = vadd.f32 %v874, %v935
        %937 = vdwg.mxu0
        %938 = vmatprep.subr.bf16.mxu0 %v861
        %939 = vmatpush1.bf16.msra.mxu0 %v860
        %940 = vmatprep.subr.bf16.mxu0 %v864
        %941 = vmatpush1.bf16.msra.mxu0 %v863
        %942 = vmatprep.subr.bf16.mxu0 0
        %943 = vmatpush1.bf16.msra.mxu0 0
        %944 = vmatprep.subr.bf16.mxu0 0
        %945 = vmatpush1.bf16.msra.mxu0 0
        %946 = vmatprep.subr.bf16.mxu0 0
        %947 = vmatpush1.bf16.msra.mxu0 0
        %948 = vmatprep.subr.bf16.mxu0 0
        %949 = vmatpush1.bf16.msra.mxu0 0
        %950 = vmatprep.subr.bf16.mxu0 0
        %951 = vmatpush1.bf16.msra.mxu0 0
        %952 = vmatprep.subr.bf16.mxu0 0
        %953 = vmatpush1.bf16.msra.mxu0 0
        %954 = vmatprep.subr.bf16.mxu0 0
        %955 = vmatpush1.bf16.msra.mxu0 0
        %956 = vmatprep.subr.bf16.mxu0 0
        %957 = vmatpush1.bf16.msra.mxu0 0
        %958 = vmatprep.subr.bf16.mxu0 0
        %959 = vmatpush1.bf16.msra.mxu0 0
        %960 = vmatprep.subr.bf16.mxu0 0
        %961 = vmatpush1.bf16.msra.mxu0 0
        %962 = vmatprep.subr.bf16.mxu0 0
        %963 = vmatpush1.bf16.msra.mxu0 0
        %964 = vmatprep.subr.bf16.mxu0 0
        %965 = vmatpush1.bf16.msra.mxu0 0
        %966 = vmatprep.subr.bf16.mxu0 0
        %967 = vmatpush1.bf16.msra.mxu0 0
        %968 = vmatprep.subr.bf16.mxu0 0
        %969 = vmatpush1.bf16.msra.mxu0 0
        %970 = vmatprep.mubr.bf16.mxu0 0
        %971 = vmatmul.mubr.bf16.gmra.mrb[0].mxu0 %v893
        %v972 = vpop.f32.mrb[0].mxu0
        %v973 = vadd.f32 %v930, %v972
        %v974 = vpop.f32.mrb[0].mxu0
        %v975 = vadd.f32 %v932, %v974
        %v976 = vpop.f32.mrb[0].mxu0
        %v977 = vadd.f32 %v934, %v976
        %v978 = vpop.f32.mrb[0].mxu0
        %v979 = vadd.f32 %v936, %v978
        %980 = vdwg.mxu0
        %981 = vmatprep.subr.bf16.mxu0 0
        %982 = vmatpush1.bf16.msra.mxu0 %v814
        %983 = vmatprep.subr.bf16.mxu0 0
        %984 = vmatpush1.bf16.msra.mxu0 %v817
        %985 = vmatprep.subr.bf16.mxu0 0
        %986 = vmatpush1.bf16.msra.mxu0 %v820
        %987 = vmatprep.subr.bf16.mxu0 0
        %988 = vmatpush1.bf16.msra.mxu0 %v823
        %989 = vmatprep.subr.bf16.mxu0 0
        %990 = vmatpush1.bf16.msra.mxu0 %v826
        %991 = vmatprep.subr.bf16.mxu0 0
        %992 = vmatpush1.bf16.msra.mxu0 %v829
        %993 = vmatprep.subr.bf16.mxu0 0
        %994 = vmatpush1.bf16.msra.mxu0 %v832
        %995 = vmatprep.subr.bf16.mxu0 0
        %996 = vmatpush1.bf16.msra.mxu0 %v835
        %997 = vmatprep.subr.bf16.mxu0 0
        %998 = vmatpush1.bf16.msra.mxu0 %v838
        %999 = vmatprep.subr.bf16.mxu0 0
        %1000 = vmatpush1.bf16.msra.mxu0 %v841
        %1001 = vmatprep.subr.bf16.mxu0 0
        %1002 = vmatpush1.bf16.msra.mxu0 %v844
        %1003 = vmatprep.subr.bf16.mxu0 0
        %1004 = vmatpush1.bf16.msra.mxu0 %v847
        %1005 = vmatprep.subr.bf16.mxu0 0
        %1006 = vmatpush1.bf16.msra.mxu0 %v850
        %1007 = vmatprep.subr.bf16.mxu0 0
        %1008 = vmatpush1.bf16.msra.mxu0 %v853
        %1009 = vmatprep.subr.bf16.mxu0 0
        %1010 = vmatpush1.bf16.msra.mxu0 %v856
        %1011 = vmatprep.subr.bf16.mxu0 0
        %1012 = vmatpush1.bf16.msra.mxu0 %v859
        %1013 = vmatprep.mubr.bf16.mxu0 %v887
        %1014 = vmatmul.mubr.bf16.gmra.mrb[0].mxu0 %v886
        %v1015 = vpop.f32.mrb[0].mxu0
        %v1016 = vadd.f32 %v869, %v1015
        %v1017 = vpop.f32.mrb[0].mxu0
        %v1018 = vpop.f32.mrb[0].mxu0
        %v1019 = vadd.f32 %v874, %v1018
        %v1020 = vpop.f32.mrb[0].mxu0
        %1021 = vdwg.mxu0
        %1022 = vmatprep.subr.bf16.mxu0 0
        %1023 = vmatpush1.bf16.msra.mxu0 %v862
        %1024 = vmatprep.subr.bf16.mxu0 0
        %1025 = vmatpush1.bf16.msra.mxu0 %v865
        %1026 = vmatprep.subr.bf16.mxu0 0
        %1027 = vmatpush1.bf16.msra.mxu0 0
        %1028 = vmatprep.subr.bf16.mxu0 0
        %1029 = vmatpush1.bf16.msra.mxu0 0
        %1030 = vmatprep.subr.bf16.mxu0 0
        %1031 = vmatpush1.bf16.msra.mxu0 0
        %1032 = vmatprep.subr.bf16.mxu0 0
        %1033 = vmatpush1.bf16.msra.mxu0 0
        %1034 = vmatprep.subr.bf16.mxu0 0
        %1035 = vmatpush1.bf16.msra.mxu0 0
        %1036 = vmatprep.subr.bf16.mxu0 0
        %1037 = vmatpush1.bf16.msra.mxu0 0
        %1038 = vmatprep.subr.bf16.mxu0 0
        %1039 = vmatpush1.bf16.msra.mxu0 0
        %1040 = vmatprep.subr.bf16.mxu0 0
        %1041 = vmatpush1.bf16.msra.mxu0 0
        %1042 = vmatprep.subr.bf16.mxu0 0
        %1043 = vmatpush1.bf16.msra.mxu0 0
        %1044 = vmatprep.subr.bf16.mxu0 0
        %1045 = vmatpush1.bf16.msra.mxu0 0
        %1046 = vmatprep.subr.bf16.mxu0 0
        %1047 = vmatpush1.bf16.msra.mxu0 0
        %1048 = vmatprep.subr.bf16.mxu0 0
        %1049 = vmatpush1.bf16.msra.mxu0 0
        %1050 = vmatprep.subr.bf16.mxu0 0
        %1051 = vmatpush1.bf16.msra.mxu0 0
        %1052 = vmatprep.subr.bf16.mxu0 0
        %1053 = vmatpush1.bf16.msra.mxu0 0
        %1054 = vmatprep.mubr.bf16.mxu0 0
        %1055 = vmatmul.mubr.bf16.gmra.mrb[0].mxu0 %v893
        %v1056 = vpop.f32.mrb[0].mxu0
        %v1057 = vadd.f32 %v1016, %v1056
        %v1058 = vpop.f32.mrb[0].mxu0
        %v1059 = vpop.f32.mrb[0].mxu0
        %v1060 = vadd.f32 %v1019, %v1059
        %v1061 = vpop.f32.mrb[0].mxu0
        %1062 = vdwg.mxu0
        %v1063 = vmax.f32 %v973, 0.0
        %v1064 = vmax.f32 %v975, 0.0
        %v1065 = vmax.f32 %v1057, 0.0
        %v1066 = vmax.f32 %v977, 0.0
        %v1067 = vmax.f32 %v979, 0.0
        %v1068 = vmax.f32 %v1060, 0.0
        %v1069 = vld [vmem:[%s3] sm:$0xff]
        %v1070 = vld [vmem:[%s3 + $0x8] sm:$0xff]
        %v1071 = vld [vmem:[%s4] sm:$0xff]
        %v1072 = vld [vmem:[%s4 + $0x8] sm:$0xff]
        %1079 = vrot.lane.b32.xlu0 %v1063, 127
        %v1080 = vpop.permute.xlu0 %1079
        %1081 = vrot.lane.b32.xlu0 %v1064, 127
        %v1082 = vpop.permute.xlu0 %1081
        %1083 = vrot.lane.b32.xlu0 %v1065, 127
        %v1084 = vpop.permute.xlu0 %1083
        %1085 = vrot.lane.b32.xlu0 %v1066, 127
        %v1086 = vpop.permute.xlu0 %1085
        %1087 = vrot.lane.b32.xlu0 %v1067, 127
        %v1088 = vpop.permute.xlu0 %1087
        %1089 = vrot.lane.b32.xlu0 %v1068, 127
        %v1090 = vpop.permute.xlu0 %1089
        %v1091 = vsel %vm388, %v1080, %v1082
        %v1092 = vsel %vm388, %v1082, %v1084
        %v1093 = vsel %vm388, %v1086, %v1088
        %v1094 = vsel %vm388, %v1088, %v1090
        %1099 = vrot.lane.b32.xlu0 %v1063, 126
        %v1100 = vpop.permute.xlu0 %1099
        %1101 = vrot.lane.b32.xlu0 %v1064, 126
        %v1102 = vpop.permute.xlu0 %1101
        %1103 = vrot.lane.b32.xlu0 %v1065, 126
        %v1104 = vpop.permute.xlu0 %1103
        %1105 = vrot.lane.b32.xlu0 %v1066, 126
        %v1106 = vpop.permute.xlu0 %1105
        %1107 = vrot.lane.b32.xlu0 %v1067, 126
        %v1108 = vpop.permute.xlu0 %1107
        %1109 = vrot.lane.b32.xlu0 %v1068, 126
        %v1110 = vpop.permute.xlu0 %1109
        %v1111 = vsel %vm445, %v1100, %v1102
        %v1112 = vsel %vm445, %v1102, %v1104
        %v1113 = vsel %vm445, %v1106, %v1108
        %v1114 = vsel %vm445, %v1108, %v1110
        %1119 = vrot.lane.b32.xlu0 %v1063, 116
        %v1120 = vpop.permute.xlu0 %1119
        %1121 = vrot.lane.b32.xlu0 %v1064, 116
        %v1122 = vpop.permute.xlu0 %1121
        %1123 = vrot.lane.b32.xlu0 %v1065, 116
        %v1124 = vpop.permute.xlu0 %1123
        %1125 = vrot.lane.b32.xlu0 %v1066, 116
        %v1126 = vpop.permute.xlu0 %1125
        %1127 = vrot.lane.b32.xlu0 %v1067, 116
        %v1128 = vpop.permute.xlu0 %1127
        %1129 = vrot.lane.b32.xlu0 %v1068, 116
        %v1130 = vpop.permute.xlu0 %1129
        %v1131 = vsel %vm502, %v1120, %v1122
        %v1132 = vsel %vm502, %v1122, %v1124
        %v1133 = vsel %vm502, %v1126, %v1128
        %v1134 = vsel %vm502, %v1128, %v1130
        %1139 = vrot.lane.b32.xlu0 %v1063, 115
        %v1140 = vpop.permute.xlu0 %1139
        %1141 = vrot.lane.b32.xlu0 %v1064, 115
        %v1142 = vpop.permute.xlu0 %1141
        %1143 = vrot.lane.b32.xlu0 %v1065, 115
        %v1144 = vpop.permute.xlu0 %1143
        %1145 = vrot.lane.b32.xlu0 %v1066, 115
        %v1146 = vpop.permute.xlu0 %1145
        %1147 = vrot.lane.b32.xlu0 %v1067, 115
        %v1148 = vpop.permute.xlu0 %1147
        %1149 = vrot.lane.b32.xlu0 %v1068, 115
        %v1150 = vpop.permute.xlu0 %1149
        %v1151 = vsel %vm559, %v1140, %v1142
        %v1152 = vsel %vm559, %v1142, %v1144
        %v1153 = vsel %vm559, %v1146, %v1148
        %v1154 = vsel %vm559, %v1148, %v1150
        %1159 = vrot.lane.b32.xlu0 %v1063, 114
        %v1160 = vpop.permute.xlu0 %1159
        %1161 = vrot.lane.b32.xlu0 %v1064, 114
        %v1162 = vpop.permute.xlu0 %1161
        %1163 = vrot.lane.b32.xlu0 %v1065, 114
        %v1164 = vpop.permute.xlu0 %1163
        %1165 = vrot.lane.b32.xlu0 %v1066, 114
        %v1166 = vpop.permute.xlu0 %1165
        %1167 = vrot.lane.b32.xlu0 %v1067, 114
        %v1168 = vpop.permute.xlu0 %1167
        %1169 = vrot.lane.b32.xlu0 %v1068, 114
        %v1170 = vpop.permute.xlu0 %1169
        %v1171 = vsel %vm616, %v1160, %v1162
        %v1172 = vsel %vm616, %v1162, %v1164
        %v1173 = vsel %vm616, %v1166, %v1168
        %v1174 = vsel %vm616, %v1168, %v1170
        %1179 = vrot.lane.b32.xlu0 %v1063, 104
        %v1180 = vpop.permute.xlu0 %1179
        %1181 = vrot.lane.b32.xlu0 %v1064, 104
        %v1182 = vpop.permute.xlu0 %1181
        %1183 = vrot.lane.b32.xlu0 %v1065, 104
        %v1184 = vpop.permute.xlu0 %1183
        %1185 = vrot.lane.b32.xlu0 %v1066, 104
        %v1186 = vpop.permute.xlu0 %1185
        %1187 = vrot.lane.b32.xlu0 %v1067, 104
        %v1188 = vpop.permute.xlu0 %1187
        %1189 = vrot.lane.b32.xlu0 %v1068, 104
        %v1190 = vpop.permute.xlu0 %1189
        %v1191 = vsel %vm673, %v1180, %v1182
        %v1192 = vsel %vm673, %v1182, %v1184
        %v1193 = vsel %vm673, %v1186, %v1188
        %v1194 = vsel %vm673, %v1188, %v1190
        %1199 = vrot.lane.b32.xlu0 %v1063, 103
        %v1200 = vpop.permute.xlu0 %1199
        %1201 = vrot.lane.b32.xlu0 %v1064, 103
        %v1202 = vpop.permute.xlu0 %1201
        %1203 = vrot.lane.b32.xlu0 %v1065, 103
        %v1204 = vpop.permute.xlu0 %1203
        %1205 = vrot.lane.b32.xlu0 %v1066, 103
        %v1206 = vpop.permute.xlu0 %1205
        %1207 = vrot.lane.b32.xlu0 %v1067, 103
        %v1208 = vpop.permute.xlu0 %1207
        %1209 = vrot.lane.b32.xlu0 %v1068, 103
        %v1210 = vpop.permute.xlu0 %1209
        %v1211 = vsel %vm730, %v1200, %v1202
        %v1212 = vsel %vm730, %v1202, %v1204
        %v1213 = vsel %vm730, %v1206, %v1208
        %v1214 = vsel %vm730, %v1208, %v1210
        %1219 = vrot.lane.b32.xlu0 %v1063, 102
        %v1220 = vpop.permute.xlu0 %1219
        %1221 = vrot.lane.b32.xlu0 %v1064, 102
        %v1222 = vpop.permute.xlu0 %1221
        %1223 = vrot.lane.b32.xlu0 %v1065, 102
        %v1224 = vpop.permute.xlu0 %1223
        %1225 = vrot.lane.b32.xlu0 %v1066, 102
        %v1226 = vpop.permute.xlu0 %1225
        %1227 = vrot.lane.b32.xlu0 %v1067, 102
        %v1228 = vpop.permute.xlu0 %1227
        %1229 = vrot.lane.b32.xlu0 %v1068, 102
        %v1230 = vpop.permute.xlu0 %1229
        %v1231 = vsel %vm787, %v1220, %v1222
        %v1232 = vsel %vm787, %v1222, %v1224
        %v1233 = vsel %vm787, %v1226, %v1228
        %v1234 = vsel %vm787, %v1228, %v1230
        %v1239 = vpack.c.bf16 %v1066, %v1063
        %v1240 = vpack.c.bf16 %v1067, %v1064
        %v1241 = vpack.c.bf16 %v1093, %v1091
        %v1242 = vpack.c.bf16 %v1094, %v1092
        %v1243 = vpack.c.bf16 %v1113, %v1111
        %v1244 = vpack.c.bf16 %v1114, %v1112
        %v1245 = vpack.c.bf16 %v1133, %v1131
        %v1246 = vpack.c.bf16 %v1134, %v1132
        %v1247 = vpack.c.bf16 %v1153, %v1151
        %v1248 = vpack.c.bf16 %v1154, %v1152
        %v1249 = vpack.c.bf16 %v1173, %v1171
        %v1250 = vpack.c.bf16 %v1174, %v1172
        %v1251 = vpack.c.bf16 %v1193, %v1191
        %v1252 = vpack.c.bf16 %v1194, %v1192
        %v1253 = vpack.c.bf16 %v1213, %v1211
        %v1254 = vpack.c.bf16 %v1214, %v1212
        %v1255 = vpack.c.bf16 %v1233, %v1231
        %v1256 = vpack.c.bf16 %v1234, %v1232
        %1258 = vset.pattern.permute.xlu0 0
        %1259 = vperm.xlu0 %1258, %v1071
        %v1260 = vpop.permute.xlu0 %1259
        %1263 = vset.pattern.permute.xlu0 0
        %1264 = vperm.xlu0 %1263, %v1072
        %v1265 = vpop.permute.xlu0 %1264
        %v1269 = vunpack.c.l.b16 %v1069
        %v1270 = vunpack.c.h.b16 %v1069
        %v1271 = vunpack.c.l.b16 %v1070
        %v1272 = vunpack.c.h.b16 %v1070
        %v1273 = vpack.c.b16 %v1271, %v1269
        %v1274 = vpack.c.b16 %v1272, %v1270
        %vm1276 = vcmask 130048
        %v1278 = vsel %vm1276, %v1274, 0
        %1280 = vmatprep.subr.bf16.mxu0 %v1240
        %1281 = vmatpush1.bf16.msra.mxu0 %v1239
        %1282 = vmatprep.subr.bf16.mxu0 %v1242
        %1283 = vmatpush1.bf16.msra.mxu0 %v1241
        %1284 = vmatprep.subr.bf16.mxu0 %v1244
        %1285 = vmatpush1.bf16.msra.mxu0 %v1243
        %1286 = vmatprep.subr.bf16.mxu0 %v1246
        %1287 = vmatpush1.bf16.msra.mxu0 %v1245
        %1288 = vmatprep.subr.bf16.mxu0 %v1248
        %1289 = vmatpush1.bf16.msra.mxu0 %v1247
        %1290 = vmatprep.subr.bf16.mxu0 %v1250
        %1291 = vmatpush1.bf16.msra.mxu0 %v1249
        %1292 = vmatprep.subr.bf16.mxu0 %v1252
        %1293 = vmatpush1.bf16.msra.mxu0 %v1251
        %1294 = vmatprep.subr.bf16.mxu0 %v1254
        %1295 = vmatpush1.bf16.msra.mxu0 %v1253
        %1296 = vmatprep.subr.bf16.mxu0 %v1256
        %1297 = vmatpush1.bf16.msra.mxu0 %v1255
        %1298 = vmatprep.subr.bf16.mxu0 0
        %1299 = vmatpush1.bf16.msra.mxu0 0
        %1300 = vmatprep.subr.bf16.mxu0 0
        %1301 = vmatpush1.bf16.msra.mxu0 0
        %1302 = vmatprep.subr.bf16.mxu0 0
        %1303 = vmatpush1.bf16.msra.mxu0 0
        %1304 = vmatprep.subr.bf16.mxu0 0
        %1305 = vmatpush1.bf16.msra.mxu0 0
        %1306 = vmatprep.subr.bf16.mxu0 0
        %1307 = vmatpush1.bf16.msra.mxu0 0
        %1308 = vmatprep.subr.bf16.mxu0 0
        %1309 = vmatpush1.bf16.msra.mxu0 0
        %1310 = vmatprep.subr.bf16.mxu0 0
        %1311 = vmatpush1.bf16.msra.mxu0 0
        %1312 = vmatprep.mubr.bf16.mxu0 %v1278
        %1313 = vmatmul.mubr.bf16.gmra.mrb[0].mxu0 %v1273
        %v1314 = vpop.f32.mrb[0].mxu0
        %v1315 = vadd.f32 %v1260, %v1314
        %v1316 = vpop.f32.mrb[0].mxu0
        %v1317 = vadd.f32 %v1260, %v1316
        %v1318 = vpop.f32.mrb[0].mxu0
        %v1319 = vadd.f32 %v1265, %v1318
        %v1320 = vpop.f32.mrb[0].mxu0
        %v1321 = vadd.f32 %v1265, %v1320
        %1322 = vdwg.mxu0
        %v1323 = vmax.f32 %v1315, 0.0
        %v1324 = vmax.f32 %v1317, 0.0
        %v1325 = vmax.f32 %v1319, 0.0
        %v1326 = vmax.f32 %v1321, 0.0
        %1327 = vst [vmem:[%s301] sm:$0xff] %v1323
        %1328 = vst [vmem:[%s301 + $0x8] sm:$0xff] %v1324
        %1329 = vst [vmem:[%s301 + $0x10] sm:$0xff] %v1325
        %1330 = vst [vmem:[%s301 + $0x18] sm:$0xff] %v1326
        %v1331 = vld [vmem:[%s5] sm:$0x1]
        %v1332 = vpack.c.bf16 %v1325, %v1323
        %v1333 = vpack.c.bf16 %v1326, %v1324
        %v1334 = vld [vmem:[#allocation2] sm:$0x1]
        %1336 = vset.pattern.permute.xlu0 0
        %1337 = vperm.xlu0 %1336, %v1334
        %v1338 = vpop.permute.xlu0 %1337
        %v1340 = vlaneseq
        %v1341 = vshrl.u32 %v1340, 7
        %v1342 = vsub.s32 0, %v1341
        %v1343 = vrot.slane %v1338, %v1342
        %v1345 = vsel %vm1276, %v1331, 0
        %1347 = vmatprep.subr.bf16.mxu0 %v1333
        %1348 = vmatpush1.bf16.msra.mxu0 %v1332
        %1349 = vmatprep.subr.bf16.mxu0 0
        %1350 = vmatpush1.bf16.msra.mxu0 0
        %1351 = vmatprep.subr.bf16.mxu0 0
        %1352 = vmatpush1.bf16.msra.mxu0 0
        %1353 = vmatprep.subr.bf16.mxu0 0
        %1354 = vmatpush1.bf16.msra.mxu0 0
        %1355 = vmatprep.subr.bf16.mxu0 0
        %1356 = vmatpush1.bf16.msra.mxu0 0
        %1357 = vmatprep.subr.bf16.mxu0 0
        %1358 = vmatpush1.bf16.msra.mxu0 0
        %1359 = vmatprep.subr.bf16.mxu0 0
        %1360 = vmatpush1.bf16.msra.mxu0 0
        %1361 = vmatprep.subr.bf16.mxu0 0
        %1362 = vmatpush1.bf16.msra.mxu0 0
        %1363 = vmatprep.subr.bf16.mxu0 0
        %1364 = vmatpush1.bf16.msra.mxu0 0
        %1365 = vmatprep.subr.bf16.mxu0 0
        %1366 = vmatpush1.bf16.msra.mxu0 0
        %1367 = vmatprep.subr.bf16.mxu0 0
        %1368 = vmatpush1.bf16.msra.mxu0 0
        %1369 = vmatprep.subr.bf16.mxu0 0
        %1370 = vmatpush1.bf16.msra.mxu0 0
        %1371 = vmatprep.subr.bf16.mxu0 0
        %1372 = vmatpush1.bf16.msra.mxu0 0
        %1373 = vmatprep.subr.bf16.mxu0 0
        %1374 = vmatpush1.bf16.msra.mxu0 0
        %1375 = vmatprep.subr.bf16.mxu0 0
        %1376 = vmatpush1.bf16.msra.mxu0 0
        %1377 = vmatprep.subr.bf16.mxu0 0
        %1378 = vmatpush1.bf16.msra.mxu0 0
        %1379 = vmatprep.mubr.bf16.mxu0 0
        %1380 = vmatmul.mubr.bf16.gmra.mrb[0].mxu0 %v1345
        %v1381 = vpop.f32.mrb[0].mxu0
        %v1382 = vadd.f32 %v1343, %v1381
        %v1383 = vpop.f32.mrb[0].mxu0
        %v1384 = vadd.f32 %v1343, %v1383
        %v1385 = vpop.f32.mrb[0].mxu0
        %v1386 = vpop.f32.mrb[0].mxu0
        %1387 = vdwg.mxu0
        %v1390 = vcombine.low %v1382, %v1384
        %v1392 = vunpack.c.l.s4 1966171168
        %v1393 = vunpack.c.0.s8 %v1392
        %v1394 = vlaneseq
        %v1395 = vshrl.u32 %v1394, 7
        %v1396 = vsub.s32 %v1393, %v1395
        %v1397 = vrot.slane %v1390, %v1396
        %v1399 = vunpack.c.l.s4 1966171168
        %v1400 = vunpack.c.0.s8 %v1399
        %v1401 = vlaneseq
        %v1402 = vshrl.u32 %v1401, 7
        %v1403 = vsub.s32 %v1400, %v1402
        %v1404 = vrot.slane %v1397, %v1403
        %v1406 = vlaneseq
        %vm1407 = vcmp.ge.s32.totalorder %v1406, 0
        %vm1408 = vcmp.lt.s32.totalorder %v1406, 256
        %vm1409 = vmand %vm1407, %vm1408
        %1410 = vst.msk [vmem:[%s316] sm:$0x3] %vm1409, %v1404
        %s1411 = sand.u32 %s185, 1
        %s1412 = scalar_lea.sflag [#allocation4], %s1411
        %s1413 = sand.u32 %s185, 1
        %s1414 = smul.addr %s1413, 32
        %s1415 = scalar_lea.vmem [#allocation3], %s1414
        %p1416 = scmp.lt.s32.totalorder %s25, 1
        %s1417 = scalar_select %p1416, %s25, 1
        %s1418 = smul.addr %s1417, 2
        %s1419 = scalar_lea.vmem %s8, %s1418
        // Predicated region
        $region49: #{unet_forward.9} parent=47 // pred_check
          %p1420 = pneg %p195
        $region50: #{unet_forward.9} parent=47 // pred_check_branch
          %1422 = sbr.rel (%p1420) target = $region52
        $region51: #{unet_forward.9} parent=47 // pred_region
          %s1424 = ssub.s32 512, 512
          %1425 = vsyncadd %s1412, %s1424
          %s1426 = smul.addr %s25, 4
          %s1427 = smul.addr %s1426, 128
          %s1428 = scalar_lea.hbm %s7, %s1427
          %s1429 = sshll.u32 %s1415, 4
          %s1430 = int_to_ptr.vmem [resolvable:$true] %s1429
          %1435 = dma.vmem_to_hbm [thread:$0]  %s1430, 512, %s1428, %s1412, 256, 256, 16
        $region52: #{unet_forward.9} parent=47 // pred_fallthru
          _
        // Predicated region
        $region53: #{unet_forward.9} parent=47 // pred_check
          %p1436 = pneg %p221
        $region54: #{unet_forward.9} parent=47 // pred_check_branch
          %1438 = sbr.rel (%p1436) target = $region56
        $region55: #{unet_forward.9} parent=47 // pred_region
          _
        $region56: #{unet_forward.9} parent=47 // pred_fallthru
          _
      $region48: #{unet_forward.9} parent=5 // pred_fallthru
        _
      %p1439 = scmp.le.s32.totalorder 2, %s20
      // Predicated region
      $region57: #{unet_forward.9} parent=5 // pred_check
        %p1440 = pneg %p1439
      $region58: #{unet_forward.9} parent=5 // pred_check_branch
        %1442 = sbr.rel (%p1440) target = $region60
      $region59: #{unet_forward.9} parent=5 // pred_region
        %s1443 = ssub.s32 %s20, 2
        // Predicated region
        $region61: #{unet_forward.9} parent=59 // pred_check
          %p1444 = pneg %p201
        $region62: #{unet_forward.9} parent=59 // pred_check_branch
          %1446 = sbr.rel (%p1444) target = $region64
        $region63: #{unet_forward.9} parent=59 // pred_region
          %s1447 = sand.u32 %s186, 1
          %s1448 = scalar_lea.sflag [#allocation4], %s1447
          %s1449 = sand.u32 %s186, 1
          %s1450 = smul.addr %s1449, 32
          %s1451 = scalar_lea.vmem [#allocation3], %s1450
          %1452 = dma.done %s1448, 512
        $region64: #{unet_forward.9} parent=59 // pred_fallthru
          _
        // Predicated region
        $region65: #{unet_forward.9} parent=59 // pred_check
          %p1453 = pneg %p227
        $region66: #{unet_forward.9} parent=59 // pred_check_branch
          %1455 = sbr.rel (%p1453) target = $region68
        $region67: #{unet_forward.9} parent=59 // pred_region
          %p1456 = scmp.lt.s32.totalorder %s26, 1
          %s1457 = scalar_select %p1456, %s26, 1
          %s1458 = smul.addr %s1457, 2
          %s1459 = scalar_lea.vmem %s8, %s1458
        $region68: #{unet_forward.9} parent=59 // pred_fallthru
          _
      $region60: #{unet_forward.9} parent=5 // pred_fallthru
        _
    $region6: #{unet_forward.9} parent=1 // loop_footer
      %s24 = sadd.s32 1, %s20
    $region7: #{unet_forward.9} parent=1 // loop_footer_branch
      %19 = sbr.rel target = $region3
    $region8: #{unet_forward.9} parent=1 // loop_exit
      _
    %1460 = vsyncpa [#allocation4], 1
    %s1461 = scalar_lea.sflag [#allocation4], 1
    %1462 = vsyncpa %s1461, 1

</llo_original>
